<compile_context>
chip_gen: v6e
topology: v6e:2x2x1
jax: 0.10.0
libtpu: 0.0.40
codegen_flags: <defaults>
</compile_context>

<pallas_src>
import functools

import jax
import jax.numpy as jnp
from jax.experimental import pallas as pl
from jax.experimental.pallas import tpu as pltpu  # noqa: F401  (kept for TPU-specific tuning hooks)

NUM_HEADS = 8
LN_EPS = 1e-5


# ------------------------------- in-kernel helpers -----------------------------------
def _layernorm(x, g, b):
    mean = jnp.mean(x, axis=-1, keepdims=True)
    var = jnp.mean(jnp.square(x - mean), axis=-1, keepdims=True)
    return (x - mean) * jax.lax.rsqrt(var + LN_EPS) * g + b


def _split_heads(x, batch, n):
    """(batch*n, D) -> (batch*NUM_HEADS, n, D//NUM_HEADS); heads are lane chunks of x."""
    hd = x.shape[-1] // NUM_HEADS
    return jnp.stack(
        [x[b * n:(b + 1) * n, h * hd:(h + 1) * hd]
         for b in range(batch) for h in range(NUM_HEADS)],
        axis=0)


def _merge_heads(x, batch):
    """(batch*NUM_HEADS, n, hd) -> (batch*n, NUM_HEADS*hd)."""
    return jnp.concatenate(
        [jnp.concatenate([x[b * NUM_HEADS + h] for h in range(NUM_HEADS)], axis=-1)
         for b in range(batch)],
        axis=0)


def _mha(q_in, k_in, v_in, wq, wk, wv, wo, bo, g1, be1, g2, be2, *, batch, nq, nk):
    """MultiHeadAttn (post-LN residual blocks) on batch-flattened rows.

    q_in: (batch*nq, Dq); k_in/v_in: (batch*nk, Dk/Dv). Returns (batch*nq, D)."""
    q = jnp.dot(q_in, wq, preferred_element_type=jnp.float32)          # (batch*nq, D)
    k = jnp.dot(k_in, wk, preferred_element_type=jnp.float32)          # (batch*nk, D)
    v = jnp.dot(v_in, wv, preferred_element_type=jnp.float32)          # (batch*nk, D)

    D = q.shape[-1]
    scale = D ** -0.5          # torch: / math.sqrt(dim_out)  (intentionally NOT head_dim)

    qh = _split_heads(q, batch, nq)                                    # (batch*H, nq, hd)
    kh = _split_heads(k, batch, nk)                                    # (batch*H, nk, hd)
    vh = _split_heads(v, batch, nk)                                    # (batch*H, nk, hd)

    logits = jnp.einsum('bqd,bkd->bqk', qh, kh,
                        preferred_element_type=jnp.float32) * scale    # (batch*H, nq, nk)
    m = jnp.max(logits, axis=-1, keepdims=True)
    e = jnp.exp(logits - m)
    # exact reciprocal (approx=True would move it to the EUP, but we keep the strict f32 check)
    A = e * pl.reciprocal(jnp.sum(e, axis=-1, keepdims=True))
    att = jnp.einsum('bqk,bkd->bqd', A, vh,
                     preferred_element_type=jnp.float32)               # (batch*H, nq, hd)
    att = _merge_heads(att, batch)                                     # (batch*nq, D)

    out = _layernorm(q + att, g1, be1)                                 # ln1(q + attend)
    ff = jnp.maximum(jnp.dot(out, wo, preferred_element_type=jnp.float32) + bo, 0.0)
    return _layernorm(out + ff, g2, be2)                               # ln2(out + relu(fc_out))


# ------------------------------- fused forward kernel --------------------------------
def fused_encoder_kernel(
        xt_ref, xc_ref, yc_ref, w_ref,
        qk_w1_ref, qk_b1_ref, qk_w2_ref, qk_b2_ref,
        v_w1x_ref, v_w1y_ref, v_b1_ref, v_w2_ref, v_b2_ref,
        sa_wq_ref, sa_wk_ref, sa_wv_ref, sa_wo_ref, sa_bo_ref,
        sa_g1_ref, sa_be1_ref, sa_g2_ref, sa_be2_ref,
        ca_wq_ref, ca_wk_ref, ca_wv_ref, ca_wo_ref, ca_bo_ref,
        ca_g1_ref, ca_be1_ref, ca_g2_ref, ca_be2_ref,
        o_ref, *, batch, nt, nc):
    xt = xt_ref[...]                     # (batch*nt, dim_x)
    xc = xc_ref[...]                     # (batch*nc, dim_x)
    yc = yc_ref[...]                     # (batch*nc, dim_y)

    qk_w1 = qk_w1_ref[...]; qk_b1 = qk_b1_ref[...]
    qk_w2 = qk_w2_ref[...]; qk_b2 = qk_b2_ref[...]

    def net_qk(x):   # Linear -> ReLU -> Linear (shared weights for q and k)
        h = jnp.maximum(jnp.dot(x, qk_w1, preferred_element_type=jnp.float32) + qk_b1, 0.0)
        return jnp.dot(h, qk_w2, preferred_element_type=jnp.float32) + qk_b2

    q = net_qk(xt)                       # (batch*nt, H)
    k = net_qk(xc)                       # (batch*nc, H)

    # net_v on [xc, yc] without materializing the concat: split-weight first layer.
    hv = jnp.maximum(
        jnp.dot(xc, v_w1x_ref[...], preferred_element_type=jnp.float32)
        + jnp.dot(yc, v_w1y_ref[...], preferred_element_type=jnp.float32)
        + v_b1_ref[...], 0.0)
    v = jnp.dot(hv, v_w2_ref[...], preferred_element_type=jnp.float32) + v_b2_ref[...]

    # SelfAttn(v)  (no w scaling on this path).
    v = _mha(v, v, v,
             sa_wq_ref[...], sa_wk_ref[...], sa_wv_ref[...], sa_wo_ref[...], sa_bo_ref[...],
             sa_g1_ref[...], sa_be1_ref[...], sa_g2_ref[...], sa_be2_ref[...],
             batch=batch, nq=nc, nk=nc)

    # v = v * w, then cross attention attn(q, k, v).
    v = v * w_ref[...]                   # (batch*nc, H) * (batch*nc, 1)
    out = _mha(q, k, v,
               ca_wq_ref[...], ca_wk_ref[...], ca_wv_ref[...], ca_wo_ref[...], ca_bo_ref[...],
               ca_g1_ref[...], ca_be1_ref[...], ca_g2_ref[...], ca_be2_ref[...],
               batch=batch, nq=nt, nk=nc)

    o_ref[...] = out                     # single (batch*nt, H) sublane/lane-dense store


# ------------------------------------- wrapper ----------------------------------------
def neu_cross_attn_encoder(params, xc, yc, xt, w):
    B, Nc, dim_x = xc.shape
    Nt = xt.shape[1]
    dim_y = yc.shape[-1]
    H = params["qk_w2"].shape[1]

    sa, ca = params["self_attn"], params["cross_attn"]
    v_w1x = params["v_w1"][:dim_x]       # split net_v first-layer weight (no input concat)
    v_w1y = params["v_w1"][dim_x:]

    kernel = functools.partial(fused_encoder_kernel, batch=B, nt=Nt, nc=Nc)
    out_flat = pl.pallas_call(
        kernel,
        out_shape=jax.ShapeDtypeStruct((B * Nt, H), jnp.float32),
        # No grid / BlockSpecs: every operand is a whole-array VMEM block (all tiny here).
    )(
        xt.reshape(B * Nt, dim_x), xc.reshape(B * Nc, dim_x),
        yc.reshape(B * Nc, dim_y), w.reshape(B * Nc, 1),
        params["qk_w1"], params["qk_b1"], params["qk_w2"], params["qk_b2"],
        v_w1x, v_w1y, params["v_b1"], params["v_w2"], params["v_b2"],
        sa["wq"], sa["wk"], sa["wv"], sa["wo"], sa["bo"],
        sa["g1"], sa["b1"], sa["g2"], sa["b2"],
        ca["wq"], ca["wk"], ca["wv"], ca["wo"], ca["bo"],
        ca["g1"], ca["b1"], ca["g2"], ca["b2"],
    )
    return out_flat.reshape(B, Nt, H)


# ---------------------------------- parameter init -------------------------------------
def init_linear(key, fan_in, fan_out):
    kw, kb = jax.random.split(key)
    bound = 1.0 / jnp.sqrt(jnp.float32(fan_in))
    w = jax.random.uniform(kw, (fan_in, fan_out), jnp.float32, -bound, bound)
    b = jax.random.uniform(kb, (1, fan_out), jnp.float32, -bound, bound)
    return w, b


def init_attn(keys, dq, dk, dv, dout):
    wq, _ = init_linear(keys[0], dq, dout)     # fc_q, bias=False
    wk, _ = init_linear(keys[1], dk, dout)     # fc_k, bias=False
    wv, _ = init_linear(keys[2], dv, dout)     # fc_v, bias=False
    wo, bo = init_linear(keys[3], dout, dout)  # fc_out
    ones = jnp.ones((1, dout), jnp.float32)
    zeros = jnp.zeros((1, dout), jnp.float32)
    return {"wq": wq, "wk": wk, "wv": wv, "wo": wo, "bo": bo,
            "g1": ones, "b1": zeros, "g2": ones, "b2": zeros}


def init_params(key, dim_x, dim_y, dim_hid):
    keys = jax.random.split(key, 12)
    p = {}
    p["qk_w1"], p["qk_b1"] = init_linear(keys[0], dim_x, dim_hid)
    p["qk_w2"], p["qk_b2"] = init_linear(keys[1], dim_hid, dim_hid)
    p["v_w1"], p["v_b1"] = init_linear(keys[2], dim_x + dim_y, dim_hid)
    p["v_w2"], p["v_b2"] = init_linear(keys[3], dim_hid, dim_hid)
    p["self_attn"] = init_attn(keys[4:8], dim_hid, dim_hid, dim_hid, dim_hid)
    p["cross_attn"] = init_attn(keys[8:12], dim_hid, dim_hid, dim_hid, dim_hid)
    return p


# --------------------------------- pure-JAX reference -----------------------------------
def _ref_ln(x, g, b):
    m = jnp.mean(x, -1, keepdims=True)
    v = jnp.mean(jnp.square(x - m), -1, keepdims=True)
    return (x - m) * jax.lax.rsqrt(v + LN_EPS) * g + b


def _ref_mha(q_in, k_in, v_in, p):
    q = q_in @ p["wq"]; k = k_in @ p["wk"]; v = v_in @ p["wv"]
    B, Nq, D = q.shape
    Nk = k.shape[1]
    hd = D // NUM_HEADS
    q3 = q.reshape(B, Nq, NUM_HEADS, hd)
    k3 = k.reshape(B, Nk, NUM_HEADS, hd)
    v3 = v.reshape(B, Nk, NUM_HEADS, hd)
    logits = jnp.einsum('bqhd,bkhd->bhqk', q3, k3) / jnp.sqrt(jnp.float32(D))
    A = jax.nn.softmax(logits, -1)
    att = jnp.einsum('bhqk,bkhd->bqhd', A, v3).reshape(B, Nq, D)
    out = _ref_ln(q + att, p["g1"], p["b1"])
    out = _ref_ln(out + jnp.maximum(out @ p["wo"] + p["bo"], 0.0), p["g2"], p["b2"])
    return out


def ref_forward(params, xc, yc, xt, w):
    mlp = lambda x, w1, b1, w2, b2: jnp.maximum(x @ w1 + b1, 0.0) @ w2 + b2
    q = mlp(xt, params["qk_w1"], params["qk_b1"], params["qk_w2"], params["qk_b2"])
    k = mlp(xc, params["qk_w1"], params["qk_b1"], params["qk_w2"], params["qk_b2"])
    v = mlp(jnp.concatenate([xc, yc], -1),
            params["v_w1"], params["v_b1"], params["v_w2"], params["v_b2"])
    v = _ref_mha(v, v, v, params["self_attn"])
    v = v * w
    return _ref_mha(q, k, v, params["cross_attn"])


# --------------------------------------- main -------------------------------------------
if __name__ == "__main__":
    key = jax.random.PRNGKey(0)
    B, Nc, Nt = 2, 8, 8
    dim_x, dim_y, dim_hid = 2, 1, 32   # dim_hid must be divisible by num_heads=8

    k1, k2, k3, k4, kp = jax.random.split(key, 5)
    xc = jax.random.normal(k1, (B, Nc, dim_x), jnp.float32)
    yc = jax.random.normal(k2, (B, Nc, dim_y), jnp.float32)
    xt = jax.random.normal(k3, (B, Nt, dim_x), jnp.float32)
    w = jax.random.uniform(k4, (B, Nc, 1), jnp.float32)

    params = init_params(kp, dim_x, dim_y, dim_hid)

    fwd = jax.jit(neu_cross_attn_encoder)
    out = jax.block_until_ready(fwd(params, xc, yc, xt, w))

    ref = ref_forward(params, xc, yc, xt, w)
    assert out.shape == (B, Nt, dim_hid), out.shape
    err = float(jnp.max(jnp.abs(out - ref)))
    assert jnp.allclose(out, ref, atol=1e-3, rtol=1e-3), f"max abs err {err}"

    print("KERNEL_OK")
</pallas_src>

<mosaic_0001>
module attributes {stable_mosaic.version = 11 : i64} {
  func.func @fused_encoder_kernel(%arg0: memref<16x2xf32, #tpu.memory_space<vmem>>, %arg1: memref<16x2xf32, #tpu.memory_space<vmem>>, %arg2: memref<16x1xf32, #tpu.memory_space<vmem>>, %arg3: memref<16x1xf32, #tpu.memory_space<vmem>>, %arg4: memref<2x32xf32, #tpu.memory_space<vmem>>, %arg5: memref<1x32xf32, #tpu.memory_space<vmem>>, %arg6: memref<32x32xf32, #tpu.memory_space<vmem>>, %arg7: memref<1x32xf32, #tpu.memory_space<vmem>>, %arg8: memref<2x32xf32, #tpu.memory_space<vmem>>, %arg9: memref<1x32xf32, #tpu.memory_space<vmem>>, %arg10: memref<1x32xf32, #tpu.memory_space<vmem>>, %arg11: memref<32x32xf32, #tpu.memory_space<vmem>>, %arg12: memref<1x32xf32, #tpu.memory_space<vmem>>, %arg13: memref<32x32xf32, #tpu.memory_space<vmem>>, %arg14: memref<32x32xf32, #tpu.memory_space<vmem>>, %arg15: memref<32x32xf32, #tpu.memory_space<vmem>>, %arg16: memref<32x32xf32, #tpu.memory_space<vmem>>, %arg17: memref<1x32xf32, #tpu.memory_space<vmem>>, %arg18: memref<1x32xf32, #tpu.memory_space<vmem>>, %arg19: memref<1x32xf32, #tpu.memory_space<vmem>>, %arg20: memref<1x32xf32, #tpu.memory_space<vmem>>, %arg21: memref<1x32xf32, #tpu.memory_space<vmem>>, %arg22: memref<32x32xf32, #tpu.memory_space<vmem>>, %arg23: memref<32x32xf32, #tpu.memory_space<vmem>>, %arg24: memref<32x32xf32, #tpu.memory_space<vmem>>, %arg25: memref<32x32xf32, #tpu.memory_space<vmem>>, %arg26: memref<1x32xf32, #tpu.memory_space<vmem>>, %arg27: memref<1x32xf32, #tpu.memory_space<vmem>>, %arg28: memref<1x32xf32, #tpu.memory_space<vmem>>, %arg29: memref<1x32xf32, #tpu.memory_space<vmem>>, %arg30: memref<1x32xf32, #tpu.memory_space<vmem>>, %arg31: memref<16x32xf32, #tpu.memory_space<vmem>>) attributes {dimension_semantics = [], scalar_prefetch = 0 : i64, scratch_operands = 0 : i64, tpu.core_type = #tpu.core_type<tc>} {
    %c0 = arith.constant 0 : index
    %c0_0 = arith.constant 0 : index
    %0 = vector.load %arg0[%c0, %c0_0] : memref<16x2xf32, #tpu.memory_space<vmem>>, vector<16x2xf32>
    %c0_1 = arith.constant 0 : index
    %c0_2 = arith.constant 0 : index
    %1 = vector.load %arg1[%c0_1, %c0_2] : memref<16x2xf32, #tpu.memory_space<vmem>>, vector<16x2xf32>
    %c0_3 = arith.constant 0 : index
    %c0_4 = arith.constant 0 : index
    %2 = vector.load %arg2[%c0_3, %c0_4] : memref<16x1xf32, #tpu.memory_space<vmem>>, vector<16x1xf32>
    %c0_5 = arith.constant 0 : index
    %c0_6 = arith.constant 0 : index
    %3 = vector.load %arg4[%c0_5, %c0_6] : memref<2x32xf32, #tpu.memory_space<vmem>>, vector<2x32xf32>
    %c0_7 = arith.constant 0 : index
    %c0_8 = arith.constant 0 : index
    %4 = vector.load %arg5[%c0_7, %c0_8] : memref<1x32xf32, #tpu.memory_space<vmem>>, vector<1x32xf32>
    %c0_9 = arith.constant 0 : index
    %c0_10 = arith.constant 0 : index
    %5 = vector.load %arg6[%c0_9, %c0_10] : memref<32x32xf32, #tpu.memory_space<vmem>>, vector<32x32xf32>
    %c0_11 = arith.constant 0 : index
    %c0_12 = arith.constant 0 : index
    %6 = vector.load %arg7[%c0_11, %c0_12] : memref<1x32xf32, #tpu.memory_space<vmem>>, vector<1x32xf32>
    %cst = arith.constant dense<0.000000e+00> : vector<16x32xf32>
    %7 = tpu.matmul %0, %3, %cst {dimension_numbers = #tpu.dot_dimension_numbers<[1], [0], [0], [1], [0, 0, 1, 1], [], []>} : vector<16x2xf32>, vector<2x32xf32>, vector<16x32xf32> -> vector<16x32xf32>
    %8 = vector.broadcast %4 : vector<1x32xf32> to vector<16x32xf32>
    %9 = arith.addf %7, %8 : vector<16x32xf32>
    %cst_13 = arith.constant 0.000000e+00 : f32
    %10 = vector.broadcast %cst_13 : f32 to vector<16x32xf32>
    %11 = arith.maximumf %9, %10 : vector<16x32xf32>
    %cst_14 = arith.constant dense<0.000000e+00> : vector<16x32xf32>
    %12 = tpu.matmul %11, %5, %cst_14 {dimension_numbers = #tpu.dot_dimension_numbers<[1], [0], [0], [1], [0, 0, 1, 1], [], []>} : vector<16x32xf32>, vector<32x32xf32>, vector<16x32xf32> -> vector<16x32xf32>
    %13 = vector.broadcast %6 : vector<1x32xf32> to vector<16x32xf32>
    %14 = arith.addf %12, %13 : vector<16x32xf32>
    %cst_15 = arith.constant dense<0.000000e+00> : vector<16x32xf32>
    %15 = tpu.matmul %1, %3, %cst_15 {dimension_numbers = #tpu.dot_dimension_numbers<[1], [0], [0], [1], [0, 0, 1, 1], [], []>} : vector<16x2xf32>, vector<2x32xf32>, vector<16x32xf32> -> vector<16x32xf32>
    %16 = vector.broadcast %4 : vector<1x32xf32> to vector<16x32xf32>
    %17 = arith.addf %15, %16 : vector<16x32xf32>
    %cst_16 = arith.constant 0.000000e+00 : f32
    %18 = vector.broadcast %cst_16 : f32 to vector<16x32xf32>
    %19 = arith.maximumf %17, %18 : vector<16x32xf32>
    %cst_17 = arith.constant dense<0.000000e+00> : vector<16x32xf32>
    %20 = tpu.matmul %19, %5, %cst_17 {dimension_numbers = #tpu.dot_dimension_numbers<[1], [0], [0], [1], [0, 0, 1, 1], [], []>} : vector<16x32xf32>, vector<32x32xf32>, vector<16x32xf32> -> vector<16x32xf32>
    %21 = vector.broadcast %6 : vector<1x32xf32> to vector<16x32xf32>
    %22 = arith.addf %20, %21 : vector<16x32xf32>
    %c0_18 = arith.constant 0 : index
    %c0_19 = arith.constant 0 : index
    %23 = vector.load %arg8[%c0_18, %c0_19] : memref<2x32xf32, #tpu.memory_space<vmem>>, vector<2x32xf32>
    %cst_20 = arith.constant dense<0.000000e+00> : vector<16x32xf32>
    %24 = tpu.matmul %1, %23, %cst_20 {dimension_numbers = #tpu.dot_dimension_numbers<[1], [0], [0], [1], [0, 0, 1, 1], [], []>} : vector<16x2xf32>, vector<2x32xf32>, vector<16x32xf32> -> vector<16x32xf32>
    %c0_21 = arith.constant 0 : index
    %c0_22 = arith.constant 0 : index
    %25 = vector.load %arg9[%c0_21, %c0_22] : memref<1x32xf32, #tpu.memory_space<vmem>>, vector<1x32xf32>
    %cst_23 = arith.constant dense<0.000000e+00> : vector<16x32xf32>
    %26 = tpu.matmul %2, %25, %cst_23 {dimension_numbers = #tpu.dot_dimension_numbers<[1], [0], [0], [1], [0, 0, 1, 1], [], []>} : vector<16x1xf32>, vector<1x32xf32>, vector<16x32xf32> -> vector<16x32xf32>
    %27 = arith.addf %24, %26 : vector<16x32xf32>
    %c0_24 = arith.constant 0 : index
    %c0_25 = arith.constant 0 : index
    %28 = vector.load %arg10[%c0_24, %c0_25] : memref<1x32xf32, #tpu.memory_space<vmem>>, vector<1x32xf32>
    %29 = vector.broadcast %28 : vector<1x32xf32> to vector<16x32xf32>
    %30 = arith.addf %27, %29 : vector<16x32xf32>
    %cst_26 = arith.constant 0.000000e+00 : f32
    %31 = vector.broadcast %cst_26 : f32 to vector<16x32xf32>
    %32 = arith.maximumf %30, %31 : vector<16x32xf32>
    %c0_27 = arith.constant 0 : index
    %c0_28 = arith.constant 0 : index
    %33 = vector.load %arg11[%c0_27, %c0_28] : memref<32x32xf32, #tpu.memory_space<vmem>>, vector<32x32xf32>
    %cst_29 = arith.constant dense<0.000000e+00> : vector<16x32xf32>
    %34 = tpu.matmul %32, %33, %cst_29 {dimension_numbers = #tpu.dot_dimension_numbers<[1], [0], [0], [1], [0, 0, 1, 1], [], []>} : vector<16x32xf32>, vector<32x32xf32>, vector<16x32xf32> -> vector<16x32xf32>
    %c0_30 = arith.constant 0 : index
    %c0_31 = arith.constant 0 : index
    %35 = vector.load %arg12[%c0_30, %c0_31] : memref<1x32xf32, #tpu.memory_space<vmem>>, vector<1x32xf32>
    %36 = vector.broadcast %35 : vector<1x32xf32> to vector<16x32xf32>
    %37 = arith.addf %34, %36 : vector<16x32xf32>
    %c0_32 = arith.constant 0 : index
    %c0_33 = arith.constant 0 : index
    %38 = vector.load %arg13[%c0_32, %c0_33] : memref<32x32xf32, #tpu.memory_space<vmem>>, vector<32x32xf32>
    %c0_34 = arith.constant 0 : index
    %c0_35 = arith.constant 0 : index
    %39 = vector.load %arg14[%c0_34, %c0_35] : memref<32x32xf32, #tpu.memory_space<vmem>>, vector<32x32xf32>
    %c0_36 = arith.constant 0 : index
    %c0_37 = arith.constant 0 : index
    %40 = vector.load %arg15[%c0_36, %c0_37] : memref<32x32xf32, #tpu.memory_space<vmem>>, vector<32x32xf32>
    %c0_38 = arith.constant 0 : index
    %c0_39 = arith.constant 0 : index
    %41 = vector.load %arg16[%c0_38, %c0_39] : memref<32x32xf32, #tpu.memory_space<vmem>>, vector<32x32xf32>
    %c0_40 = arith.constant 0 : index
    %c0_41 = arith.constant 0 : index
    %42 = vector.load %arg17[%c0_40, %c0_41] : memref<1x32xf32, #tpu.memory_space<vmem>>, vector<1x32xf32>
    %c0_42 = arith.constant 0 : index
    %c0_43 = arith.constant 0 : index
    %43 = vector.load %arg18[%c0_42, %c0_43] : memref<1x32xf32, #tpu.memory_space<vmem>>, vector<1x32xf32>
    %c0_44 = arith.constant 0 : index
    %c0_45 = arith.constant 0 : index
    %44 = vector.load %arg19[%c0_44, %c0_45] : memref<1x32xf32, #tpu.memory_space<vmem>>, vector<1x32xf32>
    %c0_46 = arith.constant 0 : index
    %c0_47 = arith.constant 0 : index
    %45 = vector.load %arg20[%c0_46, %c0_47] : memref<1x32xf32, #tpu.memory_space<vmem>>, vector<1x32xf32>
    %c0_48 = arith.constant 0 : index
    %c0_49 = arith.constant 0 : index
    %46 = vector.load %arg21[%c0_48, %c0_49] : memref<1x32xf32, #tpu.memory_space<vmem>>, vector<1x32xf32>
    %cst_50 = arith.constant dense<0.000000e+00> : vector<16x32xf32>
    %47 = tpu.matmul %37, %38, %cst_50 {dimension_numbers = #tpu.dot_dimension_numbers<[1], [0], [0], [1], [0, 0, 1, 1], [], []>} : vector<16x32xf32>, vector<32x32xf32>, vector<16x32xf32> -> vector<16x32xf32>
    %cst_51 = arith.constant dense<0.000000e+00> : vector<16x32xf32>
    %48 = tpu.matmul %37, %39, %cst_51 {dimension_numbers = #tpu.dot_dimension_numbers<[1], [0], [0], [1], [0, 0, 1, 1], [], []>} : vector<16x32xf32>, vector<32x32xf32>, vector<16x32xf32> -> vector<16x32xf32>
    %cst_52 = arith.constant dense<0.000000e+00> : vector<16x32xf32>
    %49 = tpu.matmul %37, %40, %cst_52 {dimension_numbers = #tpu.dot_dimension_numbers<[1], [0], [0], [1], [0, 0, 1, 1], [], []>} : vector<16x32xf32>, vector<32x32xf32>, vector<16x32xf32> -> vector<16x32xf32>
    %50 = vector.extract_strided_slice %47 {offsets = [0, 0], sizes = [8, 4], strides = [1, 1]} : vector<16x32xf32> to vector<8x4xf32>
    %51 = vector.extract_strided_slice %47 {offsets = [0, 4], sizes = [8, 4], strides = [1, 1]} : vector<16x32xf32> to vector<8x4xf32>
    %52 = vector.extract_strided_slice %47 {offsets = [0, 8], sizes = [8, 4], strides = [1, 1]} : vector<16x32xf32> to vector<8x4xf32>
    %53 = vector.extract_strided_slice %47 {offsets = [0, 12], sizes = [8, 4], strides = [1, 1]} : vector<16x32xf32> to vector<8x4xf32>
    %54 = vector.extract_strided_slice %47 {offsets = [0, 16], sizes = [8, 4], strides = [1, 1]} : vector<16x32xf32> to vector<8x4xf32>
    %55 = vector.extract_strided_slice %47 {offsets = [0, 20], sizes = [8, 4], strides = [1, 1]} : vector<16x32xf32> to vector<8x4xf32>
    %56 = vector.extract_strided_slice %47 {offsets = [0, 24], sizes = [8, 4], strides = [1, 1]} : vector<16x32xf32> to vector<8x4xf32>
    %57 = vector.extract_strided_slice %47 {offsets = [0, 28], sizes = [8, 4], strides = [1, 1]} : vector<16x32xf32> to vector<8x4xf32>
    %58 = vector.extract_strided_slice %47 {offsets = [8, 0], sizes = [8, 4], strides = [1, 1]} : vector<16x32xf32> to vector<8x4xf32>
    %59 = vector.extract_strided_slice %47 {offsets = [8, 4], sizes = [8, 4], strides = [1, 1]} : vector<16x32xf32> to vector<8x4xf32>
    %60 = vector.extract_strided_slice %47 {offsets = [8, 8], sizes = [8, 4], strides = [1, 1]} : vector<16x32xf32> to vector<8x4xf32>
    %61 = vector.extract_strided_slice %47 {offsets = [8, 12], sizes = [8, 4], strides = [1, 1]} : vector<16x32xf32> to vector<8x4xf32>
    %62 = vector.extract_strided_slice %47 {offsets = [8, 16], sizes = [8, 4], strides = [1, 1]} : vector<16x32xf32> to vector<8x4xf32>
    %63 = vector.extract_strided_slice %47 {offsets = [8, 20], sizes = [8, 4], strides = [1, 1]} : vector<16x32xf32> to vector<8x4xf32>
    %64 = vector.extract_strided_slice %47 {offsets = [8, 24], sizes = [8, 4], strides = [1, 1]} : vector<16x32xf32> to vector<8x4xf32>
    %65 = vector.extract_strided_slice %47 {offsets = [8, 28], sizes = [8, 4], strides = [1, 1]} : vector<16x32xf32> to vector<8x4xf32>
    %66 = vector.shape_cast %50 : vector<8x4xf32> to vector<1x8x4xf32>
    %67 = vector.shape_cast %51 : vector<8x4xf32> to vector<1x8x4xf32>
    %68 = vector.shape_cast %52 : vector<8x4xf32> to vector<1x8x4xf32>
    %69 = vector.shape_cast %53 : vector<8x4xf32> to vector<1x8x4xf32>
    %70 = vector.shape_cast %54 : vector<8x4xf32> to vector<1x8x4xf32>
    %71 = vector.shape_cast %55 : vector<8x4xf32> to vector<1x8x4xf32>
    %72 = vector.shape_cast %56 : vector<8x4xf32> to vector<1x8x4xf32>
    %73 = vector.shape_cast %57 : vector<8x4xf32> to vector<1x8x4xf32>
    %74 = vector.shape_cast %58 : vector<8x4xf32> to vector<1x8x4xf32>
    %75 = vector.shape_cast %59 : vector<8x4xf32> to vector<1x8x4xf32>
    %76 = vector.shape_cast %60 : vector<8x4xf32> to vector<1x8x4xf32>
    %77 = vector.shape_cast %61 : vector<8x4xf32> to vector<1x8x4xf32>
    %78 = vector.shape_cast %62 : vector<8x4xf32> to vector<1x8x4xf32>
    %79 = vector.shape_cast %63 : vector<8x4xf32> to vector<1x8x4xf32>
    %80 = vector.shape_cast %64 : vector<8x4xf32> to vector<1x8x4xf32>
    %81 = vector.shape_cast %65 : vector<8x4xf32> to vector<1x8x4xf32>
    %82 = tpu.concatenate %66, %67, %68, %69, %70, %71, %72, %73, %74, %75, %76, %77, %78, %79, %80, %81 in 0 : vector<1x8x4xf32>, vector<1x8x4xf32>, vector<1x8x4xf32>, vector<1x8x4xf32>, vector<1x8x4xf32>, vector<1x8x4xf32>, vector<1x8x4xf32>, vector<1x8x4xf32>, vector<1x8x4xf32>, vector<1x8x4xf32>, vector<1x8x4xf32>, vector<1x8x4xf32>, vector<1x8x4xf32>, vector<1x8x4xf32>, vector<1x8x4xf32>, vector<1x8x4xf32> -> vector<16x8x4xf32>
    %83 = vector.extract_strided_slice %48 {offsets = [0, 0], sizes = [8, 4], strides = [1, 1]} : vector<16x32xf32> to vector<8x4xf32>
    %84 = vector.extract_strided_slice %48 {offsets = [0, 4], sizes = [8, 4], strides = [1, 1]} : vector<16x32xf32> to vector<8x4xf32>
    %85 = vector.extract_strided_slice %48 {offsets = [0, 8], sizes = [8, 4], strides = [1, 1]} : vector<16x32xf32> to vector<8x4xf32>
    %86 = vector.extract_strided_slice %48 {offsets = [0, 12], sizes = [8, 4], strides = [1, 1]} : vector<16x32xf32> to vector<8x4xf32>
    %87 = vector.extract_strided_slice %48 {offsets = [0, 16], sizes = [8, 4], strides = [1, 1]} : vector<16x32xf32> to vector<8x4xf32>
    %88 = vector.extract_strided_slice %48 {offsets = [0, 20], sizes = [8, 4], strides = [1, 1]} : vector<16x32xf32> to vector<8x4xf32>
    %89 = vector.extract_strided_slice %48 {offsets = [0, 24], sizes = [8, 4], strides = [1, 1]} : vector<16x32xf32> to vector<8x4xf32>
    %90 = vector.extract_strided_slice %48 {offsets = [0, 28], sizes = [8, 4], strides = [1, 1]} : vector<16x32xf32> to vector<8x4xf32>
    %91 = vector.extract_strided_slice %48 {offsets = [8, 0], sizes = [8, 4], strides = [1, 1]} : vector<16x32xf32> to vector<8x4xf32>
    %92 = vector.extract_strided_slice %48 {offsets = [8, 4], sizes = [8, 4], strides = [1, 1]} : vector<16x32xf32> to vector<8x4xf32>
    %93 = vector.extract_strided_slice %48 {offsets = [8, 8], sizes = [8, 4], strides = [1, 1]} : vector<16x32xf32> to vector<8x4xf32>
    %94 = vector.extract_strided_slice %48 {offsets = [8, 12], sizes = [8, 4], strides = [1, 1]} : vector<16x32xf32> to vector<8x4xf32>
    %95 = vector.extract_strided_slice %48 {offsets = [8, 16], sizes = [8, 4], strides = [1, 1]} : vector<16x32xf32> to vector<8x4xf32>
    %96 = vector.extract_strided_slice %48 {offsets = [8, 20], sizes = [8, 4], strides = [1, 1]} : vector<16x32xf32> to vector<8x4xf32>
    %97 = vector.extract_strided_slice %48 {offsets = [8, 24], sizes = [8, 4], strides = [1, 1]} : vector<16x32xf32> to vector<8x4xf32>
    %98 = vector.extract_strided_slice %48 {offsets = [8, 28], sizes = [8, 4], strides = [1, 1]} : vector<16x32xf32> to vector<8x4xf32>
    %99 = vector.shape_cast %83 : vector<8x4xf32> to vector<1x8x4xf32>
    %100 = vector.shape_cast %84 : vector<8x4xf32> to vector<1x8x4xf32>
    %101 = vector.shape_cast %85 : vector<8x4xf32> to vector<1x8x4xf32>
    %102 = vector.shape_cast %86 : vector<8x4xf32> to vector<1x8x4xf32>
    %103 = vector.shape_cast %87 : vector<8x4xf32> to vector<1x8x4xf32>
    %104 = vector.shape_cast %88 : vector<8x4xf32> to vector<1x8x4xf32>
    %105 = vector.shape_cast %89 : vector<8x4xf32> to vector<1x8x4xf32>
    %106 = vector.shape_cast %90 : vector<8x4xf32> to vector<1x8x4xf32>
    %107 = vector.shape_cast %91 : vector<8x4xf32> to vector<1x8x4xf32>
    %108 = vector.shape_cast %92 : vector<8x4xf32> to vector<1x8x4xf32>
    %109 = vector.shape_cast %93 : vector<8x4xf32> to vector<1x8x4xf32>
    %110 = vector.shape_cast %94 : vector<8x4xf32> to vector<1x8x4xf32>
    %111 = vector.shape_cast %95 : vector<8x4xf32> to vector<1x8x4xf32>
    %112 = vector.shape_cast %96 : vector<8x4xf32> to vector<1x8x4xf32>
    %113 = vector.shape_cast %97 : vector<8x4xf32> to vector<1x8x4xf32>
    %114 = vector.shape_cast %98 : vector<8x4xf32> to vector<1x8x4xf32>
    %115 = tpu.concatenate %99, %100, %101, %102, %103, %104, %105, %106, %107, %108, %109, %110, %111, %112, %113, %114 in 0 : vector<1x8x4xf32>, vector<1x8x4xf32>, vector<1x8x4xf32>, vector<1x8x4xf32>, vector<1x8x4xf32>, vector<1x8x4xf32>, vector<1x8x4xf32>, vector<1x8x4xf32>, vector<1x8x4xf32>, vector<1x8x4xf32>, vector<1x8x4xf32>, vector<1x8x4xf32>, vector<1x8x4xf32>, vector<1x8x4xf32>, vector<1x8x4xf32>, vector<1x8x4xf32> -> vector<16x8x4xf32>
    %116 = vector.extract_strided_slice %49 {offsets = [0, 0], sizes = [8, 4], strides = [1, 1]} : vector<16x32xf32> to vector<8x4xf32>
    %117 = vector.extract_strided_slice %49 {offsets = [0, 4], sizes = [8, 4], strides = [1, 1]} : vector<16x32xf32> to vector<8x4xf32>
    %118 = vector.extract_strided_slice %49 {offsets = [0, 8], sizes = [8, 4], strides = [1, 1]} : vector<16x32xf32> to vector<8x4xf32>
    %119 = vector.extract_strided_slice %49 {offsets = [0, 12], sizes = [8, 4], strides = [1, 1]} : vector<16x32xf32> to vector<8x4xf32>
    %120 = vector.extract_strided_slice %49 {offsets = [0, 16], sizes = [8, 4], strides = [1, 1]} : vector<16x32xf32> to vector<8x4xf32>
    %121 = vector.extract_strided_slice %49 {offsets = [0, 20], sizes = [8, 4], strides = [1, 1]} : vector<16x32xf32> to vector<8x4xf32>
    %122 = vector.extract_strided_slice %49 {offsets = [0, 24], sizes = [8, 4], strides = [1, 1]} : vector<16x32xf32> to vector<8x4xf32>
    %123 = vector.extract_strided_slice %49 {offsets = [0, 28], sizes = [8, 4], strides = [1, 1]} : vector<16x32xf32> to vector<8x4xf32>
    %124 = vector.extract_strided_slice %49 {offsets = [8, 0], sizes = [8, 4], strides = [1, 1]} : vector<16x32xf32> to vector<8x4xf32>
    %125 = vector.extract_strided_slice %49 {offsets = [8, 4], sizes = [8, 4], strides = [1, 1]} : vector<16x32xf32> to vector<8x4xf32>
    %126 = vector.extract_strided_slice %49 {offsets = [8, 8], sizes = [8, 4], strides = [1, 1]} : vector<16x32xf32> to vector<8x4xf32>
    %127 = vector.extract_strided_slice %49 {offsets = [8, 12], sizes = [8, 4], strides = [1, 1]} : vector<16x32xf32> to vector<8x4xf32>
    %128 = vector.extract_strided_slice %49 {offsets = [8, 16], sizes = [8, 4], strides = [1, 1]} : vector<16x32xf32> to vector<8x4xf32>
    %129 = vector.extract_strided_slice %49 {offsets = [8, 20], sizes = [8, 4], strides = [1, 1]} : vector<16x32xf32> to vector<8x4xf32>
    %130 = vector.extract_strided_slice %49 {offsets = [8, 24], sizes = [8, 4], strides = [1, 1]} : vector<16x32xf32> to vector<8x4xf32>
    %131 = vector.extract_strided_slice %49 {offsets = [8, 28], sizes = [8, 4], strides = [1, 1]} : vector<16x32xf32> to vector<8x4xf32>
    %132 = vector.shape_cast %116 : vector<8x4xf32> to vector<1x8x4xf32>
    %133 = vector.shape_cast %117 : vector<8x4xf32> to vector<1x8x4xf32>
    %134 = vector.shape_cast %118 : vector<8x4xf32> to vector<1x8x4xf32>
    %135 = vector.shape_cast %119 : vector<8x4xf32> to vector<1x8x4xf32>
    %136 = vector.shape_cast %120 : vector<8x4xf32> to vector<1x8x4xf32>
    %137 = vector.shape_cast %121 : vector<8x4xf32> to vector<1x8x4xf32>
    %138 = vector.shape_cast %122 : vector<8x4xf32> to vector<1x8x4xf32>
    %139 = vector.shape_cast %123 : vector<8x4xf32> to vector<1x8x4xf32>
    %140 = vector.shape_cast %124 : vector<8x4xf32> to vector<1x8x4xf32>
    %141 = vector.shape_cast %125 : vector<8x4xf32> to vector<1x8x4xf32>
    %142 = vector.shape_cast %126 : vector<8x4xf32> to vector<1x8x4xf32>
    %143 = vector.shape_cast %127 : vector<8x4xf32> to vector<1x8x4xf32>
    %144 = vector.shape_cast %128 : vector<8x4xf32> to vector<1x8x4xf32>
    %145 = vector.shape_cast %129 : vector<8x4xf32> to vector<1x8x4xf32>
    %146 = vector.shape_cast %130 : vector<8x4xf32> to vector<1x8x4xf32>
    %147 = vector.shape_cast %131 : vector<8x4xf32> to vector<1x8x4xf32>
    %148 = tpu.concatenate %132, %133, %134, %135, %136, %137, %138, %139, %140, %141, %142, %143, %144, %145, %146, %147 in 0 : vector<1x8x4xf32>, vector<1x8x4xf32>, vector<1x8x4xf32>, vector<1x8x4xf32>, vector<1x8x4xf32>, vector<1x8x4xf32>, vector<1x8x4xf32>, vector<1x8x4xf32>, vector<1x8x4xf32>, vector<1x8x4xf32>, vector<1x8x4xf32>, vector<1x8x4xf32>, vector<1x8x4xf32>, vector<1x8x4xf32>, vector<1x8x4xf32>, vector<1x8x4xf32> -> vector<16x8x4xf32>
    "tpu.trace_start"() <{level = 10 : i32, message = "bqd,bkd->bqk"}> : () -> ()
    %cst_53 = arith.constant dense<0.000000e+00> : vector<16x8x8xf32>
    %149 = tpu.matmul %82, %115, %cst_53 {dimension_numbers = #tpu.dot_dimension_numbers<[2], [2], [1], [1], [0, 0, 0, 1, 1, 1], [0], [0]>} : vector<16x8x4xf32>, vector<16x8x4xf32>, vector<16x8x8xf32> -> vector<16x8x8xf32>
    "tpu.trace_stop"() : () -> ()
    %cst_54 = arith.constant 0.176776692 : f32
    %150 = vector.broadcast %cst_54 : f32 to vector<16x8x8xf32>
    %151 = arith.mulf %149, %150 : vector<16x8x8xf32>
    %cst_55 = arith.constant dense<0xFF800000> : vector<16x8xf32>
    %152 = vector.multi_reduction <maximumf>, %151, %cst_55 [2] : vector<16x8x8xf32> to vector<16x8xf32>
    %153 = vector.shape_cast %152 : vector<16x8xf32> to vector<16x8x1xf32>
    %154 = vector.broadcast %153 : vector<16x8x1xf32> to vector<16x8x8xf32>
    %155 = arith.subf %151, %154 : vector<16x8x8xf32>
    %156 = math.exp %155 : vector<16x8x8xf32>
    %cst_56 = arith.constant dense<0.000000e+00> : vector<16x8xf32>
    %157 = vector.multi_reduction <add>, %156, %cst_56 [2] : vector<16x8x8xf32> to vector<16x8xf32>
    %158 = vector.shape_cast %157 : vector<16x8xf32> to vector<16x8x1xf32>
    %159 = tpu.reciprocal %158 : vector<16x8x1xf32> -> vector<16x8x1xf32>
    %160 = vector.broadcast %159 : vector<16x8x1xf32> to vector<16x8x8xf32>
    %161 = arith.mulf %156, %160 : vector<16x8x8xf32>
    "tpu.trace_start"() <{level = 10 : i32, message = "bqk,bkd->bqd"}> : () -> ()
    %cst_57 = arith.constant dense<0.000000e+00> : vector<16x8x4xf32>
    %162 = tpu.matmul %161, %148, %cst_57 {dimension_numbers = #tpu.dot_dimension_numbers<[2], [1], [1], [2], [0, 0, 0, 1, 1, 2], [0], [0]>} : vector<16x8x8xf32>, vector<16x8x4xf32>, vector<16x8x4xf32> -> vector<16x8x4xf32>
    "tpu.trace_stop"() : () -> ()
    %163 = vector.extract_strided_slice %162 {offsets = [0, 0, 0], sizes = [1, 8, 4], strides = [1, 1, 1]} : vector<16x8x4xf32> to vector<1x8x4xf32>
    %164 = vector.shape_cast %163 : vector<1x8x4xf32> to vector<8x4xf32>
    %165 = vector.extract_strided_slice %162 {offsets = [1, 0, 0], sizes = [1, 8, 4], strides = [1, 1, 1]} : vector<16x8x4xf32> to vector<1x8x4xf32>
    %166 = vector.shape_cast %165 : vector<1x8x4xf32> to vector<8x4xf32>
    %167 = vector.extract_strided_slice %162 {offsets = [2, 0, 0], sizes = [1, 8, 4], strides = [1, 1, 1]} : vector<16x8x4xf32> to vector<1x8x4xf32>
    %168 = vector.shape_cast %167 : vector<1x8x4xf32> to vector<8x4xf32>
    %169 = vector.extract_strided_slice %162 {offsets = [3, 0, 0], sizes = [1, 8, 4], strides = [1, 1, 1]} : vector<16x8x4xf32> to vector<1x8x4xf32>
    %170 = vector.shape_cast %169 : vector<1x8x4xf32> to vector<8x4xf32>
    %171 = vector.extract_strided_slice %162 {offsets = [4, 0, 0], sizes = [1, 8, 4], strides = [1, 1, 1]} : vector<16x8x4xf32> to vector<1x8x4xf32>
    %172 = vector.shape_cast %171 : vector<1x8x4xf32> to vector<8x4xf32>
    %173 = vector.extract_strided_slice %162 {offsets = [5, 0, 0], sizes = [1, 8, 4], strides = [1, 1, 1]} : vector<16x8x4xf32> to vector<1x8x4xf32>
    %174 = vector.shape_cast %173 : vector<1x8x4xf32> to vector<8x4xf32>
    %175 = vector.extract_strided_slice %162 {offsets = [6, 0, 0], sizes = [1, 8, 4], strides = [1, 1, 1]} : vector<16x8x4xf32> to vector<1x8x4xf32>
    %176 = vector.shape_cast %175 : vector<1x8x4xf32> to vector<8x4xf32>
    %177 = vector.extract_strided_slice %162 {offsets = [7, 0, 0], sizes = [1, 8, 4], strides = [1, 1, 1]} : vector<16x8x4xf32> to vector<1x8x4xf32>
    %178 = vector.shape_cast %177 : vector<1x8x4xf32> to vector<8x4xf32>
    %179 = tpu.concatenate %164, %166, %168, %170, %172, %174, %176, %178 in 1 : vector<8x4xf32>, vector<8x4xf32>, vector<8x4xf32>, vector<8x4xf32>, vector<8x4xf32>, vector<8x4xf32>, vector<8x4xf32>, vector<8x4xf32> -> vector<8x32xf32>
    %180 = vector.extract_strided_slice %162 {offsets = [8, 0, 0], sizes = [1, 8, 4], strides = [1, 1, 1]} : vector<16x8x4xf32> to vector<1x8x4xf32>
    %181 = vector.shape_cast %180 : vector<1x8x4xf32> to vector<8x4xf32>
    %182 = vector.extract_strided_slice %162 {offsets = [9, 0, 0], sizes = [1, 8, 4], strides = [1, 1, 1]} : vector<16x8x4xf32> to vector<1x8x4xf32>
    %183 = vector.shape_cast %182 : vector<1x8x4xf32> to vector<8x4xf32>
    %184 = vector.extract_strided_slice %162 {offsets = [10, 0, 0], sizes = [1, 8, 4], strides = [1, 1, 1]} : vector<16x8x4xf32> to vector<1x8x4xf32>
    %185 = vector.shape_cast %184 : vector<1x8x4xf32> to vector<8x4xf32>
    %186 = vector.extract_strided_slice %162 {offsets = [11, 0, 0], sizes = [1, 8, 4], strides = [1, 1, 1]} : vector<16x8x4xf32> to vector<1x8x4xf32>
    %187 = vector.shape_cast %186 : vector<1x8x4xf32> to vector<8x4xf32>
    %188 = vector.extract_strided_slice %162 {offsets = [12, 0, 0], sizes = [1, 8, 4], strides = [1, 1, 1]} : vector<16x8x4xf32> to vector<1x8x4xf32>
    %189 = vector.shape_cast %188 : vector<1x8x4xf32> to vector<8x4xf32>
    %190 = vector.extract_strided_slice %162 {offsets = [13, 0, 0], sizes = [1, 8, 4], strides = [1, 1, 1]} : vector<16x8x4xf32> to vector<1x8x4xf32>
    %191 = vector.shape_cast %190 : vector<1x8x4xf32> to vector<8x4xf32>
    %192 = vector.extract_strided_slice %162 {offsets = [14, 0, 0], sizes = [1, 8, 4], strides = [1, 1, 1]} : vector<16x8x4xf32> to vector<1x8x4xf32>
    %193 = vector.shape_cast %192 : vector<1x8x4xf32> to vector<8x4xf32>
    %194 = vector.extract_strided_slice %162 {offsets = [15, 0, 0], sizes = [1, 8, 4], strides = [1, 1, 1]} : vector<16x8x4xf32> to vector<1x8x4xf32>
    %195 = vector.shape_cast %194 : vector<1x8x4xf32> to vector<8x4xf32>
    %196 = tpu.concatenate %181, %183, %185, %187, %189, %191, %193, %195 in 1 : vector<8x4xf32>, vector<8x4xf32>, vector<8x4xf32>, vector<8x4xf32>, vector<8x4xf32>, vector<8x4xf32>, vector<8x4xf32>, vector<8x4xf32> -> vector<8x32xf32>
    %197 = tpu.concatenate %179, %196 in 0 : vector<8x32xf32>, vector<8x32xf32> -> vector<16x32xf32>
    %198 = arith.addf %47, %197 : vector<16x32xf32>
    %cst_58 = arith.constant dense<0.000000e+00> : vector<16xf32>
    %199 = vector.multi_reduction <add>, %198, %cst_58 [1] : vector<16x32xf32> to vector<16xf32>
    %200 = vector.shape_cast %199 : vector<16xf32> to vector<16x1xf32>
    %cst_59 = arith.constant 3.200000e+01 : f32
    %201 = vector.broadcast %cst_59 : f32 to vector<16x1xf32>
    %202 = arith.divf %200, %201 : vector<16x1xf32>
    %203 = vector.broadcast %202 : vector<16x1xf32> to vector<16x32xf32>
    %204 = arith.subf %198, %203 : vector<16x32xf32>
    %205 = arith.mulf %204, %204 : vector<16x32xf32>
    %cst_60 = arith.constant dense<0.000000e+00> : vector<16xf32>
    %206 = vector.multi_reduction <add>, %205, %cst_60 [1] : vector<16x32xf32> to vector<16xf32>
    %207 = vector.shape_cast %206 : vector<16xf32> to vector<16x1xf32>
    %cst_61 = arith.constant 3.200000e+01 : f32
    %208 = vector.broadcast %cst_61 : f32 to vector<16x1xf32>
    %209 = arith.divf %207, %208 : vector<16x1xf32>
    %210 = vector.broadcast %202 : vector<16x1xf32> to vector<16x32xf32>
    %211 = arith.subf %198, %210 : vector<16x32xf32>
    %cst_62 = arith.constant 9.99999974E-6 : f32
    %212 = vector.broadcast %cst_62 : f32 to vector<16x1xf32>
    %213 = arith.addf %209, %212 : vector<16x1xf32>
    %214 = math.rsqrt %213 : vector<16x1xf32>
    %215 = vector.broadcast %214 : vector<16x1xf32> to vector<16x32xf32>
    %216 = arith.mulf %211, %215 : vector<16x32xf32>
    %217 = vector.broadcast %43 : vector<1x32xf32> to vector<16x32xf32>
    %218 = arith.mulf %216, %217 : vector<16x32xf32>
    %219 = vector.broadcast %44 : vector<1x32xf32> to vector<16x32xf32>
    %220 = arith.addf %218, %219 : vector<16x32xf32>
    %cst_63 = arith.constant dense<0.000000e+00> : vector<16x32xf32>
    %221 = tpu.matmul %220, %41, %cst_63 {dimension_numbers = #tpu.dot_dimension_numbers<[1], [0], [0], [1], [0, 0, 1, 1], [], []>} : vector<16x32xf32>, vector<32x32xf32>, vector<16x32xf32> -> vector<16x32xf32>
    %222 = vector.broadcast %42 : vector<1x32xf32> to vector<16x32xf32>
    %223 = arith.addf %221, %222 : vector<16x32xf32>
    %cst_64 = arith.constant 0.000000e+00 : f32
    %224 = vector.broadcast %cst_64 : f32 to vector<16x32xf32>
    %225 = arith.maximumf %223, %224 : vector<16x32xf32>
    %226 = arith.addf %220, %225 : vector<16x32xf32>
    %cst_65 = arith.constant dense<0.000000e+00> : vector<16xf32>
    %227 = vector.multi_reduction <add>, %226, %cst_65 [1] : vector<16x32xf32> to vector<16xf32>
    %228 = vector.shape_cast %227 : vector<16xf32> to vector<16x1xf32>
    %cst_66 = arith.constant 3.200000e+01 : f32
    %229 = vector.broadcast %cst_66 : f32 to vector<16x1xf32>
    %230 = arith.divf %228, %229 : vector<16x1xf32>
    %231 = vector.broadcast %230 : vector<16x1xf32> to vector<16x32xf32>
    %232 = arith.subf %226, %231 : vector<16x32xf32>
    %233 = arith.mulf %232, %232 : vector<16x32xf32>
    %cst_67 = arith.constant dense<0.000000e+00> : vector<16xf32>
    %234 = vector.multi_reduction <add>, %233, %cst_67 [1] : vector<16x32xf32> to vector<16xf32>
    %235 = vector.shape_cast %234 : vector<16xf32> to vector<16x1xf32>
    %cst_68 = arith.constant 3.200000e+01 : f32
    %236 = vector.broadcast %cst_68 : f32 to vector<16x1xf32>
    %237 = arith.divf %235, %236 : vector<16x1xf32>
    %238 = vector.broadcast %230 : vector<16x1xf32> to vector<16x32xf32>
    %239 = arith.subf %226, %238 : vector<16x32xf32>
    %cst_69 = arith.constant 9.99999974E-6 : f32
    %240 = vector.broadcast %cst_69 : f32 to vector<16x1xf32>
    %241 = arith.addf %237, %240 : vector<16x1xf32>
    %242 = math.rsqrt %241 : vector<16x1xf32>
    %243 = vector.broadcast %242 : vector<16x1xf32> to vector<16x32xf32>
    %244 = arith.mulf %239, %243 : vector<16x32xf32>
    %245 = vector.broadcast %45 : vector<1x32xf32> to vector<16x32xf32>
    %246 = arith.mulf %244, %245 : vector<16x32xf32>
    %247 = vector.broadcast %46 : vector<1x32xf32> to vector<16x32xf32>
    %248 = arith.addf %246, %247 : vector<16x32xf32>
    %c0_70 = arith.constant 0 : index
    %c0_71 = arith.constant 0 : index
    %249 = vector.load %arg3[%c0_70, %c0_71] : memref<16x1xf32, #tpu.memory_space<vmem>>, vector<16x1xf32>
    %250 = vector.broadcast %249 : vector<16x1xf32> to vector<16x32xf32>
    %251 = arith.mulf %248, %250 : vector<16x32xf32>
    %c0_72 = arith.constant 0 : index
    %c0_73 = arith.constant 0 : index
    %252 = vector.load %arg22[%c0_72, %c0_73] : memref<32x32xf32, #tpu.memory_space<vmem>>, vector<32x32xf32>
    %c0_74 = arith.constant 0 : index
    %c0_75 = arith.constant 0 : index
    %253 = vector.load %arg23[%c0_74, %c0_75] : memref<32x32xf32, #tpu.memory_space<vmem>>, vector<32x32xf32>
    %c0_76 = arith.constant 0 : index
    %c0_77 = arith.constant 0 : index
    %254 = vector.load %arg24[%c0_76, %c0_77] : memref<32x32xf32, #tpu.memory_space<vmem>>, vector<32x32xf32>
    %c0_78 = arith.constant 0 : index
    %c0_79 = arith.constant 0 : index
    %255 = vector.load %arg25[%c0_78, %c0_79] : memref<32x32xf32, #tpu.memory_space<vmem>>, vector<32x32xf32>
    %c0_80 = arith.constant 0 : index
    %c0_81 = arith.constant 0 : index
    %256 = vector.load %arg26[%c0_80, %c0_81] : memref<1x32xf32, #tpu.memory_space<vmem>>, vector<1x32xf32>
    %c0_82 = arith.constant 0 : index
    %c0_83 = arith.constant 0 : index
    %257 = vector.load %arg27[%c0_82, %c0_83] : memref<1x32xf32, #tpu.memory_space<vmem>>, vector<1x32xf32>
    %c0_84 = arith.constant 0 : index
    %c0_85 = arith.constant 0 : index
    %258 = vector.load %arg28[%c0_84, %c0_85] : memref<1x32xf32, #tpu.memory_space<vmem>>, vector<1x32xf32>
    %c0_86 = arith.constant 0 : index
    %c0_87 = arith.constant 0 : index
    %259 = vector.load %arg29[%c0_86, %c0_87] : memref<1x32xf32, #tpu.memory_space<vmem>>, vector<1x32xf32>
    %c0_88 = arith.constant 0 : index
    %c0_89 = arith.constant 0 : index
    %260 = vector.load %arg30[%c0_88, %c0_89] : memref<1x32xf32, #tpu.memory_space<vmem>>, vector<1x32xf32>
    %cst_90 = arith.constant dense<0.000000e+00> : vector<16x32xf32>
    %261 = tpu.matmul %14, %252, %cst_90 {dimension_numbers = #tpu.dot_dimension_numbers<[1], [0], [0], [1], [0, 0, 1, 1], [], []>} : vector<16x32xf32>, vector<32x32xf32>, vector<16x32xf32> -> vector<16x32xf32>
    %cst_91 = arith.constant dense<0.000000e+00> : vector<16x32xf32>
    %262 = tpu.matmul %22, %253, %cst_91 {dimension_numbers = #tpu.dot_dimension_numbers<[1], [0], [0], [1], [0, 0, 1, 1], [], []>} : vector<16x32xf32>, vector<32x32xf32>, vector<16x32xf32> -> vector<16x32xf32>
    %cst_92 = arith.constant dense<0.000000e+00> : vector<16x32xf32>
    %263 = tpu.matmul %251, %254, %cst_92 {dimension_numbers = #tpu.dot_dimension_numbers<[1], [0], [0], [1], [0, 0, 1, 1], [], []>} : vector<16x32xf32>, vector<32x32xf32>, vector<16x32xf32> -> vector<16x32xf32>
    %264 = vector.extract_strided_slice %261 {offsets = [0, 0], sizes = [8, 4], strides = [1, 1]} : vector<16x32xf32> to vector<8x4xf32>
    %265 = vector.extract_strided_slice %261 {offsets = [0, 4], sizes = [8, 4], strides = [1, 1]} : vector<16x32xf32> to vector<8x4xf32>
    %266 = vector.extract_strided_slice %261 {offsets = [0, 8], sizes = [8, 4], strides = [1, 1]} : vector<16x32xf32> to vector<8x4xf32>
    %267 = vector.extract_strided_slice %261 {offsets = [0, 12], sizes = [8, 4], strides = [1, 1]} : vector<16x32xf32> to vector<8x4xf32>
    %268 = vector.extract_strided_slice %261 {offsets = [0, 16], sizes = [8, 4], strides = [1, 1]} : vector<16x32xf32> to vector<8x4xf32>
    %269 = vector.extract_strided_slice %261 {offsets = [0, 20], sizes = [8, 4], strides = [1, 1]} : vector<16x32xf32> to vector<8x4xf32>
    %270 = vector.extract_strided_slice %261 {offsets = [0, 24], sizes = [8, 4], strides = [1, 1]} : vector<16x32xf32> to vector<8x4xf32>
    %271 = vector.extract_strided_slice %261 {offsets = [0, 28], sizes = [8, 4], strides = [1, 1]} : vector<16x32xf32> to vector<8x4xf32>
    %272 = vector.extract_strided_slice %261 {offsets = [8, 0], sizes = [8, 4], strides = [1, 1]} : vector<16x32xf32> to vector<8x4xf32>
    %273 = vector.extract_strided_slice %261 {offsets = [8, 4], sizes = [8, 4], strides = [1, 1]} : vector<16x32xf32> to vector<8x4xf32>
    %274 = vector.extract_strided_slice %261 {offsets = [8, 8], sizes = [8, 4], strides = [1, 1]} : vector<16x32xf32> to vector<8x4xf32>
    %275 = vector.extract_strided_slice %261 {offsets = [8, 12], sizes = [8, 4], strides = [1, 1]} : vector<16x32xf32> to vector<8x4xf32>
    %276 = vector.extract_strided_slice %261 {offsets = [8, 16], sizes = [8, 4], strides = [1, 1]} : vector<16x32xf32> to vector<8x4xf32>
    %277 = vector.extract_strided_slice %261 {offsets = [8, 20], sizes = [8, 4], strides = [1, 1]} : vector<16x32xf32> to vector<8x4xf32>
    %278 = vector.extract_strided_slice %261 {offsets = [8, 24], sizes = [8, 4], strides = [1, 1]} : vector<16x32xf32> to vector<8x4xf32>
    %279 = vector.extract_strided_slice %261 {offsets = [8, 28], sizes = [8, 4], strides = [1, 1]} : vector<16x32xf32> to vector<8x4xf32>
    %280 = vector.shape_cast %264 : vector<8x4xf32> to vector<1x8x4xf32>
    %281 = vector.shape_cast %265 : vector<8x4xf32> to vector<1x8x4xf32>
    %282 = vector.shape_cast %266 : vector<8x4xf32> to vector<1x8x4xf32>
    %283 = vector.shape_cast %267 : vector<8x4xf32> to vector<1x8x4xf32>
    %284 = vector.shape_cast %268 : vector<8x4xf32> to vector<1x8x4xf32>
    %285 = vector.shape_cast %269 : vector<8x4xf32> to vector<1x8x4xf32>
    %286 = vector.shape_cast %270 : vector<8x4xf32> to vector<1x8x4xf32>
    %287 = vector.shape_cast %271 : vector<8x4xf32> to vector<1x8x4xf32>
    %288 = vector.shape_cast %272 : vector<8x4xf32> to vector<1x8x4xf32>
    %289 = vector.shape_cast %273 : vector<8x4xf32> to vector<1x8x4xf32>
    %290 = vector.shape_cast %274 : vector<8x4xf32> to vector<1x8x4xf32>
    %291 = vector.shape_cast %275 : vector<8x4xf32> to vector<1x8x4xf32>
    %292 = vector.shape_cast %276 : vector<8x4xf32> to vector<1x8x4xf32>
    %293 = vector.shape_cast %277 : vector<8x4xf32> to vector<1x8x4xf32>
    %294 = vector.shape_cast %278 : vector<8x4xf32> to vector<1x8x4xf32>
    %295 = vector.shape_cast %279 : vector<8x4xf32> to vector<1x8x4xf32>
    %296 = tpu.concatenate %280, %281, %282, %283, %284, %285, %286, %287, %288, %289, %290, %291, %292, %293, %294, %295 in 0 : vector<1x8x4xf32>, vector<1x8x4xf32>, vector<1x8x4xf32>, vector<1x8x4xf32>, vector<1x8x4xf32>, vector<1x8x4xf32>, vector<1x8x4xf32>, vector<1x8x4xf32>, vector<1x8x4xf32>, vector<1x8x4xf32>, vector<1x8x4xf32>, vector<1x8x4xf32>, vector<1x8x4xf32>, vector<1x8x4xf32>, vector<1x8x4xf32>, vector<1x8x4xf32> -> vector<16x8x4xf32>
    %297 = vector.extract_strided_slice %262 {offsets = [0, 0], sizes = [8, 4], strides = [1, 1]} : vector<16x32xf32> to vector<8x4xf32>
    %298 = vector.extract_strided_slice %262 {offsets = [0, 4], sizes = [8, 4], strides = [1, 1]} : vector<16x32xf32> to vector<8x4xf32>
    %299 = vector.extract_strided_slice %262 {offsets = [0, 8], sizes = [8, 4], strides = [1, 1]} : vector<16x32xf32> to vector<8x4xf32>
    %300 = vector.extract_strided_slice %262 {offsets = [0, 12], sizes = [8, 4], strides = [1, 1]} : vector<16x32xf32> to vector<8x4xf32>
    %301 = vector.extract_strided_slice %262 {offsets = [0, 16], sizes = [8, 4], strides = [1, 1]} : vector<16x32xf32> to vector<8x4xf32>
    %302 = vector.extract_strided_slice %262 {offsets = [0, 20], sizes = [8, 4], strides = [1, 1]} : vector<16x32xf32> to vector<8x4xf32>
    %303 = vector.extract_strided_slice %262 {offsets = [0, 24], sizes = [8, 4], strides = [1, 1]} : vector<16x32xf32> to vector<8x4xf32>
    %304 = vector.extract_strided_slice %262 {offsets = [0, 28], sizes = [8, 4], strides = [1, 1]} : vector<16x32xf32> to vector<8x4xf32>
    %305 = vector.extract_strided_slice %262 {offsets = [8, 0], sizes = [8, 4], strides = [1, 1]} : vector<16x32xf32> to vector<8x4xf32>
    %306 = vector.extract_strided_slice %262 {offsets = [8, 4], sizes = [8, 4], strides = [1, 1]} : vector<16x32xf32> to vector<8x4xf32>
    %307 = vector.extract_strided_slice %262 {offsets = [8, 8], sizes = [8, 4], strides = [1, 1]} : vector<16x32xf32> to vector<8x4xf32>
    %308 = vector.extract_strided_slice %262 {offsets = [8, 12], sizes = [8, 4], strides = [1, 1]} : vector<16x32xf32> to vector<8x4xf32>
    %309 = vector.extract_strided_slice %262 {offsets = [8, 16], sizes = [8, 4], strides = [1, 1]} : vector<16x32xf32> to vector<8x4xf32>
    %310 = vector.extract_strided_slice %262 {offsets = [8, 20], sizes = [8, 4], strides = [1, 1]} : vector<16x32xf32> to vector<8x4xf32>
    %311 = vector.extract_strided_slice %262 {offsets = [8, 24], sizes = [8, 4], strides = [1, 1]} : vector<16x32xf32> to vector<8x4xf32>
    %312 = vector.extract_strided_slice %262 {offsets = [8, 28], sizes = [8, 4], strides = [1, 1]} : vector<16x32xf32> to vector<8x4xf32>
    %313 = vector.shape_cast %297 : vector<8x4xf32> to vector<1x8x4xf32>
    %314 = vector.shape_cast %298 : vector<8x4xf32> to vector<1x8x4xf32>
    %315 = vector.shape_cast %299 : vector<8x4xf32> to vector<1x8x4xf32>
    %316 = vector.shape_cast %300 : vector<8x4xf32> to vector<1x8x4xf32>
    %317 = vector.shape_cast %301 : vector<8x4xf32> to vector<1x8x4xf32>
    %318 = vector.shape_cast %302 : vector<8x4xf32> to vector<1x8x4xf32>
    %319 = vector.shape_cast %303 : vector<8x4xf32> to vector<1x8x4xf32>
    %320 = vector.shape_cast %304 : vector<8x4xf32> to vector<1x8x4xf32>
    %321 = vector.shape_cast %305 : vector<8x4xf32> to vector<1x8x4xf32>
    %322 = vector.shape_cast %306 : vector<8x4xf32> to vector<1x8x4xf32>
    %323 = vector.shape_cast %307 : vector<8x4xf32> to vector<1x8x4xf32>
    %324 = vector.shape_cast %308 : vector<8x4xf32> to vector<1x8x4xf32>
    %325 = vector.shape_cast %309 : vector<8x4xf32> to vector<1x8x4xf32>
    %326 = vector.shape_cast %310 : vector<8x4xf32> to vector<1x8x4xf32>
    %327 = vector.shape_cast %311 : vector<8x4xf32> to vector<1x8x4xf32>
    %328 = vector.shape_cast %312 : vector<8x4xf32> to vector<1x8x4xf32>
    %329 = tpu.concatenate %313, %314, %315, %316, %317, %318, %319, %320, %321, %322, %323, %324, %325, %326, %327, %328 in 0 : vector<1x8x4xf32>, vector<1x8x4xf32>, vector<1x8x4xf32>, vector<1x8x4xf32>, vector<1x8x4xf32>, vector<1x8x4xf32>, vector<1x8x4xf32>, vector<1x8x4xf32>, vector<1x8x4xf32>, vector<1x8x4xf32>, vector<1x8x4xf32>, vector<1x8x4xf32>, vector<1x8x4xf32>, vector<1x8x4xf32>, vector<1x8x4xf32>, vector<1x8x4xf32> -> vector<16x8x4xf32>
    %330 = vector.extract_strided_slice %263 {offsets = [0, 0], sizes = [8, 4], strides = [1, 1]} : vector<16x32xf32> to vector<8x4xf32>
    %331 = vector.extract_strided_slice %263 {offsets = [0, 4], sizes = [8, 4], strides = [1, 1]} : vector<16x32xf32> to vector<8x4xf32>
    %332 = vector.extract_strided_slice %263 {offsets = [0, 8], sizes = [8, 4], strides = [1, 1]} : vector<16x32xf32> to vector<8x4xf32>
    %333 = vector.extract_strided_slice %263 {offsets = [0, 12], sizes = [8, 4], strides = [1, 1]} : vector<16x32xf32> to vector<8x4xf32>
    %334 = vector.extract_strided_slice %263 {offsets = [0, 16], sizes = [8, 4], strides = [1, 1]} : vector<16x32xf32> to vector<8x4xf32>
    %335 = vector.extract_strided_slice %263 {offsets = [0, 20], sizes = [8, 4], strides = [1, 1]} : vector<16x32xf32> to vector<8x4xf32>
    %336 = vector.extract_strided_slice %263 {offsets = [0, 24], sizes = [8, 4], strides = [1, 1]} : vector<16x32xf32> to vector<8x4xf32>
    %337 = vector.extract_strided_slice %263 {offsets = [0, 28], sizes = [8, 4], strides = [1, 1]} : vector<16x32xf32> to vector<8x4xf32>
    %338 = vector.extract_strided_slice %263 {offsets = [8, 0], sizes = [8, 4], strides = [1, 1]} : vector<16x32xf32> to vector<8x4xf32>
    %339 = vector.extract_strided_slice %263 {offsets = [8, 4], sizes = [8, 4], strides = [1, 1]} : vector<16x32xf32> to vector<8x4xf32>
    %340 = vector.extract_strided_slice %263 {offsets = [8, 8], sizes = [8, 4], strides = [1, 1]} : vector<16x32xf32> to vector<8x4xf32>
    %341 = vector.extract_strided_slice %263 {offsets = [8, 12], sizes = [8, 4], strides = [1, 1]} : vector<16x32xf32> to vector<8x4xf32>
    %342 = vector.extract_strided_slice %263 {offsets = [8, 16], sizes = [8, 4], strides = [1, 1]} : vector<16x32xf32> to vector<8x4xf32>
    %343 = vector.extract_strided_slice %263 {offsets = [8, 20], sizes = [8, 4], strides = [1, 1]} : vector<16x32xf32> to vector<8x4xf32>
    %344 = vector.extract_strided_slice %263 {offsets = [8, 24], sizes = [8, 4], strides = [1, 1]} : vector<16x32xf32> to vector<8x4xf32>
    %345 = vector.extract_strided_slice %263 {offsets = [8, 28], sizes = [8, 4], strides = [1, 1]} : vector<16x32xf32> to vector<8x4xf32>
    %346 = vector.shape_cast %330 : vector<8x4xf32> to vector<1x8x4xf32>
    %347 = vector.shape_cast %331 : vector<8x4xf32> to vector<1x8x4xf32>
    %348 = vector.shape_cast %332 : vector<8x4xf32> to vector<1x8x4xf32>
    %349 = vector.shape_cast %333 : vector<8x4xf32> to vector<1x8x4xf32>
    %350 = vector.shape_cast %334 : vector<8x4xf32> to vector<1x8x4xf32>
    %351 = vector.shape_cast %335 : vector<8x4xf32> to vector<1x8x4xf32>
    %352 = vector.shape_cast %336 : vector<8x4xf32> to vector<1x8x4xf32>
    %353 = vector.shape_cast %337 : vector<8x4xf32> to vector<1x8x4xf32>
    %354 = vector.shape_cast %338 : vector<8x4xf32> to vector<1x8x4xf32>
    %355 = vector.shape_cast %339 : vector<8x4xf32> to vector<1x8x4xf32>
    %356 = vector.shape_cast %340 : vector<8x4xf32> to vector<1x8x4xf32>
    %357 = vector.shape_cast %341 : vector<8x4xf32> to vector<1x8x4xf32>
    %358 = vector.shape_cast %342 : vector<8x4xf32> to vector<1x8x4xf32>
    %359 = vector.shape_cast %343 : vector<8x4xf32> to vector<1x8x4xf32>
    %360 = vector.shape_cast %344 : vector<8x4xf32> to vector<1x8x4xf32>
    %361 = vector.shape_cast %345 : vector<8x4xf32> to vector<1x8x4xf32>
    %362 = tpu.concatenate %346, %347, %348, %349, %350, %351, %352, %353, %354, %355, %356, %357, %358, %359, %360, %361 in 0 : vector<1x8x4xf32>, vector<1x8x4xf32>, vector<1x8x4xf32>, vector<1x8x4xf32>, vector<1x8x4xf32>, vector<1x8x4xf32>, vector<1x8x4xf32>, vector<1x8x4xf32>, vector<1x8x4xf32>, vector<1x8x4xf32>, vector<1x8x4xf32>, vector<1x8x4xf32>, vector<1x8x4xf32>, vector<1x8x4xf32>, vector<1x8x4xf32>, vector<1x8x4xf32> -> vector<16x8x4xf32>
    "tpu.trace_start"() <{level = 10 : i32, message = "bqd,bkd->bqk"}> : () -> ()
    %cst_93 = arith.constant dense<0.000000e+00> : vector<16x8x8xf32>
    %363 = tpu.matmul %296, %329, %cst_93 {dimension_numbers = #tpu.dot_dimension_numbers<[2], [2], [1], [1], [0, 0, 0, 1, 1, 1], [0], [0]>} : vector<16x8x4xf32>, vector<16x8x4xf32>, vector<16x8x8xf32> -> vector<16x8x8xf32>
    "tpu.trace_stop"() : () -> ()
    %cst_94 = arith.constant 0.176776692 : f32
    %364 = vector.broadcast %cst_94 : f32 to vector<16x8x8xf32>
    %365 = arith.mulf %363, %364 : vector<16x8x8xf32>
    %cst_95 = arith.constant dense<0xFF800000> : vector<16x8xf32>
    %366 = vector.multi_reduction <maximumf>, %365, %cst_95 [2] : vector<16x8x8xf32> to vector<16x8xf32>
    %367 = vector.shape_cast %366 : vector<16x8xf32> to vector<16x8x1xf32>
    %368 = vector.broadcast %367 : vector<16x8x1xf32> to vector<16x8x8xf32>
    %369 = arith.subf %365, %368 : vector<16x8x8xf32>
    %370 = math.exp %369 : vector<16x8x8xf32>
    %cst_96 = arith.constant dense<0.000000e+00> : vector<16x8xf32>
    %371 = vector.multi_reduction <add>, %370, %cst_96 [2] : vector<16x8x8xf32> to vector<16x8xf32>
    %372 = vector.shape_cast %371 : vector<16x8xf32> to vector<16x8x1xf32>
    %373 = tpu.reciprocal %372 : vector<16x8x1xf32> -> vector<16x8x1xf32>
    %374 = vector.broadcast %373 : vector<16x8x1xf32> to vector<16x8x8xf32>
    %375 = arith.mulf %370, %374 : vector<16x8x8xf32>
    "tpu.trace_start"() <{level = 10 : i32, message = "bqk,bkd->bqd"}> : () -> ()
    %cst_97 = arith.constant dense<0.000000e+00> : vector<16x8x4xf32>
    %376 = tpu.matmul %375, %362, %cst_97 {dimension_numbers = #tpu.dot_dimension_numbers<[2], [1], [1], [2], [0, 0, 0, 1, 1, 2], [0], [0]>} : vector<16x8x8xf32>, vector<16x8x4xf32>, vector<16x8x4xf32> -> vector<16x8x4xf32>
    "tpu.trace_stop"() : () -> ()
    %377 = vector.extract_strided_slice %376 {offsets = [0, 0, 0], sizes = [1, 8, 4], strides = [1, 1, 1]} : vector<16x8x4xf32> to vector<1x8x4xf32>
    %378 = vector.shape_cast %377 : vector<1x8x4xf32> to vector<8x4xf32>
    %379 = vector.extract_strided_slice %376 {offsets = [1, 0, 0], sizes = [1, 8, 4], strides = [1, 1, 1]} : vector<16x8x4xf32> to vector<1x8x4xf32>
    %380 = vector.shape_cast %379 : vector<1x8x4xf32> to vector<8x4xf32>
    %381 = vector.extract_strided_slice %376 {offsets = [2, 0, 0], sizes = [1, 8, 4], strides = [1, 1, 1]} : vector<16x8x4xf32> to vector<1x8x4xf32>
    %382 = vector.shape_cast %381 : vector<1x8x4xf32> to vector<8x4xf32>
    %383 = vector.extract_strided_slice %376 {offsets = [3, 0, 0], sizes = [1, 8, 4], strides = [1, 1, 1]} : vector<16x8x4xf32> to vector<1x8x4xf32>
    %384 = vector.shape_cast %383 : vector<1x8x4xf32> to vector<8x4xf32>
    %385 = vector.extract_strided_slice %376 {offsets = [4, 0, 0], sizes = [1, 8, 4], strides = [1, 1, 1]} : vector<16x8x4xf32> to vector<1x8x4xf32>
    %386 = vector.shape_cast %385 : vector<1x8x4xf32> to vector<8x4xf32>
    %387 = vector.extract_strided_slice %376 {offsets = [5, 0, 0], sizes = [1, 8, 4], strides = [1, 1, 1]} : vector<16x8x4xf32> to vector<1x8x4xf32>
    %388 = vector.shape_cast %387 : vector<1x8x4xf32> to vector<8x4xf32>
    %389 = vector.extract_strided_slice %376 {offsets = [6, 0, 0], sizes = [1, 8, 4], strides = [1, 1, 1]} : vector<16x8x4xf32> to vector<1x8x4xf32>
    %390 = vector.shape_cast %389 : vector<1x8x4xf32> to vector<8x4xf32>
    %391 = vector.extract_strided_slice %376 {offsets = [7, 0, 0], sizes = [1, 8, 4], strides = [1, 1, 1]} : vector<16x8x4xf32> to vector<1x8x4xf32>
    %392 = vector.shape_cast %391 : vector<1x8x4xf32> to vector<8x4xf32>
    %393 = tpu.concatenate %378, %380, %382, %384, %386, %388, %390, %392 in 1 : vector<8x4xf32>, vector<8x4xf32>, vector<8x4xf32>, vector<8x4xf32>, vector<8x4xf32>, vector<8x4xf32>, vector<8x4xf32>, vector<8x4xf32> -> vector<8x32xf32>
    %394 = vector.extract_strided_slice %376 {offsets = [8, 0, 0], sizes = [1, 8, 4], strides = [1, 1, 1]} : vector<16x8x4xf32> to vector<1x8x4xf32>
    %395 = vector.shape_cast %394 : vector<1x8x4xf32> to vector<8x4xf32>
    %396 = vector.extract_strided_slice %376 {offsets = [9, 0, 0], sizes = [1, 8, 4], strides = [1, 1, 1]} : vector<16x8x4xf32> to vector<1x8x4xf32>
    %397 = vector.shape_cast %396 : vector<1x8x4xf32> to vector<8x4xf32>
    %398 = vector.extract_strided_slice %376 {offsets = [10, 0, 0], sizes = [1, 8, 4], strides = [1, 1, 1]} : vector<16x8x4xf32> to vector<1x8x4xf32>
    %399 = vector.shape_cast %398 : vector<1x8x4xf32> to vector<8x4xf32>
    %400 = vector.extract_strided_slice %376 {offsets = [11, 0, 0], sizes = [1, 8, 4], strides = [1, 1, 1]} : vector<16x8x4xf32> to vector<1x8x4xf32>
    %401 = vector.shape_cast %400 : vector<1x8x4xf32> to vector<8x4xf32>
    %402 = vector.extract_strided_slice %376 {offsets = [12, 0, 0], sizes = [1, 8, 4], strides = [1, 1, 1]} : vector<16x8x4xf32> to vector<1x8x4xf32>
    %403 = vector.shape_cast %402 : vector<1x8x4xf32> to vector<8x4xf32>
    %404 = vector.extract_strided_slice %376 {offsets = [13, 0, 0], sizes = [1, 8, 4], strides = [1, 1, 1]} : vector<16x8x4xf32> to vector<1x8x4xf32>
    %405 = vector.shape_cast %404 : vector<1x8x4xf32> to vector<8x4xf32>
    %406 = vector.extract_strided_slice %376 {offsets = [14, 0, 0], sizes = [1, 8, 4], strides = [1, 1, 1]} : vector<16x8x4xf32> to vector<1x8x4xf32>
    %407 = vector.shape_cast %406 : vector<1x8x4xf32> to vector<8x4xf32>
    %408 = vector.extract_strided_slice %376 {offsets = [15, 0, 0], sizes = [1, 8, 4], strides = [1, 1, 1]} : vector<16x8x4xf32> to vector<1x8x4xf32>
    %409 = vector.shape_cast %408 : vector<1x8x4xf32> to vector<8x4xf32>
    %410 = tpu.concatenate %395, %397, %399, %401, %403, %405, %407, %409 in 1 : vector<8x4xf32>, vector<8x4xf32>, vector<8x4xf32>, vector<8x4xf32>, vector<8x4xf32>, vector<8x4xf32>, vector<8x4xf32>, vector<8x4xf32> -> vector<8x32xf32>
    %411 = tpu.concatenate %393, %410 in 0 : vector<8x32xf32>, vector<8x32xf32> -> vector<16x32xf32>
    %412 = arith.addf %261, %411 : vector<16x32xf32>
    %cst_98 = arith.constant dense<0.000000e+00> : vector<16xf32>
    %413 = vector.multi_reduction <add>, %412, %cst_98 [1] : vector<16x32xf32> to vector<16xf32>
    %414 = vector.shape_cast %413 : vector<16xf32> to vector<16x1xf32>
    %cst_99 = arith.constant 3.200000e+01 : f32
    %415 = vector.broadcast %cst_99 : f32 to vector<16x1xf32>
    %416 = arith.divf %414, %415 : vector<16x1xf32>
    %417 = vector.broadcast %416 : vector<16x1xf32> to vector<16x32xf32>
    %418 = arith.subf %412, %417 : vector<16x32xf32>
    %419 = arith.mulf %418, %418 : vector<16x32xf32>
    %cst_100 = arith.constant dense<0.000000e+00> : vector<16xf32>
    %420 = vector.multi_reduction <add>, %419, %cst_100 [1] : vector<16x32xf32> to vector<16xf32>
    %421 = vector.shape_cast %420 : vector<16xf32> to vector<16x1xf32>
    %cst_101 = arith.constant 3.200000e+01 : f32
    %422 = vector.broadcast %cst_101 : f32 to vector<16x1xf32>
    %423 = arith.divf %421, %422 : vector<16x1xf32>
    %424 = vector.broadcast %416 : vector<16x1xf32> to vector<16x32xf32>
    %425 = arith.subf %412, %424 : vector<16x32xf32>
    %cst_102 = arith.constant 9.99999974E-6 : f32
    %426 = vector.broadcast %cst_102 : f32 to vector<16x1xf32>
    %427 = arith.addf %423, %426 : vector<16x1xf32>
    %428 = math.rsqrt %427 : vector<16x1xf32>
    %429 = vector.broadcast %428 : vector<16x1xf32> to vector<16x32xf32>
    %430 = arith.mulf %425, %429 : vector<16x32xf32>
    %431 = vector.broadcast %257 : vector<1x32xf32> to vector<16x32xf32>
    %432 = arith.mulf %430, %431 : vector<16x32xf32>
    %433 = vector.broadcast %258 : vector<1x32xf32> to vector<16x32xf32>
    %434 = arith.addf %432, %433 : vector<16x32xf32>
    %cst_103 = arith.constant dense<0.000000e+00> : vector<16x32xf32>
    %435 = tpu.matmul %434, %255, %cst_103 {dimension_numbers = #tpu.dot_dimension_numbers<[1], [0], [0], [1], [0, 0, 1, 1], [], []>} : vector<16x32xf32>, vector<32x32xf32>, vector<16x32xf32> -> vector<16x32xf32>
    %436 = vector.broadcast %256 : vector<1x32xf32> to vector<16x32xf32>
    %437 = arith.addf %435, %436 : vector<16x32xf32>
    %cst_104 = arith.constant 0.000000e+00 : f32
    %438 = vector.broadcast %cst_104 : f32 to vector<16x32xf32>
    %439 = arith.maximumf %437, %438 : vector<16x32xf32>
    %440 = arith.addf %434, %439 : vector<16x32xf32>
    %cst_105 = arith.constant dense<0.000000e+00> : vector<16xf32>
    %441 = vector.multi_reduction <add>, %440, %cst_105 [1] : vector<16x32xf32> to vector<16xf32>
    %442 = vector.shape_cast %441 : vector<16xf32> to vector<16x1xf32>
    %cst_106 = arith.constant 3.200000e+01 : f32
    %443 = vector.broadcast %cst_106 : f32 to vector<16x1xf32>
    %444 = arith.divf %442, %443 : vector<16x1xf32>
    %445 = vector.broadcast %444 : vector<16x1xf32> to vector<16x32xf32>
    %446 = arith.subf %440, %445 : vector<16x32xf32>
    %447 = arith.mulf %446, %446 : vector<16x32xf32>
    %cst_107 = arith.constant dense<0.000000e+00> : vector<16xf32>
    %448 = vector.multi_reduction <add>, %447, %cst_107 [1] : vector<16x32xf32> to vector<16xf32>
    %449 = vector.shape_cast %448 : vector<16xf32> to vector<16x1xf32>
    %cst_108 = arith.constant 3.200000e+01 : f32
    %450 = vector.broadcast %cst_108 : f32 to vector<16x1xf32>
    %451 = arith.divf %449, %450 : vector<16x1xf32>
    %452 = vector.broadcast %444 : vector<16x1xf32> to vector<16x32xf32>
    %453 = arith.subf %440, %452 : vector<16x32xf32>
    %cst_109 = arith.constant 9.99999974E-6 : f32
    %454 = vector.broadcast %cst_109 : f32 to vector<16x1xf32>
    %455 = arith.addf %451, %454 : vector<16x1xf32>
    %456 = math.rsqrt %455 : vector<16x1xf32>
    %457 = vector.broadcast %456 : vector<16x1xf32> to vector<16x32xf32>
    %458 = arith.mulf %453, %457 : vector<16x32xf32>
    %459 = vector.broadcast %259 : vector<1x32xf32> to vector<16x32xf32>
    %460 = arith.mulf %458, %459 : vector<16x32xf32>
    %461 = vector.broadcast %260 : vector<1x32xf32> to vector<16x32xf32>
    %462 = arith.addf %460, %461 : vector<16x32xf32>
    %c0_110 = arith.constant 0 : index
    %c0_111 = arith.constant 0 : index
    %463 = vector.load %arg31[%c0_110, %c0_111] : memref<16x32xf32, #tpu.memory_space<vmem>>, vector<16x32xf32>
    tpu.vector_store %arg31[%c0_110, %c0_111], %462 {strides = array<i32>} : memref<16x32xf32, #tpu.memory_space<vmem>>, vector<16x32xf32>,
    return
  }
}

</mosaic_0001>

<llo_original>
// kernel: neu_cross_attn_encoder.1
$region0: #{neu_cross_attn_encoder.1}
  #allocation0 [shape = 'u32[]', space=smem, size = 0x4, offset = 0x4, fixed_abs, tag = 'smem constant byte address 0x4 - core index']
  #allocation1 [shape = 'u32[144,128]{1,0:T(1,128)}', space=vmem, size = 0x12000, scoped, tag = 'internal scratch']
  %s0 = inlined_call_operand.smem [shape: u32[32], index: -1, kind: input, shape index: {}]
  %s1 = sld [smem:[%s0]]
  %s2 = scalar_lea.smem %s0, 1
  %s3 = sld [smem:[%s2]]
  %s4 = scalar_lea.smem %s0, 2
  %s5 = sld [smem:[%s4]]
  %s6 = scalar_lea.smem %s0, 3
  %s7 = sld [smem:[%s6]]
  %s8 = scalar_lea.smem %s0, 4
  %s9 = sld [smem:[%s8]]
  %s10 = scalar_lea.smem %s0, 5
  %s11 = sld [smem:[%s10]]
  %s12 = scalar_lea.smem %s0, 6
  %s13 = sld [smem:[%s12]]
  %s14 = scalar_lea.smem %s0, 7
  %s15 = sld [smem:[%s14]]
  %s16 = scalar_lea.smem %s0, 8
  %s17 = sld [smem:[%s16]]
  %s18 = scalar_lea.smem %s0, 9
  %s19 = sld [smem:[%s18]]
  %s20 = scalar_lea.smem %s0, 10
  %s21 = sld [smem:[%s20]]
  %s22 = scalar_lea.smem %s0, 11
  %s23 = sld [smem:[%s22]]
  %s24 = scalar_lea.smem %s0, 12
  %s25 = sld [smem:[%s24]]
  %s26 = scalar_lea.smem %s0, 13
  %s27 = sld [smem:[%s26]]
  %s28 = scalar_lea.smem %s0, 14
  %s29 = sld [smem:[%s28]]
  %s30 = scalar_lea.smem %s0, 15
  %s31 = sld [smem:[%s30]]
  %s32 = scalar_lea.smem %s0, 16
  %s33 = sld [smem:[%s32]]
  %s34 = scalar_lea.smem %s0, 17
  %s35 = sld [smem:[%s34]]
  %s36 = scalar_lea.smem %s0, 18
  %s37 = sld [smem:[%s36]]
  %s38 = scalar_lea.smem %s0, 19
  %s39 = sld [smem:[%s38]]
  %s40 = scalar_lea.smem %s0, 20
  %s41 = sld [smem:[%s40]]
  %s42 = scalar_lea.smem %s0, 21
  %s43 = sld [smem:[%s42]]
  %s44 = scalar_lea.smem %s0, 22
  %s45 = sld [smem:[%s44]]
  %s46 = scalar_lea.smem %s0, 23
  %s47 = sld [smem:[%s46]]
  %s48 = scalar_lea.smem %s0, 24
  %s49 = sld [smem:[%s48]]
  %s50 = scalar_lea.smem %s0, 25
  %s51 = sld [smem:[%s50]]
  %s52 = scalar_lea.smem %s0, 26
  %s53 = sld [smem:[%s52]]
  %s54 = scalar_lea.smem %s0, 27
  %s55 = sld [smem:[%s54]]
  %s56 = scalar_lea.smem %s0, 28
  %s57 = sld [smem:[%s56]]
  %s58 = scalar_lea.smem %s0, 29
  %s59 = sld [smem:[%s58]]
  %s60 = scalar_lea.smem %s0, 30
  %s61 = sld [smem:[%s60]]
  %s62 = scalar_lea.smem %s0, 31
  %s63 = sld [smem:[%s62]]
  %s64 = sld [smem:[#allocation0]]
  $region214: #{neu_cross_attn_encoder.1} parent=0
    _
  %s66 = ssub.s32 1, %s64
  %s67 = scalar_select 0, %s66, %s64
  $region1: #{neu_cross_attn_encoder.1} parent=0
    #allocation2 [shape = 'u8[1024]{0}', space=vmem, size = 0x400, scoped, tag = 'input window, operand 4, single buffered']
    #allocation3 [shape = 's32[1]{0}', space=sflag, size = 0x4, scoped, tag = 'scoped memory for neu_cross_attn_encoder.1']
    #allocation4 [shape = 's32[1]{0}', space=sflag, size = 0x4, scoped, tag = 'scoped memory for neu_cross_attn_encoder.1']
    #allocation5 [shape = 'u8[512]{0}', space=vmem, size = 0x400, scoped, tag = 'input window, operand 5, single buffered']
    #allocation6 [shape = 's32[1]{0}', space=sflag, size = 0x4, scoped, tag = 'scoped memory for neu_cross_attn_encoder.1']
    #allocation7 [shape = 'u8[512]{0}', space=vmem, size = 0x400, scoped, tag = 'input window, operand 7, single buffered']
    #allocation8 [shape = 'u8[512]{0}', space=vmem, size = 0x400, scoped, tag = 'input window, operand 12, single buffered']
    #allocation9 [shape = 's32[1]{0}', space=sflag, size = 0x4, scoped, tag = 'scoped memory for neu_cross_attn_encoder.1']
    #allocation10 [shape = 'u8[16384]{0}', space=vmem, size = 0x4000, scoped, tag = 'input window, operand 15, single buffered']
    #allocation11 [shape = 'u8[16384]{0}', space=vmem, size = 0x4000, scoped, tag = 'input window, operand 16, single buffered']
    #allocation12 [shape = 's32[1]{0}', space=sflag, size = 0x4, scoped, tag = 'scoped memory for neu_cross_attn_encoder.1']
    #allocation13 [shape = 'u8[512]{0}', space=vmem, size = 0x400, scoped, tag = 'input window, operand 17, single buffered']
    #allocation14 [shape = 'u8[512]{0}', space=vmem, size = 0x400, scoped, tag = 'input window, operand 18, single buffered']
    #allocation15 [shape = 's32[1]{0}', space=sflag, size = 0x4, scoped, tag = 'scoped memory for neu_cross_attn_encoder.1']
    #allocation16 [shape = 'u8[512]{0}', space=vmem, size = 0x400, scoped, tag = 'input window, operand 19, single buffered']
    #allocation17 [shape = 'u8[512]{0}', space=vmem, size = 0x400, scoped, tag = 'input window, operand 20, single buffered']
    #allocation18 [shape = 's32[1]{0}', space=sflag, size = 0x4, scoped, tag = 'scoped memory for neu_cross_attn_encoder.1']
    #allocation19 [shape = 'u8[512]{0}', space=vmem, size = 0x400, scoped, tag = 'input window, operand 21, single buffered']
    #allocation20 [shape = 'u8[16384]{0}', space=vmem, size = 0x4000, scoped, tag = 'input window, operand 22, single buffered']
    #allocation21 [shape = 's32[1]{0}', space=sflag, size = 0x4, scoped, tag = 'scoped memory for neu_cross_attn_encoder.1']
    #allocation22 [shape = 'u8[16384]{0}', space=vmem, size = 0x4000, scoped, tag = 'input window, operand 23, single buffered']
    #allocation23 [shape = 'u8[16384]{0}', space=vmem, size = 0x4000, scoped, tag = 'input window, operand 24, single buffered']
    #allocation24 [shape = 's32[1]{0}', space=sflag, size = 0x4, scoped, tag = 'scoped memory for neu_cross_attn_encoder.1']
    #allocation25 [shape = 'u8[16384]{0}', space=vmem, size = 0x4000, scoped, tag = 'input window, operand 25, single buffered']
    #allocation26 [shape = 'u8[512]{0}', space=vmem, size = 0x400, scoped, tag = 'input window, operand 26, single buffered']
    #allocation27 [shape = 's32[1]{0}', space=sflag, size = 0x4, scoped, tag = 'scoped memory for neu_cross_attn_encoder.1']
    #allocation28 [shape = 'u8[512]{0}', space=vmem, size = 0x400, scoped, tag = 'input window, operand 27, single buffered']
    #allocation29 [shape = 'u8[512]{0}', space=vmem, size = 0x400, scoped, tag = 'input window, operand 28, single buffered']
    #allocation30 [shape = 's32[1]{0}', space=sflag, size = 0x4, scoped, tag = 'scoped memory for neu_cross_attn_encoder.1']
    #allocation31 [shape = 'u8[512]{0}', space=vmem, size = 0x400, scoped, tag = 'input window, operand 29, single buffered']
    #allocation32 [shape = 'u8[512]{0}', space=vmem, size = 0x400, scoped, tag = 'input window, operand 30, single buffered']
    #allocation33 [shape = 's32[1]{0}', space=sflag, size = 0x4, scoped, tag = 'scoped memory for neu_cross_attn_encoder.1']
    #allocation34 [shape = 'u8[8192]{0}', space=vmem, size = 0x2000, scoped, tag = 'output window, operand 0, single buffered']
    %68 = vsyncpa [#allocation3], 0
    %69 = vsyncpa [#allocation6], 0
    %70 = vsyncpa [#allocation9], 0
    %71 = vsyncpa [#allocation12], 0
    %72 = vsyncpa [#allocation15], 0
    %73 = vsyncpa [#allocation18], 0
    %74 = vsyncpa [#allocation21], 0
    %75 = vsyncpa [#allocation24], 0
    %76 = vsyncpa [#allocation27], 0
    %77 = vsyncpa [#allocation30], 0
    %78 = vsyncpa [#allocation33], 0
    %79 = vsyncpa [#allocation4], 0
    // Predicated region
    $region2: #{neu_cross_attn_encoder.1} parent=1 // pred_check
      _
    $region3: #{neu_cross_attn_encoder.1} parent=1 // pred_check_branch
      %81 = sbr.rel (0) target = $region5
    $region4: #{neu_cross_attn_encoder.1} parent=1 // pred_region
      _
    $region5: #{neu_cross_attn_encoder.1} parent=1 // pred_fallthru
      _
    // Predicated region
    $region6: #{neu_cross_attn_encoder.1} parent=1 // pred_check
      _
    $region7: #{neu_cross_attn_encoder.1} parent=1 // pred_check_branch
      %83 = sbr.rel (0) target = $region9
    $region8: #{neu_cross_attn_encoder.1} parent=1 // pred_region
      _
    $region9: #{neu_cross_attn_encoder.1} parent=1 // pred_fallthru
      _
    // Predicated region
    $region10: #{neu_cross_attn_encoder.1} parent=1 // pred_check
      _
    $region11: #{neu_cross_attn_encoder.1} parent=1 // pred_check_branch
      %85 = sbr.rel (0) target = $region13
    $region12: #{neu_cross_attn_encoder.1} parent=1 // pred_region
      _
    $region13: #{neu_cross_attn_encoder.1} parent=1 // pred_fallthru
      _
    // Predicated region
    $region14: #{neu_cross_attn_encoder.1} parent=1 // pred_check
      _
    $region15: #{neu_cross_attn_encoder.1} parent=1 // pred_check_branch
      %87 = sbr.rel (0) target = $region17
    $region16: #{neu_cross_attn_encoder.1} parent=1 // pred_region
      _
    $region17: #{neu_cross_attn_encoder.1} parent=1 // pred_fallthru
      _
    // Predicated region
    $region18: #{neu_cross_attn_encoder.1} parent=1 // pred_check
      _
    $region19: #{neu_cross_attn_encoder.1} parent=1 // pred_check_branch
      %89 = sbr.rel (0) target = $region21
    $region20: #{neu_cross_attn_encoder.1} parent=1 // pred_region
      %s91 = ssub.s32 32, 32
      %92 = vsyncadd [#allocation3], %s91
      %s94 = sshll.u32 [#allocation2], 4
      %s95 = int_to_ptr.vmem [resolvable:$true] %s94
      %97 = dma.hbm_to_vmem [thread:$0]  %s9, 32, %s95, [#allocation3]
    $region21: #{neu_cross_attn_encoder.1} parent=1 // pred_fallthru
      _
    // Predicated region
    $region22: #{neu_cross_attn_encoder.1} parent=1 // pred_check
      _
    $region23: #{neu_cross_attn_encoder.1} parent=1 // pred_check_branch
      %99 = sbr.rel (0) target = $region25
    $region24: #{neu_cross_attn_encoder.1} parent=1 // pred_region
      %s101 = ssub.s32 16, 16
      %102 = vsyncadd [#allocation6], %s101
      %s104 = sshll.u32 [#allocation5], 4
      %s105 = int_to_ptr.vmem [resolvable:$true] %s104
      %107 = dma.hbm_to_vmem [thread:$0]  %s11, 16, %s105, [#allocation6]
    $region25: #{neu_cross_attn_encoder.1} parent=1 // pred_fallthru
      _
    // Predicated region
    $region26: #{neu_cross_attn_encoder.1} parent=1 // pred_check
      _
    $region27: #{neu_cross_attn_encoder.1} parent=1 // pred_check_branch
      %109 = sbr.rel (0) target = $region29
    $region28: #{neu_cross_attn_encoder.1} parent=1 // pred_region
      _
    $region29: #{neu_cross_attn_encoder.1} parent=1 // pred_fallthru
      _
    // Predicated region
    $region30: #{neu_cross_attn_encoder.1} parent=1 // pred_check
      _
    $region31: #{neu_cross_attn_encoder.1} parent=1 // pred_check_branch
      %111 = sbr.rel (0) target = $region33
    $region32: #{neu_cross_attn_encoder.1} parent=1 // pred_region
      %s113 = ssub.s32 16, 16
      %114 = vsyncadd [#allocation6], %s113
      %s116 = sshll.u32 [#allocation7], 4
      %s117 = int_to_ptr.vmem [resolvable:$true] %s116
      %119 = dma.hbm_to_vmem [thread:$0]  %s15, 16, %s117, [#allocation6]
    $region33: #{neu_cross_attn_encoder.1} parent=1 // pred_fallthru
      _
    // Predicated region
    $region34: #{neu_cross_attn_encoder.1} parent=1 // pred_check
      _
    $region35: #{neu_cross_attn_encoder.1} parent=1 // pred_check_branch
      %121 = sbr.rel (0) target = $region37
    $region36: #{neu_cross_attn_encoder.1} parent=1 // pred_region
      _
    $region37: #{neu_cross_attn_encoder.1} parent=1 // pred_fallthru
      _
    // Predicated region
    $region38: #{neu_cross_attn_encoder.1} parent=1 // pred_check
      _
    $region39: #{neu_cross_attn_encoder.1} parent=1 // pred_check_branch
      %123 = sbr.rel (0) target = $region41
    $region40: #{neu_cross_attn_encoder.1} parent=1 // pred_region
      _
    $region41: #{neu_cross_attn_encoder.1} parent=1 // pred_fallthru
      _
    // Predicated region
    $region42: #{neu_cross_attn_encoder.1} parent=1 // pred_check
      _
    $region43: #{neu_cross_attn_encoder.1} parent=1 // pred_check_branch
      %125 = sbr.rel (0) target = $region45
    $region44: #{neu_cross_attn_encoder.1} parent=1 // pred_region
      _
    $region45: #{neu_cross_attn_encoder.1} parent=1 // pred_fallthru
      _
    // Predicated region
    $region46: #{neu_cross_attn_encoder.1} parent=1 // pred_check
      _
    $region47: #{neu_cross_attn_encoder.1} parent=1 // pred_check_branch
      %127 = sbr.rel (0) target = $region49
    $region48: #{neu_cross_attn_encoder.1} parent=1 // pred_region
      _
    $region49: #{neu_cross_attn_encoder.1} parent=1 // pred_fallthru
      _
    // Predicated region
    $region50: #{neu_cross_attn_encoder.1} parent=1 // pred_check
      _
    $region51: #{neu_cross_attn_encoder.1} parent=1 // pred_check_branch
      %129 = sbr.rel (0) target = $region53
    $region52: #{neu_cross_attn_encoder.1} parent=1 // pred_region
      %s131 = ssub.s32 16, 16
      %132 = vsyncadd [#allocation9], %s131
      %s134 = sshll.u32 [#allocation8], 4
      %s135 = int_to_ptr.vmem [resolvable:$true] %s134
      %137 = dma.hbm_to_vmem [thread:$0]  %s25, 16, %s135, [#allocation9]
    $region53: #{neu_cross_attn_encoder.1} parent=1 // pred_fallthru
      _
    // Predicated region
    $region54: #{neu_cross_attn_encoder.1} parent=1 // pred_check
      _
    $region55: #{neu_cross_attn_encoder.1} parent=1 // pred_check_branch
      %139 = sbr.rel (0) target = $region57
    $region56: #{neu_cross_attn_encoder.1} parent=1 // pred_region
      _
    $region57: #{neu_cross_attn_encoder.1} parent=1 // pred_fallthru
      _
    // Predicated region
    $region58: #{neu_cross_attn_encoder.1} parent=1 // pred_check
      _
    $region59: #{neu_cross_attn_encoder.1} parent=1 // pred_check_branch
      %141 = sbr.rel (0) target = $region61
    $region60: #{neu_cross_attn_encoder.1} parent=1 // pred_region
      _
    $region61: #{neu_cross_attn_encoder.1} parent=1 // pred_fallthru
      _
    // Predicated region
    $region62: #{neu_cross_attn_encoder.1} parent=1 // pred_check
      _
    $region63: #{neu_cross_attn_encoder.1} parent=1 // pred_check_branch
      %143 = sbr.rel (0) target = $region65
    $region64: #{neu_cross_attn_encoder.1} parent=1 // pred_region
      %s145 = ssub.s32 512, 512
      %146 = vsyncadd [#allocation9], %s145
      %s147 = sshll.u32 [#allocation10], 4
      %s148 = int_to_ptr.vmem [resolvable:$true] %s147
      %153 = dma.hbm_to_vmem [thread:$0]  %s31, 512, %s148, [#allocation9], 128, 128, 8
    $region65: #{neu_cross_attn_encoder.1} parent=1 // pred_fallthru
      _
    // Predicated region
    $region66: #{neu_cross_attn_encoder.1} parent=1 // pred_check
      _
    $region67: #{neu_cross_attn_encoder.1} parent=1 // pred_check_branch
      %155 = sbr.rel (0) target = $region69
    $region68: #{neu_cross_attn_encoder.1} parent=1 // pred_region
      %s157 = ssub.s32 512, 512
      %158 = vsyncadd [#allocation12], %s157
      %s159 = sshll.u32 [#allocation11], 4
      %s160 = int_to_ptr.vmem [resolvable:$true] %s159
      %165 = dma.hbm_to_vmem [thread:$0]  %s33, 512, %s160, [#allocation12], 128, 128, 8
    $region69: #{neu_cross_attn_encoder.1} parent=1 // pred_fallthru
      _
    // Predicated region
    $region70: #{neu_cross_attn_encoder.1} parent=1 // pred_check
      _
    $region71: #{neu_cross_attn_encoder.1} parent=1 // pred_check_branch
      %167 = sbr.rel (0) target = $region73
    $region72: #{neu_cross_attn_encoder.1} parent=1 // pred_region
      %s169 = ssub.s32 16, 16
      %170 = vsyncadd [#allocation12], %s169
      %s172 = sshll.u32 [#allocation13], 4
      %s173 = int_to_ptr.vmem [resolvable:$true] %s172
      %175 = dma.hbm_to_vmem [thread:$0]  %s35, 16, %s173, [#allocation12]
    $region73: #{neu_cross_attn_encoder.1} parent=1 // pred_fallthru
      _
    // Predicated region
    $region74: #{neu_cross_attn_encoder.1} parent=1 // pred_check
      _
    $region75: #{neu_cross_attn_encoder.1} parent=1 // pred_check_branch
      %177 = sbr.rel (0) target = $region77
    $region76: #{neu_cross_attn_encoder.1} parent=1 // pred_region
      %s179 = ssub.s32 16, 16
      %180 = vsyncadd [#allocation15], %s179
      %s182 = sshll.u32 [#allocation14], 4
      %s183 = int_to_ptr.vmem [resolvable:$true] %s182
      %185 = dma.hbm_to_vmem [thread:$0]  %s37, 16, %s183, [#allocation15]
    $region77: #{neu_cross_attn_encoder.1} parent=1 // pred_fallthru
      _
    // Predicated region
    $region78: #{neu_cross_attn_encoder.1} parent=1 // pred_check
      _
    $region79: #{neu_cross_attn_encoder.1} parent=1 // pred_check_branch
      %187 = sbr.rel (0) target = $region81
    $region80: #{neu_cross_attn_encoder.1} parent=1 // pred_region
      %s189 = ssub.s32 16, 16
      %190 = vsyncadd [#allocation15], %s189
      %s192 = sshll.u32 [#allocation16], 4
      %s193 = int_to_ptr.vmem [resolvable:$true] %s192
      %195 = dma.hbm_to_vmem [thread:$0]  %s39, 16, %s193, [#allocation15]
    $region81: #{neu_cross_attn_encoder.1} parent=1 // pred_fallthru
      _
    // Predicated region
    $region82: #{neu_cross_attn_encoder.1} parent=1 // pred_check
      _
    $region83: #{neu_cross_attn_encoder.1} parent=1 // pred_check_branch
      %197 = sbr.rel (0) target = $region85
    $region84: #{neu_cross_attn_encoder.1} parent=1 // pred_region
      %s199 = ssub.s32 16, 16
      %200 = vsyncadd [#allocation18], %s199
      %s202 = sshll.u32 [#allocation17], 4
      %s203 = int_to_ptr.vmem [resolvable:$true] %s202
      %205 = dma.hbm_to_vmem [thread:$0]  %s41, 16, %s203, [#allocation18]
    $region85: #{neu_cross_attn_encoder.1} parent=1 // pred_fallthru
      _
    // Predicated region
    $region86: #{neu_cross_attn_encoder.1} parent=1 // pred_check
      _
    $region87: #{neu_cross_attn_encoder.1} parent=1 // pred_check_branch
      %207 = sbr.rel (0) target = $region89
    $region88: #{neu_cross_attn_encoder.1} parent=1 // pred_region
      %s209 = ssub.s32 16, 16
      %210 = vsyncadd [#allocation18], %s209
      %s212 = sshll.u32 [#allocation19], 4
      %s213 = int_to_ptr.vmem [resolvable:$true] %s212
      %215 = dma.hbm_to_vmem [thread:$0]  %s43, 16, %s213, [#allocation18]
    $region89: #{neu_cross_attn_encoder.1} parent=1 // pred_fallthru
      _
    // Predicated region
    $region90: #{neu_cross_attn_encoder.1} parent=1 // pred_check
      _
    $region91: #{neu_cross_attn_encoder.1} parent=1 // pred_check_branch
      %217 = sbr.rel (0) target = $region93
    $region92: #{neu_cross_attn_encoder.1} parent=1 // pred_region
      %s219 = ssub.s32 512, 512
      %220 = vsyncadd [#allocation21], %s219
      %s221 = sshll.u32 [#allocation20], 4
      %s222 = int_to_ptr.vmem [resolvable:$true] %s221
      %227 = dma.hbm_to_vmem [thread:$0]  %s45, 512, %s222, [#allocation21], 128, 128, 8
    $region93: #{neu_cross_attn_encoder.1} parent=1 // pred_fallthru
      _
    // Predicated region
    $region94: #{neu_cross_attn_encoder.1} parent=1 // pred_check
      _
    $region95: #{neu_cross_attn_encoder.1} parent=1 // pred_check_branch
      %229 = sbr.rel (0) target = $region97
    $region96: #{neu_cross_attn_encoder.1} parent=1 // pred_region
      %s231 = ssub.s32 512, 512
      %232 = vsyncadd [#allocation21], %s231
      %s233 = sshll.u32 [#allocation22], 4
      %s234 = int_to_ptr.vmem [resolvable:$true] %s233
      %239 = dma.hbm_to_vmem [thread:$0]  %s47, 512, %s234, [#allocation21], 128, 128, 8
    $region97: #{neu_cross_attn_encoder.1} parent=1 // pred_fallthru
      _
    // Predicated region
    $region98: #{neu_cross_attn_encoder.1} parent=1 // pred_check
      _
    $region99: #{neu_cross_attn_encoder.1} parent=1 // pred_check_branch
      %241 = sbr.rel (0) target = $region101
    $region100: #{neu_cross_attn_encoder.1} parent=1 // pred_region
      %s243 = ssub.s32 512, 512
      %244 = vsyncadd [#allocation24], %s243
      %s245 = sshll.u32 [#allocation23], 4
      %s246 = int_to_ptr.vmem [resolvable:$true] %s245
      %251 = dma.hbm_to_vmem [thread:$0]  %s49, 512, %s246, [#allocation24], 128, 128, 8
    $region101: #{neu_cross_attn_encoder.1} parent=1 // pred_fallthru
      _
    // Predicated region
    $region102: #{neu_cross_attn_encoder.1} parent=1 // pred_check
      _
    $region103: #{neu_cross_attn_encoder.1} parent=1 // pred_check_branch
      %253 = sbr.rel (0) target = $region105
    $region104: #{neu_cross_attn_encoder.1} parent=1 // pred_region
      %s255 = ssub.s32 512, 512
      %256 = vsyncadd [#allocation24], %s255
      %s257 = sshll.u32 [#allocation25], 4
      %s258 = int_to_ptr.vmem [resolvable:$true] %s257
      %263 = dma.hbm_to_vmem [thread:$0]  %s51, 512, %s258, [#allocation24], 128, 128, 8
    $region105: #{neu_cross_attn_encoder.1} parent=1 // pred_fallthru
      _
    // Predicated region
    $region106: #{neu_cross_attn_encoder.1} parent=1 // pred_check
      _
    $region107: #{neu_cross_attn_encoder.1} parent=1 // pred_check_branch
      %265 = sbr.rel (0) target = $region109
    $region108: #{neu_cross_attn_encoder.1} parent=1 // pred_region
      %s267 = ssub.s32 16, 16
      %268 = vsyncadd [#allocation27], %s267
      %s270 = sshll.u32 [#allocation26], 4
      %s271 = int_to_ptr.vmem [resolvable:$true] %s270
      %273 = dma.hbm_to_vmem [thread:$0]  %s53, 16, %s271, [#allocation27]
    $region109: #{neu_cross_attn_encoder.1} parent=1 // pred_fallthru
      _
    // Predicated region
    $region110: #{neu_cross_attn_encoder.1} parent=1 // pred_check
      _
    $region111: #{neu_cross_attn_encoder.1} parent=1 // pred_check_branch
      %275 = sbr.rel (0) target = $region113
    $region112: #{neu_cross_attn_encoder.1} parent=1 // pred_region
      %s277 = ssub.s32 16, 16
      %278 = vsyncadd [#allocation27], %s277
      %s280 = sshll.u32 [#allocation28], 4
      %s281 = int_to_ptr.vmem [resolvable:$true] %s280
      %283 = dma.hbm_to_vmem [thread:$0]  %s55, 16, %s281, [#allocation27]
    $region113: #{neu_cross_attn_encoder.1} parent=1 // pred_fallthru
      _
    // Predicated region
    $region114: #{neu_cross_attn_encoder.1} parent=1 // pred_check
      _
    $region115: #{neu_cross_attn_encoder.1} parent=1 // pred_check_branch
      %285 = sbr.rel (0) target = $region117
    $region116: #{neu_cross_attn_encoder.1} parent=1 // pred_region
      %s287 = ssub.s32 16, 16
      %288 = vsyncadd [#allocation30], %s287
      %s290 = sshll.u32 [#allocation29], 4
      %s291 = int_to_ptr.vmem [resolvable:$true] %s290
      %293 = dma.hbm_to_vmem [thread:$0]  %s57, 16, %s291, [#allocation30]
    $region117: #{neu_cross_attn_encoder.1} parent=1 // pred_fallthru
      _
    // Predicated region
    $region118: #{neu_cross_attn_encoder.1} parent=1 // pred_check
      _
    $region119: #{neu_cross_attn_encoder.1} parent=1 // pred_check_branch
      %295 = sbr.rel (0) target = $region121
    $region120: #{neu_cross_attn_encoder.1} parent=1 // pred_region
      %s297 = ssub.s32 16, 16
      %298 = vsyncadd [#allocation30], %s297
      %s300 = sshll.u32 [#allocation31], 4
      %s301 = int_to_ptr.vmem [resolvable:$true] %s300
      %303 = dma.hbm_to_vmem [thread:$0]  %s59, 16, %s301, [#allocation30]
    $region121: #{neu_cross_attn_encoder.1} parent=1 // pred_fallthru
      _
    // Predicated region
    $region122: #{neu_cross_attn_encoder.1} parent=1 // pred_check
      _
    $region123: #{neu_cross_attn_encoder.1} parent=1 // pred_check_branch
      %305 = sbr.rel (0) target = $region125
    $region124: #{neu_cross_attn_encoder.1} parent=1 // pred_region
      %s307 = ssub.s32 16, 16
      %308 = vsyncadd [#allocation33], %s307
      %s310 = sshll.u32 [#allocation32], 4
      %s311 = int_to_ptr.vmem [resolvable:$true] %s310
      %313 = dma.hbm_to_vmem [thread:$0]  %s61, 16, %s311, [#allocation33]
    $region125: #{neu_cross_attn_encoder.1} parent=1 // pred_fallthru
      _
    // Predicated region
    $region126: #{neu_cross_attn_encoder.1} parent=1 // pred_check
      _
    $region127: #{neu_cross_attn_encoder.1} parent=1 // pred_check_branch
      %315 = sbr.rel (0) target = $region129
    $region128: #{neu_cross_attn_encoder.1} parent=1 // pred_region
      %316 = dma.done [#allocation3], 32
    $region129: #{neu_cross_attn_encoder.1} parent=1 // pred_fallthru
      _
    // Predicated region
    $region130: #{neu_cross_attn_encoder.1} parent=1 // pred_check
      _
    $region131: #{neu_cross_attn_encoder.1} parent=1 // pred_check_branch
      %318 = sbr.rel (0) target = $region133
    $region132: #{neu_cross_attn_encoder.1} parent=1 // pred_region
      %319 = dma.done [#allocation6], 16
    $region133: #{neu_cross_attn_encoder.1} parent=1 // pred_fallthru
      _
    // Predicated region
    $region134: #{neu_cross_attn_encoder.1} parent=1 // pred_check
      _
    $region135: #{neu_cross_attn_encoder.1} parent=1 // pred_check_branch
      %321 = sbr.rel (0) target = $region137
    $region136: #{neu_cross_attn_encoder.1} parent=1 // pred_region
      %322 = dma.done [#allocation6], 16
    $region137: #{neu_cross_attn_encoder.1} parent=1 // pred_fallthru
      _
    // Predicated region
    $region138: #{neu_cross_attn_encoder.1} parent=1 // pred_check
      _
    $region139: #{neu_cross_attn_encoder.1} parent=1 // pred_check_branch
      %324 = sbr.rel (0) target = $region141
    $region140: #{neu_cross_attn_encoder.1} parent=1 // pred_region
      %325 = dma.done [#allocation9], 16
    $region141: #{neu_cross_attn_encoder.1} parent=1 // pred_fallthru
      _
    // Predicated region
    $region142: #{neu_cross_attn_encoder.1} parent=1 // pred_check
      _
    $region143: #{neu_cross_attn_encoder.1} parent=1 // pred_check_branch
      %327 = sbr.rel (0) target = $region145
    $region144: #{neu_cross_attn_encoder.1} parent=1 // pred_region
      %328 = dma.done [#allocation9], 512
    $region145: #{neu_cross_attn_encoder.1} parent=1 // pred_fallthru
      _
    // Predicated region
    $region146: #{neu_cross_attn_encoder.1} parent=1 // pred_check
      _
    $region147: #{neu_cross_attn_encoder.1} parent=1 // pred_check_branch
      %330 = sbr.rel (0) target = $region149
    $region148: #{neu_cross_attn_encoder.1} parent=1 // pred_region
      %331 = dma.done [#allocation12], 512
    $region149: #{neu_cross_attn_encoder.1} parent=1 // pred_fallthru
      _
    // Predicated region
    $region150: #{neu_cross_attn_encoder.1} parent=1 // pred_check
      _
    $region151: #{neu_cross_attn_encoder.1} parent=1 // pred_check_branch
      %333 = sbr.rel (0) target = $region153
    $region152: #{neu_cross_attn_encoder.1} parent=1 // pred_region
      %334 = dma.done [#allocation12], 16
    $region153: #{neu_cross_attn_encoder.1} parent=1 // pred_fallthru
      _
    // Predicated region
    $region154: #{neu_cross_attn_encoder.1} parent=1 // pred_check
      _
    $region155: #{neu_cross_attn_encoder.1} parent=1 // pred_check_branch
      %336 = sbr.rel (0) target = $region157
    $region156: #{neu_cross_attn_encoder.1} parent=1 // pred_region
      %337 = dma.done [#allocation15], 16
    $region157: #{neu_cross_attn_encoder.1} parent=1 // pred_fallthru
      _
    // Predicated region
    $region158: #{neu_cross_attn_encoder.1} parent=1 // pred_check
      _
    $region159: #{neu_cross_attn_encoder.1} parent=1 // pred_check_branch
      %339 = sbr.rel (0) target = $region161
    $region160: #{neu_cross_attn_encoder.1} parent=1 // pred_region
      %340 = dma.done [#allocation15], 16
    $region161: #{neu_cross_attn_encoder.1} parent=1 // pred_fallthru
      _
    // Predicated region
    $region162: #{neu_cross_attn_encoder.1} parent=1 // pred_check
      _
    $region163: #{neu_cross_attn_encoder.1} parent=1 // pred_check_branch
      %342 = sbr.rel (0) target = $region165
    $region164: #{neu_cross_attn_encoder.1} parent=1 // pred_region
      %343 = dma.done [#allocation18], 16
    $region165: #{neu_cross_attn_encoder.1} parent=1 // pred_fallthru
      _
    // Predicated region
    $region166: #{neu_cross_attn_encoder.1} parent=1 // pred_check
      _
    $region167: #{neu_cross_attn_encoder.1} parent=1 // pred_check_branch
      %345 = sbr.rel (0) target = $region169
    $region168: #{neu_cross_attn_encoder.1} parent=1 // pred_region
      %346 = dma.done [#allocation18], 16
    $region169: #{neu_cross_attn_encoder.1} parent=1 // pred_fallthru
      _
    // Predicated region
    $region170: #{neu_cross_attn_encoder.1} parent=1 // pred_check
      _
    $region171: #{neu_cross_attn_encoder.1} parent=1 // pred_check_branch
      %348 = sbr.rel (0) target = $region173
    $region172: #{neu_cross_attn_encoder.1} parent=1 // pred_region
      %349 = dma.done [#allocation21], 512
    $region173: #{neu_cross_attn_encoder.1} parent=1 // pred_fallthru
      _
    // Predicated region
    $region174: #{neu_cross_attn_encoder.1} parent=1 // pred_check
      _
    $region175: #{neu_cross_attn_encoder.1} parent=1 // pred_check_branch
      %351 = sbr.rel (0) target = $region177
    $region176: #{neu_cross_attn_encoder.1} parent=1 // pred_region
      %352 = dma.done [#allocation21], 512
    $region177: #{neu_cross_attn_encoder.1} parent=1 // pred_fallthru
      _
    // Predicated region
    $region178: #{neu_cross_attn_encoder.1} parent=1 // pred_check
      _
    $region179: #{neu_cross_attn_encoder.1} parent=1 // pred_check_branch
      %354 = sbr.rel (0) target = $region181
    $region180: #{neu_cross_attn_encoder.1} parent=1 // pred_region
      %355 = dma.done [#allocation24], 512
    $region181: #{neu_cross_attn_encoder.1} parent=1 // pred_fallthru
      _
    // Predicated region
    $region182: #{neu_cross_attn_encoder.1} parent=1 // pred_check
      _
    $region183: #{neu_cross_attn_encoder.1} parent=1 // pred_check_branch
      %357 = sbr.rel (0) target = $region185
    $region184: #{neu_cross_attn_encoder.1} parent=1 // pred_region
      %358 = dma.done [#allocation24], 512
    $region185: #{neu_cross_attn_encoder.1} parent=1 // pred_fallthru
      _
    // Predicated region
    $region186: #{neu_cross_attn_encoder.1} parent=1 // pred_check
      _
    $region187: #{neu_cross_attn_encoder.1} parent=1 // pred_check_branch
      %360 = sbr.rel (0) target = $region189
    $region188: #{neu_cross_attn_encoder.1} parent=1 // pred_region
      %361 = dma.done [#allocation27], 16
    $region189: #{neu_cross_attn_encoder.1} parent=1 // pred_fallthru
      _
    // Predicated region
    $region190: #{neu_cross_attn_encoder.1} parent=1 // pred_check
      _
    $region191: #{neu_cross_attn_encoder.1} parent=1 // pred_check_branch
      %363 = sbr.rel (0) target = $region193
    $region192: #{neu_cross_attn_encoder.1} parent=1 // pred_region
      %364 = dma.done [#allocation27], 16
    $region193: #{neu_cross_attn_encoder.1} parent=1 // pred_fallthru
      _
    // Predicated region
    $region194: #{neu_cross_attn_encoder.1} parent=1 // pred_check
      _
    $region195: #{neu_cross_attn_encoder.1} parent=1 // pred_check_branch
      %366 = sbr.rel (0) target = $region197
    $region196: #{neu_cross_attn_encoder.1} parent=1 // pred_region
      %367 = dma.done [#allocation30], 16
    $region197: #{neu_cross_attn_encoder.1} parent=1 // pred_fallthru
      _
    // Predicated region
    $region198: #{neu_cross_attn_encoder.1} parent=1 // pred_check
      _
    $region199: #{neu_cross_attn_encoder.1} parent=1 // pred_check_branch
      %369 = sbr.rel (0) target = $region201
    $region200: #{neu_cross_attn_encoder.1} parent=1 // pred_region
      %370 = dma.done [#allocation30], 16
    $region201: #{neu_cross_attn_encoder.1} parent=1 // pred_fallthru
      _
    // Predicated region
    $region202: #{neu_cross_attn_encoder.1} parent=1 // pred_check
      _
    $region203: #{neu_cross_attn_encoder.1} parent=1 // pred_check_branch
      %372 = sbr.rel (0) target = $region205
    $region204: #{neu_cross_attn_encoder.1} parent=1 // pred_region
      %373 = dma.done [#allocation33], 16
    $region205: #{neu_cross_attn_encoder.1} parent=1 // pred_fallthru
      _
    %v374 = vld [vmem:[%s1] sm:$0xff]
    %v375 = vld [vmem:[%s1 + $0x8] sm:$0xff]
    %v376 = vld [vmem:[%s3] sm:$0xff]
    %v377 = vld [vmem:[%s3 + $0x8] sm:$0xff]
    %v378 = vld [vmem:[%s5] sm:$0xff]
    %v379 = vld [vmem:[%s5 + $0x8] sm:$0xff]
    %v380 = vld [vmem:[#allocation2] sm:$0x3]
    %v381 = vld [vmem:[#allocation5] sm:$0x1]
    %v382 = vld [vmem:[%s13] sm:$0xff]
    %v383 = vld [vmem:[%s13 + $0x8] sm:$0xff]
    %v384 = vld [vmem:[%s13 + $0x10] sm:$0xff]
    %v385 = vld [vmem:[%s13 + $0x18] sm:$0xff]
    %v386 = vld [vmem:[#allocation7] sm:$0x1]
    %v388 = vlaneseq
    %v389 = vshrl.u32 %v388, 7
    %v390 = vsub.s32 0, %v389
    %v391 = vrot.slane %v381, %v390
    %vm393 = vcmask 15360
    %v395 = vsel %vm393, %v374, 0
    %v398 = vsel %vm393, %v375, 0
    %vm400 = vcmask 1041408
    %v402 = vsel %vm400, %v380, 0
    %404 = vmatprep.subr.mxu0 0.0
    %405 = vmatpush1.msra.mxu0 0.0
    %406 = vmatprep.subr.mxu0 0.0
    %407 = vmatpush1.msra.mxu0 0.0
    %408 = vmatprep.subr.mxu0 0.0
    %409 = vmatpush1.msra.mxu0 0.0
    %410 = vmatprep.subr.mxu0 0.0
    %411 = vmatpush1.msra.mxu0 0.0
    %412 = vmatprep.subr.mxu0 0.0
    %413 = vmatpush1.msra.mxu0 0.0
    %414 = vmatprep.subr.mxu0 0.0
    %415 = vmatpush1.msra.mxu0 0.0
    %416 = vmatprep.subr.mxu0 0.0
    %417 = vmatpush1.msra.mxu0 0.0
    %418 = vmatprep.subr.mxu0 0.0
    %419 = vmatpush1.msra.mxu0 0.0
    %420 = vmatprep.subr.mxu0 0.0
    %421 = vmatpush1.msra.mxu0 0.0
    %422 = vmatprep.subr.mxu0 0.0
    %423 = vmatpush1.msra.mxu0 0.0
    %424 = vmatprep.subr.mxu0 0.0
    %425 = vmatpush1.msra.mxu0 0.0
    %426 = vmatprep.subr.mxu0 0.0
    %427 = vmatpush1.msra.mxu0 0.0
    %428 = vmatprep.subr.mxu0 0.0
    %429 = vmatpush1.msra.mxu0 0.0
    %430 = vmatprep.subr.mxu0 0.0
    %431 = vmatpush1.msra.mxu0 0.0
    %432 = vmatprep.subr.mxu0 0.0
    %433 = vmatpush1.msra.mxu0 0.0
    %434 = vmatprep.subr.mxu0 0.0
    %435 = vmatpush1.msra.mxu0 %v402
    %436 = vmatprep.subr.mxu0 0.0
    %437 = vmatpush2.msra.mxu0 0.0
    %438 = vmatprep.subr.mxu0 0.0
    %439 = vmatpush2.msra.mxu0 0.0
    %440 = vmatprep.subr.mxu0 0.0
    %441 = vmatpush2.msra.mxu0 0.0
    %442 = vmatprep.subr.mxu0 0.0
    %443 = vmatpush2.msra.mxu0 0.0
    %444 = vmatprep.subr.mxu0 0.0
    %445 = vmatpush2.msra.mxu0 0.0
    %446 = vmatprep.subr.mxu0 0.0
    %447 = vmatpush2.msra.mxu0 0.0
    %448 = vmatprep.subr.mxu0 0.0
    %449 = vmatpush2.msra.mxu0 0.0
    %450 = vmatprep.subr.mxu0 0.0
    %451 = vmatpush2.msra.mxu0 0.0
    %452 = vmatprep.subr.mxu0 0.0
    %453 = vmatpush2.msra.mxu0 0.0
    %454 = vmatprep.subr.mxu0 0.0
    %455 = vmatpush2.msra.mxu0 0.0
    %456 = vmatprep.subr.mxu0 0.0
    %457 = vmatpush2.msra.mxu0 0.0
    %458 = vmatprep.subr.mxu0 0.0
    %459 = vmatpush2.msra.mxu0 0.0
    %460 = vmatprep.subr.mxu0 0.0
    %461 = vmatpush2.msra.mxu0 0.0
    %462 = vmatprep.subr.mxu0 0.0
    %463 = vmatpush2.msra.mxu0 0.0
    %464 = vmatprep.subr.mxu0 0.0
    %465 = vmatpush2.msra.mxu0 0.0
    %466 = vmatprep.subr.mxu0 0.0
    %467 = vmatpush2.msra.mxu0 0.0
    %468 = vmatprep.mubr.f32.mxu0 0.0
    %469 = vmatmul.mubr.f32.gmra.mxu0 %v395
    %v470 = vpop.f32.mrf.mxu0
    %v471 = vadd.f32 %v391, %v470
    %v472 = vpop.f32.mrf.mxu0
    %473 = vmatprep.mubr.f32.mxu0 0.0
    %474 = vmatmul.mubr.f32.gmra.mxu0 %v398
    %v475 = vpop.f32.mrf.mxu0
    %v476 = vadd.f32 %v391, %v475
    %v477 = vpop.f32.mrf.mxu0
    %478 = vdwg.mxu0
    %v479 = vmax.f32 %v471, 0.0
    %v480 = vmax.f32 %v476, 0.0
    %v482 = vlaneseq
    %v483 = vshrl.u32 %v482, 7
    %v484 = vsub.s32 0, %v483
    %v485 = vrot.slane %v386, %v484
    %vm487 = vcmask 261120
    %v489 = vsel %vm487, %v479, 0
    %v492 = vsel %vm487, %v480, 0
    %494 = vmatprep.subr.mxu0 0.0
    %495 = vmatpush1.msra.mxu0 0.0
    %496 = vmatprep.subr.mxu0 0.0
    %497 = vmatpush1.msra.mxu0 0.0
    %498 = vmatprep.subr.mxu0 0.0
    %499 = vmatpush1.msra.mxu0 0.0
    %500 = vmatprep.subr.mxu0 0.0
    %501 = vmatpush1.msra.mxu0 0.0
    %502 = vmatprep.subr.mxu0 0.0
    %503 = vmatpush1.msra.mxu0 0.0
    %504 = vmatprep.subr.mxu0 0.0
    %505 = vmatpush1.msra.mxu0 0.0
    %506 = vmatprep.subr.mxu0 0.0
    %507 = vmatpush1.msra.mxu0 0.0
    %508 = vmatprep.subr.mxu0 0.0
    %509 = vmatpush1.msra.mxu0 0.0
    %510 = vmatprep.subr.mxu0 0.0
    %511 = vmatpush1.msra.mxu0 0.0
    %512 = vmatprep.subr.mxu0 0.0
    %513 = vmatpush1.msra.mxu0 0.0
    %514 = vmatprep.subr.mxu0 0.0
    %515 = vmatpush1.msra.mxu0 0.0
    %516 = vmatprep.subr.mxu0 0.0
    %517 = vmatpush1.msra.mxu0 0.0
    %518 = vmatprep.subr.mxu0 0.0
    %519 = vmatpush1.msra.mxu0 %v385
    %520 = vmatprep.subr.mxu0 0.0
    %521 = vmatpush1.msra.mxu0 %v384
    %522 = vmatprep.subr.mxu0 0.0
    %523 = vmatpush1.msra.mxu0 %v383
    %524 = vmatprep.subr.mxu0 0.0
    %525 = vmatpush1.msra.mxu0 %v382
    %526 = vmatprep.subr.mxu0 0.0
    %527 = vmatpush2.msra.mxu0 0.0
    %528 = vmatprep.subr.mxu0 0.0
    %529 = vmatpush2.msra.mxu0 0.0
    %530 = vmatprep.subr.mxu0 0.0
    %531 = vmatpush2.msra.mxu0 0.0
    %532 = vmatprep.subr.mxu0 0.0
    %533 = vmatpush2.msra.mxu0 0.0
    %534 = vmatprep.subr.mxu0 0.0
    %535 = vmatpush2.msra.mxu0 0.0
    %536 = vmatprep.subr.mxu0 0.0
    %537 = vmatpush2.msra.mxu0 0.0
    %538 = vmatprep.subr.mxu0 0.0
    %539 = vmatpush2.msra.mxu0 0.0
    %540 = vmatprep.subr.mxu0 0.0
    %541 = vmatpush2.msra.mxu0 0.0
    %542 = vmatprep.subr.mxu0 0.0
    %543 = vmatpush2.msra.mxu0 0.0
    %544 = vmatprep.subr.mxu0 0.0
    %545 = vmatpush2.msra.mxu0 0.0
    %546 = vmatprep.subr.mxu0 0.0
    %547 = vmatpush2.msra.mxu0 0.0
    %548 = vmatprep.subr.mxu0 0.0
    %549 = vmatpush2.msra.mxu0 0.0
    %550 = vmatprep.subr.mxu0 0.0
    %551 = vmatpush2.msra.mxu0 0.0
    %552 = vmatprep.subr.mxu0 0.0
    %553 = vmatpush2.msra.mxu0 0.0
    %554 = vmatprep.subr.mxu0 0.0
    %555 = vmatpush2.msra.mxu0 0.0
    %556 = vmatprep.subr.mxu0 0.0
    %557 = vmatpush2.msra.mxu0 0.0
    %558 = vmatprep.mubr.f32.mxu0 0.0
    %559 = vmatmul.mubr.f32.gmra.mxu0 %v489
    %v560 = vpop.f32.mrf.mxu0
    %v561 = vadd.f32 %v485, %v560
    %v562 = vpop.f32.mrf.mxu0
    %563 = vmatprep.mubr.f32.mxu0 0.0
    %564 = vmatmul.mubr.f32.gmra.mxu0 %v492
    %v565 = vpop.f32.mrf.mxu0
    %v566 = vadd.f32 %v485, %v565
    %v567 = vpop.f32.mrf.mxu0
    %568 = vdwg.mxu0
    %v570 = vsel %vm393, %v376, 0
    %v573 = vsel %vm393, %v377, 0
    %575 = vmatprep.subr.mxu0 0.0
    %576 = vmatpush1.msra.mxu0 0.0
    %577 = vmatprep.subr.mxu0 0.0
    %578 = vmatpush1.msra.mxu0 0.0
    %579 = vmatprep.subr.mxu0 0.0
    %580 = vmatpush1.msra.mxu0 0.0
    %581 = vmatprep.subr.mxu0 0.0
    %582 = vmatpush1.msra.mxu0 0.0
    %583 = vmatprep.subr.mxu0 0.0
    %584 = vmatpush1.msra.mxu0 0.0
    %585 = vmatprep.subr.mxu0 0.0
    %586 = vmatpush1.msra.mxu0 0.0
    %587 = vmatprep.subr.mxu0 0.0
    %588 = vmatpush1.msra.mxu0 0.0
    %589 = vmatprep.subr.mxu0 0.0
    %590 = vmatpush1.msra.mxu0 0.0
    %591 = vmatprep.subr.mxu0 0.0
    %592 = vmatpush1.msra.mxu0 0.0
    %593 = vmatprep.subr.mxu0 0.0
    %594 = vmatpush1.msra.mxu0 0.0
    %595 = vmatprep.subr.mxu0 0.0
    %596 = vmatpush1.msra.mxu0 0.0
    %597 = vmatprep.subr.mxu0 0.0
    %598 = vmatpush1.msra.mxu0 0.0
    %599 = vmatprep.subr.mxu0 0.0
    %600 = vmatpush1.msra.mxu0 0.0
    %601 = vmatprep.subr.mxu0 0.0
    %602 = vmatpush1.msra.mxu0 0.0
    %603 = vmatprep.subr.mxu0 0.0
    %604 = vmatpush1.msra.mxu0 0.0
    %605 = vmatprep.subr.mxu0 0.0
    %606 = vmatpush1.msra.mxu0 %v402
    %607 = vmatprep.subr.mxu0 0.0
    %608 = vmatpush2.msra.mxu0 0.0
    %609 = vmatprep.subr.mxu0 0.0
    %610 = vmatpush2.msra.mxu0 0.0
    %611 = vmatprep.subr.mxu0 0.0
    %612 = vmatpush2.msra.mxu0 0.0
    %613 = vmatprep.subr.mxu0 0.0
    %614 = vmatpush2.msra.mxu0 0.0
    %615 = vmatprep.subr.mxu0 0.0
    %616 = vmatpush2.msra.mxu0 0.0
    %617 = vmatprep.subr.mxu0 0.0
    %618 = vmatpush2.msra.mxu0 0.0
    %619 = vmatprep.subr.mxu0 0.0
    %620 = vmatpush2.msra.mxu0 0.0
    %621 = vmatprep.subr.mxu0 0.0
    %622 = vmatpush2.msra.mxu0 0.0
    %623 = vmatprep.subr.mxu0 0.0
    %624 = vmatpush2.msra.mxu0 0.0
    %625 = vmatprep.subr.mxu0 0.0
    %626 = vmatpush2.msra.mxu0 0.0
    %627 = vmatprep.subr.mxu0 0.0
    %628 = vmatpush2.msra.mxu0 0.0
    %629 = vmatprep.subr.mxu0 0.0
    %630 = vmatpush2.msra.mxu0 0.0
    %631 = vmatprep.subr.mxu0 0.0
    %632 = vmatpush2.msra.mxu0 0.0
    %633 = vmatprep.subr.mxu0 0.0
    %634 = vmatpush2.msra.mxu0 0.0
    %635 = vmatprep.subr.mxu0 0.0
    %636 = vmatpush2.msra.mxu0 0.0
    %637 = vmatprep.subr.mxu0 0.0
    %638 = vmatpush2.msra.mxu0 0.0
    %639 = vmatprep.mubr.f32.mxu0 0.0
    %640 = vmatmul.mubr.f32.gmra.mxu0 %v570
    %v641 = vpop.f32.mrf.mxu0
    %v642 = vadd.f32 %v391, %v641
    %v643 = vpop.f32.mrf.mxu0
    %644 = vmatprep.mubr.f32.mxu0 0.0
    %645 = vmatmul.mubr.f32.gmra.mxu0 %v573
    %v646 = vpop.f32.mrf.mxu0
    %v647 = vadd.f32 %v391, %v646
    %v648 = vpop.f32.mrf.mxu0
    %649 = vdwg.mxu0
    %v650 = vmax.f32 %v642, 0.0
    %v651 = vmax.f32 %v647, 0.0
    %v653 = vsel %vm487, %v650, 0
    %v656 = vsel %vm487, %v651, 0
    %658 = vmatprep.subr.mxu0 0.0
    %659 = vmatpush1.msra.mxu0 0.0
    %660 = vmatprep.subr.mxu0 0.0
    %661 = vmatpush1.msra.mxu0 0.0
    %662 = vmatprep.subr.mxu0 0.0
    %663 = vmatpush1.msra.mxu0 0.0
    %664 = vmatprep.subr.mxu0 0.0
    %665 = vmatpush1.msra.mxu0 0.0
    %666 = vmatprep.subr.mxu0 0.0
    %667 = vmatpush1.msra.mxu0 0.0
    %668 = vmatprep.subr.mxu0 0.0
    %669 = vmatpush1.msra.mxu0 0.0
    %670 = vmatprep.subr.mxu0 0.0
    %671 = vmatpush1.msra.mxu0 0.0
    %672 = vmatprep.subr.mxu0 0.0
    %673 = vmatpush1.msra.mxu0 0.0
    %674 = vmatprep.subr.mxu0 0.0
    %675 = vmatpush1.msra.mxu0 0.0
    %676 = vmatprep.subr.mxu0 0.0
    %677 = vmatpush1.msra.mxu0 0.0
    %678 = vmatprep.subr.mxu0 0.0
    %679 = vmatpush1.msra.mxu0 0.0
    %680 = vmatprep.subr.mxu0 0.0
    %681 = vmatpush1.msra.mxu0 0.0
    %682 = vmatprep.subr.mxu0 0.0
    %683 = vmatpush1.msra.mxu0 %v385
    %684 = vmatprep.subr.mxu0 0.0
    %685 = vmatpush1.msra.mxu0 %v384
    %686 = vmatprep.subr.mxu0 0.0
    %687 = vmatpush1.msra.mxu0 %v383
    %688 = vmatprep.subr.mxu0 0.0
    %689 = vmatpush1.msra.mxu0 %v382
    %690 = vmatprep.subr.mxu0 0.0
    %691 = vmatpush2.msra.mxu0 0.0
    %692 = vmatprep.subr.mxu0 0.0
    %693 = vmatpush2.msra.mxu0 0.0
    %694 = vmatprep.subr.mxu0 0.0
    %695 = vmatpush2.msra.mxu0 0.0
    %696 = vmatprep.subr.mxu0 0.0
    %697 = vmatpush2.msra.mxu0 0.0
    %698 = vmatprep.subr.mxu0 0.0
    %699 = vmatpush2.msra.mxu0 0.0
    %700 = vmatprep.subr.mxu0 0.0
    %701 = vmatpush2.msra.mxu0 0.0
    %702 = vmatprep.subr.mxu0 0.0
    %703 = vmatpush2.msra.mxu0 0.0
    %704 = vmatprep.subr.mxu0 0.0
    %705 = vmatpush2.msra.mxu0 0.0
    %706 = vmatprep.subr.mxu0 0.0
    %707 = vmatpush2.msra.mxu0 0.0
    %708 = vmatprep.subr.mxu0 0.0
    %709 = vmatpush2.msra.mxu0 0.0
    %710 = vmatprep.subr.mxu0 0.0
    %711 = vmatpush2.msra.mxu0 0.0
    %712 = vmatprep.subr.mxu0 0.0
    %713 = vmatpush2.msra.mxu0 0.0
    %714 = vmatprep.subr.mxu0 0.0
    %715 = vmatpush2.msra.mxu0 0.0
    %716 = vmatprep.subr.mxu0 0.0
    %717 = vmatpush2.msra.mxu0 0.0
    %718 = vmatprep.subr.mxu0 0.0
    %719 = vmatpush2.msra.mxu0 0.0
    %720 = vmatprep.subr.mxu0 0.0
    %721 = vmatpush2.msra.mxu0 0.0
    %722 = vmatprep.mubr.f32.mxu0 0.0
    %723 = vmatmul.mubr.f32.gmra.mxu0 %v653
    %v724 = vpop.f32.mrf.mxu0
    %v725 = vadd.f32 %v485, %v724
    %v726 = vpop.f32.mrf.mxu0
    %727 = vmatprep.mubr.f32.mxu0 0.0
    %728 = vmatmul.mubr.f32.gmra.mxu0 %v656
    %v729 = vpop.f32.mrf.mxu0
    %v730 = vadd.f32 %v485, %v729
    %v731 = vpop.f32.mrf.mxu0
    %732 = vdwg.mxu0
    %v733 = vld [vmem:[%s17] sm:$0x3]
    %v734 = vld [vmem:[%s19] sm:$0x1]
    %vm735 = vcmask 7168
    %v737 = vsel %vm735, %v378, 0
    %v740 = vsel %vm735, %v379, 0
    %vm742 = vcmask 1040384
    %v744 = vsel %vm742, %v734, 0
    %746 = vmatprep.subr.mxu0 0.0
    %747 = vmatpush1.msra.mxu0 0.0
    %748 = vmatprep.subr.mxu0 0.0
    %749 = vmatpush1.msra.mxu0 0.0
    %750 = vmatprep.subr.mxu0 0.0
    %751 = vmatpush1.msra.mxu0 0.0
    %752 = vmatprep.subr.mxu0 0.0
    %753 = vmatpush1.msra.mxu0 0.0
    %754 = vmatprep.subr.mxu0 0.0
    %755 = vmatpush1.msra.mxu0 0.0
    %756 = vmatprep.subr.mxu0 0.0
    %757 = vmatpush1.msra.mxu0 0.0
    %758 = vmatprep.subr.mxu0 0.0
    %759 = vmatpush1.msra.mxu0 0.0
    %760 = vmatprep.subr.mxu0 0.0
    %761 = vmatpush1.msra.mxu0 0.0
    %762 = vmatprep.subr.mxu0 0.0
    %763 = vmatpush1.msra.mxu0 0.0
    %764 = vmatprep.subr.mxu0 0.0
    %765 = vmatpush1.msra.mxu0 0.0
    %766 = vmatprep.subr.mxu0 0.0
    %767 = vmatpush1.msra.mxu0 0.0
    %768 = vmatprep.subr.mxu0 0.0
    %769 = vmatpush1.msra.mxu0 0.0
    %770 = vmatprep.subr.mxu0 0.0
    %771 = vmatpush1.msra.mxu0 0.0
    %772 = vmatprep.subr.mxu0 0.0
    %773 = vmatpush1.msra.mxu0 0.0
    %774 = vmatprep.subr.mxu0 0.0
    %775 = vmatpush1.msra.mxu0 0.0
    %776 = vmatprep.subr.mxu0 0.0
    %777 = vmatpush1.msra.mxu0 %v744
    %778 = vmatprep.subr.mxu0 0.0
    %779 = vmatpush2.msra.mxu0 0.0
    %780 = vmatprep.subr.mxu0 0.0
    %781 = vmatpush2.msra.mxu0 0.0
    %782 = vmatprep.subr.mxu0 0.0
    %783 = vmatpush2.msra.mxu0 0.0
    %784 = vmatprep.subr.mxu0 0.0
    %785 = vmatpush2.msra.mxu0 0.0
    %786 = vmatprep.subr.mxu0 0.0
    %787 = vmatpush2.msra.mxu0 0.0
    %788 = vmatprep.subr.mxu0 0.0
    %789 = vmatpush2.msra.mxu0 0.0
    %790 = vmatprep.subr.mxu0 0.0
    %791 = vmatpush2.msra.mxu0 0.0
    %792 = vmatprep.subr.mxu0 0.0
    %793 = vmatpush2.msra.mxu0 0.0
    %794 = vmatprep.subr.mxu0 0.0
    %795 = vmatpush2.msra.mxu0 0.0
    %796 = vmatprep.subr.mxu0 0.0
    %797 = vmatpush2.msra.mxu0 0.0
    %798 = vmatprep.subr.mxu0 0.0
    %799 = vmatpush2.msra.mxu0 0.0
    %800 = vmatprep.subr.mxu0 0.0
    %801 = vmatpush2.msra.mxu0 0.0
    %802 = vmatprep.subr.mxu0 0.0
    %803 = vmatpush2.msra.mxu0 0.0
    %804 = vmatprep.subr.mxu0 0.0
    %805 = vmatpush2.msra.mxu0 0.0
    %806 = vmatprep.subr.mxu0 0.0
    %807 = vmatpush2.msra.mxu0 0.0
    %808 = vmatprep.subr.mxu0 0.0
    %809 = vmatpush2.msra.mxu0 0.0
    %810 = vmatprep.mubr.f32.mxu0 0.0
    %811 = vmatmul.mubr.f32.gmra.mxu0 %v737
    %v812 = vpop.f32.mrf.mxu0
    %v813 = vadd.f32 0.0, %v812
    %v814 = vpop.f32.mrf.mxu0
    %815 = vmatprep.mubr.f32.mxu0 0.0
    %816 = vmatmul.mubr.f32.gmra.mxu0 %v740
    %v817 = vpop.f32.mrf.mxu0
    %v818 = vadd.f32 0.0, %v817
    %v819 = vpop.f32.mrf.mxu0
    %820 = vdwg.mxu0
    %v822 = vsel %vm400, %v733, 0
    %824 = vmatprep.subr.mxu0 0.0
    %825 = vmatpush1.msra.mxu0 0.0
    %826 = vmatprep.subr.mxu0 0.0
    %827 = vmatpush1.msra.mxu0 0.0
    %828 = vmatprep.subr.mxu0 0.0
    %829 = vmatpush1.msra.mxu0 0.0
    %830 = vmatprep.subr.mxu0 0.0
    %831 = vmatpush1.msra.mxu0 0.0
    %832 = vmatprep.subr.mxu0 0.0
    %833 = vmatpush1.msra.mxu0 0.0
    %834 = vmatprep.subr.mxu0 0.0
    %835 = vmatpush1.msra.mxu0 0.0
    %836 = vmatprep.subr.mxu0 0.0
    %837 = vmatpush1.msra.mxu0 0.0
    %838 = vmatprep.subr.mxu0 0.0
    %839 = vmatpush1.msra.mxu0 0.0
    %840 = vmatprep.subr.mxu0 0.0
    %841 = vmatpush1.msra.mxu0 0.0
    %842 = vmatprep.subr.mxu0 0.0
    %843 = vmatpush1.msra.mxu0 0.0
    %844 = vmatprep.subr.mxu0 0.0
    %845 = vmatpush1.msra.mxu0 0.0
    %846 = vmatprep.subr.mxu0 0.0
    %847 = vmatpush1.msra.mxu0 0.0
    %848 = vmatprep.subr.mxu0 0.0
    %849 = vmatpush1.msra.mxu0 0.0
    %850 = vmatprep.subr.mxu0 0.0
    %851 = vmatpush1.msra.mxu0 0.0
    %852 = vmatprep.subr.mxu0 0.0
    %853 = vmatpush1.msra.mxu0 0.0
    %854 = vmatprep.subr.mxu0 0.0
    %855 = vmatpush1.msra.mxu0 %v822
    %856 = vmatprep.subr.mxu0 0.0
    %857 = vmatpush2.msra.mxu0 0.0
    %858 = vmatprep.subr.mxu0 0.0
    %859 = vmatpush2.msra.mxu0 0.0
    %860 = vmatprep.subr.mxu0 0.0
    %861 = vmatpush2.msra.mxu0 0.0
    %862 = vmatprep.subr.mxu0 0.0
    %863 = vmatpush2.msra.mxu0 0.0
    %864 = vmatprep.subr.mxu0 0.0
    %865 = vmatpush2.msra.mxu0 0.0
    %866 = vmatprep.subr.mxu0 0.0
    %867 = vmatpush2.msra.mxu0 0.0
    %868 = vmatprep.subr.mxu0 0.0
    %869 = vmatpush2.msra.mxu0 0.0
    %870 = vmatprep.subr.mxu0 0.0
    %871 = vmatpush2.msra.mxu0 0.0
    %872 = vmatprep.subr.mxu0 0.0
    %873 = vmatpush2.msra.mxu0 0.0
    %874 = vmatprep.subr.mxu0 0.0
    %875 = vmatpush2.msra.mxu0 0.0
    %876 = vmatprep.subr.mxu0 0.0
    %877 = vmatpush2.msra.mxu0 0.0
    %878 = vmatprep.subr.mxu0 0.0
    %879 = vmatpush2.msra.mxu0 0.0
    %880 = vmatprep.subr.mxu0 0.0
    %881 = vmatpush2.msra.mxu0 0.0
    %882 = vmatprep.subr.mxu0 0.0
    %883 = vmatpush2.msra.mxu0 0.0
    %884 = vmatprep.subr.mxu0 0.0
    %885 = vmatpush2.msra.mxu0 0.0
    %886 = vmatprep.subr.mxu0 0.0
    %887 = vmatpush2.msra.mxu0 0.0
    %888 = vmatprep.mubr.f32.mxu0 0.0
    %889 = vmatmul.mubr.f32.gmra.mxu0 %v570
    %v890 = vpop.f32.mrf.mxu0
    %v891 = vadd.f32 %v813, %v890
    %v892 = vpop.f32.mrf.mxu0
    %893 = vmatprep.mubr.f32.mxu0 0.0
    %894 = vmatmul.mubr.f32.gmra.mxu0 %v573
    %v895 = vpop.f32.mrf.mxu0
    %v896 = vadd.f32 %v818, %v895
    %v897 = vpop.f32.mrf.mxu0
    %898 = vdwg.mxu0
    %v899 = vld [vmem:[%s21] sm:$0x1]
    %v901 = vlaneseq
    %v902 = vshrl.u32 %v901, 7
    %v903 = vsub.s32 0, %v902
    %v904 = vrot.slane %v899, %v903
    %v906 = vadd.f32 %v891, %v904
    %v907 = vadd.f32 %v896, %v904
    %v908 = vmax.f32 %v906, 0.0
    %v909 = vmax.f32 %v907, 0.0
    %v910 = vld [vmem:[%s23] sm:$0xff]
    %v911 = vld [vmem:[%s23 + $0x8] sm:$0xff]
    %v912 = vld [vmem:[%s23 + $0x10] sm:$0xff]
    %v913 = vld [vmem:[%s23 + $0x18] sm:$0xff]
    %v914 = vld [vmem:[#allocation8] sm:$0x1]
    %v916 = vlaneseq
    %v917 = vshrl.u32 %v916, 7
    %v918 = vsub.s32 0, %v917
    %v919 = vrot.slane %v914, %v918
    %v922 = vsel %vm487, %v908, 0
    %v925 = vsel %vm487, %v909, 0
    %927 = vmatprep.subr.mxu0 0.0
    %928 = vmatpush1.msra.mxu0 0.0
    %929 = vmatprep.subr.mxu0 0.0
    %930 = vmatpush1.msra.mxu0 0.0
    %931 = vmatprep.subr.mxu0 0.0
    %932 = vmatpush1.msra.mxu0 0.0
    %933 = vmatprep.subr.mxu0 0.0
    %934 = vmatpush1.msra.mxu0 0.0
    %935 = vmatprep.subr.mxu0 0.0
    %936 = vmatpush1.msra.mxu0 0.0
    %937 = vmatprep.subr.mxu0 0.0
    %938 = vmatpush1.msra.mxu0 0.0
    %939 = vmatprep.subr.mxu0 0.0
    %940 = vmatpush1.msra.mxu0 0.0
    %941 = vmatprep.subr.mxu0 0.0
    %942 = vmatpush1.msra.mxu0 0.0
    %943 = vmatprep.subr.mxu0 0.0
    %944 = vmatpush1.msra.mxu0 0.0
    %945 = vmatprep.subr.mxu0 0.0
    %946 = vmatpush1.msra.mxu0 0.0
    %947 = vmatprep.subr.mxu0 0.0
    %948 = vmatpush1.msra.mxu0 0.0
    %949 = vmatprep.subr.mxu0 0.0
    %950 = vmatpush1.msra.mxu0 0.0
    %951 = vmatprep.subr.mxu0 0.0
    %952 = vmatpush1.msra.mxu0 %v913
    %953 = vmatprep.subr.mxu0 0.0
    %954 = vmatpush1.msra.mxu0 %v912
    %955 = vmatprep.subr.mxu0 0.0
    %956 = vmatpush1.msra.mxu0 %v911
    %957 = vmatprep.subr.mxu0 0.0
    %958 = vmatpush1.msra.mxu0 %v910
    %959 = vmatprep.subr.mxu0 0.0
    %960 = vmatpush2.msra.mxu0 0.0
    %961 = vmatprep.subr.mxu0 0.0
    %962 = vmatpush2.msra.mxu0 0.0
    %963 = vmatprep.subr.mxu0 0.0
    %964 = vmatpush2.msra.mxu0 0.0
    %965 = vmatprep.subr.mxu0 0.0
    %966 = vmatpush2.msra.mxu0 0.0
    %967 = vmatprep.subr.mxu0 0.0
    %968 = vmatpush2.msra.mxu0 0.0
    %969 = vmatprep.subr.mxu0 0.0
    %970 = vmatpush2.msra.mxu0 0.0
    %971 = vmatprep.subr.mxu0 0.0
    %972 = vmatpush2.msra.mxu0 0.0
    %973 = vmatprep.subr.mxu0 0.0
    %974 = vmatpush2.msra.mxu0 0.0
    %975 = vmatprep.subr.mxu0 0.0
    %976 = vmatpush2.msra.mxu0 0.0
    %977 = vmatprep.subr.mxu0 0.0
    %978 = vmatpush2.msra.mxu0 0.0
    %979 = vmatprep.subr.mxu0 0.0
    %980 = vmatpush2.msra.mxu0 0.0
    %981 = vmatprep.subr.mxu0 0.0
    %982 = vmatpush2.msra.mxu0 0.0
    %983 = vmatprep.subr.mxu0 0.0
    %984 = vmatpush2.msra.mxu0 0.0
    %985 = vmatprep.subr.mxu0 0.0
    %986 = vmatpush2.msra.mxu0 0.0
    %987 = vmatprep.subr.mxu0 0.0
    %988 = vmatpush2.msra.mxu0 0.0
    %989 = vmatprep.subr.mxu0 0.0
    %990 = vmatpush2.msra.mxu0 0.0
    %991 = vmatprep.mubr.f32.mxu0 0.0
    %992 = vmatmul.mubr.f32.gmra.mxu0 %v922
    %v993 = vpop.f32.mrf.mxu0
    %v994 = vadd.f32 %v919, %v993
    %v995 = vpop.f32.mrf.mxu0
    %996 = vmatprep.mubr.f32.mxu0 0.0
    %997 = vmatmul.mubr.f32.gmra.mxu0 %v925
    %v998 = vpop.f32.mrf.mxu0
    %v999 = vadd.f32 %v919, %v998
    %v1000 = vpop.f32.mrf.mxu0
    %1001 = vdwg.mxu0
    %v1002 = vld [vmem:[%s27] sm:$0xff]
    %v1003 = vld [vmem:[%s27 + $0x8] sm:$0xff]
    %v1004 = vld [vmem:[%s27 + $0x10] sm:$0xff]
    %v1005 = vld [vmem:[%s27 + $0x18] sm:$0xff]
    %v1006 = vld [vmem:[%s29] sm:$0xff]
    %v1007 = vld [vmem:[%s29 + $0x8] sm:$0xff]
    %v1008 = vld [vmem:[%s29 + $0x10] sm:$0xff]
    %v1009 = vld [vmem:[%s29 + $0x18] sm:$0xff]
    %v1010 = vld [vmem:[#allocation10] sm:$0xff]
    %v1011 = vld [vmem:[#allocation10 + $0x8] sm:$0xff]
    %v1012 = vld [vmem:[#allocation10 + $0x10] sm:$0xff]
    %v1013 = vld [vmem:[#allocation10 + $0x18] sm:$0xff]
    %v1014 = vld [vmem:[#allocation11] sm:$0xff]
    %v1015 = vld [vmem:[#allocation11 + $0x8] sm:$0xff]
    %v1016 = vld [vmem:[#allocation11 + $0x10] sm:$0xff]
    %v1017 = vld [vmem:[#allocation11 + $0x18] sm:$0xff]
    %v1018 = vld [vmem:[#allocation13] sm:$0x1]
    %v1019 = vld [vmem:[#allocation14] sm:$0x1]
    %v1020 = vld [vmem:[#allocation16] sm:$0x1]
    %v1021 = vld [vmem:[#allocation17] sm:$0x1]
    %v1022 = vld [vmem:[#allocation19] sm:$0x1]
    %v1024 = vsel %vm487, %v994, 0
    %v1027 = vsel %vm487, %v999, 0
    %1029 = vmatprep.subr.mxu0 0.0
    %1030 = vmatpush1.msra.mxu0 0.0
    %1031 = vmatprep.subr.mxu0 0.0
    %1032 = vmatpush1.msra.mxu0 0.0
    %1033 = vmatprep.subr.mxu0 0.0
    %1034 = vmatpush1.msra.mxu0 0.0
    %1035 = vmatprep.subr.mxu0 0.0
    %1036 = vmatpush1.msra.mxu0 0.0
    %1037 = vmatprep.subr.mxu0 0.0
    %1038 = vmatpush1.msra.mxu0 0.0
    %1039 = vmatprep.subr.mxu0 0.0
    %1040 = vmatpush1.msra.mxu0 0.0
    %1041 = vmatprep.subr.mxu0 0.0
    %1042 = vmatpush1.msra.mxu0 0.0
    %1043 = vmatprep.subr.mxu0 0.0
    %1044 = vmatpush1.msra.mxu0 0.0
    %1045 = vmatprep.subr.mxu0 0.0
    %1046 = vmatpush1.msra.mxu0 0.0
    %1047 = vmatprep.subr.mxu0 0.0
    %1048 = vmatpush1.msra.mxu0 0.0
    %1049 = vmatprep.subr.mxu0 0.0
    %1050 = vmatpush1.msra.mxu0 0.0
    %1051 = vmatprep.subr.mxu0 0.0
    %1052 = vmatpush1.msra.mxu0 0.0
    %1053 = vmatprep.subr.mxu0 0.0
    %1054 = vmatpush1.msra.mxu0 %v1005
    %1055 = vmatprep.subr.mxu0 0.0
    %1056 = vmatpush1.msra.mxu0 %v1004
    %1057 = vmatprep.subr.mxu0 0.0
    %1058 = vmatpush1.msra.mxu0 %v1003
    %1059 = vmatprep.subr.mxu0 0.0
    %1060 = vmatpush1.msra.mxu0 %v1002
    %1061 = vmatprep.subr.mxu0 0.0
    %1062 = vmatpush2.msra.mxu0 0.0
    %1063 = vmatprep.subr.mxu0 0.0
    %1064 = vmatpush2.msra.mxu0 0.0
    %1065 = vmatprep.subr.mxu0 0.0
    %1066 = vmatpush2.msra.mxu0 0.0
    %1067 = vmatprep.subr.mxu0 0.0
    %1068 = vmatpush2.msra.mxu0 0.0
    %1069 = vmatprep.subr.mxu0 0.0
    %1070 = vmatpush2.msra.mxu0 0.0
    %1071 = vmatprep.subr.mxu0 0.0
    %1072 = vmatpush2.msra.mxu0 0.0
    %1073 = vmatprep.subr.mxu0 0.0
    %1074 = vmatpush2.msra.mxu0 0.0
    %1075 = vmatprep.subr.mxu0 0.0
    %1076 = vmatpush2.msra.mxu0 0.0
    %1077 = vmatprep.subr.mxu0 0.0
    %1078 = vmatpush2.msra.mxu0 0.0
    %1079 = vmatprep.subr.mxu0 0.0
    %1080 = vmatpush2.msra.mxu0 0.0
    %1081 = vmatprep.subr.mxu0 0.0
    %1082 = vmatpush2.msra.mxu0 0.0
    %1083 = vmatprep.subr.mxu0 0.0
    %1084 = vmatpush2.msra.mxu0 0.0
    %1085 = vmatprep.subr.mxu0 0.0
    %1086 = vmatpush2.msra.mxu0 0.0
    %1087 = vmatprep.subr.mxu0 0.0
    %1088 = vmatpush2.msra.mxu0 0.0
    %1089 = vmatprep.subr.mxu0 0.0
    %1090 = vmatpush2.msra.mxu0 0.0
    %1091 = vmatprep.subr.mxu0 0.0
    %1092 = vmatpush2.msra.mxu0 0.0
    %1093 = vmatprep.mubr.f32.mxu0 0.0
    %1094 = vmatmul.mubr.f32.gmra.mxu0 %v1024
    %v1095 = vpop.f32.mrf.mxu0
    %v1096 = vadd.f32 0.0, %v1095
    %v1097 = vpop.f32.mrf.mxu0
    %1098 = vmatprep.mubr.f32.mxu0 0.0
    %1099 = vmatmul.mubr.f32.gmra.mxu0 %v1027
    %v1100 = vpop.f32.mrf.mxu0
    %v1101 = vadd.f32 0.0, %v1100
    %v1102 = vpop.f32.mrf.mxu0
    %1103 = vdwg.mxu0
    %1104 = vmatprep.subr.mxu0 0.0
    %1105 = vmatpush1.msra.mxu0 0.0
    %1106 = vmatprep.subr.mxu0 0.0
    %1107 = vmatpush1.msra.mxu0 0.0
    %1108 = vmatprep.subr.mxu0 0.0
    %1109 = vmatpush1.msra.mxu0 0.0
    %1110 = vmatprep.subr.mxu0 0.0
    %1111 = vmatpush1.msra.mxu0 0.0
    %1112 = vmatprep.subr.mxu0 0.0
    %1113 = vmatpush1.msra.mxu0 0.0
    %1114 = vmatprep.subr.mxu0 0.0
    %1115 = vmatpush1.msra.mxu0 0.0
    %1116 = vmatprep.subr.mxu0 0.0
    %1117 = vmatpush1.msra.mxu0 0.0
    %1118 = vmatprep.subr.mxu0 0.0
    %1119 = vmatpush1.msra.mxu0 0.0
    %1120 = vmatprep.subr.mxu0 0.0
    %1121 = vmatpush1.msra.mxu0 0.0
    %1122 = vmatprep.subr.mxu0 0.0
    %1123 = vmatpush1.msra.mxu0 0.0
    %1124 = vmatprep.subr.mxu0 0.0
    %1125 = vmatpush1.msra.mxu0 0.0
    %1126 = vmatprep.subr.mxu0 0.0
    %1127 = vmatpush1.msra.mxu0 0.0
    %1128 = vmatprep.subr.mxu0 0.0
    %1129 = vmatpush1.msra.mxu0 %v1009
    %1130 = vmatprep.subr.mxu0 0.0
    %1131 = vmatpush1.msra.mxu0 %v1008
    %1132 = vmatprep.subr.mxu0 0.0
    %1133 = vmatpush1.msra.mxu0 %v1007
    %1134 = vmatprep.subr.mxu0 0.0
    %1135 = vmatpush1.msra.mxu0 %v1006
    %1136 = vmatprep.subr.mxu0 0.0
    %1137 = vmatpush2.msra.mxu0 0.0
    %1138 = vmatprep.subr.mxu0 0.0
    %1139 = vmatpush2.msra.mxu0 0.0
    %1140 = vmatprep.subr.mxu0 0.0
    %1141 = vmatpush2.msra.mxu0 0.0
    %1142 = vmatprep.subr.mxu0 0.0
    %1143 = vmatpush2.msra.mxu0 0.0
    %1144 = vmatprep.subr.mxu0 0.0
    %1145 = vmatpush2.msra.mxu0 0.0
    %1146 = vmatprep.subr.mxu0 0.0
    %1147 = vmatpush2.msra.mxu0 0.0
    %1148 = vmatprep.subr.mxu0 0.0
    %1149 = vmatpush2.msra.mxu0 0.0
    %1150 = vmatprep.subr.mxu0 0.0
    %1151 = vmatpush2.msra.mxu0 0.0
    %1152 = vmatprep.subr.mxu0 0.0
    %1153 = vmatpush2.msra.mxu0 0.0
    %1154 = vmatprep.subr.mxu0 0.0
    %1155 = vmatpush2.msra.mxu0 0.0
    %1156 = vmatprep.subr.mxu0 0.0
    %1157 = vmatpush2.msra.mxu0 0.0
    %1158 = vmatprep.subr.mxu0 0.0
    %1159 = vmatpush2.msra.mxu0 0.0
    %1160 = vmatprep.subr.mxu0 0.0
    %1161 = vmatpush2.msra.mxu0 0.0
    %1162 = vmatprep.subr.mxu0 0.0
    %1163 = vmatpush2.msra.mxu0 0.0
    %1164 = vmatprep.subr.mxu0 0.0
    %1165 = vmatpush2.msra.mxu0 0.0
    %1166 = vmatprep.subr.mxu0 0.0
    %1167 = vmatpush2.msra.mxu0 0.0
    %1168 = vmatprep.mubr.f32.mxu0 0.0
    %1169 = vmatmul.mubr.f32.gmra.mxu0 %v1024
    %v1170 = vpop.f32.mrf.mxu0
    %v1171 = vadd.f32 0.0, %v1170
    %v1172 = vpop.f32.mrf.mxu0
    %1173 = vmatprep.mubr.f32.mxu0 0.0
    %1174 = vmatmul.mubr.f32.gmra.mxu0 %v1027
    %v1175 = vpop.f32.mrf.mxu0
    %v1176 = vadd.f32 0.0, %v1175
    %v1177 = vpop.f32.mrf.mxu0
    %1178 = vdwg.mxu0
    %1179 = vmatprep.subr.mxu0 0.0
    %1180 = vmatpush1.msra.mxu0 0.0
    %1181 = vmatprep.subr.mxu0 0.0
    %1182 = vmatpush1.msra.mxu0 0.0
    %1183 = vmatprep.subr.mxu0 0.0
    %1184 = vmatpush1.msra.mxu0 0.0
    %1185 = vmatprep.subr.mxu0 0.0
    %1186 = vmatpush1.msra.mxu0 0.0
    %1187 = vmatprep.subr.mxu0 0.0
    %1188 = vmatpush1.msra.mxu0 0.0
    %1189 = vmatprep.subr.mxu0 0.0
    %1190 = vmatpush1.msra.mxu0 0.0
    %1191 = vmatprep.subr.mxu0 0.0
    %1192 = vmatpush1.msra.mxu0 0.0
    %1193 = vmatprep.subr.mxu0 0.0
    %1194 = vmatpush1.msra.mxu0 0.0
    %1195 = vmatprep.subr.mxu0 0.0
    %1196 = vmatpush1.msra.mxu0 0.0
    %1197 = vmatprep.subr.mxu0 0.0
    %1198 = vmatpush1.msra.mxu0 0.0
    %1199 = vmatprep.subr.mxu0 0.0
    %1200 = vmatpush1.msra.mxu0 0.0
    %1201 = vmatprep.subr.mxu0 0.0
    %1202 = vmatpush1.msra.mxu0 0.0
    %1203 = vmatprep.subr.mxu0 0.0
    %1204 = vmatpush1.msra.mxu0 %v1013
    %1205 = vmatprep.subr.mxu0 0.0
    %1206 = vmatpush1.msra.mxu0 %v1012
    %1207 = vmatprep.subr.mxu0 0.0
    %1208 = vmatpush1.msra.mxu0 %v1011
    %1209 = vmatprep.subr.mxu0 0.0
    %1210 = vmatpush1.msra.mxu0 %v1010
    %1211 = vmatprep.subr.mxu0 0.0
    %1212 = vmatpush2.msra.mxu0 0.0
    %1213 = vmatprep.subr.mxu0 0.0
    %1214 = vmatpush2.msra.mxu0 0.0
    %1215 = vmatprep.subr.mxu0 0.0
    %1216 = vmatpush2.msra.mxu0 0.0
    %1217 = vmatprep.subr.mxu0 0.0
    %1218 = vmatpush2.msra.mxu0 0.0
    %1219 = vmatprep.subr.mxu0 0.0
    %1220 = vmatpush2.msra.mxu0 0.0
    %1221 = vmatprep.subr.mxu0 0.0
    %1222 = vmatpush2.msra.mxu0 0.0
    %1223 = vmatprep.subr.mxu0 0.0
    %1224 = vmatpush2.msra.mxu0 0.0
    %1225 = vmatprep.subr.mxu0 0.0
    %1226 = vmatpush2.msra.mxu0 0.0
    %1227 = vmatprep.subr.mxu0 0.0
    %1228 = vmatpush2.msra.mxu0 0.0
    %1229 = vmatprep.subr.mxu0 0.0
    %1230 = vmatpush2.msra.mxu0 0.0
    %1231 = vmatprep.subr.mxu0 0.0
    %1232 = vmatpush2.msra.mxu0 0.0
    %1233 = vmatprep.subr.mxu0 0.0
    %1234 = vmatpush2.msra.mxu0 0.0
    %1235 = vmatprep.subr.mxu0 0.0
    %1236 = vmatpush2.msra.mxu0 0.0
    %1237 = vmatprep.subr.mxu0 0.0
    %1238 = vmatpush2.msra.mxu0 0.0
    %1239 = vmatprep.subr.mxu0 0.0
    %1240 = vmatpush2.msra.mxu0 0.0
    %1241 = vmatprep.subr.mxu0 0.0
    %1242 = vmatpush2.msra.mxu0 0.0
    %1243 = vmatprep.mubr.f32.mxu0 0.0
    %1244 = vmatmul.mubr.f32.gmra.mxu0 %v1024
    %v1245 = vpop.f32.mrf.mxu0
    %v1246 = vadd.f32 0.0, %v1245
    %v1247 = vpop.f32.mrf.mxu0
    %1248 = vmatprep.mubr.f32.mxu0 0.0
    %1249 = vmatmul.mubr.f32.gmra.mxu0 %v1027
    %v1250 = vpop.f32.mrf.mxu0
    %v1251 = vadd.f32 0.0, %v1250
    %v1252 = vpop.f32.mrf.mxu0
    %1253 = vdwg.mxu0
    %1255 = vrot.lane.b32.xlu0 %v1096, 124
    %v1256 = vpop.permute.xlu0 %1255
    %1257 = vrot.lane.b32.xlu0 %v1096, 120
    %v1258 = vpop.permute.xlu0 %1257
    %1259 = vrot.lane.b32.xlu0 %v1096, 116
    %v1260 = vpop.permute.xlu0 %1259
    %1261 = vrot.lane.b32.xlu0 %v1096, 112
    %v1262 = vpop.permute.xlu0 %1261
    %1263 = vrot.lane.b32.xlu0 %v1096, 108
    %v1264 = vpop.permute.xlu0 %1263
    %1265 = vrot.lane.b32.xlu0 %v1096, 104
    %v1266 = vpop.permute.xlu0 %1265
    %1267 = vrot.lane.b32.xlu0 %v1096, 100
    %v1268 = vpop.permute.xlu0 %1267
    %1270 = vrot.lane.b32.xlu0 %v1101, 124
    %v1271 = vpop.permute.xlu0 %1270
    %1272 = vrot.lane.b32.xlu0 %v1101, 120
    %v1273 = vpop.permute.xlu0 %1272
    %1274 = vrot.lane.b32.xlu0 %v1101, 116
    %v1275 = vpop.permute.xlu0 %1274
    %1276 = vrot.lane.b32.xlu0 %v1101, 112
    %v1277 = vpop.permute.xlu0 %1276
    %1278 = vrot.lane.b32.xlu0 %v1101, 108
    %v1279 = vpop.permute.xlu0 %1278
    %1280 = vrot.lane.b32.xlu0 %v1101, 104
    %v1281 = vpop.permute.xlu0 %1280
    %1282 = vrot.lane.b32.xlu0 %v1101, 100
    %v1283 = vpop.permute.xlu0 %1282
    %1285 = vrot.lane.b32.xlu0 %v1171, 124
    %v1286 = vpop.permute.xlu0 %1285
    %1287 = vrot.lane.b32.xlu0 %v1171, 120
    %v1288 = vpop.permute.xlu0 %1287
    %1289 = vrot.lane.b32.xlu0 %v1171, 116
    %v1290 = vpop.permute.xlu0 %1289
    %1291 = vrot.lane.b32.xlu0 %v1171, 112
    %v1292 = vpop.permute.xlu0 %1291
    %1293 = vrot.lane.b32.xlu0 %v1171, 108
    %v1294 = vpop.permute.xlu0 %1293
    %1295 = vrot.lane.b32.xlu0 %v1171, 104
    %v1296 = vpop.permute.xlu0 %1295
    %1297 = vrot.lane.b32.xlu0 %v1171, 100
    %v1298 = vpop.permute.xlu0 %1297
    %1300 = vrot.lane.b32.xlu0 %v1176, 124
    %v1301 = vpop.permute.xlu0 %1300
    %1302 = vrot.lane.b32.xlu0 %v1176, 120
    %v1303 = vpop.permute.xlu0 %1302
    %1304 = vrot.lane.b32.xlu0 %v1176, 116
    %v1305 = vpop.permute.xlu0 %1304
    %1306 = vrot.lane.b32.xlu0 %v1176, 112
    %v1307 = vpop.permute.xlu0 %1306
    %1308 = vrot.lane.b32.xlu0 %v1176, 108
    %v1309 = vpop.permute.xlu0 %1308
    %1310 = vrot.lane.b32.xlu0 %v1176, 104
    %v1311 = vpop.permute.xlu0 %1310
    %1312 = vrot.lane.b32.xlu0 %v1176, 100
    %v1313 = vpop.permute.xlu0 %1312
    %1315 = vrot.lane.b32.xlu0 %v1246, 124
    %v1316 = vpop.permute.xlu0 %1315
    %1318 = vrot.lane.b32.xlu0 %v1246, 120
    %v1319 = vpop.permute.xlu0 %1318
    %1321 = vrot.lane.b32.xlu0 %v1246, 116
    %v1322 = vpop.permute.xlu0 %1321
    %1324 = vrot.lane.b32.xlu0 %v1246, 112
    %v1325 = vpop.permute.xlu0 %1324
    %1327 = vrot.lane.b32.xlu0 %v1246, 108
    %v1328 = vpop.permute.xlu0 %1327
    %1330 = vrot.lane.b32.xlu0 %v1246, 104
    %v1331 = vpop.permute.xlu0 %1330
    %1333 = vrot.lane.b32.xlu0 %v1246, 100
    %v1334 = vpop.permute.xlu0 %1333
    %1337 = vrot.lane.b32.xlu0 %v1251, 124
    %v1338 = vpop.permute.xlu0 %1337
    %1340 = vrot.lane.b32.xlu0 %v1251, 120
    %v1341 = vpop.permute.xlu0 %1340
    %1343 = vrot.lane.b32.xlu0 %v1251, 116
    %v1344 = vpop.permute.xlu0 %1343
    %1346 = vrot.lane.b32.xlu0 %v1251, 112
    %v1347 = vpop.permute.xlu0 %1346
    %1349 = vrot.lane.b32.xlu0 %v1251, 108
    %v1350 = vpop.permute.xlu0 %1349
    %1352 = vrot.lane.b32.xlu0 %v1251, 104
    %v1353 = vpop.permute.xlu0 %1352
    %1355 = vrot.lane.b32.xlu0 %v1251, 100
    %v1356 = vpop.permute.xlu0 %1355
    %vm1358 = vcmask 31744
    %v1359 = vsel %vm1358, %v1096, 0
    %v1361 = vsel %vm1358, %v1171, 0
    %1363 = vmatprep.subr.mxu0 0.0
    %1364 = vmatpush1.xpose.msra.mxu0 0.0
    %1365 = vmatprep.subr.mxu0 0.0
    %1366 = vmatpush1.xpose.msra.mxu0 0.0
    %1367 = vmatprep.subr.mxu0 0.0
    %1368 = vmatpush1.xpose.msra.mxu0 0.0
    %1369 = vmatprep.subr.mxu0 0.0
    %1370 = vmatpush1.xpose.msra.mxu0 0.0
    %1371 = vmatprep.subr.mxu0 0.0
    %1372 = vmatpush1.xpose.msra.mxu0 0.0
    %1373 = vmatprep.subr.mxu0 0.0
    %1374 = vmatpush1.xpose.msra.mxu0 0.0
    %1375 = vmatprep.subr.mxu0 0.0
    %1376 = vmatpush1.xpose.msra.mxu0 0.0
    %1377 = vmatprep.subr.mxu0 0.0
    %1378 = vmatpush1.xpose.msra.mxu0 0.0
    %1379 = vmatprep.subr.mxu0 0.0
    %1380 = vmatpush1.xpose.msra.mxu0 0.0
    %1381 = vmatprep.subr.mxu0 0.0
    %1382 = vmatpush1.xpose.msra.mxu0 0.0
    %1383 = vmatprep.subr.mxu0 0.0
    %1384 = vmatpush1.xpose.msra.mxu0 0.0
    %1385 = vmatprep.subr.mxu0 0.0
    %1386 = vmatpush1.xpose.msra.mxu0 0.0
    %1387 = vmatprep.subr.mxu0 0.0
    %1388 = vmatpush1.xpose.msra.mxu0 0.0
    %1389 = vmatprep.subr.mxu0 0.0
    %1390 = vmatpush1.xpose.msra.mxu0 0.0
    %1391 = vmatprep.subr.mxu0 0.0
    %1392 = vmatpush1.xpose.msra.mxu0 0.0
    %1393 = vmatprep.subr.mxu0 0.0
    %1394 = vmatpush1.xpose.msra.mxu0 %v1361
    %1395 = vmatprep.subr.mxu0 0.0
    %1396 = vmatpush2.xpose.msra.mxu0 0.0
    %1397 = vmatprep.subr.mxu0 0.0
    %1398 = vmatpush2.xpose.msra.mxu0 0.0
    %1399 = vmatprep.subr.mxu0 0.0
    %1400 = vmatpush2.xpose.msra.mxu0 0.0
    %1401 = vmatprep.subr.mxu0 0.0
    %1402 = vmatpush2.xpose.msra.mxu0 0.0
    %1403 = vmatprep.subr.mxu0 0.0
    %1404 = vmatpush2.xpose.msra.mxu0 0.0
    %1405 = vmatprep.subr.mxu0 0.0
    %1406 = vmatpush2.xpose.msra.mxu0 0.0
    %1407 = vmatprep.subr.mxu0 0.0
    %1408 = vmatpush2.xpose.msra.mxu0 0.0
    %1409 = vmatprep.subr.mxu0 0.0
    %1410 = vmatpush2.xpose.msra.mxu0 0.0
    %1411 = vmatprep.subr.mxu0 0.0
    %1412 = vmatpush2.xpose.msra.mxu0 0.0
    %1413 = vmatprep.subr.mxu0 0.0
    %1414 = vmatpush2.xpose.msra.mxu0 0.0
    %1415 = vmatprep.subr.mxu0 0.0
    %1416 = vmatpush2.xpose.msra.mxu0 0.0
    %1417 = vmatprep.subr.mxu0 0.0
    %1418 = vmatpush2.xpose.msra.mxu0 0.0
    %1419 = vmatprep.subr.mxu0 0.0
    %1420 = vmatpush2.xpose.msra.mxu0 0.0
    %1421 = vmatprep.subr.mxu0 0.0
    %1422 = vmatpush2.xpose.msra.mxu0 0.0
    %1423 = vmatprep.subr.mxu0 0.0
    %1424 = vmatpush2.xpose.msra.mxu0 0.0
    %1425 = vmatprep.subr.mxu0 0.0
    %1426 = vmatpush2.xpose.msra.mxu0 0.0
    %1427 = vmatprep.mubr.f32.mxu0 0.0
    %1428 = vmatmul.mubr.f32.gmra.mxu0 %v1359
    %v1429 = vpop.f32.mrf.mxu0
    %v1430 = vadd.f32 0.0, %v1429
    %v1431 = vpop.f32.mrf.mxu0
    %1432 = vdwg.mxu0
    %v1433 = vsel %vm1358, %v1256, 0
    %v1435 = vsel %vm1358, %v1286, 0
    %1437 = vmatprep.subr.mxu0 0.0
    %1438 = vmatpush1.xpose.msra.mxu0 0.0
    %1439 = vmatprep.subr.mxu0 0.0
    %1440 = vmatpush1.xpose.msra.mxu0 0.0
    %1441 = vmatprep.subr.mxu0 0.0
    %1442 = vmatpush1.xpose.msra.mxu0 0.0
    %1443 = vmatprep.subr.mxu0 0.0
    %1444 = vmatpush1.xpose.msra.mxu0 0.0
    %1445 = vmatprep.subr.mxu0 0.0
    %1446 = vmatpush1.xpose.msra.mxu0 0.0
    %1447 = vmatprep.subr.mxu0 0.0
    %1448 = vmatpush1.xpose.msra.mxu0 0.0
    %1449 = vmatprep.subr.mxu0 0.0
    %1450 = vmatpush1.xpose.msra.mxu0 0.0
    %1451 = vmatprep.subr.mxu0 0.0
    %1452 = vmatpush1.xpose.msra.mxu0 0.0
    %1453 = vmatprep.subr.mxu0 0.0
    %1454 = vmatpush1.xpose.msra.mxu0 0.0
    %1455 = vmatprep.subr.mxu0 0.0
    %1456 = vmatpush1.xpose.msra.mxu0 0.0
    %1457 = vmatprep.subr.mxu0 0.0
    %1458 = vmatpush1.xpose.msra.mxu0 0.0
    %1459 = vmatprep.subr.mxu0 0.0
    %1460 = vmatpush1.xpose.msra.mxu0 0.0
    %1461 = vmatprep.subr.mxu0 0.0
    %1462 = vmatpush1.xpose.msra.mxu0 0.0
    %1463 = vmatprep.subr.mxu0 0.0
    %1464 = vmatpush1.xpose.msra.mxu0 0.0
    %1465 = vmatprep.subr.mxu0 0.0
    %1466 = vmatpush1.xpose.msra.mxu0 0.0
    %1467 = vmatprep.subr.mxu0 0.0
    %1468 = vmatpush1.xpose.msra.mxu0 %v1435
    %1469 = vmatprep.subr.mxu0 0.0
    %1470 = vmatpush2.xpose.msra.mxu0 0.0
    %1471 = vmatprep.subr.mxu0 0.0
    %1472 = vmatpush2.xpose.msra.mxu0 0.0
    %1473 = vmatprep.subr.mxu0 0.0
    %1474 = vmatpush2.xpose.msra.mxu0 0.0
    %1475 = vmatprep.subr.mxu0 0.0
    %1476 = vmatpush2.xpose.msra.mxu0 0.0
    %1477 = vmatprep.subr.mxu0 0.0
    %1478 = vmatpush2.xpose.msra.mxu0 0.0
    %1479 = vmatprep.subr.mxu0 0.0
    %1480 = vmatpush2.xpose.msra.mxu0 0.0
    %1481 = vmatprep.subr.mxu0 0.0
    %1482 = vmatpush2.xpose.msra.mxu0 0.0
    %1483 = vmatprep.subr.mxu0 0.0
    %1484 = vmatpush2.xpose.msra.mxu0 0.0
    %1485 = vmatprep.subr.mxu0 0.0
    %1486 = vmatpush2.xpose.msra.mxu0 0.0
    %1487 = vmatprep.subr.mxu0 0.0
    %1488 = vmatpush2.xpose.msra.mxu0 0.0
    %1489 = vmatprep.subr.mxu0 0.0
    %1490 = vmatpush2.xpose.msra.mxu0 0.0
    %1491 = vmatprep.subr.mxu0 0.0
    %1492 = vmatpush2.xpose.msra.mxu0 0.0
    %1493 = vmatprep.subr.mxu0 0.0
    %1494 = vmatpush2.xpose.msra.mxu0 0.0
    %1495 = vmatprep.subr.mxu0 0.0
    %1496 = vmatpush2.xpose.msra.mxu0 0.0
    %1497 = vmatprep.subr.mxu0 0.0
    %1498 = vmatpush2.xpose.msra.mxu0 0.0
    %1499 = vmatprep.subr.mxu0 0.0
    %1500 = vmatpush2.xpose.msra.mxu0 0.0
    %1501 = vmatprep.mubr.f32.mxu0 0.0
    %1502 = vmatmul.mubr.f32.gmra.mxu0 %v1433
    %v1503 = vpop.f32.mrf.mxu0
    %v1504 = vadd.f32 0.0, %v1503
    %v1505 = vpop.f32.mrf.mxu0
    %1506 = vdwg.mxu0
    %v1507 = vsel %vm1358, %v1258, 0
    %v1509 = vsel %vm1358, %v1288, 0
    %1511 = vmatprep.subr.mxu0 0.0
    %1512 = vmatpush1.xpose.msra.mxu0 0.0
    %1513 = vmatprep.subr.mxu0 0.0
    %1514 = vmatpush1.xpose.msra.mxu0 0.0
    %1515 = vmatprep.subr.mxu0 0.0
    %1516 = vmatpush1.xpose.msra.mxu0 0.0
    %1517 = vmatprep.subr.mxu0 0.0
    %1518 = vmatpush1.xpose.msra.mxu0 0.0
    %1519 = vmatprep.subr.mxu0 0.0
    %1520 = vmatpush1.xpose.msra.mxu0 0.0
    %1521 = vmatprep.subr.mxu0 0.0
    %1522 = vmatpush1.xpose.msra.mxu0 0.0
    %1523 = vmatprep.subr.mxu0 0.0
    %1524 = vmatpush1.xpose.msra.mxu0 0.0
    %1525 = vmatprep.subr.mxu0 0.0
    %1526 = vmatpush1.xpose.msra.mxu0 0.0
    %1527 = vmatprep.subr.mxu0 0.0
    %1528 = vmatpush1.xpose.msra.mxu0 0.0
    %1529 = vmatprep.subr.mxu0 0.0
    %1530 = vmatpush1.xpose.msra.mxu0 0.0
    %1531 = vmatprep.subr.mxu0 0.0
    %1532 = vmatpush1.xpose.msra.mxu0 0.0
    %1533 = vmatprep.subr.mxu0 0.0
    %1534 = vmatpush1.xpose.msra.mxu0 0.0
    %1535 = vmatprep.subr.mxu0 0.0
    %1536 = vmatpush1.xpose.msra.mxu0 0.0
    %1537 = vmatprep.subr.mxu0 0.0
    %1538 = vmatpush1.xpose.msra.mxu0 0.0
    %1539 = vmatprep.subr.mxu0 0.0
    %1540 = vmatpush1.xpose.msra.mxu0 0.0
    %1541 = vmatprep.subr.mxu0 0.0
    %1542 = vmatpush1.xpose.msra.mxu0 %v1509
    %1543 = vmatprep.subr.mxu0 0.0
    %1544 = vmatpush2.xpose.msra.mxu0 0.0
    %1545 = vmatprep.subr.mxu0 0.0
    %1546 = vmatpush2.xpose.msra.mxu0 0.0
    %1547 = vmatprep.subr.mxu0 0.0
    %1548 = vmatpush2.xpose.msra.mxu0 0.0
    %1549 = vmatprep.subr.mxu0 0.0
    %1550 = vmatpush2.xpose.msra.mxu0 0.0
    %1551 = vmatprep.subr.mxu0 0.0
    %1552 = vmatpush2.xpose.msra.mxu0 0.0
    %1553 = vmatprep.subr.mxu0 0.0
    %1554 = vmatpush2.xpose.msra.mxu0 0.0
    %1555 = vmatprep.subr.mxu0 0.0
    %1556 = vmatpush2.xpose.msra.mxu0 0.0
    %1557 = vmatprep.subr.mxu0 0.0
    %1558 = vmatpush2.xpose.msra.mxu0 0.0
    %1559 = vmatprep.subr.mxu0 0.0
    %1560 = vmatpush2.xpose.msra.mxu0 0.0
    %1561 = vmatprep.subr.mxu0 0.0
    %1562 = vmatpush2.xpose.msra.mxu0 0.0
    %1563 = vmatprep.subr.mxu0 0.0
    %1564 = vmatpush2.xpose.msra.mxu0 0.0
    %1565 = vmatprep.subr.mxu0 0.0
    %1566 = vmatpush2.xpose.msra.mxu0 0.0
    %1567 = vmatprep.subr.mxu0 0.0
    %1568 = vmatpush2.xpose.msra.mxu0 0.0
    %1569 = vmatprep.subr.mxu0 0.0
    %1570 = vmatpush2.xpose.msra.mxu0 0.0
    %1571 = vmatprep.subr.mxu0 0.0
    %1572 = vmatpush2.xpose.msra.mxu0 0.0
    %1573 = vmatprep.subr.mxu0 0.0
    %1574 = vmatpush2.xpose.msra.mxu0 0.0
    %1575 = vmatprep.mubr.f32.mxu0 0.0
    %1576 = vmatmul.mubr.f32.gmra.mxu0 %v1507
    %v1577 = vpop.f32.mrf.mxu0
    %v1578 = vadd.f32 0.0, %v1577
    %v1579 = vpop.f32.mrf.mxu0
    %1580 = vdwg.mxu0
    %v1581 = vsel %vm1358, %v1260, 0
    %v1583 = vsel %vm1358, %v1290, 0
    %1585 = vmatprep.subr.mxu0 0.0
    %1586 = vmatpush1.xpose.msra.mxu0 0.0
    %1587 = vmatprep.subr.mxu0 0.0
    %1588 = vmatpush1.xpose.msra.mxu0 0.0
    %1589 = vmatprep.subr.mxu0 0.0
    %1590 = vmatpush1.xpose.msra.mxu0 0.0
    %1591 = vmatprep.subr.mxu0 0.0
    %1592 = vmatpush1.xpose.msra.mxu0 0.0
    %1593 = vmatprep.subr.mxu0 0.0
    %1594 = vmatpush1.xpose.msra.mxu0 0.0
    %1595 = vmatprep.subr.mxu0 0.0
    %1596 = vmatpush1.xpose.msra.mxu0 0.0
    %1597 = vmatprep.subr.mxu0 0.0
    %1598 = vmatpush1.xpose.msra.mxu0 0.0
    %1599 = vmatprep.subr.mxu0 0.0
    %1600 = vmatpush1.xpose.msra.mxu0 0.0
    %1601 = vmatprep.subr.mxu0 0.0
    %1602 = vmatpush1.xpose.msra.mxu0 0.0
    %1603 = vmatprep.subr.mxu0 0.0
    %1604 = vmatpush1.xpose.msra.mxu0 0.0
    %1605 = vmatprep.subr.mxu0 0.0
    %1606 = vmatpush1.xpose.msra.mxu0 0.0
    %1607 = vmatprep.subr.mxu0 0.0
    %1608 = vmatpush1.xpose.msra.mxu0 0.0
    %1609 = vmatprep.subr.mxu0 0.0
    %1610 = vmatpush1.xpose.msra.mxu0 0.0
    %1611 = vmatprep.subr.mxu0 0.0
    %1612 = vmatpush1.xpose.msra.mxu0 0.0
    %1613 = vmatprep.subr.mxu0 0.0
    %1614 = vmatpush1.xpose.msra.mxu0 0.0
    %1615 = vmatprep.subr.mxu0 0.0
    %1616 = vmatpush1.xpose.msra.mxu0 %v1583
    %1617 = vmatprep.subr.mxu0 0.0
    %1618 = vmatpush2.xpose.msra.mxu0 0.0
    %1619 = vmatprep.subr.mxu0 0.0
    %1620 = vmatpush2.xpose.msra.mxu0 0.0
    %1621 = vmatprep.subr.mxu0 0.0
    %1622 = vmatpush2.xpose.msra.mxu0 0.0
    %1623 = vmatprep.subr.mxu0 0.0
    %1624 = vmatpush2.xpose.msra.mxu0 0.0
    %1625 = vmatprep.subr.mxu0 0.0
    %1626 = vmatpush2.xpose.msra.mxu0 0.0
    %1627 = vmatprep.subr.mxu0 0.0
    %1628 = vmatpush2.xpose.msra.mxu0 0.0
    %1629 = vmatprep.subr.mxu0 0.0
    %1630 = vmatpush2.xpose.msra.mxu0 0.0
    %1631 = vmatprep.subr.mxu0 0.0
    %1632 = vmatpush2.xpose.msra.mxu0 0.0
    %1633 = vmatprep.subr.mxu0 0.0
    %1634 = vmatpush2.xpose.msra.mxu0 0.0
    %1635 = vmatprep.subr.mxu0 0.0
    %1636 = vmatpush2.xpose.msra.mxu0 0.0
    %1637 = vmatprep.subr.mxu0 0.0
    %1638 = vmatpush2.xpose.msra.mxu0 0.0
    %1639 = vmatprep.subr.mxu0 0.0
    %1640 = vmatpush2.xpose.msra.mxu0 0.0
    %1641 = vmatprep.subr.mxu0 0.0
    %1642 = vmatpush2.xpose.msra.mxu0 0.0
    %1643 = vmatprep.subr.mxu0 0.0
    %1644 = vmatpush2.xpose.msra.mxu0 0.0
    %1645 = vmatprep.subr.mxu0 0.0
    %1646 = vmatpush2.xpose.msra.mxu0 0.0
    %1647 = vmatprep.subr.mxu0 0.0
    %1648 = vmatpush2.xpose.msra.mxu0 0.0
    %1649 = vmatprep.mubr.f32.mxu0 0.0
    %1650 = vmatmul.mubr.f32.gmra.mxu0 %v1581
    %v1651 = vpop.f32.mrf.mxu0
    %v1652 = vadd.f32 0.0, %v1651
    %v1653 = vpop.f32.mrf.mxu0
    %1654 = vdwg.mxu0
    %v1655 = vsel %vm1358, %v1262, 0
    %v1657 = vsel %vm1358, %v1292, 0
    %1659 = vmatprep.subr.mxu0 0.0
    %1660 = vmatpush1.xpose.msra.mxu0 0.0
    %1661 = vmatprep.subr.mxu0 0.0
    %1662 = vmatpush1.xpose.msra.mxu0 0.0
    %1663 = vmatprep.subr.mxu0 0.0
    %1664 = vmatpush1.xpose.msra.mxu0 0.0
    %1665 = vmatprep.subr.mxu0 0.0
    %1666 = vmatpush1.xpose.msra.mxu0 0.0
    %1667 = vmatprep.subr.mxu0 0.0
    %1668 = vmatpush1.xpose.msra.mxu0 0.0
    %1669 = vmatprep.subr.mxu0 0.0
    %1670 = vmatpush1.xpose.msra.mxu0 0.0
    %1671 = vmatprep.subr.mxu0 0.0
    %1672 = vmatpush1.xpose.msra.mxu0 0.0
    %1673 = vmatprep.subr.mxu0 0.0
    %1674 = vmatpush1.xpose.msra.mxu0 0.0
    %1675 = vmatprep.subr.mxu0 0.0
    %1676 = vmatpush1.xpose.msra.mxu0 0.0
    %1677 = vmatprep.subr.mxu0 0.0
    %1678 = vmatpush1.xpose.msra.mxu0 0.0
    %1679 = vmatprep.subr.mxu0 0.0
    %1680 = vmatpush1.xpose.msra.mxu0 0.0
    %1681 = vmatprep.subr.mxu0 0.0
    %1682 = vmatpush1.xpose.msra.mxu0 0.0
    %1683 = vmatprep.subr.mxu0 0.0
    %1684 = vmatpush1.xpose.msra.mxu0 0.0
    %1685 = vmatprep.subr.mxu0 0.0
    %1686 = vmatpush1.xpose.msra.mxu0 0.0
    %1687 = vmatprep.subr.mxu0 0.0
    %1688 = vmatpush1.xpose.msra.mxu0 0.0
    %1689 = vmatprep.subr.mxu0 0.0
    %1690 = vmatpush1.xpose.msra.mxu0 %v1657
    %1691 = vmatprep.subr.mxu0 0.0
    %1692 = vmatpush2.xpose.msra.mxu0 0.0
    %1693 = vmatprep.subr.mxu0 0.0
    %1694 = vmatpush2.xpose.msra.mxu0 0.0
    %1695 = vmatprep.subr.mxu0 0.0
    %1696 = vmatpush2.xpose.msra.mxu0 0.0
    %1697 = vmatprep.subr.mxu0 0.0
    %1698 = vmatpush2.xpose.msra.mxu0 0.0
    %1699 = vmatprep.subr.mxu0 0.0
    %1700 = vmatpush2.xpose.msra.mxu0 0.0
    %1701 = vmatprep.subr.mxu0 0.0
    %1702 = vmatpush2.xpose.msra.mxu0 0.0
    %1703 = vmatprep.subr.mxu0 0.0
    %1704 = vmatpush2.xpose.msra.mxu0 0.0
    %1705 = vmatprep.subr.mxu0 0.0
    %1706 = vmatpush2.xpose.msra.mxu0 0.0
    %1707 = vmatprep.subr.mxu0 0.0
    %1708 = vmatpush2.xpose.msra.mxu0 0.0
    %1709 = vmatprep.subr.mxu0 0.0
    %1710 = vmatpush2.xpose.msra.mxu0 0.0
    %1711 = vmatprep.subr.mxu0 0.0
    %1712 = vmatpush2.xpose.msra.mxu0 0.0
    %1713 = vmatprep.subr.mxu0 0.0
    %1714 = vmatpush2.xpose.msra.mxu0 0.0
    %1715 = vmatprep.subr.mxu0 0.0
    %1716 = vmatpush2.xpose.msra.mxu0 0.0
    %1717 = vmatprep.subr.mxu0 0.0
    %1718 = vmatpush2.xpose.msra.mxu0 0.0
    %1719 = vmatprep.subr.mxu0 0.0
    %1720 = vmatpush2.xpose.msra.mxu0 0.0
    %1721 = vmatprep.subr.mxu0 0.0
    %1722 = vmatpush2.xpose.msra.mxu0 0.0
    %1723 = vmatprep.mubr.f32.mxu0 0.0
    %1724 = vmatmul.mubr.f32.gmra.mxu0 %v1655
    %v1725 = vpop.f32.mrf.mxu0
    %v1726 = vadd.f32 0.0, %v1725
    %v1727 = vpop.f32.mrf.mxu0
    %1728 = vdwg.mxu0
    %v1729 = vsel %vm1358, %v1264, 0
    %v1731 = vsel %vm1358, %v1294, 0
    %1733 = vmatprep.subr.mxu0 0.0
    %1734 = vmatpush1.xpose.msra.mxu0 0.0
    %1735 = vmatprep.subr.mxu0 0.0
    %1736 = vmatpush1.xpose.msra.mxu0 0.0
    %1737 = vmatprep.subr.mxu0 0.0
    %1738 = vmatpush1.xpose.msra.mxu0 0.0
    %1739 = vmatprep.subr.mxu0 0.0
    %1740 = vmatpush1.xpose.msra.mxu0 0.0
    %1741 = vmatprep.subr.mxu0 0.0
    %1742 = vmatpush1.xpose.msra.mxu0 0.0
    %1743 = vmatprep.subr.mxu0 0.0
    %1744 = vmatpush1.xpose.msra.mxu0 0.0
    %1745 = vmatprep.subr.mxu0 0.0
    %1746 = vmatpush1.xpose.msra.mxu0 0.0
    %1747 = vmatprep.subr.mxu0 0.0
    %1748 = vmatpush1.xpose.msra.mxu0 0.0
    %1749 = vmatprep.subr.mxu0 0.0
    %1750 = vmatpush1.xpose.msra.mxu0 0.0
    %1751 = vmatprep.subr.mxu0 0.0
    %1752 = vmatpush1.xpose.msra.mxu0 0.0
    %1753 = vmatprep.subr.mxu0 0.0
    %1754 = vmatpush1.xpose.msra.mxu0 0.0
    %1755 = vmatprep.subr.mxu0 0.0
    %1756 = vmatpush1.xpose.msra.mxu0 0.0
    %1757 = vmatprep.subr.mxu0 0.0
    %1758 = vmatpush1.xpose.msra.mxu0 0.0
    %1759 = vmatprep.subr.mxu0 0.0
    %1760 = vmatpush1.xpose.msra.mxu0 0.0
    %1761 = vmatprep.subr.mxu0 0.0
    %1762 = vmatpush1.xpose.msra.mxu0 0.0
    %1763 = vmatprep.subr.mxu0 0.0
    %1764 = vmatpush1.xpose.msra.mxu0 %v1731
    %1765 = vmatprep.subr.mxu0 0.0
    %1766 = vmatpush2.xpose.msra.mxu0 0.0
    %1767 = vmatprep.subr.mxu0 0.0
    %1768 = vmatpush2.xpose.msra.mxu0 0.0
    %1769 = vmatprep.subr.mxu0 0.0
    %1770 = vmatpush2.xpose.msra.mxu0 0.0
    %1771 = vmatprep.subr.mxu0 0.0
    %1772 = vmatpush2.xpose.msra.mxu0 0.0
    %1773 = vmatprep.subr.mxu0 0.0
    %1774 = vmatpush2.xpose.msra.mxu0 0.0
    %1775 = vmatprep.subr.mxu0 0.0
    %1776 = vmatpush2.xpose.msra.mxu0 0.0
    %1777 = vmatprep.subr.mxu0 0.0
    %1778 = vmatpush2.xpose.msra.mxu0 0.0
    %1779 = vmatprep.subr.mxu0 0.0
    %1780 = vmatpush2.xpose.msra.mxu0 0.0
    %1781 = vmatprep.subr.mxu0 0.0
    %1782 = vmatpush2.xpose.msra.mxu0 0.0
    %1783 = vmatprep.subr.mxu0 0.0
    %1784 = vmatpush2.xpose.msra.mxu0 0.0
    %1785 = vmatprep.subr.mxu0 0.0
    %1786 = vmatpush2.xpose.msra.mxu0 0.0
    %1787 = vmatprep.subr.mxu0 0.0
    %1788 = vmatpush2.xpose.msra.mxu0 0.0
    %1789 = vmatprep.subr.mxu0 0.0
    %1790 = vmatpush2.xpose.msra.mxu0 0.0
    %1791 = vmatprep.subr.mxu0 0.0
    %1792 = vmatpush2.xpose.msra.mxu0 0.0
    %1793 = vmatprep.subr.mxu0 0.0
    %1794 = vmatpush2.xpose.msra.mxu0 0.0
    %1795 = vmatprep.subr.mxu0 0.0
    %1796 = vmatpush2.xpose.msra.mxu0 0.0
    %1797 = vmatprep.mubr.f32.mxu0 0.0
    %1798 = vmatmul.mubr.f32.gmra.mxu0 %v1729
    %v1799 = vpop.f32.mrf.mxu0
    %v1800 = vadd.f32 0.0, %v1799
    %v1801 = vpop.f32.mrf.mxu0
    %1802 = vdwg.mxu0
    %v1803 = vsel %vm1358, %v1266, 0
    %v1805 = vsel %vm1358, %v1296, 0
    %1807 = vmatprep.subr.mxu0 0.0
    %1808 = vmatpush1.xpose.msra.mxu0 0.0
    %1809 = vmatprep.subr.mxu0 0.0
    %1810 = vmatpush1.xpose.msra.mxu0 0.0
    %1811 = vmatprep.subr.mxu0 0.0
    %1812 = vmatpush1.xpose.msra.mxu0 0.0
    %1813 = vmatprep.subr.mxu0 0.0
    %1814 = vmatpush1.xpose.msra.mxu0 0.0
    %1815 = vmatprep.subr.mxu0 0.0
    %1816 = vmatpush1.xpose.msra.mxu0 0.0
    %1817 = vmatprep.subr.mxu0 0.0
    %1818 = vmatpush1.xpose.msra.mxu0 0.0
    %1819 = vmatprep.subr.mxu0 0.0
    %1820 = vmatpush1.xpose.msra.mxu0 0.0
    %1821 = vmatprep.subr.mxu0 0.0
    %1822 = vmatpush1.xpose.msra.mxu0 0.0
    %1823 = vmatprep.subr.mxu0 0.0
    %1824 = vmatpush1.xpose.msra.mxu0 0.0
    %1825 = vmatprep.subr.mxu0 0.0
    %1826 = vmatpush1.xpose.msra.mxu0 0.0
    %1827 = vmatprep.subr.mxu0 0.0
    %1828 = vmatpush1.xpose.msra.mxu0 0.0
    %1829 = vmatprep.subr.mxu0 0.0
    %1830 = vmatpush1.xpose.msra.mxu0 0.0
    %1831 = vmatprep.subr.mxu0 0.0
    %1832 = vmatpush1.xpose.msra.mxu0 0.0
    %1833 = vmatprep.subr.mxu0 0.0
    %1834 = vmatpush1.xpose.msra.mxu0 0.0
    %1835 = vmatprep.subr.mxu0 0.0
    %1836 = vmatpush1.xpose.msra.mxu0 0.0
    %1837 = vmatprep.subr.mxu0 0.0
    %1838 = vmatpush1.xpose.msra.mxu0 %v1805
    %1839 = vmatprep.subr.mxu0 0.0
    %1840 = vmatpush2.xpose.msra.mxu0 0.0
    %1841 = vmatprep.subr.mxu0 0.0
    %1842 = vmatpush2.xpose.msra.mxu0 0.0
    %1843 = vmatprep.subr.mxu0 0.0
    %1844 = vmatpush2.xpose.msra.mxu0 0.0
    %1845 = vmatprep.subr.mxu0 0.0
    %1846 = vmatpush2.xpose.msra.mxu0 0.0
    %1847 = vmatprep.subr.mxu0 0.0
    %1848 = vmatpush2.xpose.msra.mxu0 0.0
    %1849 = vmatprep.subr.mxu0 0.0
    %1850 = vmatpush2.xpose.msra.mxu0 0.0
    %1851 = vmatprep.subr.mxu0 0.0
    %1852 = vmatpush2.xpose.msra.mxu0 0.0
    %1853 = vmatprep.subr.mxu0 0.0
    %1854 = vmatpush2.xpose.msra.mxu0 0.0
    %1855 = vmatprep.subr.mxu0 0.0
    %1856 = vmatpush2.xpose.msra.mxu0 0.0
    %1857 = vmatprep.subr.mxu0 0.0
    %1858 = vmatpush2.xpose.msra.mxu0 0.0
    %1859 = vmatprep.subr.mxu0 0.0
    %1860 = vmatpush2.xpose.msra.mxu0 0.0
    %1861 = vmatprep.subr.mxu0 0.0
    %1862 = vmatpush2.xpose.msra.mxu0 0.0
    %1863 = vmatprep.subr.mxu0 0.0
    %1864 = vmatpush2.xpose.msra.mxu0 0.0
    %1865 = vmatprep.subr.mxu0 0.0
    %1866 = vmatpush2.xpose.msra.mxu0 0.0
    %1867 = vmatprep.subr.mxu0 0.0
    %1868 = vmatpush2.xpose.msra.mxu0 0.0
    %1869 = vmatprep.subr.mxu0 0.0
    %1870 = vmatpush2.xpose.msra.mxu0 0.0
    %1871 = vmatprep.mubr.f32.mxu0 0.0
    %1872 = vmatmul.mubr.f32.gmra.mxu0 %v1803
    %v1873 = vpop.f32.mrf.mxu0
    %v1874 = vadd.f32 0.0, %v1873
    %v1875 = vpop.f32.mrf.mxu0
    %1876 = vdwg.mxu0
    %v1877 = vsel %vm1358, %v1268, 0
    %v1879 = vsel %vm1358, %v1298, 0
    %1881 = vmatprep.subr.mxu0 0.0
    %1882 = vmatpush1.xpose.msra.mxu0 0.0
    %1883 = vmatprep.subr.mxu0 0.0
    %1884 = vmatpush1.xpose.msra.mxu0 0.0
    %1885 = vmatprep.subr.mxu0 0.0
    %1886 = vmatpush1.xpose.msra.mxu0 0.0
    %1887 = vmatprep.subr.mxu0 0.0
    %1888 = vmatpush1.xpose.msra.mxu0 0.0
    %1889 = vmatprep.subr.mxu0 0.0
    %1890 = vmatpush1.xpose.msra.mxu0 0.0
    %1891 = vmatprep.subr.mxu0 0.0
    %1892 = vmatpush1.xpose.msra.mxu0 0.0
    %1893 = vmatprep.subr.mxu0 0.0
    %1894 = vmatpush1.xpose.msra.mxu0 0.0
    %1895 = vmatprep.subr.mxu0 0.0
    %1896 = vmatpush1.xpose.msra.mxu0 0.0
    %1897 = vmatprep.subr.mxu0 0.0
    %1898 = vmatpush1.xpose.msra.mxu0 0.0
    %1899 = vmatprep.subr.mxu0 0.0
    %1900 = vmatpush1.xpose.msra.mxu0 0.0
    %1901 = vmatprep.subr.mxu0 0.0
    %1902 = vmatpush1.xpose.msra.mxu0 0.0
    %1903 = vmatprep.subr.mxu0 0.0
    %1904 = vmatpush1.xpose.msra.mxu0 0.0
    %1905 = vmatprep.subr.mxu0 0.0
    %1906 = vmatpush1.xpose.msra.mxu0 0.0
    %1907 = vmatprep.subr.mxu0 0.0
    %1908 = vmatpush1.xpose.msra.mxu0 0.0
    %1909 = vmatprep.subr.mxu0 0.0
    %1910 = vmatpush1.xpose.msra.mxu0 0.0
    %1911 = vmatprep.subr.mxu0 0.0
    %1912 = vmatpush1.xpose.msra.mxu0 %v1879
    %1913 = vmatprep.subr.mxu0 0.0
    %1914 = vmatpush2.xpose.msra.mxu0 0.0
    %1915 = vmatprep.subr.mxu0 0.0
    %1916 = vmatpush2.xpose.msra.mxu0 0.0
    %1917 = vmatprep.subr.mxu0 0.0
    %1918 = vmatpush2.xpose.msra.mxu0 0.0
    %1919 = vmatprep.subr.mxu0 0.0
    %1920 = vmatpush2.xpose.msra.mxu0 0.0
    %1921 = vmatprep.subr.mxu0 0.0
    %1922 = vmatpush2.xpose.msra.mxu0 0.0
    %1923 = vmatprep.subr.mxu0 0.0
    %1924 = vmatpush2.xpose.msra.mxu0 0.0
    %1925 = vmatprep.subr.mxu0 0.0
    %1926 = vmatpush2.xpose.msra.mxu0 0.0
    %1927 = vmatprep.subr.mxu0 0.0
    %1928 = vmatpush2.xpose.msra.mxu0 0.0
    %1929 = vmatprep.subr.mxu0 0.0
    %1930 = vmatpush2.xpose.msra.mxu0 0.0
    %1931 = vmatprep.subr.mxu0 0.0
    %1932 = vmatpush2.xpose.msra.mxu0 0.0
    %1933 = vmatprep.subr.mxu0 0.0
    %1934 = vmatpush2.xpose.msra.mxu0 0.0
    %1935 = vmatprep.subr.mxu0 0.0
    %1936 = vmatpush2.xpose.msra.mxu0 0.0
    %1937 = vmatprep.subr.mxu0 0.0
    %1938 = vmatpush2.xpose.msra.mxu0 0.0
    %1939 = vmatprep.subr.mxu0 0.0
    %1940 = vmatpush2.xpose.msra.mxu0 0.0
    %1941 = vmatprep.subr.mxu0 0.0
    %1942 = vmatpush2.xpose.msra.mxu0 0.0
    %1943 = vmatprep.subr.mxu0 0.0
    %1944 = vmatpush2.xpose.msra.mxu0 0.0
    %1945 = vmatprep.mubr.f32.mxu0 0.0
    %1946 = vmatmul.mubr.f32.gmra.mxu0 %v1877
    %v1947 = vpop.f32.mrf.mxu0
    %v1948 = vadd.f32 0.0, %v1947
    %v1949 = vpop.f32.mrf.mxu0
    %1950 = vdwg.mxu0
    %v1951 = vsel %vm1358, %v1101, 0
    %v1953 = vsel %vm1358, %v1176, 0
    %1955 = vmatprep.subr.mxu0 0.0
    %1956 = vmatpush1.xpose.msra.mxu0 0.0
    %1957 = vmatprep.subr.mxu0 0.0
    %1958 = vmatpush1.xpose.msra.mxu0 0.0
    %1959 = vmatprep.subr.mxu0 0.0
    %1960 = vmatpush1.xpose.msra.mxu0 0.0
    %1961 = vmatprep.subr.mxu0 0.0
    %1962 = vmatpush1.xpose.msra.mxu0 0.0
    %1963 = vmatprep.subr.mxu0 0.0
    %1964 = vmatpush1.xpose.msra.mxu0 0.0
    %1965 = vmatprep.subr.mxu0 0.0
    %1966 = vmatpush1.xpose.msra.mxu0 0.0
    %1967 = vmatprep.subr.mxu0 0.0
    %1968 = vmatpush1.xpose.msra.mxu0 0.0
    %1969 = vmatprep.subr.mxu0 0.0
    %1970 = vmatpush1.xpose.msra.mxu0 0.0
    %1971 = vmatprep.subr.mxu0 0.0
    %1972 = vmatpush1.xpose.msra.mxu0 0.0
    %1973 = vmatprep.subr.mxu0 0.0
    %1974 = vmatpush1.xpose.msra.mxu0 0.0
    %1975 = vmatprep.subr.mxu0 0.0
    %1976 = vmatpush1.xpose.msra.mxu0 0.0
    %1977 = vmatprep.subr.mxu0 0.0
    %1978 = vmatpush1.xpose.msra.mxu0 0.0
    %1979 = vmatprep.subr.mxu0 0.0
    %1980 = vmatpush1.xpose.msra.mxu0 0.0
    %1981 = vmatprep.subr.mxu0 0.0
    %1982 = vmatpush1.xpose.msra.mxu0 0.0
    %1983 = vmatprep.subr.mxu0 0.0
    %1984 = vmatpush1.xpose.msra.mxu0 0.0
    %1985 = vmatprep.subr.mxu0 0.0
    %1986 = vmatpush1.xpose.msra.mxu0 %v1953
    %1987 = vmatprep.subr.mxu0 0.0
    %1988 = vmatpush2.xpose.msra.mxu0 0.0
    %1989 = vmatprep.subr.mxu0 0.0
    %1990 = vmatpush2.xpose.msra.mxu0 0.0
    %1991 = vmatprep.subr.mxu0 0.0
    %1992 = vmatpush2.xpose.msra.mxu0 0.0
    %1993 = vmatprep.subr.mxu0 0.0
    %1994 = vmatpush2.xpose.msra.mxu0 0.0
    %1995 = vmatprep.subr.mxu0 0.0
    %1996 = vmatpush2.xpose.msra.mxu0 0.0
    %1997 = vmatprep.subr.mxu0 0.0
    %1998 = vmatpush2.xpose.msra.mxu0 0.0
    %1999 = vmatprep.subr.mxu0 0.0
    %2000 = vmatpush2.xpose.msra.mxu0 0.0
    %2001 = vmatprep.subr.mxu0 0.0
    %2002 = vmatpush2.xpose.msra.mxu0 0.0
    %2003 = vmatprep.subr.mxu0 0.0
    %2004 = vmatpush2.xpose.msra.mxu0 0.0
    %2005 = vmatprep.subr.mxu0 0.0
    %2006 = vmatpush2.xpose.msra.mxu0 0.0
    %2007 = vmatprep.subr.mxu0 0.0
    %2008 = vmatpush2.xpose.msra.mxu0 0.0
    %2009 = vmatprep.subr.mxu0 0.0
    %2010 = vmatpush2.xpose.msra.mxu0 0.0
    %2011 = vmatprep.subr.mxu0 0.0
    %2012 = vmatpush2.xpose.msra.mxu0 0.0
    %2013 = vmatprep.subr.mxu0 0.0
    %2014 = vmatpush2.xpose.msra.mxu0 0.0
    %2015 = vmatprep.subr.mxu0 0.0
    %2016 = vmatpush2.xpose.msra.mxu0 0.0
    %2017 = vmatprep.subr.mxu0 0.0
    %2018 = vmatpush2.xpose.msra.mxu0 0.0
    %2019 = vmatprep.mubr.f32.mxu0 0.0
    %2020 = vmatmul.mubr.f32.gmra.mxu0 %v1951
    %v2021 = vpop.f32.mrf.mxu0
    %v2022 = vadd.f32 0.0, %v2021
    %v2023 = vpop.f32.mrf.mxu0
    %2024 = vdwg.mxu0
    %v2025 = vsel %vm1358, %v1271, 0
    %v2027 = vsel %vm1358, %v1301, 0
    %2029 = vmatprep.subr.mxu0 0.0
    %2030 = vmatpush1.xpose.msra.mxu0 0.0
    %2031 = vmatprep.subr.mxu0 0.0
    %2032 = vmatpush1.xpose.msra.mxu0 0.0
    %2033 = vmatprep.subr.mxu0 0.0
    %2034 = vmatpush1.xpose.msra.mxu0 0.0
    %2035 = vmatprep.subr.mxu0 0.0
    %2036 = vmatpush1.xpose.msra.mxu0 0.0
    %2037 = vmatprep.subr.mxu0 0.0
    %2038 = vmatpush1.xpose.msra.mxu0 0.0
    %2039 = vmatprep.subr.mxu0 0.0
    %2040 = vmatpush1.xpose.msra.mxu0 0.0
    %2041 = vmatprep.subr.mxu0 0.0
    %2042 = vmatpush1.xpose.msra.mxu0 0.0
    %2043 = vmatprep.subr.mxu0 0.0
    %2044 = vmatpush1.xpose.msra.mxu0 0.0
    %2045 = vmatprep.subr.mxu0 0.0
    %2046 = vmatpush1.xpose.msra.mxu0 0.0
    %2047 = vmatprep.subr.mxu0 0.0
    %2048 = vmatpush1.xpose.msra.mxu0 0.0
    %2049 = vmatprep.subr.mxu0 0.0
    %2050 = vmatpush1.xpose.msra.mxu0 0.0
    %2051 = vmatprep.subr.mxu0 0.0
    %2052 = vmatpush1.xpose.msra.mxu0 0.0
    %2053 = vmatprep.subr.mxu0 0.0
    %2054 = vmatpush1.xpose.msra.mxu0 0.0
    %2055 = vmatprep.subr.mxu0 0.0
    %2056 = vmatpush1.xpose.msra.mxu0 0.0
    %2057 = vmatprep.subr.mxu0 0.0
    %2058 = vmatpush1.xpose.msra.mxu0 0.0
    %2059 = vmatprep.subr.mxu0 0.0
    %2060 = vmatpush1.xpose.msra.mxu0 %v2027
    %2061 = vmatprep.subr.mxu0 0.0
    %2062 = vmatpush2.xpose.msra.mxu0 0.0
    %2063 = vmatprep.subr.mxu0 0.0
    %2064 = vmatpush2.xpose.msra.mxu0 0.0
    %2065 = vmatprep.subr.mxu0 0.0
    %2066 = vmatpush2.xpose.msra.mxu0 0.0
    %2067 = vmatprep.subr.mxu0 0.0
    %2068 = vmatpush2.xpose.msra.mxu0 0.0
    %2069 = vmatprep.subr.mxu0 0.0
    %2070 = vmatpush2.xpose.msra.mxu0 0.0
    %2071 = vmatprep.subr.mxu0 0.0
    %2072 = vmatpush2.xpose.msra.mxu0 0.0
    %2073 = vmatprep.subr.mxu0 0.0
    %2074 = vmatpush2.xpose.msra.mxu0 0.0
    %2075 = vmatprep.subr.mxu0 0.0
    %2076 = vmatpush2.xpose.msra.mxu0 0.0
    %2077 = vmatprep.subr.mxu0 0.0
    %2078 = vmatpush2.xpose.msra.mxu0 0.0
    %2079 = vmatprep.subr.mxu0 0.0
    %2080 = vmatpush2.xpose.msra.mxu0 0.0
    %2081 = vmatprep.subr.mxu0 0.0
    %2082 = vmatpush2.xpose.msra.mxu0 0.0
    %2083 = vmatprep.subr.mxu0 0.0
    %2084 = vmatpush2.xpose.msra.mxu0 0.0
    %2085 = vmatprep.subr.mxu0 0.0
    %2086 = vmatpush2.xpose.msra.mxu0 0.0
    %2087 = vmatprep.subr.mxu0 0.0
    %2088 = vmatpush2.xpose.msra.mxu0 0.0
    %2089 = vmatprep.subr.mxu0 0.0
    %2090 = vmatpush2.xpose.msra.mxu0 0.0
    %2091 = vmatprep.subr.mxu0 0.0
    %2092 = vmatpush2.xpose.msra.mxu0 0.0
    %2093 = vmatprep.mubr.f32.mxu0 0.0
    %2094 = vmatmul.mubr.f32.gmra.mxu0 %v2025
    %v2095 = vpop.f32.mrf.mxu0
    %v2096 = vadd.f32 0.0, %v2095
    %v2097 = vpop.f32.mrf.mxu0
    %2098 = vdwg.mxu0
    %v2099 = vsel %vm1358, %v1273, 0
    %v2101 = vsel %vm1358, %v1303, 0
    %2103 = vmatprep.subr.mxu0 0.0
    %2104 = vmatpush1.xpose.msra.mxu0 0.0
    %2105 = vmatprep.subr.mxu0 0.0
    %2106 = vmatpush1.xpose.msra.mxu0 0.0
    %2107 = vmatprep.subr.mxu0 0.0
    %2108 = vmatpush1.xpose.msra.mxu0 0.0
    %2109 = vmatprep.subr.mxu0 0.0
    %2110 = vmatpush1.xpose.msra.mxu0 0.0
    %2111 = vmatprep.subr.mxu0 0.0
    %2112 = vmatpush1.xpose.msra.mxu0 0.0
    %2113 = vmatprep.subr.mxu0 0.0
    %2114 = vmatpush1.xpose.msra.mxu0 0.0
    %2115 = vmatprep.subr.mxu0 0.0
    %2116 = vmatpush1.xpose.msra.mxu0 0.0
    %2117 = vmatprep.subr.mxu0 0.0
    %2118 = vmatpush1.xpose.msra.mxu0 0.0
    %2119 = vmatprep.subr.mxu0 0.0
    %2120 = vmatpush1.xpose.msra.mxu0 0.0
    %2121 = vmatprep.subr.mxu0 0.0
    %2122 = vmatpush1.xpose.msra.mxu0 0.0
    %2123 = vmatprep.subr.mxu0 0.0
    %2124 = vmatpush1.xpose.msra.mxu0 0.0
    %2125 = vmatprep.subr.mxu0 0.0
    %2126 = vmatpush1.xpose.msra.mxu0 0.0
    %2127 = vmatprep.subr.mxu0 0.0
    %2128 = vmatpush1.xpose.msra.mxu0 0.0
    %2129 = vmatprep.subr.mxu0 0.0
    %2130 = vmatpush1.xpose.msra.mxu0 0.0
    %2131 = vmatprep.subr.mxu0 0.0
    %2132 = vmatpush1.xpose.msra.mxu0 0.0
    %2133 = vmatprep.subr.mxu0 0.0
    %2134 = vmatpush1.xpose.msra.mxu0 %v2101
    %2135 = vmatprep.subr.mxu0 0.0
    %2136 = vmatpush2.xpose.msra.mxu0 0.0
    %2137 = vmatprep.subr.mxu0 0.0
    %2138 = vmatpush2.xpose.msra.mxu0 0.0
    %2139 = vmatprep.subr.mxu0 0.0
    %2140 = vmatpush2.xpose.msra.mxu0 0.0
    %2141 = vmatprep.subr.mxu0 0.0
    %2142 = vmatpush2.xpose.msra.mxu0 0.0
    %2143 = vmatprep.subr.mxu0 0.0
    %2144 = vmatpush2.xpose.msra.mxu0 0.0
    %2145 = vmatprep.subr.mxu0 0.0
    %2146 = vmatpush2.xpose.msra.mxu0 0.0
    %2147 = vmatprep.subr.mxu0 0.0
    %2148 = vmatpush2.xpose.msra.mxu0 0.0
    %2149 = vmatprep.subr.mxu0 0.0
    %2150 = vmatpush2.xpose.msra.mxu0 0.0
    %2151 = vmatprep.subr.mxu0 0.0
    %2152 = vmatpush2.xpose.msra.mxu0 0.0
    %2153 = vmatprep.subr.mxu0 0.0
    %2154 = vmatpush2.xpose.msra.mxu0 0.0
    %2155 = vmatprep.subr.mxu0 0.0
    %2156 = vmatpush2.xpose.msra.mxu0 0.0
    %2157 = vmatprep.subr.mxu0 0.0
    %2158 = vmatpush2.xpose.msra.mxu0 0.0
    %2159 = vmatprep.subr.mxu0 0.0
    %2160 = vmatpush2.xpose.msra.mxu0 0.0
    %2161 = vmatprep.subr.mxu0 0.0
    %2162 = vmatpush2.xpose.msra.mxu0 0.0
    %2163 = vmatprep.subr.mxu0 0.0
    %2164 = vmatpush2.xpose.msra.mxu0 0.0
    %2165 = vmatprep.subr.mxu0 0.0
    %2166 = vmatpush2.xpose.msra.mxu0 0.0
    %2167 = vmatprep.mubr.f32.mxu0 0.0
    %2168 = vmatmul.mubr.f32.gmra.mxu0 %v2099
    %v2169 = vpop.f32.mrf.mxu0
    %v2170 = vadd.f32 0.0, %v2169
    %v2171 = vpop.f32.mrf.mxu0
    %2172 = vdwg.mxu0
    %v2173 = vsel %vm1358, %v1275, 0
    %v2175 = vsel %vm1358, %v1305, 0
    %2177 = vmatprep.subr.mxu0 0.0
    %2178 = vmatpush1.xpose.msra.mxu0 0.0
    %2179 = vmatprep.subr.mxu0 0.0
    %2180 = vmatpush1.xpose.msra.mxu0 0.0
    %2181 = vmatprep.subr.mxu0 0.0
    %2182 = vmatpush1.xpose.msra.mxu0 0.0
    %2183 = vmatprep.subr.mxu0 0.0
    %2184 = vmatpush1.xpose.msra.mxu0 0.0
    %2185 = vmatprep.subr.mxu0 0.0
    %2186 = vmatpush1.xpose.msra.mxu0 0.0
    %2187 = vmatprep.subr.mxu0 0.0
    %2188 = vmatpush1.xpose.msra.mxu0 0.0
    %2189 = vmatprep.subr.mxu0 0.0
    %2190 = vmatpush1.xpose.msra.mxu0 0.0
    %2191 = vmatprep.subr.mxu0 0.0
    %2192 = vmatpush1.xpose.msra.mxu0 0.0
    %2193 = vmatprep.subr.mxu0 0.0
    %2194 = vmatpush1.xpose.msra.mxu0 0.0
    %2195 = vmatprep.subr.mxu0 0.0
    %2196 = vmatpush1.xpose.msra.mxu0 0.0
    %2197 = vmatprep.subr.mxu0 0.0
    %2198 = vmatpush1.xpose.msra.mxu0 0.0
    %2199 = vmatprep.subr.mxu0 0.0
    %2200 = vmatpush1.xpose.msra.mxu0 0.0
    %2201 = vmatprep.subr.mxu0 0.0
    %2202 = vmatpush1.xpose.msra.mxu0 0.0
    %2203 = vmatprep.subr.mxu0 0.0
    %2204 = vmatpush1.xpose.msra.mxu0 0.0
    %2205 = vmatprep.subr.mxu0 0.0
    %2206 = vmatpush1.xpose.msra.mxu0 0.0
    %2207 = vmatprep.subr.mxu0 0.0
    %2208 = vmatpush1.xpose.msra.mxu0 %v2175
    %2209 = vmatprep.subr.mxu0 0.0
    %2210 = vmatpush2.xpose.msra.mxu0 0.0
    %2211 = vmatprep.subr.mxu0 0.0
    %2212 = vmatpush2.xpose.msra.mxu0 0.0
    %2213 = vmatprep.subr.mxu0 0.0
    %2214 = vmatpush2.xpose.msra.mxu0 0.0
    %2215 = vmatprep.subr.mxu0 0.0
    %2216 = vmatpush2.xpose.msra.mxu0 0.0
    %2217 = vmatprep.subr.mxu0 0.0
    %2218 = vmatpush2.xpose.msra.mxu0 0.0
    %2219 = vmatprep.subr.mxu0 0.0
    %2220 = vmatpush2.xpose.msra.mxu0 0.0
    %2221 = vmatprep.subr.mxu0 0.0
    %2222 = vmatpush2.xpose.msra.mxu0 0.0
    %2223 = vmatprep.subr.mxu0 0.0
    %2224 = vmatpush2.xpose.msra.mxu0 0.0
    %2225 = vmatprep.subr.mxu0 0.0
    %2226 = vmatpush2.xpose.msra.mxu0 0.0
    %2227 = vmatprep.subr.mxu0 0.0
    %2228 = vmatpush2.xpose.msra.mxu0 0.0
    %2229 = vmatprep.subr.mxu0 0.0
    %2230 = vmatpush2.xpose.msra.mxu0 0.0
    %2231 = vmatprep.subr.mxu0 0.0
    %2232 = vmatpush2.xpose.msra.mxu0 0.0
    %2233 = vmatprep.subr.mxu0 0.0
    %2234 = vmatpush2.xpose.msra.mxu0 0.0
    %2235 = vmatprep.subr.mxu0 0.0
    %2236 = vmatpush2.xpose.msra.mxu0 0.0
    %2237 = vmatprep.subr.mxu0 0.0
    %2238 = vmatpush2.xpose.msra.mxu0 0.0
    %2239 = vmatprep.subr.mxu0 0.0
    %2240 = vmatpush2.xpose.msra.mxu0 0.0
    %2241 = vmatprep.mubr.f32.mxu0 0.0
    %2242 = vmatmul.mubr.f32.gmra.mxu0 %v2173
    %v2243 = vpop.f32.mrf.mxu0
    %v2244 = vadd.f32 0.0, %v2243
    %v2245 = vpop.f32.mrf.mxu0
    %2246 = vdwg.mxu0
    %v2247 = vsel %vm1358, %v1277, 0
    %v2249 = vsel %vm1358, %v1307, 0
    %2251 = vmatprep.subr.mxu0 0.0
    %2252 = vmatpush1.xpose.msra.mxu0 0.0
    %2253 = vmatprep.subr.mxu0 0.0
    %2254 = vmatpush1.xpose.msra.mxu0 0.0
    %2255 = vmatprep.subr.mxu0 0.0
    %2256 = vmatpush1.xpose.msra.mxu0 0.0
    %2257 = vmatprep.subr.mxu0 0.0
    %2258 = vmatpush1.xpose.msra.mxu0 0.0
    %2259 = vmatprep.subr.mxu0 0.0
    %2260 = vmatpush1.xpose.msra.mxu0 0.0
    %2261 = vmatprep.subr.mxu0 0.0
    %2262 = vmatpush1.xpose.msra.mxu0 0.0
    %2263 = vmatprep.subr.mxu0 0.0
    %2264 = vmatpush1.xpose.msra.mxu0 0.0
    %2265 = vmatprep.subr.mxu0 0.0
    %2266 = vmatpush1.xpose.msra.mxu0 0.0
    %2267 = vmatprep.subr.mxu0 0.0
    %2268 = vmatpush1.xpose.msra.mxu0 0.0
    %2269 = vmatprep.subr.mxu0 0.0
    %2270 = vmatpush1.xpose.msra.mxu0 0.0
    %2271 = vmatprep.subr.mxu0 0.0
    %2272 = vmatpush1.xpose.msra.mxu0 0.0
    %2273 = vmatprep.subr.mxu0 0.0
    %2274 = vmatpush1.xpose.msra.mxu0 0.0
    %2275 = vmatprep.subr.mxu0 0.0
    %2276 = vmatpush1.xpose.msra.mxu0 0.0
    %2277 = vmatprep.subr.mxu0 0.0
    %2278 = vmatpush1.xpose.msra.mxu0 0.0
    %2279 = vmatprep.subr.mxu0 0.0
    %2280 = vmatpush1.xpose.msra.mxu0 0.0
    %2281 = vmatprep.subr.mxu0 0.0
    %2282 = vmatpush1.xpose.msra.mxu0 %v2249
    %2283 = vmatprep.subr.mxu0 0.0
    %2284 = vmatpush2.xpose.msra.mxu0 0.0
    %2285 = vmatprep.subr.mxu0 0.0
    %2286 = vmatpush2.xpose.msra.mxu0 0.0
    %2287 = vmatprep.subr.mxu0 0.0
    %2288 = vmatpush2.xpose.msra.mxu0 0.0
    %2289 = vmatprep.subr.mxu0 0.0
    %2290 = vmatpush2.xpose.msra.mxu0 0.0
    %2291 = vmatprep.subr.mxu0 0.0
    %2292 = vmatpush2.xpose.msra.mxu0 0.0
    %2293 = vmatprep.subr.mxu0 0.0
    %2294 = vmatpush2.xpose.msra.mxu0 0.0
    %2295 = vmatprep.subr.mxu0 0.0
    %2296 = vmatpush2.xpose.msra.mxu0 0.0
    %2297 = vmatprep.subr.mxu0 0.0
    %2298 = vmatpush2.xpose.msra.mxu0 0.0
    %2299 = vmatprep.subr.mxu0 0.0
    %2300 = vmatpush2.xpose.msra.mxu0 0.0
    %2301 = vmatprep.subr.mxu0 0.0
    %2302 = vmatpush2.xpose.msra.mxu0 0.0
    %2303 = vmatprep.subr.mxu0 0.0
    %2304 = vmatpush2.xpose.msra.mxu0 0.0
    %2305 = vmatprep.subr.mxu0 0.0
    %2306 = vmatpush2.xpose.msra.mxu0 0.0
    %2307 = vmatprep.subr.mxu0 0.0
    %2308 = vmatpush2.xpose.msra.mxu0 0.0
    %2309 = vmatprep.subr.mxu0 0.0
    %2310 = vmatpush2.xpose.msra.mxu0 0.0
    %2311 = vmatprep.subr.mxu0 0.0
    %2312 = vmatpush2.xpose.msra.mxu0 0.0
    %2313 = vmatprep.subr.mxu0 0.0
    %2314 = vmatpush2.xpose.msra.mxu0 0.0
    %2315 = vmatprep.mubr.f32.mxu0 0.0
    %2316 = vmatmul.mubr.f32.gmra.mxu0 %v2247
    %v2317 = vpop.f32.mrf.mxu0
    %v2318 = vadd.f32 0.0, %v2317
    %v2319 = vpop.f32.mrf.mxu0
    %2320 = vdwg.mxu0
    %v2321 = vsel %vm1358, %v1279, 0
    %v2323 = vsel %vm1358, %v1309, 0
    %2325 = vmatprep.subr.mxu0 0.0
    %2326 = vmatpush1.xpose.msra.mxu0 0.0
    %2327 = vmatprep.subr.mxu0 0.0
    %2328 = vmatpush1.xpose.msra.mxu0 0.0
    %2329 = vmatprep.subr.mxu0 0.0
    %2330 = vmatpush1.xpose.msra.mxu0 0.0
    %2331 = vmatprep.subr.mxu0 0.0
    %2332 = vmatpush1.xpose.msra.mxu0 0.0
    %2333 = vmatprep.subr.mxu0 0.0
    %2334 = vmatpush1.xpose.msra.mxu0 0.0
    %2335 = vmatprep.subr.mxu0 0.0
    %2336 = vmatpush1.xpose.msra.mxu0 0.0
    %2337 = vmatprep.subr.mxu0 0.0
    %2338 = vmatpush1.xpose.msra.mxu0 0.0
    %2339 = vmatprep.subr.mxu0 0.0
    %2340 = vmatpush1.xpose.msra.mxu0 0.0
    %2341 = vmatprep.subr.mxu0 0.0
    %2342 = vmatpush1.xpose.msra.mxu0 0.0
    %2343 = vmatprep.subr.mxu0 0.0
    %2344 = vmatpush1.xpose.msra.mxu0 0.0
    %2345 = vmatprep.subr.mxu0 0.0
    %2346 = vmatpush1.xpose.msra.mxu0 0.0
    %2347 = vmatprep.subr.mxu0 0.0
    %2348 = vmatpush1.xpose.msra.mxu0 0.0
    %2349 = vmatprep.subr.mxu0 0.0
    %2350 = vmatpush1.xpose.msra.mxu0 0.0
    %2351 = vmatprep.subr.mxu0 0.0
    %2352 = vmatpush1.xpose.msra.mxu0 0.0
    %2353 = vmatprep.subr.mxu0 0.0
    %2354 = vmatpush1.xpose.msra.mxu0 0.0
    %2355 = vmatprep.subr.mxu0 0.0
    %2356 = vmatpush1.xpose.msra.mxu0 %v2323
    %2357 = vmatprep.subr.mxu0 0.0
    %2358 = vmatpush2.xpose.msra.mxu0 0.0
    %2359 = vmatprep.subr.mxu0 0.0
    %2360 = vmatpush2.xpose.msra.mxu0 0.0
    %2361 = vmatprep.subr.mxu0 0.0
    %2362 = vmatpush2.xpose.msra.mxu0 0.0
    %2363 = vmatprep.subr.mxu0 0.0
    %2364 = vmatpush2.xpose.msra.mxu0 0.0
    %2365 = vmatprep.subr.mxu0 0.0
    %2366 = vmatpush2.xpose.msra.mxu0 0.0
    %2367 = vmatprep.subr.mxu0 0.0
    %2368 = vmatpush2.xpose.msra.mxu0 0.0
    %2369 = vmatprep.subr.mxu0 0.0
    %2370 = vmatpush2.xpose.msra.mxu0 0.0
    %2371 = vmatprep.subr.mxu0 0.0
    %2372 = vmatpush2.xpose.msra.mxu0 0.0
    %2373 = vmatprep.subr.mxu0 0.0
    %2374 = vmatpush2.xpose.msra.mxu0 0.0
    %2375 = vmatprep.subr.mxu0 0.0
    %2376 = vmatpush2.xpose.msra.mxu0 0.0
    %2377 = vmatprep.subr.mxu0 0.0
    %2378 = vmatpush2.xpose.msra.mxu0 0.0
    %2379 = vmatprep.subr.mxu0 0.0
    %2380 = vmatpush2.xpose.msra.mxu0 0.0
    %2381 = vmatprep.subr.mxu0 0.0
    %2382 = vmatpush2.xpose.msra.mxu0 0.0
    %2383 = vmatprep.subr.mxu0 0.0
    %2384 = vmatpush2.xpose.msra.mxu0 0.0
    %2385 = vmatprep.subr.mxu0 0.0
    %2386 = vmatpush2.xpose.msra.mxu0 0.0
    %2387 = vmatprep.subr.mxu0 0.0
    %2388 = vmatpush2.xpose.msra.mxu0 0.0
    %2389 = vmatprep.mubr.f32.mxu0 0.0
    %2390 = vmatmul.mubr.f32.gmra.mxu0 %v2321
    %v2391 = vpop.f32.mrf.mxu0
    %v2392 = vadd.f32 0.0, %v2391
    %v2393 = vpop.f32.mrf.mxu0
    %2394 = vdwg.mxu0
    %v2395 = vsel %vm1358, %v1281, 0
    %v2397 = vsel %vm1358, %v1311, 0
    %2399 = vmatprep.subr.mxu0 0.0
    %2400 = vmatpush1.xpose.msra.mxu0 0.0
    %2401 = vmatprep.subr.mxu0 0.0
    %2402 = vmatpush1.xpose.msra.mxu0 0.0
    %2403 = vmatprep.subr.mxu0 0.0
    %2404 = vmatpush1.xpose.msra.mxu0 0.0
    %2405 = vmatprep.subr.mxu0 0.0
    %2406 = vmatpush1.xpose.msra.mxu0 0.0
    %2407 = vmatprep.subr.mxu0 0.0
    %2408 = vmatpush1.xpose.msra.mxu0 0.0
    %2409 = vmatprep.subr.mxu0 0.0
    %2410 = vmatpush1.xpose.msra.mxu0 0.0
    %2411 = vmatprep.subr.mxu0 0.0
    %2412 = vmatpush1.xpose.msra.mxu0 0.0
    %2413 = vmatprep.subr.mxu0 0.0
    %2414 = vmatpush1.xpose.msra.mxu0 0.0
    %2415 = vmatprep.subr.mxu0 0.0
    %2416 = vmatpush1.xpose.msra.mxu0 0.0
    %2417 = vmatprep.subr.mxu0 0.0
    %2418 = vmatpush1.xpose.msra.mxu0 0.0
    %2419 = vmatprep.subr.mxu0 0.0
    %2420 = vmatpush1.xpose.msra.mxu0 0.0
    %2421 = vmatprep.subr.mxu0 0.0
    %2422 = vmatpush1.xpose.msra.mxu0 0.0
    %2423 = vmatprep.subr.mxu0 0.0
    %2424 = vmatpush1.xpose.msra.mxu0 0.0
    %2425 = vmatprep.subr.mxu0 0.0
    %2426 = vmatpush1.xpose.msra.mxu0 0.0
    %2427 = vmatprep.subr.mxu0 0.0
    %2428 = vmatpush1.xpose.msra.mxu0 0.0
    %2429 = vmatprep.subr.mxu0 0.0
    %2430 = vmatpush1.xpose.msra.mxu0 %v2397
    %2431 = vmatprep.subr.mxu0 0.0
    %2432 = vmatpush2.xpose.msra.mxu0 0.0
    %2433 = vmatprep.subr.mxu0 0.0
    %2434 = vmatpush2.xpose.msra.mxu0 0.0
    %2435 = vmatprep.subr.mxu0 0.0
    %2436 = vmatpush2.xpose.msra.mxu0 0.0
    %2437 = vmatprep.subr.mxu0 0.0
    %2438 = vmatpush2.xpose.msra.mxu0 0.0
    %2439 = vmatprep.subr.mxu0 0.0
    %2440 = vmatpush2.xpose.msra.mxu0 0.0
    %2441 = vmatprep.subr.mxu0 0.0
    %2442 = vmatpush2.xpose.msra.mxu0 0.0
    %2443 = vmatprep.subr.mxu0 0.0
    %2444 = vmatpush2.xpose.msra.mxu0 0.0
    %2445 = vmatprep.subr.mxu0 0.0
    %2446 = vmatpush2.xpose.msra.mxu0 0.0
    %2447 = vmatprep.subr.mxu0 0.0
    %2448 = vmatpush2.xpose.msra.mxu0 0.0
    %2449 = vmatprep.subr.mxu0 0.0
    %2450 = vmatpush2.xpose.msra.mxu0 0.0
    %2451 = vmatprep.subr.mxu0 0.0
    %2452 = vmatpush2.xpose.msra.mxu0 0.0
    %2453 = vmatprep.subr.mxu0 0.0
    %2454 = vmatpush2.xpose.msra.mxu0 0.0
    %2455 = vmatprep.subr.mxu0 0.0
    %2456 = vmatpush2.xpose.msra.mxu0 0.0
    %2457 = vmatprep.subr.mxu0 0.0
    %2458 = vmatpush2.xpose.msra.mxu0 0.0
    %2459 = vmatprep.subr.mxu0 0.0
    %2460 = vmatpush2.xpose.msra.mxu0 0.0
    %2461 = vmatprep.subr.mxu0 0.0
    %2462 = vmatpush2.xpose.msra.mxu0 0.0
    %2463 = vmatprep.mubr.f32.mxu0 0.0
    %2464 = vmatmul.mubr.f32.gmra.mxu0 %v2395
    %v2465 = vpop.f32.mrf.mxu0
    %v2466 = vadd.f32 0.0, %v2465
    %v2467 = vpop.f32.mrf.mxu0
    %2468 = vdwg.mxu0
    %v2469 = vsel %vm1358, %v1283, 0
    %v2471 = vsel %vm1358, %v1313, 0
    %2473 = vmatprep.subr.mxu0 0.0
    %2474 = vmatpush1.xpose.msra.mxu0 0.0
    %2475 = vmatprep.subr.mxu0 0.0
    %2476 = vmatpush1.xpose.msra.mxu0 0.0
    %2477 = vmatprep.subr.mxu0 0.0
    %2478 = vmatpush1.xpose.msra.mxu0 0.0
    %2479 = vmatprep.subr.mxu0 0.0
    %2480 = vmatpush1.xpose.msra.mxu0 0.0
    %2481 = vmatprep.subr.mxu0 0.0
    %2482 = vmatpush1.xpose.msra.mxu0 0.0
    %2483 = vmatprep.subr.mxu0 0.0
    %2484 = vmatpush1.xpose.msra.mxu0 0.0
    %2485 = vmatprep.subr.mxu0 0.0
    %2486 = vmatpush1.xpose.msra.mxu0 0.0
    %2487 = vmatprep.subr.mxu0 0.0
    %2488 = vmatpush1.xpose.msra.mxu0 0.0
    %2489 = vmatprep.subr.mxu0 0.0
    %2490 = vmatpush1.xpose.msra.mxu0 0.0
    %2491 = vmatprep.subr.mxu0 0.0
    %2492 = vmatpush1.xpose.msra.mxu0 0.0
    %2493 = vmatprep.subr.mxu0 0.0
    %2494 = vmatpush1.xpose.msra.mxu0 0.0
    %2495 = vmatprep.subr.mxu0 0.0
    %2496 = vmatpush1.xpose.msra.mxu0 0.0
    %2497 = vmatprep.subr.mxu0 0.0
    %2498 = vmatpush1.xpose.msra.mxu0 0.0
    %2499 = vmatprep.subr.mxu0 0.0
    %2500 = vmatpush1.xpose.msra.mxu0 0.0
    %2501 = vmatprep.subr.mxu0 0.0
    %2502 = vmatpush1.xpose.msra.mxu0 0.0
    %2503 = vmatprep.subr.mxu0 0.0
    %2504 = vmatpush1.xpose.msra.mxu0 %v2471
    %2505 = vmatprep.subr.mxu0 0.0
    %2506 = vmatpush2.xpose.msra.mxu0 0.0
    %2507 = vmatprep.subr.mxu0 0.0
    %2508 = vmatpush2.xpose.msra.mxu0 0.0
    %2509 = vmatprep.subr.mxu0 0.0
    %2510 = vmatpush2.xpose.msra.mxu0 0.0
    %2511 = vmatprep.subr.mxu0 0.0
    %2512 = vmatpush2.xpose.msra.mxu0 0.0
    %2513 = vmatprep.subr.mxu0 0.0
    %2514 = vmatpush2.xpose.msra.mxu0 0.0
    %2515 = vmatprep.subr.mxu0 0.0
    %2516 = vmatpush2.xpose.msra.mxu0 0.0
    %2517 = vmatprep.subr.mxu0 0.0
    %2518 = vmatpush2.xpose.msra.mxu0 0.0
    %2519 = vmatprep.subr.mxu0 0.0
    %2520 = vmatpush2.xpose.msra.mxu0 0.0
    %2521 = vmatprep.subr.mxu0 0.0
    %2522 = vmatpush2.xpose.msra.mxu0 0.0
    %2523 = vmatprep.subr.mxu0 0.0
    %2524 = vmatpush2.xpose.msra.mxu0 0.0
    %2525 = vmatprep.subr.mxu0 0.0
    %2526 = vmatpush2.xpose.msra.mxu0 0.0
    %2527 = vmatprep.subr.mxu0 0.0
    %2528 = vmatpush2.xpose.msra.mxu0 0.0
    %2529 = vmatprep.subr.mxu0 0.0
    %2530 = vmatpush2.xpose.msra.mxu0 0.0
    %2531 = vmatprep.subr.mxu0 0.0
    %2532 = vmatpush2.xpose.msra.mxu0 0.0
    %2533 = vmatprep.subr.mxu0 0.0
    %2534 = vmatpush2.xpose.msra.mxu0 0.0
    %2535 = vmatprep.subr.mxu0 0.0
    %2536 = vmatpush2.xpose.msra.mxu0 0.0
    %2537 = vmatprep.mubr.f32.mxu0 0.0
    %2538 = vmatmul.mubr.f32.gmra.mxu0 %v2469
    %v2539 = vpop.f32.mrf.mxu0
    %v2540 = vadd.f32 0.0, %v2539
    %v2541 = vpop.f32.mrf.mxu0
    %2542 = vdwg.mxu0
    %v2543 = vmul.f32 %v1430, 0.17677669
    %v2544 = vmul.f32 %v1504, 0.17677669
    %v2545 = vmul.f32 %v1578, 0.17677669
    %v2546 = vmul.f32 %v1652, 0.17677669
    %v2547 = vmul.f32 %v1726, 0.17677669
    %v2548 = vmul.f32 %v1800, 0.17677669
    %v2549 = vmul.f32 %v1874, 0.17677669
    %v2550 = vmul.f32 %v1948, 0.17677669
    %v2551 = vmul.f32 %v2022, 0.17677669
    %v2552 = vmul.f32 %v2096, 0.17677669
    %v2553 = vmul.f32 %v2170, 0.17677669
    %v2554 = vmul.f32 %v2244, 0.17677669
    %v2555 = vmul.f32 %v2318, 0.17677669
    %v2556 = vmul.f32 %v2392, 0.17677669
    %v2557 = vmul.f32 %v2466, 0.17677669
    %v2558 = vmul.f32 %v2540, 0.17677669
    %vm2559 = vcmask 64512
    %v2560 = vsel %vm2559, %v2543, -inf
    %2561 = vmax.xlane.f32.xlu0 %v2560
    %v2562 = vpop.xlane.xlu0 %2561
    %v2563 = vsel %vm2559, %v2544, -inf
    %2564 = vmax.xlane.f32.xlu0 %v2563
    %v2565 = vpop.xlane.xlu0 %2564
    %v2566 = vsel %vm2559, %v2545, -inf
    %2567 = vmax.xlane.f32.xlu0 %v2566
    %v2568 = vpop.xlane.xlu0 %2567
    %v2569 = vsel %vm2559, %v2546, -inf
    %2570 = vmax.xlane.f32.xlu0 %v2569
    %v2571 = vpop.xlane.xlu0 %2570
    %v2572 = vsel %vm2559, %v2547, -inf
    %2573 = vmax.xlane.f32.xlu0 %v2572
    %v2574 = vpop.xlane.xlu0 %2573
    %v2575 = vsel %vm2559, %v2548, -inf
    %2576 = vmax.xlane.f32.xlu0 %v2575
    %v2577 = vpop.xlane.xlu0 %2576
    %v2578 = vsel %vm2559, %v2549, -inf
    %2579 = vmax.xlane.f32.xlu0 %v2578
    %v2580 = vpop.xlane.xlu0 %2579
    %v2581 = vsel %vm2559, %v2550, -inf
    %2582 = vmax.xlane.f32.xlu0 %v2581
    %v2583 = vpop.xlane.xlu0 %2582
    %v2584 = vsel %vm2559, %v2551, -inf
    %2585 = vmax.xlane.f32.xlu0 %v2584
    %v2586 = vpop.xlane.xlu0 %2585
    %v2587 = vsel %vm2559, %v2552, -inf
    %2588 = vmax.xlane.f32.xlu0 %v2587
    %v2589 = vpop.xlane.xlu0 %2588
    %v2590 = vsel %vm2559, %v2553, -inf
    %2591 = vmax.xlane.f32.xlu0 %v2590
    %v2592 = vpop.xlane.xlu0 %2591
    %v2593 = vsel %vm2559, %v2554, -inf
    %2594 = vmax.xlane.f32.xlu0 %v2593
    %v2595 = vpop.xlane.xlu0 %2594
    %v2596 = vsel %vm2559, %v2555, -inf
    %2597 = vmax.xlane.f32.xlu0 %v2596
    %v2598 = vpop.xlane.xlu0 %2597
    %v2599 = vsel %vm2559, %v2556, -inf
    %2600 = vmax.xlane.f32.xlu0 %v2599
    %v2601 = vpop.xlane.xlu0 %2600
    %v2602 = vsel %vm2559, %v2557, -inf
    %2603 = vmax.xlane.f32.xlu0 %v2602
    %v2604 = vpop.xlane.xlu0 %2603
    %v2605 = vsel %vm2559, %v2558, -inf
    %2606 = vmax.xlane.f32.xlu0 %v2605
    %v2607 = vpop.xlane.xlu0 %2606
    %v2608 = vsub.f32 %v2543, %v2562
    %v2609 = vsub.f32 %v2544, %v2565
    %v2610 = vsub.f32 %v2545, %v2568
    %v2611 = vsub.f32 %v2546, %v2571
    %v2612 = vsub.f32 %v2547, %v2574
    %v2613 = vsub.f32 %v2548, %v2577
    %v2614 = vsub.f32 %v2549, %v2580
    %v2615 = vsub.f32 %v2550, %v2583
    %v2616 = vsub.f32 %v2551, %v2586
    %v2617 = vsub.f32 %v2552, %v2589
    %v2618 = vsub.f32 %v2553, %v2592
    %v2619 = vsub.f32 %v2554, %v2595
    %v2620 = vsub.f32 %v2555, %v2598
    %v2621 = vsub.f32 %v2556, %v2601
    %v2622 = vsub.f32 %v2557, %v2604
    %v2623 = vsub.f32 %v2558, %v2607
    %v2624 = vmul.f32 %v2608, 1.442695
    %v2625 = vpow.pop %v2624
    %v2626 = vmul.f32 %v2609, 1.442695
    %v2627 = vpow.pop %v2626
    %v2628 = vmul.f32 %v2610, 1.442695
    %v2629 = vpow.pop %v2628
    %v2630 = vmul.f32 %v2611, 1.442695
    %v2631 = vpow.pop %v2630
    %v2632 = vmul.f32 %v2612, 1.442695
    %v2633 = vpow.pop %v2632
    %v2634 = vmul.f32 %v2613, 1.442695
    %v2635 = vpow.pop %v2634
    %v2636 = vmul.f32 %v2614, 1.442695
    %v2637 = vpow.pop %v2636
    %v2638 = vmul.f32 %v2615, 1.442695
    %v2639 = vpow.pop %v2638
    %v2640 = vmul.f32 %v2616, 1.442695
    %v2641 = vpow.pop %v2640
    %v2642 = vmul.f32 %v2617, 1.442695
    %v2643 = vpow.pop %v2642
    %v2644 = vmul.f32 %v2618, 1.442695
    %v2645 = vpow.pop %v2644
    %v2646 = vmul.f32 %v2619, 1.442695
    %v2647 = vpow.pop %v2646
    %v2648 = vmul.f32 %v2620, 1.442695
    %v2649 = vpow.pop %v2648
    %v2650 = vmul.f32 %v2621, 1.442695
    %v2651 = vpow.pop %v2650
    %v2652 = vmul.f32 %v2622, 1.442695
    %v2653 = vpow.pop %v2652
    %v2654 = vmul.f32 %v2623, 1.442695
    %v2655 = vpow.pop %v2654
    %v2656 = vsel %vm2559, %v2625, 0.0
    %2657 = vadd.xlane.f32.xlu0 %v2656
    %v2658 = vpop.xlane.xlu0 %2657
    %v2659 = vsel %vm2559, %v2627, 0.0
    %2660 = vadd.xlane.f32.xlu0 %v2659
    %v2661 = vpop.xlane.xlu0 %2660
    %v2662 = vsel %vm2559, %v2629, 0.0
    %2663 = vadd.xlane.f32.xlu0 %v2662
    %v2664 = vpop.xlane.xlu0 %2663
    %v2665 = vsel %vm2559, %v2631, 0.0
    %2666 = vadd.xlane.f32.xlu0 %v2665
    %v2667 = vpop.xlane.xlu0 %2666
    %v2668 = vsel %vm2559, %v2633, 0.0
    %2669 = vadd.xlane.f32.xlu0 %v2668
    %v2670 = vpop.xlane.xlu0 %2669
    %v2671 = vsel %vm2559, %v2635, 0.0
    %2672 = vadd.xlane.f32.xlu0 %v2671
    %v2673 = vpop.xlane.xlu0 %2672
    %v2674 = vsel %vm2559, %v2637, 0.0
    %2675 = vadd.xlane.f32.xlu0 %v2674
    %v2676 = vpop.xlane.xlu0 %2675
    %v2677 = vsel %vm2559, %v2639, 0.0
    %2678 = vadd.xlane.f32.xlu0 %v2677
    %v2679 = vpop.xlane.xlu0 %2678
    %v2680 = vsel %vm2559, %v2641, 0.0
    %2681 = vadd.xlane.f32.xlu0 %v2680
    %v2682 = vpop.xlane.xlu0 %2681
    %v2683 = vsel %vm2559, %v2643, 0.0
    %2684 = vadd.xlane.f32.xlu0 %v2683
    %v2685 = vpop.xlane.xlu0 %2684
    %v2686 = vsel %vm2559, %v2645, 0.0
    %2687 = vadd.xlane.f32.xlu0 %v2686
    %v2688 = vpop.xlane.xlu0 %2687
    %v2689 = vsel %vm2559, %v2647, 0.0
    %2690 = vadd.xlane.f32.xlu0 %v2689
    %v2691 = vpop.xlane.xlu0 %2690
    %v2692 = vsel %vm2559, %v2649, 0.0
    %2693 = vadd.xlane.f32.xlu0 %v2692
    %v2694 = vpop.xlane.xlu0 %2693
    %v2695 = vsel %vm2559, %v2651, 0.0
    %2696 = vadd.xlane.f32.xlu0 %v2695
    %v2697 = vpop.xlane.xlu0 %2696
    %v2698 = vsel %vm2559, %v2653, 0.0
    %2699 = vadd.xlane.f32.xlu0 %v2698
    %v2700 = vpop.xlane.xlu0 %2699
    %v2701 = vsel %vm2559, %v2655, 0.0
    %2702 = vadd.xlane.f32.xlu0 %v2701
    %v2703 = vpop.xlane.xlu0 %2702
    %v2704 = vrcp.pop %v2658
    %v2705 = vrcp.pop %v2661
    %v2706 = vrcp.pop %v2664
    %v2707 = vrcp.pop %v2667
    %v2708 = vrcp.pop %v2670
    %v2709 = vrcp.pop %v2673
    %v2710 = vrcp.pop %v2676
    %v2711 = vrcp.pop %v2679
    %v2712 = vrcp.pop %v2682
    %v2713 = vrcp.pop %v2685
    %v2714 = vrcp.pop %v2688
    %v2715 = vrcp.pop %v2691
    %v2716 = vrcp.pop %v2694
    %v2717 = vrcp.pop %v2697
    %v2718 = vrcp.pop %v2700
    %v2719 = vrcp.pop %v2703
    %v2720 = vmul.f32 %v2625, %v2704
    %v2721 = vmul.f32 %v2627, %v2705
    %v2722 = vmul.f32 %v2629, %v2706
    %v2723 = vmul.f32 %v2631, %v2707
    %v2724 = vmul.f32 %v2633, %v2708
    %v2725 = vmul.f32 %v2635, %v2709
    %v2726 = vmul.f32 %v2637, %v2710
    %v2727 = vmul.f32 %v2639, %v2711
    %v2728 = vmul.f32 %v2641, %v2712
    %v2729 = vmul.f32 %v2643, %v2713
    %v2730 = vmul.f32 %v2645, %v2714
    %v2731 = vmul.f32 %v2647, %v2715
    %v2732 = vmul.f32 %v2649, %v2716
    %v2733 = vmul.f32 %v2651, %v2717
    %v2734 = vmul.f32 %v2653, %v2718
    %v2735 = vmul.f32 %v2655, %v2719
    %v2737 = vsel %vm2559, %v2720, 0
    %2739 = vmatprep.subr.mxu0 0.0
    %2740 = vmatpush1.msra.mxu0 0.0
    %2741 = vmatprep.subr.mxu0 0.0
    %2742 = vmatpush1.msra.mxu0 0.0
    %2743 = vmatprep.subr.mxu0 0.0
    %2744 = vmatpush1.msra.mxu0 0.0
    %2745 = vmatprep.subr.mxu0 0.0
    %2746 = vmatpush1.msra.mxu0 0.0
    %2747 = vmatprep.subr.mxu0 0.0
    %2748 = vmatpush1.msra.mxu0 0.0
    %2749 = vmatprep.subr.mxu0 0.0
    %2750 = vmatpush1.msra.mxu0 0.0
    %2751 = vmatprep.subr.mxu0 0.0
    %2752 = vmatpush1.msra.mxu0 0.0
    %2753 = vmatprep.subr.mxu0 0.0
    %2754 = vmatpush1.msra.mxu0 0.0
    %2755 = vmatprep.subr.mxu0 0.0
    %2756 = vmatpush1.msra.mxu0 0.0
    %2757 = vmatprep.subr.mxu0 0.0
    %2758 = vmatpush1.msra.mxu0 0.0
    %2759 = vmatprep.subr.mxu0 0.0
    %2760 = vmatpush1.msra.mxu0 0.0
    %2761 = vmatprep.subr.mxu0 0.0
    %2762 = vmatpush1.msra.mxu0 0.0
    %2763 = vmatprep.subr.mxu0 0.0
    %2764 = vmatpush1.msra.mxu0 0.0
    %2765 = vmatprep.subr.mxu0 0.0
    %2766 = vmatpush1.msra.mxu0 0.0
    %2767 = vmatprep.subr.mxu0 0.0
    %2768 = vmatpush1.msra.mxu0 0.0
    %2769 = vmatprep.subr.mxu0 0.0
    %2770 = vmatpush1.msra.mxu0 %v1246
    %2771 = vmatprep.subr.mxu0 0.0
    %2772 = vmatpush2.msra.mxu0 0.0
    %2773 = vmatprep.subr.mxu0 0.0
    %2774 = vmatpush2.msra.mxu0 0.0
    %2775 = vmatprep.subr.mxu0 0.0
    %2776 = vmatpush2.msra.mxu0 0.0
    %2777 = vmatprep.subr.mxu0 0.0
    %2778 = vmatpush2.msra.mxu0 0.0
    %2779 = vmatprep.subr.mxu0 0.0
    %2780 = vmatpush2.msra.mxu0 0.0
    %2781 = vmatprep.subr.mxu0 0.0
    %2782 = vmatpush2.msra.mxu0 0.0
    %2783 = vmatprep.subr.mxu0 0.0
    %2784 = vmatpush2.msra.mxu0 0.0
    %2785 = vmatprep.subr.mxu0 0.0
    %2786 = vmatpush2.msra.mxu0 0.0
    %2787 = vmatprep.subr.mxu0 0.0
    %2788 = vmatpush2.msra.mxu0 0.0
    %2789 = vmatprep.subr.mxu0 0.0
    %2790 = vmatpush2.msra.mxu0 0.0
    %2791 = vmatprep.subr.mxu0 0.0
    %2792 = vmatpush2.msra.mxu0 0.0
    %2793 = vmatprep.subr.mxu0 0.0
    %2794 = vmatpush2.msra.mxu0 0.0
    %2795 = vmatprep.subr.mxu0 0.0
    %2796 = vmatpush2.msra.mxu0 0.0
    %2797 = vmatprep.subr.mxu0 0.0
    %2798 = vmatpush2.msra.mxu0 0.0
    %2799 = vmatprep.subr.mxu0 0.0
    %2800 = vmatpush2.msra.mxu0 0.0
    %2801 = vmatprep.subr.mxu0 0.0
    %2802 = vmatpush2.msra.mxu0 0.0
    %2803 = vmatprep.mubr.f32.mxu0 0.0
    %2804 = vmatmul.mubr.f32.gmra.mxu0 %v2737
    %v2805 = vpop.f32.mrf.mxu0
    %v2806 = vadd.f32 0.0, %v2805
    %v2807 = vpop.f32.mrf.mxu0
    %2808 = vdwg.mxu0
    %v2810 = vsel %vm2559, %v2721, 0
    %2812 = vmatprep.subr.mxu0 0.0
    %2813 = vmatpush1.msra.mxu0 0.0
    %2814 = vmatprep.subr.mxu0 0.0
    %2815 = vmatpush1.msra.mxu0 0.0
    %2816 = vmatprep.subr.mxu0 0.0
    %2817 = vmatpush1.msra.mxu0 0.0
    %2818 = vmatprep.subr.mxu0 0.0
    %2819 = vmatpush1.msra.mxu0 0.0
    %2820 = vmatprep.subr.mxu0 0.0
    %2821 = vmatpush1.msra.mxu0 0.0
    %2822 = vmatprep.subr.mxu0 0.0
    %2823 = vmatpush1.msra.mxu0 0.0
    %2824 = vmatprep.subr.mxu0 0.0
    %2825 = vmatpush1.msra.mxu0 0.0
    %2826 = vmatprep.subr.mxu0 0.0
    %2827 = vmatpush1.msra.mxu0 0.0
    %2828 = vmatprep.subr.mxu0 0.0
    %2829 = vmatpush1.msra.mxu0 0.0
    %2830 = vmatprep.subr.mxu0 0.0
    %2831 = vmatpush1.msra.mxu0 0.0
    %2832 = vmatprep.subr.mxu0 0.0
    %2833 = vmatpush1.msra.mxu0 0.0
    %2834 = vmatprep.subr.mxu0 0.0
    %2835 = vmatpush1.msra.mxu0 0.0
    %2836 = vmatprep.subr.mxu0 0.0
    %2837 = vmatpush1.msra.mxu0 0.0
    %2838 = vmatprep.subr.mxu0 0.0
    %2839 = vmatpush1.msra.mxu0 0.0
    %2840 = vmatprep.subr.mxu0 0.0
    %2841 = vmatpush1.msra.mxu0 0.0
    %2842 = vmatprep.subr.mxu0 0.0
    %2843 = vmatpush1.msra.mxu0 %v1316
    %2844 = vmatprep.subr.mxu0 0.0
    %2845 = vmatpush2.msra.mxu0 0.0
    %2846 = vmatprep.subr.mxu0 0.0
    %2847 = vmatpush2.msra.mxu0 0.0
    %2848 = vmatprep.subr.mxu0 0.0
    %2849 = vmatpush2.msra.mxu0 0.0
    %2850 = vmatprep.subr.mxu0 0.0
    %2851 = vmatpush2.msra.mxu0 0.0
    %2852 = vmatprep.subr.mxu0 0.0
    %2853 = vmatpush2.msra.mxu0 0.0
    %2854 = vmatprep.subr.mxu0 0.0
    %2855 = vmatpush2.msra.mxu0 0.0
    %2856 = vmatprep.subr.mxu0 0.0
    %2857 = vmatpush2.msra.mxu0 0.0
    %2858 = vmatprep.subr.mxu0 0.0
    %2859 = vmatpush2.msra.mxu0 0.0
    %2860 = vmatprep.subr.mxu0 0.0
    %2861 = vmatpush2.msra.mxu0 0.0
    %2862 = vmatprep.subr.mxu0 0.0
    %2863 = vmatpush2.msra.mxu0 0.0
    %2864 = vmatprep.subr.mxu0 0.0
    %2865 = vmatpush2.msra.mxu0 0.0
    %2866 = vmatprep.subr.mxu0 0.0
    %2867 = vmatpush2.msra.mxu0 0.0
    %2868 = vmatprep.subr.mxu0 0.0
    %2869 = vmatpush2.msra.mxu0 0.0
    %2870 = vmatprep.subr.mxu0 0.0
    %2871 = vmatpush2.msra.mxu0 0.0
    %2872 = vmatprep.subr.mxu0 0.0
    %2873 = vmatpush2.msra.mxu0 0.0
    %2874 = vmatprep.subr.mxu0 0.0
    %2875 = vmatpush2.msra.mxu0 0.0
    %2876 = vmatprep.mubr.f32.mxu0 0.0
    %2877 = vmatmul.mubr.f32.gmra.mxu0 %v2810
    %v2878 = vpop.f32.mrf.mxu0
    %v2879 = vadd.f32 0.0, %v2878
    %v2880 = vpop.f32.mrf.mxu0
    %2881 = vdwg.mxu0
    %v2883 = vsel %vm2559, %v2722, 0
    %2885 = vmatprep.subr.mxu0 0.0
    %2886 = vmatpush1.msra.mxu0 0.0
    %2887 = vmatprep.subr.mxu0 0.0
    %2888 = vmatpush1.msra.mxu0 0.0
    %2889 = vmatprep.subr.mxu0 0.0
    %2890 = vmatpush1.msra.mxu0 0.0
    %2891 = vmatprep.subr.mxu0 0.0
    %2892 = vmatpush1.msra.mxu0 0.0
    %2893 = vmatprep.subr.mxu0 0.0
    %2894 = vmatpush1.msra.mxu0 0.0
    %2895 = vmatprep.subr.mxu0 0.0
    %2896 = vmatpush1.msra.mxu0 0.0
    %2897 = vmatprep.subr.mxu0 0.0
    %2898 = vmatpush1.msra.mxu0 0.0
    %2899 = vmatprep.subr.mxu0 0.0
    %2900 = vmatpush1.msra.mxu0 0.0
    %2901 = vmatprep.subr.mxu0 0.0
    %2902 = vmatpush1.msra.mxu0 0.0
    %2903 = vmatprep.subr.mxu0 0.0
    %2904 = vmatpush1.msra.mxu0 0.0
    %2905 = vmatprep.subr.mxu0 0.0
    %2906 = vmatpush1.msra.mxu0 0.0
    %2907 = vmatprep.subr.mxu0 0.0
    %2908 = vmatpush1.msra.mxu0 0.0
    %2909 = vmatprep.subr.mxu0 0.0
    %2910 = vmatpush1.msra.mxu0 0.0
    %2911 = vmatprep.subr.mxu0 0.0
    %2912 = vmatpush1.msra.mxu0 0.0
    %2913 = vmatprep.subr.mxu0 0.0
    %2914 = vmatpush1.msra.mxu0 0.0
    %2915 = vmatprep.subr.mxu0 0.0
    %2916 = vmatpush1.msra.mxu0 %v1319
    %2917 = vmatprep.subr.mxu0 0.0
    %2918 = vmatpush2.msra.mxu0 0.0
    %2919 = vmatprep.subr.mxu0 0.0
    %2920 = vmatpush2.msra.mxu0 0.0
    %2921 = vmatprep.subr.mxu0 0.0
    %2922 = vmatpush2.msra.mxu0 0.0
    %2923 = vmatprep.subr.mxu0 0.0
    %2924 = vmatpush2.msra.mxu0 0.0
    %2925 = vmatprep.subr.mxu0 0.0
    %2926 = vmatpush2.msra.mxu0 0.0
    %2927 = vmatprep.subr.mxu0 0.0
    %2928 = vmatpush2.msra.mxu0 0.0
    %2929 = vmatprep.subr.mxu0 0.0
    %2930 = vmatpush2.msra.mxu0 0.0
    %2931 = vmatprep.subr.mxu0 0.0
    %2932 = vmatpush2.msra.mxu0 0.0
    %2933 = vmatprep.subr.mxu0 0.0
    %2934 = vmatpush2.msra.mxu0 0.0
    %2935 = vmatprep.subr.mxu0 0.0
    %2936 = vmatpush2.msra.mxu0 0.0
    %2937 = vmatprep.subr.mxu0 0.0
    %2938 = vmatpush2.msra.mxu0 0.0
    %2939 = vmatprep.subr.mxu0 0.0
    %2940 = vmatpush2.msra.mxu0 0.0
    %2941 = vmatprep.subr.mxu0 0.0
    %2942 = vmatpush2.msra.mxu0 0.0
    %2943 = vmatprep.subr.mxu0 0.0
    %2944 = vmatpush2.msra.mxu0 0.0
    %2945 = vmatprep.subr.mxu0 0.0
    %2946 = vmatpush2.msra.mxu0 0.0
    %2947 = vmatprep.subr.mxu0 0.0
    %2948 = vmatpush2.msra.mxu0 0.0
    %2949 = vmatprep.mubr.f32.mxu0 0.0
    %2950 = vmatmul.mubr.f32.gmra.mxu0 %v2883
    %v2951 = vpop.f32.mrf.mxu0
    %v2952 = vadd.f32 0.0, %v2951
    %v2953 = vpop.f32.mrf.mxu0
    %2954 = vdwg.mxu0
    %v2956 = vsel %vm2559, %v2723, 0
    %2958 = vmatprep.subr.mxu0 0.0
    %2959 = vmatpush1.msra.mxu0 0.0
    %2960 = vmatprep.subr.mxu0 0.0
    %2961 = vmatpush1.msra.mxu0 0.0
    %2962 = vmatprep.subr.mxu0 0.0
    %2963 = vmatpush1.msra.mxu0 0.0
    %2964 = vmatprep.subr.mxu0 0.0
    %2965 = vmatpush1.msra.mxu0 0.0
    %2966 = vmatprep.subr.mxu0 0.0
    %2967 = vmatpush1.msra.mxu0 0.0
    %2968 = vmatprep.subr.mxu0 0.0
    %2969 = vmatpush1.msra.mxu0 0.0
    %2970 = vmatprep.subr.mxu0 0.0
    %2971 = vmatpush1.msra.mxu0 0.0
    %2972 = vmatprep.subr.mxu0 0.0
    %2973 = vmatpush1.msra.mxu0 0.0
    %2974 = vmatprep.subr.mxu0 0.0
    %2975 = vmatpush1.msra.mxu0 0.0
    %2976 = vmatprep.subr.mxu0 0.0
    %2977 = vmatpush1.msra.mxu0 0.0
    %2978 = vmatprep.subr.mxu0 0.0
    %2979 = vmatpush1.msra.mxu0 0.0
    %2980 = vmatprep.subr.mxu0 0.0
    %2981 = vmatpush1.msra.mxu0 0.0
    %2982 = vmatprep.subr.mxu0 0.0
    %2983 = vmatpush1.msra.mxu0 0.0
    %2984 = vmatprep.subr.mxu0 0.0
    %2985 = vmatpush1.msra.mxu0 0.0
    %2986 = vmatprep.subr.mxu0 0.0
    %2987 = vmatpush1.msra.mxu0 0.0
    %2988 = vmatprep.subr.mxu0 0.0
    %2989 = vmatpush1.msra.mxu0 %v1322
    %2990 = vmatprep.subr.mxu0 0.0
    %2991 = vmatpush2.msra.mxu0 0.0
    %2992 = vmatprep.subr.mxu0 0.0
    %2993 = vmatpush2.msra.mxu0 0.0
    %2994 = vmatprep.subr.mxu0 0.0
    %2995 = vmatpush2.msra.mxu0 0.0
    %2996 = vmatprep.subr.mxu0 0.0
    %2997 = vmatpush2.msra.mxu0 0.0
    %2998 = vmatprep.subr.mxu0 0.0
    %2999 = vmatpush2.msra.mxu0 0.0
    %3000 = vmatprep.subr.mxu0 0.0
    %3001 = vmatpush2.msra.mxu0 0.0
    %3002 = vmatprep.subr.mxu0 0.0
    %3003 = vmatpush2.msra.mxu0 0.0
    %3004 = vmatprep.subr.mxu0 0.0
    %3005 = vmatpush2.msra.mxu0 0.0
    %3006 = vmatprep.subr.mxu0 0.0
    %3007 = vmatpush2.msra.mxu0 0.0
    %3008 = vmatprep.subr.mxu0 0.0
    %3009 = vmatpush2.msra.mxu0 0.0
    %3010 = vmatprep.subr.mxu0 0.0
    %3011 = vmatpush2.msra.mxu0 0.0
    %3012 = vmatprep.subr.mxu0 0.0
    %3013 = vmatpush2.msra.mxu0 0.0
    %3014 = vmatprep.subr.mxu0 0.0
    %3015 = vmatpush2.msra.mxu0 0.0
    %3016 = vmatprep.subr.mxu0 0.0
    %3017 = vmatpush2.msra.mxu0 0.0
    %3018 = vmatprep.subr.mxu0 0.0
    %3019 = vmatpush2.msra.mxu0 0.0
    %3020 = vmatprep.subr.mxu0 0.0
    %3021 = vmatpush2.msra.mxu0 0.0
    %3022 = vmatprep.mubr.f32.mxu0 0.0
    %3023 = vmatmul.mubr.f32.gmra.mxu0 %v2956
    %v3024 = vpop.f32.mrf.mxu0
    %v3025 = vadd.f32 0.0, %v3024
    %v3026 = vpop.f32.mrf.mxu0
    %3027 = vdwg.mxu0
    %v3029 = vsel %vm2559, %v2724, 0
    %3031 = vmatprep.subr.mxu0 0.0
    %3032 = vmatpush1.msra.mxu0 0.0
    %3033 = vmatprep.subr.mxu0 0.0
    %3034 = vmatpush1.msra.mxu0 0.0
    %3035 = vmatprep.subr.mxu0 0.0
    %3036 = vmatpush1.msra.mxu0 0.0
    %3037 = vmatprep.subr.mxu0 0.0
    %3038 = vmatpush1.msra.mxu0 0.0
    %3039 = vmatprep.subr.mxu0 0.0
    %3040 = vmatpush1.msra.mxu0 0.0
    %3041 = vmatprep.subr.mxu0 0.0
    %3042 = vmatpush1.msra.mxu0 0.0
    %3043 = vmatprep.subr.mxu0 0.0
    %3044 = vmatpush1.msra.mxu0 0.0
    %3045 = vmatprep.subr.mxu0 0.0
    %3046 = vmatpush1.msra.mxu0 0.0
    %3047 = vmatprep.subr.mxu0 0.0
    %3048 = vmatpush1.msra.mxu0 0.0
    %3049 = vmatprep.subr.mxu0 0.0
    %3050 = vmatpush1.msra.mxu0 0.0
    %3051 = vmatprep.subr.mxu0 0.0
    %3052 = vmatpush1.msra.mxu0 0.0
    %3053 = vmatprep.subr.mxu0 0.0
    %3054 = vmatpush1.msra.mxu0 0.0
    %3055 = vmatprep.subr.mxu0 0.0
    %3056 = vmatpush1.msra.mxu0 0.0
    %3057 = vmatprep.subr.mxu0 0.0
    %3058 = vmatpush1.msra.mxu0 0.0
    %3059 = vmatprep.subr.mxu0 0.0
    %3060 = vmatpush1.msra.mxu0 0.0
    %3061 = vmatprep.subr.mxu0 0.0
    %3062 = vmatpush1.msra.mxu0 %v1325
    %3063 = vmatprep.subr.mxu0 0.0
    %3064 = vmatpush2.msra.mxu0 0.0
    %3065 = vmatprep.subr.mxu0 0.0
    %3066 = vmatpush2.msra.mxu0 0.0
    %3067 = vmatprep.subr.mxu0 0.0
    %3068 = vmatpush2.msra.mxu0 0.0
    %3069 = vmatprep.subr.mxu0 0.0
    %3070 = vmatpush2.msra.mxu0 0.0
    %3071 = vmatprep.subr.mxu0 0.0
    %3072 = vmatpush2.msra.mxu0 0.0
    %3073 = vmatprep.subr.mxu0 0.0
    %3074 = vmatpush2.msra.mxu0 0.0
    %3075 = vmatprep.subr.mxu0 0.0
    %3076 = vmatpush2.msra.mxu0 0.0
    %3077 = vmatprep.subr.mxu0 0.0
    %3078 = vmatpush2.msra.mxu0 0.0
    %3079 = vmatprep.subr.mxu0 0.0
    %3080 = vmatpush2.msra.mxu0 0.0
    %3081 = vmatprep.subr.mxu0 0.0
    %3082 = vmatpush2.msra.mxu0 0.0
    %3083 = vmatprep.subr.mxu0 0.0
    %3084 = vmatpush2.msra.mxu0 0.0
    %3085 = vmatprep.subr.mxu0 0.0
    %3086 = vmatpush2.msra.mxu0 0.0
    %3087 = vmatprep.subr.mxu0 0.0
    %3088 = vmatpush2.msra.mxu0 0.0
    %3089 = vmatprep.subr.mxu0 0.0
    %3090 = vmatpush2.msra.mxu0 0.0
    %3091 = vmatprep.subr.mxu0 0.0
    %3092 = vmatpush2.msra.mxu0 0.0
    %3093 = vmatprep.subr.mxu0 0.0
    %3094 = vmatpush2.msra.mxu0 0.0
    %3095 = vmatprep.mubr.f32.mxu0 0.0
    %3096 = vmatmul.mubr.f32.gmra.mxu0 %v3029
    %v3097 = vpop.f32.mrf.mxu0
    %v3098 = vadd.f32 0.0, %v3097
    %v3099 = vpop.f32.mrf.mxu0
    %3100 = vdwg.mxu0
    %v3102 = vsel %vm2559, %v2725, 0
    %3104 = vmatprep.subr.mxu0 0.0
    %3105 = vmatpush1.msra.mxu0 0.0
    %3106 = vmatprep.subr.mxu0 0.0
    %3107 = vmatpush1.msra.mxu0 0.0
    %3108 = vmatprep.subr.mxu0 0.0
    %3109 = vmatpush1.msra.mxu0 0.0
    %3110 = vmatprep.subr.mxu0 0.0
    %3111 = vmatpush1.msra.mxu0 0.0
    %3112 = vmatprep.subr.mxu0 0.0
    %3113 = vmatpush1.msra.mxu0 0.0
    %3114 = vmatprep.subr.mxu0 0.0
    %3115 = vmatpush1.msra.mxu0 0.0
    %3116 = vmatprep.subr.mxu0 0.0
    %3117 = vmatpush1.msra.mxu0 0.0
    %3118 = vmatprep.subr.mxu0 0.0
    %3119 = vmatpush1.msra.mxu0 0.0
    %3120 = vmatprep.subr.mxu0 0.0
    %3121 = vmatpush1.msra.mxu0 0.0
    %3122 = vmatprep.subr.mxu0 0.0
    %3123 = vmatpush1.msra.mxu0 0.0
    %3124 = vmatprep.subr.mxu0 0.0
    %3125 = vmatpush1.msra.mxu0 0.0
    %3126 = vmatprep.subr.mxu0 0.0
    %3127 = vmatpush1.msra.mxu0 0.0
    %3128 = vmatprep.subr.mxu0 0.0
    %3129 = vmatpush1.msra.mxu0 0.0
    %3130 = vmatprep.subr.mxu0 0.0
    %3131 = vmatpush1.msra.mxu0 0.0
    %3132 = vmatprep.subr.mxu0 0.0
    %3133 = vmatpush1.msra.mxu0 0.0
    %3134 = vmatprep.subr.mxu0 0.0
    %3135 = vmatpush1.msra.mxu0 %v1328
    %3136 = vmatprep.subr.mxu0 0.0
    %3137 = vmatpush2.msra.mxu0 0.0
    %3138 = vmatprep.subr.mxu0 0.0
    %3139 = vmatpush2.msra.mxu0 0.0
    %3140 = vmatprep.subr.mxu0 0.0
    %3141 = vmatpush2.msra.mxu0 0.0
    %3142 = vmatprep.subr.mxu0 0.0
    %3143 = vmatpush2.msra.mxu0 0.0
    %3144 = vmatprep.subr.mxu0 0.0
    %3145 = vmatpush2.msra.mxu0 0.0
    %3146 = vmatprep.subr.mxu0 0.0
    %3147 = vmatpush2.msra.mxu0 0.0
    %3148 = vmatprep.subr.mxu0 0.0
    %3149 = vmatpush2.msra.mxu0 0.0
    %3150 = vmatprep.subr.mxu0 0.0
    %3151 = vmatpush2.msra.mxu0 0.0
    %3152 = vmatprep.subr.mxu0 0.0
    %3153 = vmatpush2.msra.mxu0 0.0
    %3154 = vmatprep.subr.mxu0 0.0
    %3155 = vmatpush2.msra.mxu0 0.0
    %3156 = vmatprep.subr.mxu0 0.0
    %3157 = vmatpush2.msra.mxu0 0.0
    %3158 = vmatprep.subr.mxu0 0.0
    %3159 = vmatpush2.msra.mxu0 0.0
    %3160 = vmatprep.subr.mxu0 0.0
    %3161 = vmatpush2.msra.mxu0 0.0
    %3162 = vmatprep.subr.mxu0 0.0
    %3163 = vmatpush2.msra.mxu0 0.0
    %3164 = vmatprep.subr.mxu0 0.0
    %3165 = vmatpush2.msra.mxu0 0.0
    %3166 = vmatprep.subr.mxu0 0.0
    %3167 = vmatpush2.msra.mxu0 0.0
    %3168 = vmatprep.mubr.f32.mxu0 0.0
    %3169 = vmatmul.mubr.f32.gmra.mxu0 %v3102
    %v3170 = vpop.f32.mrf.mxu0
    %v3171 = vadd.f32 0.0, %v3170
    %v3172 = vpop.f32.mrf.mxu0
    %3173 = vdwg.mxu0
    %v3175 = vsel %vm2559, %v2726, 0
    %3177 = vmatprep.subr.mxu0 0.0
    %3178 = vmatpush1.msra.mxu0 0.0
    %3179 = vmatprep.subr.mxu0 0.0
    %3180 = vmatpush1.msra.mxu0 0.0
    %3181 = vmatprep.subr.mxu0 0.0
    %3182 = vmatpush1.msra.mxu0 0.0
    %3183 = vmatprep.subr.mxu0 0.0
    %3184 = vmatpush1.msra.mxu0 0.0
    %3185 = vmatprep.subr.mxu0 0.0
    %3186 = vmatpush1.msra.mxu0 0.0
    %3187 = vmatprep.subr.mxu0 0.0
    %3188 = vmatpush1.msra.mxu0 0.0
    %3189 = vmatprep.subr.mxu0 0.0
    %3190 = vmatpush1.msra.mxu0 0.0
    %3191 = vmatprep.subr.mxu0 0.0
    %3192 = vmatpush1.msra.mxu0 0.0
    %3193 = vmatprep.subr.mxu0 0.0
    %3194 = vmatpush1.msra.mxu0 0.0
    %3195 = vmatprep.subr.mxu0 0.0
    %3196 = vmatpush1.msra.mxu0 0.0
    %3197 = vmatprep.subr.mxu0 0.0
    %3198 = vmatpush1.msra.mxu0 0.0
    %3199 = vmatprep.subr.mxu0 0.0
    %3200 = vmatpush1.msra.mxu0 0.0
    %3201 = vmatprep.subr.mxu0 0.0
    %3202 = vmatpush1.msra.mxu0 0.0
    %3203 = vmatprep.subr.mxu0 0.0
    %3204 = vmatpush1.msra.mxu0 0.0
    %3205 = vmatprep.subr.mxu0 0.0
    %3206 = vmatpush1.msra.mxu0 0.0
    %3207 = vmatprep.subr.mxu0 0.0
    %3208 = vmatpush1.msra.mxu0 %v1331
    %3209 = vmatprep.subr.mxu0 0.0
    %3210 = vmatpush2.msra.mxu0 0.0
    %3211 = vmatprep.subr.mxu0 0.0
    %3212 = vmatpush2.msra.mxu0 0.0
    %3213 = vmatprep.subr.mxu0 0.0
    %3214 = vmatpush2.msra.mxu0 0.0
    %3215 = vmatprep.subr.mxu0 0.0
    %3216 = vmatpush2.msra.mxu0 0.0
    %3217 = vmatprep.subr.mxu0 0.0
    %3218 = vmatpush2.msra.mxu0 0.0
    %3219 = vmatprep.subr.mxu0 0.0
    %3220 = vmatpush2.msra.mxu0 0.0
    %3221 = vmatprep.subr.mxu0 0.0
    %3222 = vmatpush2.msra.mxu0 0.0
    %3223 = vmatprep.subr.mxu0 0.0
    %3224 = vmatpush2.msra.mxu0 0.0
    %3225 = vmatprep.subr.mxu0 0.0
    %3226 = vmatpush2.msra.mxu0 0.0
    %3227 = vmatprep.subr.mxu0 0.0
    %3228 = vmatpush2.msra.mxu0 0.0
    %3229 = vmatprep.subr.mxu0 0.0
    %3230 = vmatpush2.msra.mxu0 0.0
    %3231 = vmatprep.subr.mxu0 0.0
    %3232 = vmatpush2.msra.mxu0 0.0
    %3233 = vmatprep.subr.mxu0 0.0
    %3234 = vmatpush2.msra.mxu0 0.0
    %3235 = vmatprep.subr.mxu0 0.0
    %3236 = vmatpush2.msra.mxu0 0.0
    %3237 = vmatprep.subr.mxu0 0.0
    %3238 = vmatpush2.msra.mxu0 0.0
    %3239 = vmatprep.subr.mxu0 0.0
    %3240 = vmatpush2.msra.mxu0 0.0
    %3241 = vmatprep.mubr.f32.mxu0 0.0
    %3242 = vmatmul.mubr.f32.gmra.mxu0 %v3175
    %v3243 = vpop.f32.mrf.mxu0
    %v3244 = vadd.f32 0.0, %v3243
    %v3245 = vpop.f32.mrf.mxu0
    %3246 = vdwg.mxu0
    %v3248 = vsel %vm2559, %v2727, 0
    %3250 = vmatprep.subr.mxu0 0.0
    %3251 = vmatpush1.msra.mxu0 0.0
    %3252 = vmatprep.subr.mxu0 0.0
    %3253 = vmatpush1.msra.mxu0 0.0
    %3254 = vmatprep.subr.mxu0 0.0
    %3255 = vmatpush1.msra.mxu0 0.0
    %3256 = vmatprep.subr.mxu0 0.0
    %3257 = vmatpush1.msra.mxu0 0.0
    %3258 = vmatprep.subr.mxu0 0.0
    %3259 = vmatpush1.msra.mxu0 0.0
    %3260 = vmatprep.subr.mxu0 0.0
    %3261 = vmatpush1.msra.mxu0 0.0
    %3262 = vmatprep.subr.mxu0 0.0
    %3263 = vmatpush1.msra.mxu0 0.0
    %3264 = vmatprep.subr.mxu0 0.0
    %3265 = vmatpush1.msra.mxu0 0.0
    %3266 = vmatprep.subr.mxu0 0.0
    %3267 = vmatpush1.msra.mxu0 0.0
    %3268 = vmatprep.subr.mxu0 0.0
    %3269 = vmatpush1.msra.mxu0 0.0
    %3270 = vmatprep.subr.mxu0 0.0
    %3271 = vmatpush1.msra.mxu0 0.0
    %3272 = vmatprep.subr.mxu0 0.0
    %3273 = vmatpush1.msra.mxu0 0.0
    %3274 = vmatprep.subr.mxu0 0.0
    %3275 = vmatpush1.msra.mxu0 0.0
    %3276 = vmatprep.subr.mxu0 0.0
    %3277 = vmatpush1.msra.mxu0 0.0
    %3278 = vmatprep.subr.mxu0 0.0
    %3279 = vmatpush1.msra.mxu0 0.0
    %3280 = vmatprep.subr.mxu0 0.0
    %3281 = vmatpush1.msra.mxu0 %v1334
    %3282 = vmatprep.subr.mxu0 0.0
    %3283 = vmatpush2.msra.mxu0 0.0
    %3284 = vmatprep.subr.mxu0 0.0
    %3285 = vmatpush2.msra.mxu0 0.0
    %3286 = vmatprep.subr.mxu0 0.0
    %3287 = vmatpush2.msra.mxu0 0.0
    %3288 = vmatprep.subr.mxu0 0.0
    %3289 = vmatpush2.msra.mxu0 0.0
    %3290 = vmatprep.subr.mxu0 0.0
    %3291 = vmatpush2.msra.mxu0 0.0
    %3292 = vmatprep.subr.mxu0 0.0
    %3293 = vmatpush2.msra.mxu0 0.0
    %3294 = vmatprep.subr.mxu0 0.0
    %3295 = vmatpush2.msra.mxu0 0.0
    %3296 = vmatprep.subr.mxu0 0.0
    %3297 = vmatpush2.msra.mxu0 0.0
    %3298 = vmatprep.subr.mxu0 0.0
    %3299 = vmatpush2.msra.mxu0 0.0
    %3300 = vmatprep.subr.mxu0 0.0
    %3301 = vmatpush2.msra.mxu0 0.0
    %3302 = vmatprep.subr.mxu0 0.0
    %3303 = vmatpush2.msra.mxu0 0.0
    %3304 = vmatprep.subr.mxu0 0.0
    %3305 = vmatpush2.msra.mxu0 0.0
    %3306 = vmatprep.subr.mxu0 0.0
    %3307 = vmatpush2.msra.mxu0 0.0
    %3308 = vmatprep.subr.mxu0 0.0
    %3309 = vmatpush2.msra.mxu0 0.0
    %3310 = vmatprep.subr.mxu0 0.0
    %3311 = vmatpush2.msra.mxu0 0.0
    %3312 = vmatprep.subr.mxu0 0.0
    %3313 = vmatpush2.msra.mxu0 0.0
    %3314 = vmatprep.mubr.f32.mxu0 0.0
    %3315 = vmatmul.mubr.f32.gmra.mxu0 %v3248
    %v3316 = vpop.f32.mrf.mxu0
    %v3317 = vadd.f32 0.0, %v3316
    %v3318 = vpop.f32.mrf.mxu0
    %3319 = vdwg.mxu0
    %v3321 = vsel %vm2559, %v2728, 0
    %3323 = vmatprep.subr.mxu0 0.0
    %3324 = vmatpush1.msra.mxu0 0.0
    %3325 = vmatprep.subr.mxu0 0.0
    %3326 = vmatpush1.msra.mxu0 0.0
    %3327 = vmatprep.subr.mxu0 0.0
    %3328 = vmatpush1.msra.mxu0 0.0
    %3329 = vmatprep.subr.mxu0 0.0
    %3330 = vmatpush1.msra.mxu0 0.0
    %3331 = vmatprep.subr.mxu0 0.0
    %3332 = vmatpush1.msra.mxu0 0.0
    %3333 = vmatprep.subr.mxu0 0.0
    %3334 = vmatpush1.msra.mxu0 0.0
    %3335 = vmatprep.subr.mxu0 0.0
    %3336 = vmatpush1.msra.mxu0 0.0
    %3337 = vmatprep.subr.mxu0 0.0
    %3338 = vmatpush1.msra.mxu0 0.0
    %3339 = vmatprep.subr.mxu0 0.0
    %3340 = vmatpush1.msra.mxu0 0.0
    %3341 = vmatprep.subr.mxu0 0.0
    %3342 = vmatpush1.msra.mxu0 0.0
    %3343 = vmatprep.subr.mxu0 0.0
    %3344 = vmatpush1.msra.mxu0 0.0
    %3345 = vmatprep.subr.mxu0 0.0
    %3346 = vmatpush1.msra.mxu0 0.0
    %3347 = vmatprep.subr.mxu0 0.0
    %3348 = vmatpush1.msra.mxu0 0.0
    %3349 = vmatprep.subr.mxu0 0.0
    %3350 = vmatpush1.msra.mxu0 0.0
    %3351 = vmatprep.subr.mxu0 0.0
    %3352 = vmatpush1.msra.mxu0 0.0
    %3353 = vmatprep.subr.mxu0 0.0
    %3354 = vmatpush1.msra.mxu0 %v1251
    %3355 = vmatprep.subr.mxu0 0.0
    %3356 = vmatpush2.msra.mxu0 0.0
    %3357 = vmatprep.subr.mxu0 0.0
    %3358 = vmatpush2.msra.mxu0 0.0
    %3359 = vmatprep.subr.mxu0 0.0
    %3360 = vmatpush2.msra.mxu0 0.0
    %3361 = vmatprep.subr.mxu0 0.0
    %3362 = vmatpush2.msra.mxu0 0.0
    %3363 = vmatprep.subr.mxu0 0.0
    %3364 = vmatpush2.msra.mxu0 0.0
    %3365 = vmatprep.subr.mxu0 0.0
    %3366 = vmatpush2.msra.mxu0 0.0
    %3367 = vmatprep.subr.mxu0 0.0
    %3368 = vmatpush2.msra.mxu0 0.0
    %3369 = vmatprep.subr.mxu0 0.0
    %3370 = vmatpush2.msra.mxu0 0.0
    %3371 = vmatprep.subr.mxu0 0.0
    %3372 = vmatpush2.msra.mxu0 0.0
    %3373 = vmatprep.subr.mxu0 0.0
    %3374 = vmatpush2.msra.mxu0 0.0
    %3375 = vmatprep.subr.mxu0 0.0
    %3376 = vmatpush2.msra.mxu0 0.0
    %3377 = vmatprep.subr.mxu0 0.0
    %3378 = vmatpush2.msra.mxu0 0.0
    %3379 = vmatprep.subr.mxu0 0.0
    %3380 = vmatpush2.msra.mxu0 0.0
    %3381 = vmatprep.subr.mxu0 0.0
    %3382 = vmatpush2.msra.mxu0 0.0
    %3383 = vmatprep.subr.mxu0 0.0
    %3384 = vmatpush2.msra.mxu0 0.0
    %3385 = vmatprep.subr.mxu0 0.0
    %3386 = vmatpush2.msra.mxu0 0.0
    %3387 = vmatprep.mubr.f32.mxu0 0.0
    %3388 = vmatmul.mubr.f32.gmra.mxu0 %v3321
    %v3389 = vpop.f32.mrf.mxu0
    %v3390 = vadd.f32 0.0, %v3389
    %v3391 = vpop.f32.mrf.mxu0
    %3392 = vdwg.mxu0
    %v3394 = vsel %vm2559, %v2729, 0
    %3396 = vmatprep.subr.mxu0 0.0
    %3397 = vmatpush1.msra.mxu0 0.0
    %3398 = vmatprep.subr.mxu0 0.0
    %3399 = vmatpush1.msra.mxu0 0.0
    %3400 = vmatprep.subr.mxu0 0.0
    %3401 = vmatpush1.msra.mxu0 0.0
    %3402 = vmatprep.subr.mxu0 0.0
    %3403 = vmatpush1.msra.mxu0 0.0
    %3404 = vmatprep.subr.mxu0 0.0
    %3405 = vmatpush1.msra.mxu0 0.0
    %3406 = vmatprep.subr.mxu0 0.0
    %3407 = vmatpush1.msra.mxu0 0.0
    %3408 = vmatprep.subr.mxu0 0.0
    %3409 = vmatpush1.msra.mxu0 0.0
    %3410 = vmatprep.subr.mxu0 0.0
    %3411 = vmatpush1.msra.mxu0 0.0
    %3412 = vmatprep.subr.mxu0 0.0
    %3413 = vmatpush1.msra.mxu0 0.0
    %3414 = vmatprep.subr.mxu0 0.0
    %3415 = vmatpush1.msra.mxu0 0.0
    %3416 = vmatprep.subr.mxu0 0.0
    %3417 = vmatpush1.msra.mxu0 0.0
    %3418 = vmatprep.subr.mxu0 0.0
    %3419 = vmatpush1.msra.mxu0 0.0
    %3420 = vmatprep.subr.mxu0 0.0
    %3421 = vmatpush1.msra.mxu0 0.0
    %3422 = vmatprep.subr.mxu0 0.0
    %3423 = vmatpush1.msra.mxu0 0.0
    %3424 = vmatprep.subr.mxu0 0.0
    %3425 = vmatpush1.msra.mxu0 0.0
    %3426 = vmatprep.subr.mxu0 0.0
    %3427 = vmatpush1.msra.mxu0 %v1338
    %3428 = vmatprep.subr.mxu0 0.0
    %3429 = vmatpush2.msra.mxu0 0.0
    %3430 = vmatprep.subr.mxu0 0.0
    %3431 = vmatpush2.msra.mxu0 0.0
    %3432 = vmatprep.subr.mxu0 0.0
    %3433 = vmatpush2.msra.mxu0 0.0
    %3434 = vmatprep.subr.mxu0 0.0
    %3435 = vmatpush2.msra.mxu0 0.0
    %3436 = vmatprep.subr.mxu0 0.0
    %3437 = vmatpush2.msra.mxu0 0.0
    %3438 = vmatprep.subr.mxu0 0.0
    %3439 = vmatpush2.msra.mxu0 0.0
    %3440 = vmatprep.subr.mxu0 0.0
    %3441 = vmatpush2.msra.mxu0 0.0
    %3442 = vmatprep.subr.mxu0 0.0
    %3443 = vmatpush2.msra.mxu0 0.0
    %3444 = vmatprep.subr.mxu0 0.0
    %3445 = vmatpush2.msra.mxu0 0.0
    %3446 = vmatprep.subr.mxu0 0.0
    %3447 = vmatpush2.msra.mxu0 0.0
    %3448 = vmatprep.subr.mxu0 0.0
    %3449 = vmatpush2.msra.mxu0 0.0
    %3450 = vmatprep.subr.mxu0 0.0
    %3451 = vmatpush2.msra.mxu0 0.0
    %3452 = vmatprep.subr.mxu0 0.0
    %3453 = vmatpush2.msra.mxu0 0.0
    %3454 = vmatprep.subr.mxu0 0.0
    %3455 = vmatpush2.msra.mxu0 0.0
    %3456 = vmatprep.subr.mxu0 0.0
    %3457 = vmatpush2.msra.mxu0 0.0
    %3458 = vmatprep.subr.mxu0 0.0
    %3459 = vmatpush2.msra.mxu0 0.0
    %3460 = vmatprep.mubr.f32.mxu0 0.0
    %3461 = vmatmul.mubr.f32.gmra.mxu0 %v3394
    %v3462 = vpop.f32.mrf.mxu0
    %v3463 = vadd.f32 0.0, %v3462
    %v3464 = vpop.f32.mrf.mxu0
    %3465 = vdwg.mxu0
    %v3467 = vsel %vm2559, %v2730, 0
    %3469 = vmatprep.subr.mxu0 0.0
    %3470 = vmatpush1.msra.mxu0 0.0
    %3471 = vmatprep.subr.mxu0 0.0
    %3472 = vmatpush1.msra.mxu0 0.0
    %3473 = vmatprep.subr.mxu0 0.0
    %3474 = vmatpush1.msra.mxu0 0.0
    %3475 = vmatprep.subr.mxu0 0.0
    %3476 = vmatpush1.msra.mxu0 0.0
    %3477 = vmatprep.subr.mxu0 0.0
    %3478 = vmatpush1.msra.mxu0 0.0
    %3479 = vmatprep.subr.mxu0 0.0
    %3480 = vmatpush1.msra.mxu0 0.0
    %3481 = vmatprep.subr.mxu0 0.0
    %3482 = vmatpush1.msra.mxu0 0.0
    %3483 = vmatprep.subr.mxu0 0.0
    %3484 = vmatpush1.msra.mxu0 0.0
    %3485 = vmatprep.subr.mxu0 0.0
    %3486 = vmatpush1.msra.mxu0 0.0
    %3487 = vmatprep.subr.mxu0 0.0
    %3488 = vmatpush1.msra.mxu0 0.0
    %3489 = vmatprep.subr.mxu0 0.0
    %3490 = vmatpush1.msra.mxu0 0.0
    %3491 = vmatprep.subr.mxu0 0.0
    %3492 = vmatpush1.msra.mxu0 0.0
    %3493 = vmatprep.subr.mxu0 0.0
    %3494 = vmatpush1.msra.mxu0 0.0
    %3495 = vmatprep.subr.mxu0 0.0
    %3496 = vmatpush1.msra.mxu0 0.0
    %3497 = vmatprep.subr.mxu0 0.0
    %3498 = vmatpush1.msra.mxu0 0.0
    %3499 = vmatprep.subr.mxu0 0.0
    %3500 = vmatpush1.msra.mxu0 %v1341
    %3501 = vmatprep.subr.mxu0 0.0
    %3502 = vmatpush2.msra.mxu0 0.0
    %3503 = vmatprep.subr.mxu0 0.0
    %3504 = vmatpush2.msra.mxu0 0.0
    %3505 = vmatprep.subr.mxu0 0.0
    %3506 = vmatpush2.msra.mxu0 0.0
    %3507 = vmatprep.subr.mxu0 0.0
    %3508 = vmatpush2.msra.mxu0 0.0
    %3509 = vmatprep.subr.mxu0 0.0
    %3510 = vmatpush2.msra.mxu0 0.0
    %3511 = vmatprep.subr.mxu0 0.0
    %3512 = vmatpush2.msra.mxu0 0.0
    %3513 = vmatprep.subr.mxu0 0.0
    %3514 = vmatpush2.msra.mxu0 0.0
    %3515 = vmatprep.subr.mxu0 0.0
    %3516 = vmatpush2.msra.mxu0 0.0
    %3517 = vmatprep.subr.mxu0 0.0
    %3518 = vmatpush2.msra.mxu0 0.0
    %3519 = vmatprep.subr.mxu0 0.0
    %3520 = vmatpush2.msra.mxu0 0.0
    %3521 = vmatprep.subr.mxu0 0.0
    %3522 = vmatpush2.msra.mxu0 0.0
    %3523 = vmatprep.subr.mxu0 0.0
    %3524 = vmatpush2.msra.mxu0 0.0
    %3525 = vmatprep.subr.mxu0 0.0
    %3526 = vmatpush2.msra.mxu0 0.0
    %3527 = vmatprep.subr.mxu0 0.0
    %3528 = vmatpush2.msra.mxu0 0.0
    %3529 = vmatprep.subr.mxu0 0.0
    %3530 = vmatpush2.msra.mxu0 0.0
    %3531 = vmatprep.subr.mxu0 0.0
    %3532 = vmatpush2.msra.mxu0 0.0
    %3533 = vmatprep.mubr.f32.mxu0 0.0
    %3534 = vmatmul.mubr.f32.gmra.mxu0 %v3467
    %v3535 = vpop.f32.mrf.mxu0
    %v3536 = vadd.f32 0.0, %v3535
    %v3537 = vpop.f32.mrf.mxu0
    %3538 = vdwg.mxu0
    %v3540 = vsel %vm2559, %v2731, 0
    %3542 = vmatprep.subr.mxu0 0.0
    %3543 = vmatpush1.msra.mxu0 0.0
    %3544 = vmatprep.subr.mxu0 0.0
    %3545 = vmatpush1.msra.mxu0 0.0
    %3546 = vmatprep.subr.mxu0 0.0
    %3547 = vmatpush1.msra.mxu0 0.0
    %3548 = vmatprep.subr.mxu0 0.0
    %3549 = vmatpush1.msra.mxu0 0.0
    %3550 = vmatprep.subr.mxu0 0.0
    %3551 = vmatpush1.msra.mxu0 0.0
    %3552 = vmatprep.subr.mxu0 0.0
    %3553 = vmatpush1.msra.mxu0 0.0
    %3554 = vmatprep.subr.mxu0 0.0
    %3555 = vmatpush1.msra.mxu0 0.0
    %3556 = vmatprep.subr.mxu0 0.0
    %3557 = vmatpush1.msra.mxu0 0.0
    %3558 = vmatprep.subr.mxu0 0.0
    %3559 = vmatpush1.msra.mxu0 0.0
    %3560 = vmatprep.subr.mxu0 0.0
    %3561 = vmatpush1.msra.mxu0 0.0
    %3562 = vmatprep.subr.mxu0 0.0
    %3563 = vmatpush1.msra.mxu0 0.0
    %3564 = vmatprep.subr.mxu0 0.0
    %3565 = vmatpush1.msra.mxu0 0.0
    %3566 = vmatprep.subr.mxu0 0.0
    %3567 = vmatpush1.msra.mxu0 0.0
    %3568 = vmatprep.subr.mxu0 0.0
    %3569 = vmatpush1.msra.mxu0 0.0
    %3570 = vmatprep.subr.mxu0 0.0
    %3571 = vmatpush1.msra.mxu0 0.0
    %3572 = vmatprep.subr.mxu0 0.0
    %3573 = vmatpush1.msra.mxu0 %v1344
    %3574 = vmatprep.subr.mxu0 0.0
    %3575 = vmatpush2.msra.mxu0 0.0
    %3576 = vmatprep.subr.mxu0 0.0
    %3577 = vmatpush2.msra.mxu0 0.0
    %3578 = vmatprep.subr.mxu0 0.0
    %3579 = vmatpush2.msra.mxu0 0.0
    %3580 = vmatprep.subr.mxu0 0.0
    %3581 = vmatpush2.msra.mxu0 0.0
    %3582 = vmatprep.subr.mxu0 0.0
    %3583 = vmatpush2.msra.mxu0 0.0
    %3584 = vmatprep.subr.mxu0 0.0
    %3585 = vmatpush2.msra.mxu0 0.0
    %3586 = vmatprep.subr.mxu0 0.0
    %3587 = vmatpush2.msra.mxu0 0.0
    %3588 = vmatprep.subr.mxu0 0.0
    %3589 = vmatpush2.msra.mxu0 0.0
    %3590 = vmatprep.subr.mxu0 0.0
    %3591 = vmatpush2.msra.mxu0 0.0
    %3592 = vmatprep.subr.mxu0 0.0
    %3593 = vmatpush2.msra.mxu0 0.0
    %3594 = vmatprep.subr.mxu0 0.0
    %3595 = vmatpush2.msra.mxu0 0.0
    %3596 = vmatprep.subr.mxu0 0.0
    %3597 = vmatpush2.msra.mxu0 0.0
    %3598 = vmatprep.subr.mxu0 0.0
    %3599 = vmatpush2.msra.mxu0 0.0
    %3600 = vmatprep.subr.mxu0 0.0
    %3601 = vmatpush2.msra.mxu0 0.0
    %3602 = vmatprep.subr.mxu0 0.0
    %3603 = vmatpush2.msra.mxu0 0.0
    %3604 = vmatprep.subr.mxu0 0.0
    %3605 = vmatpush2.msra.mxu0 0.0
    %3606 = vmatprep.mubr.f32.mxu0 0.0
    %3607 = vmatmul.mubr.f32.gmra.mxu0 %v3540
    %v3608 = vpop.f32.mrf.mxu0
    %v3609 = vadd.f32 0.0, %v3608
    %v3610 = vpop.f32.mrf.mxu0
    %3611 = vdwg.mxu0
    %v3613 = vsel %vm2559, %v2732, 0
    %3615 = vmatprep.subr.mxu0 0.0
    %3616 = vmatpush1.msra.mxu0 0.0
    %3617 = vmatprep.subr.mxu0 0.0
    %3618 = vmatpush1.msra.mxu0 0.0
    %3619 = vmatprep.subr.mxu0 0.0
    %3620 = vmatpush1.msra.mxu0 0.0
    %3621 = vmatprep.subr.mxu0 0.0
    %3622 = vmatpush1.msra.mxu0 0.0
    %3623 = vmatprep.subr.mxu0 0.0
    %3624 = vmatpush1.msra.mxu0 0.0
    %3625 = vmatprep.subr.mxu0 0.0
    %3626 = vmatpush1.msra.mxu0 0.0
    %3627 = vmatprep.subr.mxu0 0.0
    %3628 = vmatpush1.msra.mxu0 0.0
    %3629 = vmatprep.subr.mxu0 0.0
    %3630 = vmatpush1.msra.mxu0 0.0
    %3631 = vmatprep.subr.mxu0 0.0
    %3632 = vmatpush1.msra.mxu0 0.0
    %3633 = vmatprep.subr.mxu0 0.0
    %3634 = vmatpush1.msra.mxu0 0.0
    %3635 = vmatprep.subr.mxu0 0.0
    %3636 = vmatpush1.msra.mxu0 0.0
    %3637 = vmatprep.subr.mxu0 0.0
    %3638 = vmatpush1.msra.mxu0 0.0
    %3639 = vmatprep.subr.mxu0 0.0
    %3640 = vmatpush1.msra.mxu0 0.0
    %3641 = vmatprep.subr.mxu0 0.0
    %3642 = vmatpush1.msra.mxu0 0.0
    %3643 = vmatprep.subr.mxu0 0.0
    %3644 = vmatpush1.msra.mxu0 0.0
    %3645 = vmatprep.subr.mxu0 0.0
    %3646 = vmatpush1.msra.mxu0 %v1347
    %3647 = vmatprep.subr.mxu0 0.0
    %3648 = vmatpush2.msra.mxu0 0.0
    %3649 = vmatprep.subr.mxu0 0.0
    %3650 = vmatpush2.msra.mxu0 0.0
    %3651 = vmatprep.subr.mxu0 0.0
    %3652 = vmatpush2.msra.mxu0 0.0
    %3653 = vmatprep.subr.mxu0 0.0
    %3654 = vmatpush2.msra.mxu0 0.0
    %3655 = vmatprep.subr.mxu0 0.0
    %3656 = vmatpush2.msra.mxu0 0.0
    %3657 = vmatprep.subr.mxu0 0.0
    %3658 = vmatpush2.msra.mxu0 0.0
    %3659 = vmatprep.subr.mxu0 0.0
    %3660 = vmatpush2.msra.mxu0 0.0
    %3661 = vmatprep.subr.mxu0 0.0
    %3662 = vmatpush2.msra.mxu0 0.0
    %3663 = vmatprep.subr.mxu0 0.0
    %3664 = vmatpush2.msra.mxu0 0.0
    %3665 = vmatprep.subr.mxu0 0.0
    %3666 = vmatpush2.msra.mxu0 0.0
    %3667 = vmatprep.subr.mxu0 0.0
    %3668 = vmatpush2.msra.mxu0 0.0
    %3669 = vmatprep.subr.mxu0 0.0
    %3670 = vmatpush2.msra.mxu0 0.0
    %3671 = vmatprep.subr.mxu0 0.0
    %3672 = vmatpush2.msra.mxu0 0.0
    %3673 = vmatprep.subr.mxu0 0.0
    %3674 = vmatpush2.msra.mxu0 0.0
    %3675 = vmatprep.subr.mxu0 0.0
    %3676 = vmatpush2.msra.mxu0 0.0
    %3677 = vmatprep.subr.mxu0 0.0
    %3678 = vmatpush2.msra.mxu0 0.0
    %3679 = vmatprep.mubr.f32.mxu0 0.0
    %3680 = vmatmul.mubr.f32.gmra.mxu0 %v3613
    %v3681 = vpop.f32.mrf.mxu0
    %v3682 = vadd.f32 0.0, %v3681
    %v3683 = vpop.f32.mrf.mxu0
    %3684 = vdwg.mxu0
    %v3686 = vsel %vm2559, %v2733, 0
    %3688 = vmatprep.subr.mxu0 0.0
    %3689 = vmatpush1.msra.mxu0 0.0
    %3690 = vmatprep.subr.mxu0 0.0
    %3691 = vmatpush1.msra.mxu0 0.0
    %3692 = vmatprep.subr.mxu0 0.0
    %3693 = vmatpush1.msra.mxu0 0.0
    %3694 = vmatprep.subr.mxu0 0.0
    %3695 = vmatpush1.msra.mxu0 0.0
    %3696 = vmatprep.subr.mxu0 0.0
    %3697 = vmatpush1.msra.mxu0 0.0
    %3698 = vmatprep.subr.mxu0 0.0
    %3699 = vmatpush1.msra.mxu0 0.0
    %3700 = vmatprep.subr.mxu0 0.0
    %3701 = vmatpush1.msra.mxu0 0.0
    %3702 = vmatprep.subr.mxu0 0.0
    %3703 = vmatpush1.msra.mxu0 0.0
    %3704 = vmatprep.subr.mxu0 0.0
    %3705 = vmatpush1.msra.mxu0 0.0
    %3706 = vmatprep.subr.mxu0 0.0
    %3707 = vmatpush1.msra.mxu0 0.0
    %3708 = vmatprep.subr.mxu0 0.0
    %3709 = vmatpush1.msra.mxu0 0.0
    %3710 = vmatprep.subr.mxu0 0.0
    %3711 = vmatpush1.msra.mxu0 0.0
    %3712 = vmatprep.subr.mxu0 0.0
    %3713 = vmatpush1.msra.mxu0 0.0
    %3714 = vmatprep.subr.mxu0 0.0
    %3715 = vmatpush1.msra.mxu0 0.0
    %3716 = vmatprep.subr.mxu0 0.0
    %3717 = vmatpush1.msra.mxu0 0.0
    %3718 = vmatprep.subr.mxu0 0.0
    %3719 = vmatpush1.msra.mxu0 %v1350
    %3720 = vmatprep.subr.mxu0 0.0
    %3721 = vmatpush2.msra.mxu0 0.0
    %3722 = vmatprep.subr.mxu0 0.0
    %3723 = vmatpush2.msra.mxu0 0.0
    %3724 = vmatprep.subr.mxu0 0.0
    %3725 = vmatpush2.msra.mxu0 0.0
    %3726 = vmatprep.subr.mxu0 0.0
    %3727 = vmatpush2.msra.mxu0 0.0
    %3728 = vmatprep.subr.mxu0 0.0
    %3729 = vmatpush2.msra.mxu0 0.0
    %3730 = vmatprep.subr.mxu0 0.0
    %3731 = vmatpush2.msra.mxu0 0.0
    %3732 = vmatprep.subr.mxu0 0.0
    %3733 = vmatpush2.msra.mxu0 0.0
    %3734 = vmatprep.subr.mxu0 0.0
    %3735 = vmatpush2.msra.mxu0 0.0
    %3736 = vmatprep.subr.mxu0 0.0
    %3737 = vmatpush2.msra.mxu0 0.0
    %3738 = vmatprep.subr.mxu0 0.0
    %3739 = vmatpush2.msra.mxu0 0.0
    %3740 = vmatprep.subr.mxu0 0.0
    %3741 = vmatpush2.msra.mxu0 0.0
    %3742 = vmatprep.subr.mxu0 0.0
    %3743 = vmatpush2.msra.mxu0 0.0
    %3744 = vmatprep.subr.mxu0 0.0
    %3745 = vmatpush2.msra.mxu0 0.0
    %3746 = vmatprep.subr.mxu0 0.0
    %3747 = vmatpush2.msra.mxu0 0.0
    %3748 = vmatprep.subr.mxu0 0.0
    %3749 = vmatpush2.msra.mxu0 0.0
    %3750 = vmatprep.subr.mxu0 0.0
    %3751 = vmatpush2.msra.mxu0 0.0
    %3752 = vmatprep.mubr.f32.mxu0 0.0
    %3753 = vmatmul.mubr.f32.gmra.mxu0 %v3686
    %v3754 = vpop.f32.mrf.mxu0
    %v3755 = vadd.f32 0.0, %v3754
    %v3756 = vpop.f32.mrf.mxu0
    %3757 = vdwg.mxu0
    %v3759 = vsel %vm2559, %v2734, 0
    %3761 = vmatprep.subr.mxu0 0.0
    %3762 = vmatpush1.msra.mxu0 0.0
    %3763 = vmatprep.subr.mxu0 0.0
    %3764 = vmatpush1.msra.mxu0 0.0
    %3765 = vmatprep.subr.mxu0 0.0
    %3766 = vmatpush1.msra.mxu0 0.0
    %3767 = vmatprep.subr.mxu0 0.0
    %3768 = vmatpush1.msra.mxu0 0.0
    %3769 = vmatprep.subr.mxu0 0.0
    %3770 = vmatpush1.msra.mxu0 0.0
    %3771 = vmatprep.subr.mxu0 0.0
    %3772 = vmatpush1.msra.mxu0 0.0
    %3773 = vmatprep.subr.mxu0 0.0
    %3774 = vmatpush1.msra.mxu0 0.0
    %3775 = vmatprep.subr.mxu0 0.0
    %3776 = vmatpush1.msra.mxu0 0.0
    %3777 = vmatprep.subr.mxu0 0.0
    %3778 = vmatpush1.msra.mxu0 0.0
    %3779 = vmatprep.subr.mxu0 0.0
    %3780 = vmatpush1.msra.mxu0 0.0
    %3781 = vmatprep.subr.mxu0 0.0
    %3782 = vmatpush1.msra.mxu0 0.0
    %3783 = vmatprep.subr.mxu0 0.0
    %3784 = vmatpush1.msra.mxu0 0.0
    %3785 = vmatprep.subr.mxu0 0.0
    %3786 = vmatpush1.msra.mxu0 0.0
    %3787 = vmatprep.subr.mxu0 0.0
    %3788 = vmatpush1.msra.mxu0 0.0
    %3789 = vmatprep.subr.mxu0 0.0
    %3790 = vmatpush1.msra.mxu0 0.0
    %3791 = vmatprep.subr.mxu0 0.0
    %3792 = vmatpush1.msra.mxu0 %v1353
    %3793 = vmatprep.subr.mxu0 0.0
    %3794 = vmatpush2.msra.mxu0 0.0
    %3795 = vmatprep.subr.mxu0 0.0
    %3796 = vmatpush2.msra.mxu0 0.0
    %3797 = vmatprep.subr.mxu0 0.0
    %3798 = vmatpush2.msra.mxu0 0.0
    %3799 = vmatprep.subr.mxu0 0.0
    %3800 = vmatpush2.msra.mxu0 0.0
    %3801 = vmatprep.subr.mxu0 0.0
    %3802 = vmatpush2.msra.mxu0 0.0
    %3803 = vmatprep.subr.mxu0 0.0
    %3804 = vmatpush2.msra.mxu0 0.0
    %3805 = vmatprep.subr.mxu0 0.0
    %3806 = vmatpush2.msra.mxu0 0.0
    %3807 = vmatprep.subr.mxu0 0.0
    %3808 = vmatpush2.msra.mxu0 0.0
    %3809 = vmatprep.subr.mxu0 0.0
    %3810 = vmatpush2.msra.mxu0 0.0
    %3811 = vmatprep.subr.mxu0 0.0
    %3812 = vmatpush2.msra.mxu0 0.0
    %3813 = vmatprep.subr.mxu0 0.0
    %3814 = vmatpush2.msra.mxu0 0.0
    %3815 = vmatprep.subr.mxu0 0.0
    %3816 = vmatpush2.msra.mxu0 0.0
    %3817 = vmatprep.subr.mxu0 0.0
    %3818 = vmatpush2.msra.mxu0 0.0
    %3819 = vmatprep.subr.mxu0 0.0
    %3820 = vmatpush2.msra.mxu0 0.0
    %3821 = vmatprep.subr.mxu0 0.0
    %3822 = vmatpush2.msra.mxu0 0.0
    %3823 = vmatprep.subr.mxu0 0.0
    %3824 = vmatpush2.msra.mxu0 0.0
    %3825 = vmatprep.mubr.f32.mxu0 0.0
    %3826 = vmatmul.mubr.f32.gmra.mxu0 %v3759
    %v3827 = vpop.f32.mrf.mxu0
    %v3828 = vadd.f32 0.0, %v3827
    %v3829 = vpop.f32.mrf.mxu0
    %3830 = vdwg.mxu0
    %v3832 = vsel %vm2559, %v2735, 0
    %3834 = vmatprep.subr.mxu0 0.0
    %3835 = vmatpush1.msra.mxu0 0.0
    %3836 = vmatprep.subr.mxu0 0.0
    %3837 = vmatpush1.msra.mxu0 0.0
    %3838 = vmatprep.subr.mxu0 0.0
    %3839 = vmatpush1.msra.mxu0 0.0
    %3840 = vmatprep.subr.mxu0 0.0
    %3841 = vmatpush1.msra.mxu0 0.0
    %3842 = vmatprep.subr.mxu0 0.0
    %3843 = vmatpush1.msra.mxu0 0.0
    %3844 = vmatprep.subr.mxu0 0.0
    %3845 = vmatpush1.msra.mxu0 0.0
    %3846 = vmatprep.subr.mxu0 0.0
    %3847 = vmatpush1.msra.mxu0 0.0
    %3848 = vmatprep.subr.mxu0 0.0
    %3849 = vmatpush1.msra.mxu0 0.0
    %3850 = vmatprep.subr.mxu0 0.0
    %3851 = vmatpush1.msra.mxu0 0.0
    %3852 = vmatprep.subr.mxu0 0.0
    %3853 = vmatpush1.msra.mxu0 0.0
    %3854 = vmatprep.subr.mxu0 0.0
    %3855 = vmatpush1.msra.mxu0 0.0
    %3856 = vmatprep.subr.mxu0 0.0
    %3857 = vmatpush1.msra.mxu0 0.0
    %3858 = vmatprep.subr.mxu0 0.0
    %3859 = vmatpush1.msra.mxu0 0.0
    %3860 = vmatprep.subr.mxu0 0.0
    %3861 = vmatpush1.msra.mxu0 0.0
    %3862 = vmatprep.subr.mxu0 0.0
    %3863 = vmatpush1.msra.mxu0 0.0
    %3864 = vmatprep.subr.mxu0 0.0
    %3865 = vmatpush1.msra.mxu0 %v1356
    %3866 = vmatprep.subr.mxu0 0.0
    %3867 = vmatpush2.msra.mxu0 0.0
    %3868 = vmatprep.subr.mxu0 0.0
    %3869 = vmatpush2.msra.mxu0 0.0
    %3870 = vmatprep.subr.mxu0 0.0
    %3871 = vmatpush2.msra.mxu0 0.0
    %3872 = vmatprep.subr.mxu0 0.0
    %3873 = vmatpush2.msra.mxu0 0.0
    %3874 = vmatprep.subr.mxu0 0.0
    %3875 = vmatpush2.msra.mxu0 0.0
    %3876 = vmatprep.subr.mxu0 0.0
    %3877 = vmatpush2.msra.mxu0 0.0
    %3878 = vmatprep.subr.mxu0 0.0
    %3879 = vmatpush2.msra.mxu0 0.0
    %3880 = vmatprep.subr.mxu0 0.0
    %3881 = vmatpush2.msra.mxu0 0.0
    %3882 = vmatprep.subr.mxu0 0.0
    %3883 = vmatpush2.msra.mxu0 0.0
    %3884 = vmatprep.subr.mxu0 0.0
    %3885 = vmatpush2.msra.mxu0 0.0
    %3886 = vmatprep.subr.mxu0 0.0
    %3887 = vmatpush2.msra.mxu0 0.0
    %3888 = vmatprep.subr.mxu0 0.0
    %3889 = vmatpush2.msra.mxu0 0.0
    %3890 = vmatprep.subr.mxu0 0.0
    %3891 = vmatpush2.msra.mxu0 0.0
    %3892 = vmatprep.subr.mxu0 0.0
    %3893 = vmatpush2.msra.mxu0 0.0
    %3894 = vmatprep.subr.mxu0 0.0
    %3895 = vmatpush2.msra.mxu0 0.0
    %3896 = vmatprep.subr.mxu0 0.0
    %3897 = vmatpush2.msra.mxu0 0.0
    %3898 = vmatprep.mubr.f32.mxu0 0.0
    %3899 = vmatmul.mubr.f32.gmra.mxu0 %v3832
    %v3900 = vpop.f32.mrf.mxu0
    %v3901 = vadd.f32 0.0, %v3900
    %v3902 = vpop.f32.mrf.mxu0
    %3903 = vdwg.mxu0
    %3905 = vrot.lane.b32.xlu0 %v2879, 4
    %v3906 = vpop.permute.xlu0 %3905
    %3909 = vrot.lane.b32.xlu0 %v2952, 8
    %v3910 = vpop.permute.xlu0 %3909
    %3913 = vrot.lane.b32.xlu0 %v3025, 12
    %v3914 = vpop.permute.xlu0 %3913
    %3917 = vrot.lane.b32.xlu0 %v3098, 16
    %v3918 = vpop.permute.xlu0 %3917
    %3921 = vrot.lane.b32.xlu0 %v3171, 20
    %v3922 = vpop.permute.xlu0 %3921
    %3925 = vrot.lane.b32.xlu0 %v3244, 24
    %v3926 = vpop.permute.xlu0 %3925
    %3929 = vrot.lane.b32.xlu0 %v3317, 28
    %v3930 = vpop.permute.xlu0 %3929
    %v3932 = vsel %vm1358, %v2806, %v3906
    %v3933 = vsel %vm2559, %v3932, %v3910
    %vm3934 = vcmask 97280
    %v3935 = vsel %vm3934, %v3933, %v3914
    %vm3936 = vcmask 130048
    %v3937 = vsel %vm3936, %v3935, %v3918
    %vm3938 = vcmask 162816
    %v3939 = vsel %vm3938, %v3937, %v3922
    %vm3940 = vcmask 195584
    %v3941 = vsel %vm3940, %v3939, %v3926
    %vm3942 = vcmask 228352
    %v3943 = vsel %vm3942, %v3941, %v3930
    %3945 = vrot.lane.b32.xlu0 %v3463, 4
    %v3946 = vpop.permute.xlu0 %3945
    %3949 = vrot.lane.b32.xlu0 %v3536, 8
    %v3950 = vpop.permute.xlu0 %3949
    %3953 = vrot.lane.b32.xlu0 %v3609, 12
    %v3954 = vpop.permute.xlu0 %3953
    %3957 = vrot.lane.b32.xlu0 %v3682, 16
    %v3958 = vpop.permute.xlu0 %3957
    %3961 = vrot.lane.b32.xlu0 %v3755, 20
    %v3962 = vpop.permute.xlu0 %3961
    %3965 = vrot.lane.b32.xlu0 %v3828, 24
    %v3966 = vpop.permute.xlu0 %3965
    %3969 = vrot.lane.b32.xlu0 %v3901, 28
    %v3970 = vpop.permute.xlu0 %3969
    %v3972 = vsel %vm1358, %v3390, %v3946
    %v3973 = vsel %vm2559, %v3972, %v3950
    %v3974 = vsel %vm3934, %v3973, %v3954
    %v3975 = vsel %vm3936, %v3974, %v3958
    %v3976 = vsel %vm3938, %v3975, %v3962
    %v3977 = vsel %vm3940, %v3976, %v3966
    %v3978 = vsel %vm3942, %v3977, %v3970
    %v3979 = vadd.f32 %v1096, %v3943
    %v3980 = vadd.f32 %v1101, %v3978
    %v3981 = vsel %vm487, %v3979, 0.0
    %3982 = vadd.xlane.f32.xlu0 %v3981
    %v3983 = vpop.xlane.xlu0 %3982
    %v3984 = vsel %vm487, %v3980, 0.0
    %3985 = vadd.xlane.f32.xlu0 %v3984
    %v3986 = vpop.xlane.xlu0 %3985
    %v3987 = vrcp.pop 32.0
    %v3988 = vmul.f32 %v3983, %v3987
    %v3989 = vmul.f32 %v3986, %v3987
    %v3990 = vsub.f32 %v3979, %v3988
    %v3991 = vsub.f32 %v3980, %v3989
    %v3992 = vmul.f32 %v3990, %v3990
    %v3993 = vmul.f32 %v3991, %v3991
    %v3994 = vsel %vm487, %v3992, 0.0
    %3995 = vadd.xlane.f32.xlu0 %v3994
    %v3996 = vpop.xlane.xlu0 %3995
    %v3997 = vsel %vm487, %v3993, 0.0
    %3998 = vadd.xlane.f32.xlu0 %v3997
    %v3999 = vpop.xlane.xlu0 %3998
    %v4000 = vmul.f32 %v3996, %v3987
    %v4001 = vmul.f32 %v3999, %v3987
    %v4002 = vadd.f32 %v4000, 1e-05
    %v4003 = vadd.f32 %v4001, 1e-05
    %v4004 = vrsqrt.pop %v4002
    %v4005 = vrsqrt.pop %v4003
    %v4006 = vmul.f32 %v3990, %v4004
    %v4007 = vmul.f32 %v3991, %v4005
    %v4009 = vlaneseq
    %v4010 = vshrl.u32 %v4009, 7
    %v4011 = vsub.s32 0, %v4010
    %v4012 = vrot.slane %v1019, %v4011
    %v4014 = vmul.f32 %v4006, %v4012
    %v4015 = vmul.f32 %v4007, %v4012
    %v4017 = vlaneseq
    %v4018 = vshrl.u32 %v4017, 7
    %v4019 = vsub.s32 0, %v4018
    %v4020 = vrot.slane %v1020, %v4019
    %v4022 = vadd.f32 %v4014, %v4020
    %v4023 = vadd.f32 %v4015, %v4020
    %v4025 = vlaneseq
    %v4026 = vshrl.u32 %v4025, 7
    %v4027 = vsub.s32 0, %v4026
    %v4028 = vrot.slane %v1018, %v4027
    %v4031 = vsel %vm487, %v4022, 0
    %v4034 = vsel %vm487, %v4023, 0
    %4036 = vmatprep.subr.mxu0 0.0
    %4037 = vmatpush1.msra.mxu0 0.0
    %4038 = vmatprep.subr.mxu0 0.0
    %4039 = vmatpush1.msra.mxu0 0.0
    %4040 = vmatprep.subr.mxu0 0.0
    %4041 = vmatpush1.msra.mxu0 0.0
    %4042 = vmatprep.subr.mxu0 0.0
    %4043 = vmatpush1.msra.mxu0 0.0
    %4044 = vmatprep.subr.mxu0 0.0
    %4045 = vmatpush1.msra.mxu0 0.0
    %4046 = vmatprep.subr.mxu0 0.0
    %4047 = vmatpush1.msra.mxu0 0.0
    %4048 = vmatprep.subr.mxu0 0.0
    %4049 = vmatpush1.msra.mxu0 0.0
    %4050 = vmatprep.subr.mxu0 0.0
    %4051 = vmatpush1.msra.mxu0 0.0
    %4052 = vmatprep.subr.mxu0 0.0
    %4053 = vmatpush1.msra.mxu0 0.0
    %4054 = vmatprep.subr.mxu0 0.0
    %4055 = vmatpush1.msra.mxu0 0.0
    %4056 = vmatprep.subr.mxu0 0.0
    %4057 = vmatpush1.msra.mxu0 0.0
    %4058 = vmatprep.subr.mxu0 0.0
    %4059 = vmatpush1.msra.mxu0 0.0
    %4060 = vmatprep.subr.mxu0 0.0
    %4061 = vmatpush1.msra.mxu0 %v1017
    %4062 = vmatprep.subr.mxu0 0.0
    %4063 = vmatpush1.msra.mxu0 %v1016
    %4064 = vmatprep.subr.mxu0 0.0
    %4065 = vmatpush1.msra.mxu0 %v1015
    %4066 = vmatprep.subr.mxu0 0.0
    %4067 = vmatpush1.msra.mxu0 %v1014
    %4068 = vmatprep.subr.mxu0 0.0
    %4069 = vmatpush2.msra.mxu0 0.0
    %4070 = vmatprep.subr.mxu0 0.0
    %4071 = vmatpush2.msra.mxu0 0.0
    %4072 = vmatprep.subr.mxu0 0.0
    %4073 = vmatpush2.msra.mxu0 0.0
    %4074 = vmatprep.subr.mxu0 0.0
    %4075 = vmatpush2.msra.mxu0 0.0
    %4076 = vmatprep.subr.mxu0 0.0
    %4077 = vmatpush2.msra.mxu0 0.0
    %4078 = vmatprep.subr.mxu0 0.0
    %4079 = vmatpush2.msra.mxu0 0.0
    %4080 = vmatprep.subr.mxu0 0.0
    %4081 = vmatpush2.msra.mxu0 0.0
    %4082 = vmatprep.subr.mxu0 0.0
    %4083 = vmatpush2.msra.mxu0 0.0
    %4084 = vmatprep.subr.mxu0 0.0
    %4085 = vmatpush2.msra.mxu0 0.0
    %4086 = vmatprep.subr.mxu0 0.0
    %4087 = vmatpush2.msra.mxu0 0.0
    %4088 = vmatprep.subr.mxu0 0.0
    %4089 = vmatpush2.msra.mxu0 0.0
    %4090 = vmatprep.subr.mxu0 0.0
    %4091 = vmatpush2.msra.mxu0 0.0
    %4092 = vmatprep.subr.mxu0 0.0
    %4093 = vmatpush2.msra.mxu0 0.0
    %4094 = vmatprep.subr.mxu0 0.0
    %4095 = vmatpush2.msra.mxu0 0.0
    %4096 = vmatprep.subr.mxu0 0.0
    %4097 = vmatpush2.msra.mxu0 0.0
    %4098 = vmatprep.subr.mxu0 0.0
    %4099 = vmatpush2.msra.mxu0 0.0
    %4100 = vmatprep.mubr.f32.mxu0 0.0
    %4101 = vmatmul.mubr.f32.gmra.mxu0 %v4031
    %v4102 = vpop.f32.mrf.mxu0
    %v4103 = vadd.f32 %v4028, %v4102
    %v4104 = vpop.f32.mrf.mxu0
    %4105 = vmatprep.mubr.f32.mxu0 0.0
    %4106 = vmatmul.mubr.f32.gmra.mxu0 %v4034
    %v4107 = vpop.f32.mrf.mxu0
    %v4108 = vadd.f32 %v4028, %v4107
    %v4109 = vpop.f32.mrf.mxu0
    %4110 = vdwg.mxu0
    %v4111 = vmax.f32 %v4103, 0.0
    %v4112 = vmax.f32 %v4108, 0.0
    %v4113 = vadd.f32 %v4022, %v4111
    %v4114 = vadd.f32 %v4023, %v4112
    %v4115 = vsel %vm487, %v4113, 0.0
    %4116 = vadd.xlane.f32.xlu0 %v4115
    %v4117 = vpop.xlane.xlu0 %4116
    %v4118 = vsel %vm487, %v4114, 0.0
    %4119 = vadd.xlane.f32.xlu0 %v4118
    %v4120 = vpop.xlane.xlu0 %4119
    %v4121 = vmul.f32 %v4117, %v3987
    %v4122 = vmul.f32 %v4120, %v3987
    %v4123 = vsub.f32 %v4113, %v4121
    %v4124 = vsub.f32 %v4114, %v4122
    %v4125 = vmul.f32 %v4123, %v4123
    %v4126 = vmul.f32 %v4124, %v4124
    %v4127 = vsel %vm487, %v4125, 0.0
    %4128 = vadd.xlane.f32.xlu0 %v4127
    %v4129 = vpop.xlane.xlu0 %4128
    %v4130 = vsel %vm487, %v4126, 0.0
    %4131 = vadd.xlane.f32.xlu0 %v4130
    %v4132 = vpop.xlane.xlu0 %4131
    %v4133 = vmul.f32 %v4129, %v3987
    %v4134 = vmul.f32 %v4132, %v3987
    %v4135 = vadd.f32 %v4133, 1e-05
    %v4136 = vadd.f32 %v4134, 1e-05
    %v4137 = vrsqrt.pop %v4135
    %v4138 = vrsqrt.pop %v4136
    %v4139 = vmul.f32 %v4123, %v4137
    %v4140 = vmul.f32 %v4124, %v4138
    %v4142 = vlaneseq
    %v4143 = vshrl.u32 %v4142, 7
    %v4144 = vsub.s32 0, %v4143
    %v4145 = vrot.slane %v1021, %v4144
    %v4147 = vmul.f32 %v4139, %v4145
    %v4148 = vmul.f32 %v4140, %v4145
    %v4150 = vlaneseq
    %v4151 = vshrl.u32 %v4150, 7
    %v4152 = vsub.s32 0, %v4151
    %v4153 = vrot.slane %v1022, %v4152
    %v4155 = vadd.f32 %v4147, %v4153
    %v4156 = vadd.f32 %v4148, %v4153
    %v4157 = vld [vmem:[%s7] sm:$0xff]
    %v4158 = vld [vmem:[%s7 + $0x8] sm:$0xff]
    %4160 = vset.pattern.permute.xlu0 0
    %4161 = vperm.xlu0 %4160, %v4157
    %v4162 = vpop.permute.xlu0 %4161
    %4165 = vset.pattern.permute.xlu0 0
    %4166 = vperm.xlu0 %4165, %v4158
    %v4167 = vpop.permute.xlu0 %4166
    %v4169 = vmul.f32 %v4155, %v4162
    %v4170 = vmul.f32 %v4156, %v4167
    %v4171 = vld [vmem:[#allocation20] sm:$0xff]
    %v4172 = vld [vmem:[#allocation20 + $0x8] sm:$0xff]
    %v4173 = vld [vmem:[#allocation20 + $0x10] sm:$0xff]
    %v4174 = vld [vmem:[#allocation20 + $0x18] sm:$0xff]
    %v4175 = vld [vmem:[#allocation22] sm:$0xff]
    %v4176 = vld [vmem:[#allocation22 + $0x8] sm:$0xff]
    %v4177 = vld [vmem:[#allocation22 + $0x10] sm:$0xff]
    %v4178 = vld [vmem:[#allocation22 + $0x18] sm:$0xff]
    %v4179 = vld [vmem:[#allocation23] sm:$0xff]
    %v4180 = vld [vmem:[#allocation23 + $0x8] sm:$0xff]
    %v4181 = vld [vmem:[#allocation23 + $0x10] sm:$0xff]
    %v4182 = vld [vmem:[#allocation23 + $0x18] sm:$0xff]
    %v4183 = vld [vmem:[#allocation25] sm:$0xff]
    %v4184 = vld [vmem:[#allocation25 + $0x8] sm:$0xff]
    %v4185 = vld [vmem:[#allocation25 + $0x10] sm:$0xff]
    %v4186 = vld [vmem:[#allocation25 + $0x18] sm:$0xff]
    %v4187 = vld [vmem:[#allocation26] sm:$0x1]
    %v4188 = vld [vmem:[#allocation28] sm:$0x1]
    %v4189 = vld [vmem:[#allocation29] sm:$0x1]
    %v4190 = vld [vmem:[#allocation31] sm:$0x1]
    %v4191 = vld [vmem:[#allocation32] sm:$0x1]
    %v4193 = vsel %vm487, %v561, 0
    %v4196 = vsel %vm487, %v566, 0
    %4198 = vmatprep.subr.mxu0 0.0
    %4199 = vmatpush1.msra.mxu0 0.0
    %4200 = vmatprep.subr.mxu0 0.0
    %4201 = vmatpush1.msra.mxu0 0.0
    %4202 = vmatprep.subr.mxu0 0.0
    %4203 = vmatpush1.msra.mxu0 0.0
    %4204 = vmatprep.subr.mxu0 0.0
    %4205 = vmatpush1.msra.mxu0 0.0
    %4206 = vmatprep.subr.mxu0 0.0
    %4207 = vmatpush1.msra.mxu0 0.0
    %4208 = vmatprep.subr.mxu0 0.0
    %4209 = vmatpush1.msra.mxu0 0.0
    %4210 = vmatprep.subr.mxu0 0.0
    %4211 = vmatpush1.msra.mxu0 0.0
    %4212 = vmatprep.subr.mxu0 0.0
    %4213 = vmatpush1.msra.mxu0 0.0
    %4214 = vmatprep.subr.mxu0 0.0
    %4215 = vmatpush1.msra.mxu0 0.0
    %4216 = vmatprep.subr.mxu0 0.0
    %4217 = vmatpush1.msra.mxu0 0.0
    %4218 = vmatprep.subr.mxu0 0.0
    %4219 = vmatpush1.msra.mxu0 0.0
    %4220 = vmatprep.subr.mxu0 0.0
    %4221 = vmatpush1.msra.mxu0 0.0
    %4222 = vmatprep.subr.mxu0 0.0
    %4223 = vmatpush1.msra.mxu0 %v4174
    %4224 = vmatprep.subr.mxu0 0.0
    %4225 = vmatpush1.msra.mxu0 %v4173
    %4226 = vmatprep.subr.mxu0 0.0
    %4227 = vmatpush1.msra.mxu0 %v4172
    %4228 = vmatprep.subr.mxu0 0.0
    %4229 = vmatpush1.msra.mxu0 %v4171
    %4230 = vmatprep.subr.mxu0 0.0
    %4231 = vmatpush2.msra.mxu0 0.0
    %4232 = vmatprep.subr.mxu0 0.0
    %4233 = vmatpush2.msra.mxu0 0.0
    %4234 = vmatprep.subr.mxu0 0.0
    %4235 = vmatpush2.msra.mxu0 0.0
    %4236 = vmatprep.subr.mxu0 0.0
    %4237 = vmatpush2.msra.mxu0 0.0
    %4238 = vmatprep.subr.mxu0 0.0
    %4239 = vmatpush2.msra.mxu0 0.0
    %4240 = vmatprep.subr.mxu0 0.0
    %4241 = vmatpush2.msra.mxu0 0.0
    %4242 = vmatprep.subr.mxu0 0.0
    %4243 = vmatpush2.msra.mxu0 0.0
    %4244 = vmatprep.subr.mxu0 0.0
    %4245 = vmatpush2.msra.mxu0 0.0
    %4246 = vmatprep.subr.mxu0 0.0
    %4247 = vmatpush2.msra.mxu0 0.0
    %4248 = vmatprep.subr.mxu0 0.0
    %4249 = vmatpush2.msra.mxu0 0.0
    %4250 = vmatprep.subr.mxu0 0.0
    %4251 = vmatpush2.msra.mxu0 0.0
    %4252 = vmatprep.subr.mxu0 0.0
    %4253 = vmatpush2.msra.mxu0 0.0
    %4254 = vmatprep.subr.mxu0 0.0
    %4255 = vmatpush2.msra.mxu0 0.0
    %4256 = vmatprep.subr.mxu0 0.0
    %4257 = vmatpush2.msra.mxu0 0.0
    %4258 = vmatprep.subr.mxu0 0.0
    %4259 = vmatpush2.msra.mxu0 0.0
    %4260 = vmatprep.subr.mxu0 0.0
    %4261 = vmatpush2.msra.mxu0 0.0
    %4262 = vmatprep.mubr.f32.mxu0 0.0
    %4263 = vmatmul.mubr.f32.gmra.mxu0 %v4193
    %v4264 = vpop.f32.mrf.mxu0
    %v4265 = vadd.f32 0.0, %v4264
    %v4266 = vpop.f32.mrf.mxu0
    %4267 = vmatprep.mubr.f32.mxu0 0.0
    %4268 = vmatmul.mubr.f32.gmra.mxu0 %v4196
    %v4269 = vpop.f32.mrf.mxu0
    %v4270 = vadd.f32 0.0, %v4269
    %v4271 = vpop.f32.mrf.mxu0
    %4272 = vdwg.mxu0
    %v4274 = vsel %vm487, %v725, 0
    %v4277 = vsel %vm487, %v730, 0
    %4279 = vmatprep.subr.mxu0 0.0
    %4280 = vmatpush1.msra.mxu0 0.0
    %4281 = vmatprep.subr.mxu0 0.0
    %4282 = vmatpush1.msra.mxu0 0.0
    %4283 = vmatprep.subr.mxu0 0.0
    %4284 = vmatpush1.msra.mxu0 0.0
    %4285 = vmatprep.subr.mxu0 0.0
    %4286 = vmatpush1.msra.mxu0 0.0
    %4287 = vmatprep.subr.mxu0 0.0
    %4288 = vmatpush1.msra.mxu0 0.0
    %4289 = vmatprep.subr.mxu0 0.0
    %4290 = vmatpush1.msra.mxu0 0.0
    %4291 = vmatprep.subr.mxu0 0.0
    %4292 = vmatpush1.msra.mxu0 0.0
    %4293 = vmatprep.subr.mxu0 0.0
    %4294 = vmatpush1.msra.mxu0 0.0
    %4295 = vmatprep.subr.mxu0 0.0
    %4296 = vmatpush1.msra.mxu0 0.0
    %4297 = vmatprep.subr.mxu0 0.0
    %4298 = vmatpush1.msra.mxu0 0.0
    %4299 = vmatprep.subr.mxu0 0.0
    %4300 = vmatpush1.msra.mxu0 0.0
    %4301 = vmatprep.subr.mxu0 0.0
    %4302 = vmatpush1.msra.mxu0 0.0
    %4303 = vmatprep.subr.mxu0 0.0
    %4304 = vmatpush1.msra.mxu0 %v4178
    %4305 = vmatprep.subr.mxu0 0.0
    %4306 = vmatpush1.msra.mxu0 %v4177
    %4307 = vmatprep.subr.mxu0 0.0
    %4308 = vmatpush1.msra.mxu0 %v4176
    %4309 = vmatprep.subr.mxu0 0.0
    %4310 = vmatpush1.msra.mxu0 %v4175
    %4311 = vmatprep.subr.mxu0 0.0
    %4312 = vmatpush2.msra.mxu0 0.0
    %4313 = vmatprep.subr.mxu0 0.0
    %4314 = vmatpush2.msra.mxu0 0.0
    %4315 = vmatprep.subr.mxu0 0.0
    %4316 = vmatpush2.msra.mxu0 0.0
    %4317 = vmatprep.subr.mxu0 0.0
    %4318 = vmatpush2.msra.mxu0 0.0
    %4319 = vmatprep.subr.mxu0 0.0
    %4320 = vmatpush2.msra.mxu0 0.0
    %4321 = vmatprep.subr.mxu0 0.0
    %4322 = vmatpush2.msra.mxu0 0.0
    %4323 = vmatprep.subr.mxu0 0.0
    %4324 = vmatpush2.msra.mxu0 0.0
    %4325 = vmatprep.subr.mxu0 0.0
    %4326 = vmatpush2.msra.mxu0 0.0
    %4327 = vmatprep.subr.mxu0 0.0
    %4328 = vmatpush2.msra.mxu0 0.0
    %4329 = vmatprep.subr.mxu0 0.0
    %4330 = vmatpush2.msra.mxu0 0.0
    %4331 = vmatprep.subr.mxu0 0.0
    %4332 = vmatpush2.msra.mxu0 0.0
    %4333 = vmatprep.subr.mxu0 0.0
    %4334 = vmatpush2.msra.mxu0 0.0
    %4335 = vmatprep.subr.mxu0 0.0
    %4336 = vmatpush2.msra.mxu0 0.0
    %4337 = vmatprep.subr.mxu0 0.0
    %4338 = vmatpush2.msra.mxu0 0.0
    %4339 = vmatprep.subr.mxu0 0.0
    %4340 = vmatpush2.msra.mxu0 0.0
    %4341 = vmatprep.subr.mxu0 0.0
    %4342 = vmatpush2.msra.mxu0 0.0
    %4343 = vmatprep.mubr.f32.mxu0 0.0
    %4344 = vmatmul.mubr.f32.gmra.mxu0 %v4274
    %v4345 = vpop.f32.mrf.mxu0
    %v4346 = vadd.f32 0.0, %v4345
    %v4347 = vpop.f32.mrf.mxu0
    %4348 = vmatprep.mubr.f32.mxu0 0.0
    %4349 = vmatmul.mubr.f32.gmra.mxu0 %v4277
    %v4350 = vpop.f32.mrf.mxu0
    %v4351 = vadd.f32 0.0, %v4350
    %v4352 = vpop.f32.mrf.mxu0
    %4353 = vdwg.mxu0
    %v4355 = vsel %vm487, %v4169, 0
    %v4358 = vsel %vm487, %v4170, 0
    %4360 = vmatprep.subr.mxu0 0.0
    %4361 = vmatpush1.msra.mxu0 0.0
    %4362 = vmatprep.subr.mxu0 0.0
    %4363 = vmatpush1.msra.mxu0 0.0
    %4364 = vmatprep.subr.mxu0 0.0
    %4365 = vmatpush1.msra.mxu0 0.0
    %4366 = vmatprep.subr.mxu0 0.0
    %4367 = vmatpush1.msra.mxu0 0.0
    %4368 = vmatprep.subr.mxu0 0.0
    %4369 = vmatpush1.msra.mxu0 0.0
    %4370 = vmatprep.subr.mxu0 0.0
    %4371 = vmatpush1.msra.mxu0 0.0
    %4372 = vmatprep.subr.mxu0 0.0
    %4373 = vmatpush1.msra.mxu0 0.0
    %4374 = vmatprep.subr.mxu0 0.0
    %4375 = vmatpush1.msra.mxu0 0.0
    %4376 = vmatprep.subr.mxu0 0.0
    %4377 = vmatpush1.msra.mxu0 0.0
    %4378 = vmatprep.subr.mxu0 0.0
    %4379 = vmatpush1.msra.mxu0 0.0
    %4380 = vmatprep.subr.mxu0 0.0
    %4381 = vmatpush1.msra.mxu0 0.0
    %4382 = vmatprep.subr.mxu0 0.0
    %4383 = vmatpush1.msra.mxu0 0.0
    %4384 = vmatprep.subr.mxu0 0.0
    %4385 = vmatpush1.msra.mxu0 %v4182
    %4386 = vmatprep.subr.mxu0 0.0
    %4387 = vmatpush1.msra.mxu0 %v4181
    %4388 = vmatprep.subr.mxu0 0.0
    %4389 = vmatpush1.msra.mxu0 %v4180
    %4390 = vmatprep.subr.mxu0 0.0
    %4391 = vmatpush1.msra.mxu0 %v4179
    %4392 = vmatprep.subr.mxu0 0.0
    %4393 = vmatpush2.msra.mxu0 0.0
    %4394 = vmatprep.subr.mxu0 0.0
    %4395 = vmatpush2.msra.mxu0 0.0
    %4396 = vmatprep.subr.mxu0 0.0
    %4397 = vmatpush2.msra.mxu0 0.0
    %4398 = vmatprep.subr.mxu0 0.0
    %4399 = vmatpush2.msra.mxu0 0.0
    %4400 = vmatprep.subr.mxu0 0.0
    %4401 = vmatpush2.msra.mxu0 0.0
    %4402 = vmatprep.subr.mxu0 0.0
    %4403 = vmatpush2.msra.mxu0 0.0
    %4404 = vmatprep.subr.mxu0 0.0
    %4405 = vmatpush2.msra.mxu0 0.0
    %4406 = vmatprep.subr.mxu0 0.0
    %4407 = vmatpush2.msra.mxu0 0.0
    %4408 = vmatprep.subr.mxu0 0.0
    %4409 = vmatpush2.msra.mxu0 0.0
    %4410 = vmatprep.subr.mxu0 0.0
    %4411 = vmatpush2.msra.mxu0 0.0
    %4412 = vmatprep.subr.mxu0 0.0
    %4413 = vmatpush2.msra.mxu0 0.0
    %4414 = vmatprep.subr.mxu0 0.0
    %4415 = vmatpush2.msra.mxu0 0.0
    %4416 = vmatprep.subr.mxu0 0.0
    %4417 = vmatpush2.msra.mxu0 0.0
    %4418 = vmatprep.subr.mxu0 0.0
    %4419 = vmatpush2.msra.mxu0 0.0
    %4420 = vmatprep.subr.mxu0 0.0
    %4421 = vmatpush2.msra.mxu0 0.0
    %4422 = vmatprep.subr.mxu0 0.0
    %4423 = vmatpush2.msra.mxu0 0.0
    %4424 = vmatprep.mubr.f32.mxu0 0.0
    %4425 = vmatmul.mubr.f32.gmra.mxu0 %v4355
    %v4426 = vpop.f32.mrf.mxu0
    %v4427 = vadd.f32 0.0, %v4426
    %v4428 = vpop.f32.mrf.mxu0
    %4429 = vmatprep.mubr.f32.mxu0 0.0
    %4430 = vmatmul.mubr.f32.gmra.mxu0 %v4358
    %v4431 = vpop.f32.mrf.mxu0
    %v4432 = vadd.f32 0.0, %v4431
    %v4433 = vpop.f32.mrf.mxu0
    %4434 = vdwg.mxu0
    %4436 = vrot.lane.b32.xlu0 %v4265, 124
    %v4437 = vpop.permute.xlu0 %4436
    %4438 = vrot.lane.b32.xlu0 %v4265, 120
    %v4439 = vpop.permute.xlu0 %4438
    %4440 = vrot.lane.b32.xlu0 %v4265, 116
    %v4441 = vpop.permute.xlu0 %4440
    %4442 = vrot.lane.b32.xlu0 %v4265, 112
    %v4443 = vpop.permute.xlu0 %4442
    %4444 = vrot.lane.b32.xlu0 %v4265, 108
    %v4445 = vpop.permute.xlu0 %4444
    %4446 = vrot.lane.b32.xlu0 %v4265, 104
    %v4447 = vpop.permute.xlu0 %4446
    %4448 = vrot.lane.b32.xlu0 %v4265, 100
    %v4449 = vpop.permute.xlu0 %4448
    %4451 = vrot.lane.b32.xlu0 %v4270, 124
    %v4452 = vpop.permute.xlu0 %4451
    %4453 = vrot.lane.b32.xlu0 %v4270, 120
    %v4454 = vpop.permute.xlu0 %4453
    %4455 = vrot.lane.b32.xlu0 %v4270, 116
    %v4456 = vpop.permute.xlu0 %4455
    %4457 = vrot.lane.b32.xlu0 %v4270, 112
    %v4458 = vpop.permute.xlu0 %4457
    %4459 = vrot.lane.b32.xlu0 %v4270, 108
    %v4460 = vpop.permute.xlu0 %4459
    %4461 = vrot.lane.b32.xlu0 %v4270, 104
    %v4462 = vpop.permute.xlu0 %4461
    %4463 = vrot.lane.b32.xlu0 %v4270, 100
    %v4464 = vpop.permute.xlu0 %4463
    %4466 = vrot.lane.b32.xlu0 %v4346, 124
    %v4467 = vpop.permute.xlu0 %4466
    %4468 = vrot.lane.b32.xlu0 %v4346, 120
    %v4469 = vpop.permute.xlu0 %4468
    %4470 = vrot.lane.b32.xlu0 %v4346, 116
    %v4471 = vpop.permute.xlu0 %4470
    %4472 = vrot.lane.b32.xlu0 %v4346, 112
    %v4473 = vpop.permute.xlu0 %4472
    %4474 = vrot.lane.b32.xlu0 %v4346, 108
    %v4475 = vpop.permute.xlu0 %4474
    %4476 = vrot.lane.b32.xlu0 %v4346, 104
    %v4477 = vpop.permute.xlu0 %4476
    %4478 = vrot.lane.b32.xlu0 %v4346, 100
    %v4479 = vpop.permute.xlu0 %4478
    %4481 = vrot.lane.b32.xlu0 %v4351, 124
    %v4482 = vpop.permute.xlu0 %4481
    %4483 = vrot.lane.b32.xlu0 %v4351, 120
    %v4484 = vpop.permute.xlu0 %4483
    %4485 = vrot.lane.b32.xlu0 %v4351, 116
    %v4486 = vpop.permute.xlu0 %4485
    %4487 = vrot.lane.b32.xlu0 %v4351, 112
    %v4488 = vpop.permute.xlu0 %4487
    %4489 = vrot.lane.b32.xlu0 %v4351, 108
    %v4490 = vpop.permute.xlu0 %4489
    %4491 = vrot.lane.b32.xlu0 %v4351, 104
    %v4492 = vpop.permute.xlu0 %4491
    %4493 = vrot.lane.b32.xlu0 %v4351, 100
    %v4494 = vpop.permute.xlu0 %4493
    %4496 = vrot.lane.b32.xlu0 %v4427, 124
    %v4497 = vpop.permute.xlu0 %4496
    %4499 = vrot.lane.b32.xlu0 %v4427, 120
    %v4500 = vpop.permute.xlu0 %4499
    %4502 = vrot.lane.b32.xlu0 %v4427, 116
    %v4503 = vpop.permute.xlu0 %4502
    %4505 = vrot.lane.b32.xlu0 %v4427, 112
    %v4506 = vpop.permute.xlu0 %4505
    %4508 = vrot.lane.b32.xlu0 %v4427, 108
    %v4509 = vpop.permute.xlu0 %4508
    %4511 = vrot.lane.b32.xlu0 %v4427, 104
    %v4512 = vpop.permute.xlu0 %4511
    %4514 = vrot.lane.b32.xlu0 %v4427, 100
    %v4515 = vpop.permute.xlu0 %4514
    %4518 = vrot.lane.b32.xlu0 %v4432, 124
    %v4519 = vpop.permute.xlu0 %4518
    %4521 = vrot.lane.b32.xlu0 %v4432, 120
    %v4522 = vpop.permute.xlu0 %4521
    %4524 = vrot.lane.b32.xlu0 %v4432, 116
    %v4525 = vpop.permute.xlu0 %4524
    %4527 = vrot.lane.b32.xlu0 %v4432, 112
    %v4528 = vpop.permute.xlu0 %4527
    %4530 = vrot.lane.b32.xlu0 %v4432, 108
    %v4531 = vpop.permute.xlu0 %4530
    %4533 = vrot.lane.b32.xlu0 %v4432, 104
    %v4534 = vpop.permute.xlu0 %4533
    %4536 = vrot.lane.b32.xlu0 %v4432, 100
    %v4537 = vpop.permute.xlu0 %4536
    %v4539 = vsel %vm1358, %v4265, 0
    %v4541 = vsel %vm1358, %v4346, 0
    %4543 = vmatprep.subr.mxu0 0.0
    %4544 = vmatpush1.xpose.msra.mxu0 0.0
    %4545 = vmatprep.subr.mxu0 0.0
    %4546 = vmatpush1.xpose.msra.mxu0 0.0
    %4547 = vmatprep.subr.mxu0 0.0
    %4548 = vmatpush1.xpose.msra.mxu0 0.0
    %4549 = vmatprep.subr.mxu0 0.0
    %4550 = vmatpush1.xpose.msra.mxu0 0.0
    %4551 = vmatprep.subr.mxu0 0.0
    %4552 = vmatpush1.xpose.msra.mxu0 0.0
    %4553 = vmatprep.subr.mxu0 0.0
    %4554 = vmatpush1.xpose.msra.mxu0 0.0
    %4555 = vmatprep.subr.mxu0 0.0
    %4556 = vmatpush1.xpose.msra.mxu0 0.0
    %4557 = vmatprep.subr.mxu0 0.0
    %4558 = vmatpush1.xpose.msra.mxu0 0.0
    %4559 = vmatprep.subr.mxu0 0.0
    %4560 = vmatpush1.xpose.msra.mxu0 0.0
    %4561 = vmatprep.subr.mxu0 0.0
    %4562 = vmatpush1.xpose.msra.mxu0 0.0
    %4563 = vmatprep.subr.mxu0 0.0
    %4564 = vmatpush1.xpose.msra.mxu0 0.0
    %4565 = vmatprep.subr.mxu0 0.0
    %4566 = vmatpush1.xpose.msra.mxu0 0.0
    %4567 = vmatprep.subr.mxu0 0.0
    %4568 = vmatpush1.xpose.msra.mxu0 0.0
    %4569 = vmatprep.subr.mxu0 0.0
    %4570 = vmatpush1.xpose.msra.mxu0 0.0
    %4571 = vmatprep.subr.mxu0 0.0
    %4572 = vmatpush1.xpose.msra.mxu0 0.0
    %4573 = vmatprep.subr.mxu0 0.0
    %4574 = vmatpush1.xpose.msra.mxu0 %v4541
    %4575 = vmatprep.subr.mxu0 0.0
    %4576 = vmatpush2.xpose.msra.mxu0 0.0
    %4577 = vmatprep.subr.mxu0 0.0
    %4578 = vmatpush2.xpose.msra.mxu0 0.0
    %4579 = vmatprep.subr.mxu0 0.0
    %4580 = vmatpush2.xpose.msra.mxu0 0.0
    %4581 = vmatprep.subr.mxu0 0.0
    %4582 = vmatpush2.xpose.msra.mxu0 0.0
    %4583 = vmatprep.subr.mxu0 0.0
    %4584 = vmatpush2.xpose.msra.mxu0 0.0
    %4585 = vmatprep.subr.mxu0 0.0
    %4586 = vmatpush2.xpose.msra.mxu0 0.0
    %4587 = vmatprep.subr.mxu0 0.0
    %4588 = vmatpush2.xpose.msra.mxu0 0.0
    %4589 = vmatprep.subr.mxu0 0.0
    %4590 = vmatpush2.xpose.msra.mxu0 0.0
    %4591 = vmatprep.subr.mxu0 0.0
    %4592 = vmatpush2.xpose.msra.mxu0 0.0
    %4593 = vmatprep.subr.mxu0 0.0
    %4594 = vmatpush2.xpose.msra.mxu0 0.0
    %4595 = vmatprep.subr.mxu0 0.0
    %4596 = vmatpush2.xpose.msra.mxu0 0.0
    %4597 = vmatprep.subr.mxu0 0.0
    %4598 = vmatpush2.xpose.msra.mxu0 0.0
    %4599 = vmatprep.subr.mxu0 0.0
    %4600 = vmatpush2.xpose.msra.mxu0 0.0
    %4601 = vmatprep.subr.mxu0 0.0
    %4602 = vmatpush2.xpose.msra.mxu0 0.0
    %4603 = vmatprep.subr.mxu0 0.0
    %4604 = vmatpush2.xpose.msra.mxu0 0.0
    %4605 = vmatprep.subr.mxu0 0.0
    %4606 = vmatpush2.xpose.msra.mxu0 0.0
    %4607 = vmatprep.mubr.f32.mxu0 0.0
    %4608 = vmatmul.mubr.f32.gmra.mxu0 %v4539
    %v4609 = vpop.f32.mrf.mxu0
    %v4610 = vadd.f32 0.0, %v4609
    %v4611 = vpop.f32.mrf.mxu0
    %4612 = vdwg.mxu0
    %v4613 = vsel %vm1358, %v4437, 0
    %v4615 = vsel %vm1358, %v4467, 0
    %4617 = vmatprep.subr.mxu0 0.0
    %4618 = vmatpush1.xpose.msra.mxu0 0.0
    %4619 = vmatprep.subr.mxu0 0.0
    %4620 = vmatpush1.xpose.msra.mxu0 0.0
    %4621 = vmatprep.subr.mxu0 0.0
    %4622 = vmatpush1.xpose.msra.mxu0 0.0
    %4623 = vmatprep.subr.mxu0 0.0
    %4624 = vmatpush1.xpose.msra.mxu0 0.0
    %4625 = vmatprep.subr.mxu0 0.0
    %4626 = vmatpush1.xpose.msra.mxu0 0.0
    %4627 = vmatprep.subr.mxu0 0.0
    %4628 = vmatpush1.xpose.msra.mxu0 0.0
    %4629 = vmatprep.subr.mxu0 0.0
    %4630 = vmatpush1.xpose.msra.mxu0 0.0
    %4631 = vmatprep.subr.mxu0 0.0
    %4632 = vmatpush1.xpose.msra.mxu0 0.0
    %4633 = vmatprep.subr.mxu0 0.0
    %4634 = vmatpush1.xpose.msra.mxu0 0.0
    %4635 = vmatprep.subr.mxu0 0.0
    %4636 = vmatpush1.xpose.msra.mxu0 0.0
    %4637 = vmatprep.subr.mxu0 0.0
    %4638 = vmatpush1.xpose.msra.mxu0 0.0
    %4639 = vmatprep.subr.mxu0 0.0
    %4640 = vmatpush1.xpose.msra.mxu0 0.0
    %4641 = vmatprep.subr.mxu0 0.0
    %4642 = vmatpush1.xpose.msra.mxu0 0.0
    %4643 = vmatprep.subr.mxu0 0.0
    %4644 = vmatpush1.xpose.msra.mxu0 0.0
    %4645 = vmatprep.subr.mxu0 0.0
    %4646 = vmatpush1.xpose.msra.mxu0 0.0
    %4647 = vmatprep.subr.mxu0 0.0
    %4648 = vmatpush1.xpose.msra.mxu0 %v4615
    %4649 = vmatprep.subr.mxu0 0.0
    %4650 = vmatpush2.xpose.msra.mxu0 0.0
    %4651 = vmatprep.subr.mxu0 0.0
    %4652 = vmatpush2.xpose.msra.mxu0 0.0
    %4653 = vmatprep.subr.mxu0 0.0
    %4654 = vmatpush2.xpose.msra.mxu0 0.0
    %4655 = vmatprep.subr.mxu0 0.0
    %4656 = vmatpush2.xpose.msra.mxu0 0.0
    %4657 = vmatprep.subr.mxu0 0.0
    %4658 = vmatpush2.xpose.msra.mxu0 0.0
    %4659 = vmatprep.subr.mxu0 0.0
    %4660 = vmatpush2.xpose.msra.mxu0 0.0
    %4661 = vmatprep.subr.mxu0 0.0
    %4662 = vmatpush2.xpose.msra.mxu0 0.0
    %4663 = vmatprep.subr.mxu0 0.0
    %4664 = vmatpush2.xpose.msra.mxu0 0.0
    %4665 = vmatprep.subr.mxu0 0.0
    %4666 = vmatpush2.xpose.msra.mxu0 0.0
    %4667 = vmatprep.subr.mxu0 0.0
    %4668 = vmatpush2.xpose.msra.mxu0 0.0
    %4669 = vmatprep.subr.mxu0 0.0
    %4670 = vmatpush2.xpose.msra.mxu0 0.0
    %4671 = vmatprep.subr.mxu0 0.0
    %4672 = vmatpush2.xpose.msra.mxu0 0.0
    %4673 = vmatprep.subr.mxu0 0.0
    %4674 = vmatpush2.xpose.msra.mxu0 0.0
    %4675 = vmatprep.subr.mxu0 0.0
    %4676 = vmatpush2.xpose.msra.mxu0 0.0
    %4677 = vmatprep.subr.mxu0 0.0
    %4678 = vmatpush2.xpose.msra.mxu0 0.0
    %4679 = vmatprep.subr.mxu0 0.0
    %4680 = vmatpush2.xpose.msra.mxu0 0.0
    %4681 = vmatprep.mubr.f32.mxu0 0.0
    %4682 = vmatmul.mubr.f32.gmra.mxu0 %v4613
    %v4683 = vpop.f32.mrf.mxu0
    %v4684 = vadd.f32 0.0, %v4683
    %v4685 = vpop.f32.mrf.mxu0
    %4686 = vdwg.mxu0
    %v4687 = vsel %vm1358, %v4439, 0
    %v4689 = vsel %vm1358, %v4469, 0
    %4691 = vmatprep.subr.mxu0 0.0
    %4692 = vmatpush1.xpose.msra.mxu0 0.0
    %4693 = vmatprep.subr.mxu0 0.0
    %4694 = vmatpush1.xpose.msra.mxu0 0.0
    %4695 = vmatprep.subr.mxu0 0.0
    %4696 = vmatpush1.xpose.msra.mxu0 0.0
    %4697 = vmatprep.subr.mxu0 0.0
    %4698 = vmatpush1.xpose.msra.mxu0 0.0
    %4699 = vmatprep.subr.mxu0 0.0
    %4700 = vmatpush1.xpose.msra.mxu0 0.0
    %4701 = vmatprep.subr.mxu0 0.0
    %4702 = vmatpush1.xpose.msra.mxu0 0.0
    %4703 = vmatprep.subr.mxu0 0.0
    %4704 = vmatpush1.xpose.msra.mxu0 0.0
    %4705 = vmatprep.subr.mxu0 0.0
    %4706 = vmatpush1.xpose.msra.mxu0 0.0
    %4707 = vmatprep.subr.mxu0 0.0
    %4708 = vmatpush1.xpose.msra.mxu0 0.0
    %4709 = vmatprep.subr.mxu0 0.0
    %4710 = vmatpush1.xpose.msra.mxu0 0.0
    %4711 = vmatprep.subr.mxu0 0.0
    %4712 = vmatpush1.xpose.msra.mxu0 0.0
    %4713 = vmatprep.subr.mxu0 0.0
    %4714 = vmatpush1.xpose.msra.mxu0 0.0
    %4715 = vmatprep.subr.mxu0 0.0
    %4716 = vmatpush1.xpose.msra.mxu0 0.0
    %4717 = vmatprep.subr.mxu0 0.0
    %4718 = vmatpush1.xpose.msra.mxu0 0.0
    %4719 = vmatprep.subr.mxu0 0.0
    %4720 = vmatpush1.xpose.msra.mxu0 0.0
    %4721 = vmatprep.subr.mxu0 0.0
    %4722 = vmatpush1.xpose.msra.mxu0 %v4689
    %4723 = vmatprep.subr.mxu0 0.0
    %4724 = vmatpush2.xpose.msra.mxu0 0.0
    %4725 = vmatprep.subr.mxu0 0.0
    %4726 = vmatpush2.xpose.msra.mxu0 0.0
    %4727 = vmatprep.subr.mxu0 0.0
    %4728 = vmatpush2.xpose.msra.mxu0 0.0
    %4729 = vmatprep.subr.mxu0 0.0
    %4730 = vmatpush2.xpose.msra.mxu0 0.0
    %4731 = vmatprep.subr.mxu0 0.0
    %4732 = vmatpush2.xpose.msra.mxu0 0.0
    %4733 = vmatprep.subr.mxu0 0.0
    %4734 = vmatpush2.xpose.msra.mxu0 0.0
    %4735 = vmatprep.subr.mxu0 0.0
    %4736 = vmatpush2.xpose.msra.mxu0 0.0
    %4737 = vmatprep.subr.mxu0 0.0
    %4738 = vmatpush2.xpose.msra.mxu0 0.0
    %4739 = vmatprep.subr.mxu0 0.0
    %4740 = vmatpush2.xpose.msra.mxu0 0.0
    %4741 = vmatprep.subr.mxu0 0.0
    %4742 = vmatpush2.xpose.msra.mxu0 0.0
    %4743 = vmatprep.subr.mxu0 0.0
    %4744 = vmatpush2.xpose.msra.mxu0 0.0
    %4745 = vmatprep.subr.mxu0 0.0
    %4746 = vmatpush2.xpose.msra.mxu0 0.0
    %4747 = vmatprep.subr.mxu0 0.0
    %4748 = vmatpush2.xpose.msra.mxu0 0.0
    %4749 = vmatprep.subr.mxu0 0.0
    %4750 = vmatpush2.xpose.msra.mxu0 0.0
    %4751 = vmatprep.subr.mxu0 0.0
    %4752 = vmatpush2.xpose.msra.mxu0 0.0
    %4753 = vmatprep.subr.mxu0 0.0
    %4754 = vmatpush2.xpose.msra.mxu0 0.0
    %4755 = vmatprep.mubr.f32.mxu0 0.0
    %4756 = vmatmul.mubr.f32.gmra.mxu0 %v4687
    %v4757 = vpop.f32.mrf.mxu0
    %v4758 = vadd.f32 0.0, %v4757
    %v4759 = vpop.f32.mrf.mxu0
    %4760 = vdwg.mxu0
    %v4761 = vsel %vm1358, %v4441, 0
    %v4763 = vsel %vm1358, %v4471, 0
    %4765 = vmatprep.subr.mxu0 0.0
    %4766 = vmatpush1.xpose.msra.mxu0 0.0
    %4767 = vmatprep.subr.mxu0 0.0
    %4768 = vmatpush1.xpose.msra.mxu0 0.0
    %4769 = vmatprep.subr.mxu0 0.0
    %4770 = vmatpush1.xpose.msra.mxu0 0.0
    %4771 = vmatprep.subr.mxu0 0.0
    %4772 = vmatpush1.xpose.msra.mxu0 0.0
    %4773 = vmatprep.subr.mxu0 0.0
    %4774 = vmatpush1.xpose.msra.mxu0 0.0
    %4775 = vmatprep.subr.mxu0 0.0
    %4776 = vmatpush1.xpose.msra.mxu0 0.0
    %4777 = vmatprep.subr.mxu0 0.0
    %4778 = vmatpush1.xpose.msra.mxu0 0.0
    %4779 = vmatprep.subr.mxu0 0.0
    %4780 = vmatpush1.xpose.msra.mxu0 0.0
    %4781 = vmatprep.subr.mxu0 0.0
    %4782 = vmatpush1.xpose.msra.mxu0 0.0
    %4783 = vmatprep.subr.mxu0 0.0
    %4784 = vmatpush1.xpose.msra.mxu0 0.0
    %4785 = vmatprep.subr.mxu0 0.0
    %4786 = vmatpush1.xpose.msra.mxu0 0.0
    %4787 = vmatprep.subr.mxu0 0.0
    %4788 = vmatpush1.xpose.msra.mxu0 0.0
    %4789 = vmatprep.subr.mxu0 0.0
    %4790 = vmatpush1.xpose.msra.mxu0 0.0
    %4791 = vmatprep.subr.mxu0 0.0
    %4792 = vmatpush1.xpose.msra.mxu0 0.0
    %4793 = vmatprep.subr.mxu0 0.0
    %4794 = vmatpush1.xpose.msra.mxu0 0.0
    %4795 = vmatprep.subr.mxu0 0.0
    %4796 = vmatpush1.xpose.msra.mxu0 %v4763
    %4797 = vmatprep.subr.mxu0 0.0
    %4798 = vmatpush2.xpose.msra.mxu0 0.0
    %4799 = vmatprep.subr.mxu0 0.0
    %4800 = vmatpush2.xpose.msra.mxu0 0.0
    %4801 = vmatprep.subr.mxu0 0.0
    %4802 = vmatpush2.xpose.msra.mxu0 0.0
    %4803 = vmatprep.subr.mxu0 0.0
    %4804 = vmatpush2.xpose.msra.mxu0 0.0
    %4805 = vmatprep.subr.mxu0 0.0
    %4806 = vmatpush2.xpose.msra.mxu0 0.0
    %4807 = vmatprep.subr.mxu0 0.0
    %4808 = vmatpush2.xpose.msra.mxu0 0.0
    %4809 = vmatprep.subr.mxu0 0.0
    %4810 = vmatpush2.xpose.msra.mxu0 0.0
    %4811 = vmatprep.subr.mxu0 0.0
    %4812 = vmatpush2.xpose.msra.mxu0 0.0
    %4813 = vmatprep.subr.mxu0 0.0
    %4814 = vmatpush2.xpose.msra.mxu0 0.0
    %4815 = vmatprep.subr.mxu0 0.0
    %4816 = vmatpush2.xpose.msra.mxu0 0.0
    %4817 = vmatprep.subr.mxu0 0.0
    %4818 = vmatpush2.xpose.msra.mxu0 0.0
    %4819 = vmatprep.subr.mxu0 0.0
    %4820 = vmatpush2.xpose.msra.mxu0 0.0
    %4821 = vmatprep.subr.mxu0 0.0
    %4822 = vmatpush2.xpose.msra.mxu0 0.0
    %4823 = vmatprep.subr.mxu0 0.0
    %4824 = vmatpush2.xpose.msra.mxu0 0.0
    %4825 = vmatprep.subr.mxu0 0.0
    %4826 = vmatpush2.xpose.msra.mxu0 0.0
    %4827 = vmatprep.subr.mxu0 0.0
    %4828 = vmatpush2.xpose.msra.mxu0 0.0
    %4829 = vmatprep.mubr.f32.mxu0 0.0
    %4830 = vmatmul.mubr.f32.gmra.mxu0 %v4761
    %v4831 = vpop.f32.mrf.mxu0
    %v4832 = vadd.f32 0.0, %v4831
    %v4833 = vpop.f32.mrf.mxu0
    %4834 = vdwg.mxu0
    %v4835 = vsel %vm1358, %v4443, 0
    %v4837 = vsel %vm1358, %v4473, 0
    %4839 = vmatprep.subr.mxu0 0.0
    %4840 = vmatpush1.xpose.msra.mxu0 0.0
    %4841 = vmatprep.subr.mxu0 0.0
    %4842 = vmatpush1.xpose.msra.mxu0 0.0
    %4843 = vmatprep.subr.mxu0 0.0
    %4844 = vmatpush1.xpose.msra.mxu0 0.0
    %4845 = vmatprep.subr.mxu0 0.0
    %4846 = vmatpush1.xpose.msra.mxu0 0.0
    %4847 = vmatprep.subr.mxu0 0.0
    %4848 = vmatpush1.xpose.msra.mxu0 0.0
    %4849 = vmatprep.subr.mxu0 0.0
    %4850 = vmatpush1.xpose.msra.mxu0 0.0
    %4851 = vmatprep.subr.mxu0 0.0
    %4852 = vmatpush1.xpose.msra.mxu0 0.0
    %4853 = vmatprep.subr.mxu0 0.0
    %4854 = vmatpush1.xpose.msra.mxu0 0.0
    %4855 = vmatprep.subr.mxu0 0.0
    %4856 = vmatpush1.xpose.msra.mxu0 0.0
    %4857 = vmatprep.subr.mxu0 0.0
    %4858 = vmatpush1.xpose.msra.mxu0 0.0
    %4859 = vmatprep.subr.mxu0 0.0
    %4860 = vmatpush1.xpose.msra.mxu0 0.0
    %4861 = vmatprep.subr.mxu0 0.0
    %4862 = vmatpush1.xpose.msra.mxu0 0.0
    %4863 = vmatprep.subr.mxu0 0.0
    %4864 = vmatpush1.xpose.msra.mxu0 0.0
    %4865 = vmatprep.subr.mxu0 0.0
    %4866 = vmatpush1.xpose.msra.mxu0 0.0
    %4867 = vmatprep.subr.mxu0 0.0
    %4868 = vmatpush1.xpose.msra.mxu0 0.0
    %4869 = vmatprep.subr.mxu0 0.0
    %4870 = vmatpush1.xpose.msra.mxu0 %v4837
    %4871 = vmatprep.subr.mxu0 0.0
    %4872 = vmatpush2.xpose.msra.mxu0 0.0
    %4873 = vmatprep.subr.mxu0 0.0
    %4874 = vmatpush2.xpose.msra.mxu0 0.0
    %4875 = vmatprep.subr.mxu0 0.0
    %4876 = vmatpush2.xpose.msra.mxu0 0.0
    %4877 = vmatprep.subr.mxu0 0.0
    %4878 = vmatpush2.xpose.msra.mxu0 0.0
    %4879 = vmatprep.subr.mxu0 0.0
    %4880 = vmatpush2.xpose.msra.mxu0 0.0
    %4881 = vmatprep.subr.mxu0 0.0
    %4882 = vmatpush2.xpose.msra.mxu0 0.0
    %4883 = vmatprep.subr.mxu0 0.0
    %4884 = vmatpush2.xpose.msra.mxu0 0.0
    %4885 = vmatprep.subr.mxu0 0.0
    %4886 = vmatpush2.xpose.msra.mxu0 0.0
    %4887 = vmatprep.subr.mxu0 0.0
    %4888 = vmatpush2.xpose.msra.mxu0 0.0
    %4889 = vmatprep.subr.mxu0 0.0
    %4890 = vmatpush2.xpose.msra.mxu0 0.0
    %4891 = vmatprep.subr.mxu0 0.0
    %4892 = vmatpush2.xpose.msra.mxu0 0.0
    %4893 = vmatprep.subr.mxu0 0.0
    %4894 = vmatpush2.xpose.msra.mxu0 0.0
    %4895 = vmatprep.subr.mxu0 0.0
    %4896 = vmatpush2.xpose.msra.mxu0 0.0
    %4897 = vmatprep.subr.mxu0 0.0
    %4898 = vmatpush2.xpose.msra.mxu0 0.0
    %4899 = vmatprep.subr.mxu0 0.0
    %4900 = vmatpush2.xpose.msra.mxu0 0.0
    %4901 = vmatprep.subr.mxu0 0.0
    %4902 = vmatpush2.xpose.msra.mxu0 0.0
    %4903 = vmatprep.mubr.f32.mxu0 0.0
    %4904 = vmatmul.mubr.f32.gmra.mxu0 %v4835
    %v4905 = vpop.f32.mrf.mxu0
    %v4906 = vadd.f32 0.0, %v4905
    %v4907 = vpop.f32.mrf.mxu0
    %4908 = vdwg.mxu0
    %v4909 = vsel %vm1358, %v4445, 0
    %v4911 = vsel %vm1358, %v4475, 0
    %4913 = vmatprep.subr.mxu0 0.0
    %4914 = vmatpush1.xpose.msra.mxu0 0.0
    %4915 = vmatprep.subr.mxu0 0.0
    %4916 = vmatpush1.xpose.msra.mxu0 0.0
    %4917 = vmatprep.subr.mxu0 0.0
    %4918 = vmatpush1.xpose.msra.mxu0 0.0
    %4919 = vmatprep.subr.mxu0 0.0
    %4920 = vmatpush1.xpose.msra.mxu0 0.0
    %4921 = vmatprep.subr.mxu0 0.0
    %4922 = vmatpush1.xpose.msra.mxu0 0.0
    %4923 = vmatprep.subr.mxu0 0.0
    %4924 = vmatpush1.xpose.msra.mxu0 0.0
    %4925 = vmatprep.subr.mxu0 0.0
    %4926 = vmatpush1.xpose.msra.mxu0 0.0
    %4927 = vmatprep.subr.mxu0 0.0
    %4928 = vmatpush1.xpose.msra.mxu0 0.0
    %4929 = vmatprep.subr.mxu0 0.0
    %4930 = vmatpush1.xpose.msra.mxu0 0.0
    %4931 = vmatprep.subr.mxu0 0.0
    %4932 = vmatpush1.xpose.msra.mxu0 0.0
    %4933 = vmatprep.subr.mxu0 0.0
    %4934 = vmatpush1.xpose.msra.mxu0 0.0
    %4935 = vmatprep.subr.mxu0 0.0
    %4936 = vmatpush1.xpose.msra.mxu0 0.0
    %4937 = vmatprep.subr.mxu0 0.0
    %4938 = vmatpush1.xpose.msra.mxu0 0.0
    %4939 = vmatprep.subr.mxu0 0.0
    %4940 = vmatpush1.xpose.msra.mxu0 0.0
    %4941 = vmatprep.subr.mxu0 0.0
    %4942 = vmatpush1.xpose.msra.mxu0 0.0
    %4943 = vmatprep.subr.mxu0 0.0
    %4944 = vmatpush1.xpose.msra.mxu0 %v4911
    %4945 = vmatprep.subr.mxu0 0.0
    %4946 = vmatpush2.xpose.msra.mxu0 0.0
    %4947 = vmatprep.subr.mxu0 0.0
    %4948 = vmatpush2.xpose.msra.mxu0 0.0
    %4949 = vmatprep.subr.mxu0 0.0
    %4950 = vmatpush2.xpose.msra.mxu0 0.0
    %4951 = vmatprep.subr.mxu0 0.0
    %4952 = vmatpush2.xpose.msra.mxu0 0.0
    %4953 = vmatprep.subr.mxu0 0.0
    %4954 = vmatpush2.xpose.msra.mxu0 0.0
    %4955 = vmatprep.subr.mxu0 0.0
    %4956 = vmatpush2.xpose.msra.mxu0 0.0
    %4957 = vmatprep.subr.mxu0 0.0
    %4958 = vmatpush2.xpose.msra.mxu0 0.0
    %4959 = vmatprep.subr.mxu0 0.0
    %4960 = vmatpush2.xpose.msra.mxu0 0.0
    %4961 = vmatprep.subr.mxu0 0.0
    %4962 = vmatpush2.xpose.msra.mxu0 0.0
    %4963 = vmatprep.subr.mxu0 0.0
    %4964 = vmatpush2.xpose.msra.mxu0 0.0
    %4965 = vmatprep.subr.mxu0 0.0
    %4966 = vmatpush2.xpose.msra.mxu0 0.0
    %4967 = vmatprep.subr.mxu0 0.0
    %4968 = vmatpush2.xpose.msra.mxu0 0.0
    %4969 = vmatprep.subr.mxu0 0.0
    %4970 = vmatpush2.xpose.msra.mxu0 0.0
    %4971 = vmatprep.subr.mxu0 0.0
    %4972 = vmatpush2.xpose.msra.mxu0 0.0
    %4973 = vmatprep.subr.mxu0 0.0
    %4974 = vmatpush2.xpose.msra.mxu0 0.0
    %4975 = vmatprep.subr.mxu0 0.0
    %4976 = vmatpush2.xpose.msra.mxu0 0.0
    %4977 = vmatprep.mubr.f32.mxu0 0.0
    %4978 = vmatmul.mubr.f32.gmra.mxu0 %v4909
    %v4979 = vpop.f32.mrf.mxu0
    %v4980 = vadd.f32 0.0, %v4979
    %v4981 = vpop.f32.mrf.mxu0
    %4982 = vdwg.mxu0
    %v4983 = vsel %vm1358, %v4447, 0
    %v4985 = vsel %vm1358, %v4477, 0
    %4987 = vmatprep.subr.mxu0 0.0
    %4988 = vmatpush1.xpose.msra.mxu0 0.0
    %4989 = vmatprep.subr.mxu0 0.0
    %4990 = vmatpush1.xpose.msra.mxu0 0.0
    %4991 = vmatprep.subr.mxu0 0.0
    %4992 = vmatpush1.xpose.msra.mxu0 0.0
    %4993 = vmatprep.subr.mxu0 0.0
    %4994 = vmatpush1.xpose.msra.mxu0 0.0
    %4995 = vmatprep.subr.mxu0 0.0
    %4996 = vmatpush1.xpose.msra.mxu0 0.0
    %4997 = vmatprep.subr.mxu0 0.0
    %4998 = vmatpush1.xpose.msra.mxu0 0.0
    %4999 = vmatprep.subr.mxu0 0.0
    %5000 = vmatpush1.xpose.msra.mxu0 0.0
    %5001 = vmatprep.subr.mxu0 0.0
    %5002 = vmatpush1.xpose.msra.mxu0 0.0
    %5003 = vmatprep.subr.mxu0 0.0
    %5004 = vmatpush1.xpose.msra.mxu0 0.0
    %5005 = vmatprep.subr.mxu0 0.0
    %5006 = vmatpush1.xpose.msra.mxu0 0.0
    %5007 = vmatprep.subr.mxu0 0.0
    %5008 = vmatpush1.xpose.msra.mxu0 0.0
    %5009 = vmatprep.subr.mxu0 0.0
    %5010 = vmatpush1.xpose.msra.mxu0 0.0
    %5011 = vmatprep.subr.mxu0 0.0
    %5012 = vmatpush1.xpose.msra.mxu0 0.0
    %5013 = vmatprep.subr.mxu0 0.0
    %5014 = vmatpush1.xpose.msra.mxu0 0.0
    %5015 = vmatprep.subr.mxu0 0.0
    %5016 = vmatpush1.xpose.msra.mxu0 0.0
    %5017 = vmatprep.subr.mxu0 0.0
    %5018 = vmatpush1.xpose.msra.mxu0 %v4985
    %5019 = vmatprep.subr.mxu0 0.0
    %5020 = vmatpush2.xpose.msra.mxu0 0.0
    %5021 = vmatprep.subr.mxu0 0.0
    %5022 = vmatpush2.xpose.msra.mxu0 0.0
    %5023 = vmatprep.subr.mxu0 0.0
    %5024 = vmatpush2.xpose.msra.mxu0 0.0
    %5025 = vmatprep.subr.mxu0 0.0
    %5026 = vmatpush2.xpose.msra.mxu0 0.0
    %5027 = vmatprep.subr.mxu0 0.0
    %5028 = vmatpush2.xpose.msra.mxu0 0.0
    %5029 = vmatprep.subr.mxu0 0.0
    %5030 = vmatpush2.xpose.msra.mxu0 0.0
    %5031 = vmatprep.subr.mxu0 0.0
    %5032 = vmatpush2.xpose.msra.mxu0 0.0
    %5033 = vmatprep.subr.mxu0 0.0
    %5034 = vmatpush2.xpose.msra.mxu0 0.0
    %5035 = vmatprep.subr.mxu0 0.0
    %5036 = vmatpush2.xpose.msra.mxu0 0.0
    %5037 = vmatprep.subr.mxu0 0.0
    %5038 = vmatpush2.xpose.msra.mxu0 0.0
    %5039 = vmatprep.subr.mxu0 0.0
    %5040 = vmatpush2.xpose.msra.mxu0 0.0
    %5041 = vmatprep.subr.mxu0 0.0
    %5042 = vmatpush2.xpose.msra.mxu0 0.0
    %5043 = vmatprep.subr.mxu0 0.0
    %5044 = vmatpush2.xpose.msra.mxu0 0.0
    %5045 = vmatprep.subr.mxu0 0.0
    %5046 = vmatpush2.xpose.msra.mxu0 0.0
    %5047 = vmatprep.subr.mxu0 0.0
    %5048 = vmatpush2.xpose.msra.mxu0 0.0
    %5049 = vmatprep.subr.mxu0 0.0
    %5050 = vmatpush2.xpose.msra.mxu0 0.0
    %5051 = vmatprep.mubr.f32.mxu0 0.0
    %5052 = vmatmul.mubr.f32.gmra.mxu0 %v4983
    %v5053 = vpop.f32.mrf.mxu0
    %v5054 = vadd.f32 0.0, %v5053
    %v5055 = vpop.f32.mrf.mxu0
    %5056 = vdwg.mxu0
    %v5057 = vsel %vm1358, %v4449, 0
    %v5059 = vsel %vm1358, %v4479, 0
    %5061 = vmatprep.subr.mxu0 0.0
    %5062 = vmatpush1.xpose.msra.mxu0 0.0
    %5063 = vmatprep.subr.mxu0 0.0
    %5064 = vmatpush1.xpose.msra.mxu0 0.0
    %5065 = vmatprep.subr.mxu0 0.0
    %5066 = vmatpush1.xpose.msra.mxu0 0.0
    %5067 = vmatprep.subr.mxu0 0.0
    %5068 = vmatpush1.xpose.msra.mxu0 0.0
    %5069 = vmatprep.subr.mxu0 0.0
    %5070 = vmatpush1.xpose.msra.mxu0 0.0
    %5071 = vmatprep.subr.mxu0 0.0
    %5072 = vmatpush1.xpose.msra.mxu0 0.0
    %5073 = vmatprep.subr.mxu0 0.0
    %5074 = vmatpush1.xpose.msra.mxu0 0.0
    %5075 = vmatprep.subr.mxu0 0.0
    %5076 = vmatpush1.xpose.msra.mxu0 0.0
    %5077 = vmatprep.subr.mxu0 0.0
    %5078 = vmatpush1.xpose.msra.mxu0 0.0
    %5079 = vmatprep.subr.mxu0 0.0
    %5080 = vmatpush1.xpose.msra.mxu0 0.0
    %5081 = vmatprep.subr.mxu0 0.0
    %5082 = vmatpush1.xpose.msra.mxu0 0.0
    %5083 = vmatprep.subr.mxu0 0.0
    %5084 = vmatpush1.xpose.msra.mxu0 0.0
    %5085 = vmatprep.subr.mxu0 0.0
    %5086 = vmatpush1.xpose.msra.mxu0 0.0
    %5087 = vmatprep.subr.mxu0 0.0
    %5088 = vmatpush1.xpose.msra.mxu0 0.0
    %5089 = vmatprep.subr.mxu0 0.0
    %5090 = vmatpush1.xpose.msra.mxu0 0.0
    %5091 = vmatprep.subr.mxu0 0.0
    %5092 = vmatpush1.xpose.msra.mxu0 %v5059
    %5093 = vmatprep.subr.mxu0 0.0
    %5094 = vmatpush2.xpose.msra.mxu0 0.0
    %5095 = vmatprep.subr.mxu0 0.0
    %5096 = vmatpush2.xpose.msra.mxu0 0.0
    %5097 = vmatprep.subr.mxu0 0.0
    %5098 = vmatpush2.xpose.msra.mxu0 0.0
    %5099 = vmatprep.subr.mxu0 0.0
    %5100 = vmatpush2.xpose.msra.mxu0 0.0
    %5101 = vmatprep.subr.mxu0 0.0
    %5102 = vmatpush2.xpose.msra.mxu0 0.0
    %5103 = vmatprep.subr.mxu0 0.0
    %5104 = vmatpush2.xpose.msra.mxu0 0.0
    %5105 = vmatprep.subr.mxu0 0.0
    %5106 = vmatpush2.xpose.msra.mxu0 0.0
    %5107 = vmatprep.subr.mxu0 0.0
    %5108 = vmatpush2.xpose.msra.mxu0 0.0
    %5109 = vmatprep.subr.mxu0 0.0
    %5110 = vmatpush2.xpose.msra.mxu0 0.0
    %5111 = vmatprep.subr.mxu0 0.0
    %5112 = vmatpush2.xpose.msra.mxu0 0.0
    %5113 = vmatprep.subr.mxu0 0.0
    %5114 = vmatpush2.xpose.msra.mxu0 0.0
    %5115 = vmatprep.subr.mxu0 0.0
    %5116 = vmatpush2.xpose.msra.mxu0 0.0
    %5117 = vmatprep.subr.mxu0 0.0
    %5118 = vmatpush2.xpose.msra.mxu0 0.0
    %5119 = vmatprep.subr.mxu0 0.0
    %5120 = vmatpush2.xpose.msra.mxu0 0.0
    %5121 = vmatprep.subr.mxu0 0.0
    %5122 = vmatpush2.xpose.msra.mxu0 0.0
    %5123 = vmatprep.subr.mxu0 0.0
    %5124 = vmatpush2.xpose.msra.mxu0 0.0
    %5125 = vmatprep.mubr.f32.mxu0 0.0
    %5126 = vmatmul.mubr.f32.gmra.mxu0 %v5057
    %v5127 = vpop.f32.mrf.mxu0
    %v5128 = vadd.f32 0.0, %v5127
    %v5129 = vpop.f32.mrf.mxu0
    %5130 = vdwg.mxu0
    %v5131 = vsel %vm1358, %v4270, 0
    %v5133 = vsel %vm1358, %v4351, 0
    %5135 = vmatprep.subr.mxu0 0.0
    %5136 = vmatpush1.xpose.msra.mxu0 0.0
    %5137 = vmatprep.subr.mxu0 0.0
    %5138 = vmatpush1.xpose.msra.mxu0 0.0
    %5139 = vmatprep.subr.mxu0 0.0
    %5140 = vmatpush1.xpose.msra.mxu0 0.0
    %5141 = vmatprep.subr.mxu0 0.0
    %5142 = vmatpush1.xpose.msra.mxu0 0.0
    %5143 = vmatprep.subr.mxu0 0.0
    %5144 = vmatpush1.xpose.msra.mxu0 0.0
    %5145 = vmatprep.subr.mxu0 0.0
    %5146 = vmatpush1.xpose.msra.mxu0 0.0
    %5147 = vmatprep.subr.mxu0 0.0
    %5148 = vmatpush1.xpose.msra.mxu0 0.0
    %5149 = vmatprep.subr.mxu0 0.0
    %5150 = vmatpush1.xpose.msra.mxu0 0.0
    %5151 = vmatprep.subr.mxu0 0.0
    %5152 = vmatpush1.xpose.msra.mxu0 0.0
    %5153 = vmatprep.subr.mxu0 0.0
    %5154 = vmatpush1.xpose.msra.mxu0 0.0
    %5155 = vmatprep.subr.mxu0 0.0
    %5156 = vmatpush1.xpose.msra.mxu0 0.0
    %5157 = vmatprep.subr.mxu0 0.0
    %5158 = vmatpush1.xpose.msra.mxu0 0.0
    %5159 = vmatprep.subr.mxu0 0.0
    %5160 = vmatpush1.xpose.msra.mxu0 0.0
    %5161 = vmatprep.subr.mxu0 0.0
    %5162 = vmatpush1.xpose.msra.mxu0 0.0
    %5163 = vmatprep.subr.mxu0 0.0
    %5164 = vmatpush1.xpose.msra.mxu0 0.0
    %5165 = vmatprep.subr.mxu0 0.0
    %5166 = vmatpush1.xpose.msra.mxu0 %v5133
    %5167 = vmatprep.subr.mxu0 0.0
    %5168 = vmatpush2.xpose.msra.mxu0 0.0
    %5169 = vmatprep.subr.mxu0 0.0
    %5170 = vmatpush2.xpose.msra.mxu0 0.0
    %5171 = vmatprep.subr.mxu0 0.0
    %5172 = vmatpush2.xpose.msra.mxu0 0.0
    %5173 = vmatprep.subr.mxu0 0.0
    %5174 = vmatpush2.xpose.msra.mxu0 0.0
    %5175 = vmatprep.subr.mxu0 0.0
    %5176 = vmatpush2.xpose.msra.mxu0 0.0
    %5177 = vmatprep.subr.mxu0 0.0
    %5178 = vmatpush2.xpose.msra.mxu0 0.0
    %5179 = vmatprep.subr.mxu0 0.0
    %5180 = vmatpush2.xpose.msra.mxu0 0.0
    %5181 = vmatprep.subr.mxu0 0.0
    %5182 = vmatpush2.xpose.msra.mxu0 0.0
    %5183 = vmatprep.subr.mxu0 0.0
    %5184 = vmatpush2.xpose.msra.mxu0 0.0
    %5185 = vmatprep.subr.mxu0 0.0
    %5186 = vmatpush2.xpose.msra.mxu0 0.0
    %5187 = vmatprep.subr.mxu0 0.0
    %5188 = vmatpush2.xpose.msra.mxu0 0.0
    %5189 = vmatprep.subr.mxu0 0.0
    %5190 = vmatpush2.xpose.msra.mxu0 0.0
    %5191 = vmatprep.subr.mxu0 0.0
    %5192 = vmatpush2.xpose.msra.mxu0 0.0
    %5193 = vmatprep.subr.mxu0 0.0
    %5194 = vmatpush2.xpose.msra.mxu0 0.0
    %5195 = vmatprep.subr.mxu0 0.0
    %5196 = vmatpush2.xpose.msra.mxu0 0.0
    %5197 = vmatprep.subr.mxu0 0.0
    %5198 = vmatpush2.xpose.msra.mxu0 0.0
    %5199 = vmatprep.mubr.f32.mxu0 0.0
    %5200 = vmatmul.mubr.f32.gmra.mxu0 %v5131
    %v5201 = vpop.f32.mrf.mxu0
    %v5202 = vadd.f32 0.0, %v5201
    %v5203 = vpop.f32.mrf.mxu0
    %5204 = vdwg.mxu0
    %v5205 = vsel %vm1358, %v4452, 0
    %v5207 = vsel %vm1358, %v4482, 0
    %5209 = vmatprep.subr.mxu0 0.0
    %5210 = vmatpush1.xpose.msra.mxu0 0.0
    %5211 = vmatprep.subr.mxu0 0.0
    %5212 = vmatpush1.xpose.msra.mxu0 0.0
    %5213 = vmatprep.subr.mxu0 0.0
    %5214 = vmatpush1.xpose.msra.mxu0 0.0
    %5215 = vmatprep.subr.mxu0 0.0
    %5216 = vmatpush1.xpose.msra.mxu0 0.0
    %5217 = vmatprep.subr.mxu0 0.0
    %5218 = vmatpush1.xpose.msra.mxu0 0.0
    %5219 = vmatprep.subr.mxu0 0.0
    %5220 = vmatpush1.xpose.msra.mxu0 0.0
    %5221 = vmatprep.subr.mxu0 0.0
    %5222 = vmatpush1.xpose.msra.mxu0 0.0
    %5223 = vmatprep.subr.mxu0 0.0
    %5224 = vmatpush1.xpose.msra.mxu0 0.0
    %5225 = vmatprep.subr.mxu0 0.0
    %5226 = vmatpush1.xpose.msra.mxu0 0.0
    %5227 = vmatprep.subr.mxu0 0.0
    %5228 = vmatpush1.xpose.msra.mxu0 0.0
    %5229 = vmatprep.subr.mxu0 0.0
    %5230 = vmatpush1.xpose.msra.mxu0 0.0
    %5231 = vmatprep.subr.mxu0 0.0
    %5232 = vmatpush1.xpose.msra.mxu0 0.0
    %5233 = vmatprep.subr.mxu0 0.0
    %5234 = vmatpush1.xpose.msra.mxu0 0.0
    %5235 = vmatprep.subr.mxu0 0.0
    %5236 = vmatpush1.xpose.msra.mxu0 0.0
    %5237 = vmatprep.subr.mxu0 0.0
    %5238 = vmatpush1.xpose.msra.mxu0 0.0
    %5239 = vmatprep.subr.mxu0 0.0
    %5240 = vmatpush1.xpose.msra.mxu0 %v5207
    %5241 = vmatprep.subr.mxu0 0.0
    %5242 = vmatpush2.xpose.msra.mxu0 0.0
    %5243 = vmatprep.subr.mxu0 0.0
    %5244 = vmatpush2.xpose.msra.mxu0 0.0
    %5245 = vmatprep.subr.mxu0 0.0
    %5246 = vmatpush2.xpose.msra.mxu0 0.0
    %5247 = vmatprep.subr.mxu0 0.0
    %5248 = vmatpush2.xpose.msra.mxu0 0.0
    %5249 = vmatprep.subr.mxu0 0.0
    %5250 = vmatpush2.xpose.msra.mxu0 0.0
    %5251 = vmatprep.subr.mxu0 0.0
    %5252 = vmatpush2.xpose.msra.mxu0 0.0
    %5253 = vmatprep.subr.mxu0 0.0
    %5254 = vmatpush2.xpose.msra.mxu0 0.0
    %5255 = vmatprep.subr.mxu0 0.0
    %5256 = vmatpush2.xpose.msra.mxu0 0.0
    %5257 = vmatprep.subr.mxu0 0.0
    %5258 = vmatpush2.xpose.msra.mxu0 0.0
    %5259 = vmatprep.subr.mxu0 0.0
    %5260 = vmatpush2.xpose.msra.mxu0 0.0
    %5261 = vmatprep.subr.mxu0 0.0
    %5262 = vmatpush2.xpose.msra.mxu0 0.0
    %5263 = vmatprep.subr.mxu0 0.0
    %5264 = vmatpush2.xpose.msra.mxu0 0.0
    %5265 = vmatprep.subr.mxu0 0.0
    %5266 = vmatpush2.xpose.msra.mxu0 0.0
    %5267 = vmatprep.subr.mxu0 0.0
    %5268 = vmatpush2.xpose.msra.mxu0 0.0
    %5269 = vmatprep.subr.mxu0 0.0
    %5270 = vmatpush2.xpose.msra.mxu0 0.0
    %5271 = vmatprep.subr.mxu0 0.0
    %5272 = vmatpush2.xpose.msra.mxu0 0.0
    %5273 = vmatprep.mubr.f32.mxu0 0.0
    %5274 = vmatmul.mubr.f32.gmra.mxu0 %v5205
    %v5275 = vpop.f32.mrf.mxu0
    %v5276 = vadd.f32 0.0, %v5275
    %v5277 = vpop.f32.mrf.mxu0
    %5278 = vdwg.mxu0
    %v5279 = vsel %vm1358, %v4454, 0
    %v5281 = vsel %vm1358, %v4484, 0
    %5283 = vmatprep.subr.mxu0 0.0
    %5284 = vmatpush1.xpose.msra.mxu0 0.0
    %5285 = vmatprep.subr.mxu0 0.0
    %5286 = vmatpush1.xpose.msra.mxu0 0.0
    %5287 = vmatprep.subr.mxu0 0.0
    %5288 = vmatpush1.xpose.msra.mxu0 0.0
    %5289 = vmatprep.subr.mxu0 0.0
    %5290 = vmatpush1.xpose.msra.mxu0 0.0
    %5291 = vmatprep.subr.mxu0 0.0
    %5292 = vmatpush1.xpose.msra.mxu0 0.0
    %5293 = vmatprep.subr.mxu0 0.0
    %5294 = vmatpush1.xpose.msra.mxu0 0.0
    %5295 = vmatprep.subr.mxu0 0.0
    %5296 = vmatpush1.xpose.msra.mxu0 0.0
    %5297 = vmatprep.subr.mxu0 0.0
    %5298 = vmatpush1.xpose.msra.mxu0 0.0
    %5299 = vmatprep.subr.mxu0 0.0
    %5300 = vmatpush1.xpose.msra.mxu0 0.0
    %5301 = vmatprep.subr.mxu0 0.0
    %5302 = vmatpush1.xpose.msra.mxu0 0.0
    %5303 = vmatprep.subr.mxu0 0.0
    %5304 = vmatpush1.xpose.msra.mxu0 0.0
    %5305 = vmatprep.subr.mxu0 0.0
    %5306 = vmatpush1.xpose.msra.mxu0 0.0
    %5307 = vmatprep.subr.mxu0 0.0
    %5308 = vmatpush1.xpose.msra.mxu0 0.0
    %5309 = vmatprep.subr.mxu0 0.0
    %5310 = vmatpush1.xpose.msra.mxu0 0.0
    %5311 = vmatprep.subr.mxu0 0.0
    %5312 = vmatpush1.xpose.msra.mxu0 0.0
    %5313 = vmatprep.subr.mxu0 0.0
    %5314 = vmatpush1.xpose.msra.mxu0 %v5281
    %5315 = vmatprep.subr.mxu0 0.0
    %5316 = vmatpush2.xpose.msra.mxu0 0.0
    %5317 = vmatprep.subr.mxu0 0.0
    %5318 = vmatpush2.xpose.msra.mxu0 0.0
    %5319 = vmatprep.subr.mxu0 0.0
    %5320 = vmatpush2.xpose.msra.mxu0 0.0
    %5321 = vmatprep.subr.mxu0 0.0
    %5322 = vmatpush2.xpose.msra.mxu0 0.0
    %5323 = vmatprep.subr.mxu0 0.0
    %5324 = vmatpush2.xpose.msra.mxu0 0.0
    %5325 = vmatprep.subr.mxu0 0.0
    %5326 = vmatpush2.xpose.msra.mxu0 0.0
    %5327 = vmatprep.subr.mxu0 0.0
    %5328 = vmatpush2.xpose.msra.mxu0 0.0
    %5329 = vmatprep.subr.mxu0 0.0
    %5330 = vmatpush2.xpose.msra.mxu0 0.0
    %5331 = vmatprep.subr.mxu0 0.0
    %5332 = vmatpush2.xpose.msra.mxu0 0.0
    %5333 = vmatprep.subr.mxu0 0.0
    %5334 = vmatpush2.xpose.msra.mxu0 0.0
    %5335 = vmatprep.subr.mxu0 0.0
    %5336 = vmatpush2.xpose.msra.mxu0 0.0
    %5337 = vmatprep.subr.mxu0 0.0
    %5338 = vmatpush2.xpose.msra.mxu0 0.0
    %5339 = vmatprep.subr.mxu0 0.0
    %5340 = vmatpush2.xpose.msra.mxu0 0.0
    %5341 = vmatprep.subr.mxu0 0.0
    %5342 = vmatpush2.xpose.msra.mxu0 0.0
    %5343 = vmatprep.subr.mxu0 0.0
    %5344 = vmatpush2.xpose.msra.mxu0 0.0
    %5345 = vmatprep.subr.mxu0 0.0
    %5346 = vmatpush2.xpose.msra.mxu0 0.0
    %5347 = vmatprep.mubr.f32.mxu0 0.0
    %5348 = vmatmul.mubr.f32.gmra.mxu0 %v5279
    %v5349 = vpop.f32.mrf.mxu0
    %v5350 = vadd.f32 0.0, %v5349
    %v5351 = vpop.f32.mrf.mxu0
    %5352 = vdwg.mxu0
    %v5353 = vsel %vm1358, %v4456, 0
    %v5355 = vsel %vm1358, %v4486, 0
    %5357 = vmatprep.subr.mxu0 0.0
    %5358 = vmatpush1.xpose.msra.mxu0 0.0
    %5359 = vmatprep.subr.mxu0 0.0
    %5360 = vmatpush1.xpose.msra.mxu0 0.0
    %5361 = vmatprep.subr.mxu0 0.0
    %5362 = vmatpush1.xpose.msra.mxu0 0.0
    %5363 = vmatprep.subr.mxu0 0.0
    %5364 = vmatpush1.xpose.msra.mxu0 0.0
    %5365 = vmatprep.subr.mxu0 0.0
    %5366 = vmatpush1.xpose.msra.mxu0 0.0
    %5367 = vmatprep.subr.mxu0 0.0
    %5368 = vmatpush1.xpose.msra.mxu0 0.0
    %5369 = vmatprep.subr.mxu0 0.0
    %5370 = vmatpush1.xpose.msra.mxu0 0.0
    %5371 = vmatprep.subr.mxu0 0.0
    %5372 = vmatpush1.xpose.msra.mxu0 0.0
    %5373 = vmatprep.subr.mxu0 0.0
    %5374 = vmatpush1.xpose.msra.mxu0 0.0
    %5375 = vmatprep.subr.mxu0 0.0
    %5376 = vmatpush1.xpose.msra.mxu0 0.0
    %5377 = vmatprep.subr.mxu0 0.0
    %5378 = vmatpush1.xpose.msra.mxu0 0.0
    %5379 = vmatprep.subr.mxu0 0.0
    %5380 = vmatpush1.xpose.msra.mxu0 0.0
    %5381 = vmatprep.subr.mxu0 0.0
    %5382 = vmatpush1.xpose.msra.mxu0 0.0
    %5383 = vmatprep.subr.mxu0 0.0
    %5384 = vmatpush1.xpose.msra.mxu0 0.0
    %5385 = vmatprep.subr.mxu0 0.0
    %5386 = vmatpush1.xpose.msra.mxu0 0.0
    %5387 = vmatprep.subr.mxu0 0.0
    %5388 = vmatpush1.xpose.msra.mxu0 %v5355
    %5389 = vmatprep.subr.mxu0 0.0
    %5390 = vmatpush2.xpose.msra.mxu0 0.0
    %5391 = vmatprep.subr.mxu0 0.0
    %5392 = vmatpush2.xpose.msra.mxu0 0.0
    %5393 = vmatprep.subr.mxu0 0.0
    %5394 = vmatpush2.xpose.msra.mxu0 0.0
    %5395 = vmatprep.subr.mxu0 0.0
    %5396 = vmatpush2.xpose.msra.mxu0 0.0
    %5397 = vmatprep.subr.mxu0 0.0
    %5398 = vmatpush2.xpose.msra.mxu0 0.0
    %5399 = vmatprep.subr.mxu0 0.0
    %5400 = vmatpush2.xpose.msra.mxu0 0.0
    %5401 = vmatprep.subr.mxu0 0.0
    %5402 = vmatpush2.xpose.msra.mxu0 0.0
    %5403 = vmatprep.subr.mxu0 0.0
    %5404 = vmatpush2.xpose.msra.mxu0 0.0
    %5405 = vmatprep.subr.mxu0 0.0
    %5406 = vmatpush2.xpose.msra.mxu0 0.0
    %5407 = vmatprep.subr.mxu0 0.0
    %5408 = vmatpush2.xpose.msra.mxu0 0.0
    %5409 = vmatprep.subr.mxu0 0.0
    %5410 = vmatpush2.xpose.msra.mxu0 0.0
    %5411 = vmatprep.subr.mxu0 0.0
    %5412 = vmatpush2.xpose.msra.mxu0 0.0
    %5413 = vmatprep.subr.mxu0 0.0
    %5414 = vmatpush2.xpose.msra.mxu0 0.0
    %5415 = vmatprep.subr.mxu0 0.0
    %5416 = vmatpush2.xpose.msra.mxu0 0.0
    %5417 = vmatprep.subr.mxu0 0.0
    %5418 = vmatpush2.xpose.msra.mxu0 0.0
    %5419 = vmatprep.subr.mxu0 0.0
    %5420 = vmatpush2.xpose.msra.mxu0 0.0
    %5421 = vmatprep.mubr.f32.mxu0 0.0
    %5422 = vmatmul.mubr.f32.gmra.mxu0 %v5353
    %v5423 = vpop.f32.mrf.mxu0
    %v5424 = vadd.f32 0.0, %v5423
    %v5425 = vpop.f32.mrf.mxu0
    %5426 = vdwg.mxu0
    %v5427 = vsel %vm1358, %v4458, 0
    %v5429 = vsel %vm1358, %v4488, 0
    %5431 = vmatprep.subr.mxu0 0.0
    %5432 = vmatpush1.xpose.msra.mxu0 0.0
    %5433 = vmatprep.subr.mxu0 0.0
    %5434 = vmatpush1.xpose.msra.mxu0 0.0
    %5435 = vmatprep.subr.mxu0 0.0
    %5436 = vmatpush1.xpose.msra.mxu0 0.0
    %5437 = vmatprep.subr.mxu0 0.0
    %5438 = vmatpush1.xpose.msra.mxu0 0.0
    %5439 = vmatprep.subr.mxu0 0.0
    %5440 = vmatpush1.xpose.msra.mxu0 0.0
    %5441 = vmatprep.subr.mxu0 0.0
    %5442 = vmatpush1.xpose.msra.mxu0 0.0
    %5443 = vmatprep.subr.mxu0 0.0
    %5444 = vmatpush1.xpose.msra.mxu0 0.0
    %5445 = vmatprep.subr.mxu0 0.0
    %5446 = vmatpush1.xpose.msra.mxu0 0.0
    %5447 = vmatprep.subr.mxu0 0.0
    %5448 = vmatpush1.xpose.msra.mxu0 0.0
    %5449 = vmatprep.subr.mxu0 0.0
    %5450 = vmatpush1.xpose.msra.mxu0 0.0
    %5451 = vmatprep.subr.mxu0 0.0
    %5452 = vmatpush1.xpose.msra.mxu0 0.0
    %5453 = vmatprep.subr.mxu0 0.0
    %5454 = vmatpush1.xpose.msra.mxu0 0.0
    %5455 = vmatprep.subr.mxu0 0.0
    %5456 = vmatpush1.xpose.msra.mxu0 0.0
    %5457 = vmatprep.subr.mxu0 0.0
    %5458 = vmatpush1.xpose.msra.mxu0 0.0
    %5459 = vmatprep.subr.mxu0 0.0
    %5460 = vmatpush1.xpose.msra.mxu0 0.0
    %5461 = vmatprep.subr.mxu0 0.0
    %5462 = vmatpush1.xpose.msra.mxu0 %v5429
    %5463 = vmatprep.subr.mxu0 0.0
    %5464 = vmatpush2.xpose.msra.mxu0 0.0
    %5465 = vmatprep.subr.mxu0 0.0
    %5466 = vmatpush2.xpose.msra.mxu0 0.0
    %5467 = vmatprep.subr.mxu0 0.0
    %5468 = vmatpush2.xpose.msra.mxu0 0.0
    %5469 = vmatprep.subr.mxu0 0.0
    %5470 = vmatpush2.xpose.msra.mxu0 0.0
    %5471 = vmatprep.subr.mxu0 0.0
    %5472 = vmatpush2.xpose.msra.mxu0 0.0
    %5473 = vmatprep.subr.mxu0 0.0
    %5474 = vmatpush2.xpose.msra.mxu0 0.0
    %5475 = vmatprep.subr.mxu0 0.0
    %5476 = vmatpush2.xpose.msra.mxu0 0.0
    %5477 = vmatprep.subr.mxu0 0.0
    %5478 = vmatpush2.xpose.msra.mxu0 0.0
    %5479 = vmatprep.subr.mxu0 0.0
    %5480 = vmatpush2.xpose.msra.mxu0 0.0
    %5481 = vmatprep.subr.mxu0 0.0
    %5482 = vmatpush2.xpose.msra.mxu0 0.0
    %5483 = vmatprep.subr.mxu0 0.0
    %5484 = vmatpush2.xpose.msra.mxu0 0.0
    %5485 = vmatprep.subr.mxu0 0.0
    %5486 = vmatpush2.xpose.msra.mxu0 0.0
    %5487 = vmatprep.subr.mxu0 0.0
    %5488 = vmatpush2.xpose.msra.mxu0 0.0
    %5489 = vmatprep.subr.mxu0 0.0
    %5490 = vmatpush2.xpose.msra.mxu0 0.0
    %5491 = vmatprep.subr.mxu0 0.0
    %5492 = vmatpush2.xpose.msra.mxu0 0.0
    %5493 = vmatprep.subr.mxu0 0.0
    %5494 = vmatpush2.xpose.msra.mxu0 0.0
    %5495 = vmatprep.mubr.f32.mxu0 0.0
    %5496 = vmatmul.mubr.f32.gmra.mxu0 %v5427
    %v5497 = vpop.f32.mrf.mxu0
    %v5498 = vadd.f32 0.0, %v5497
    %v5499 = vpop.f32.mrf.mxu0
    %5500 = vdwg.mxu0
    %v5501 = vsel %vm1358, %v4460, 0
    %v5503 = vsel %vm1358, %v4490, 0
    %5505 = vmatprep.subr.mxu0 0.0
    %5506 = vmatpush1.xpose.msra.mxu0 0.0
    %5507 = vmatprep.subr.mxu0 0.0
    %5508 = vmatpush1.xpose.msra.mxu0 0.0
    %5509 = vmatprep.subr.mxu0 0.0
    %5510 = vmatpush1.xpose.msra.mxu0 0.0
    %5511 = vmatprep.subr.mxu0 0.0
    %5512 = vmatpush1.xpose.msra.mxu0 0.0
    %5513 = vmatprep.subr.mxu0 0.0
    %5514 = vmatpush1.xpose.msra.mxu0 0.0
    %5515 = vmatprep.subr.mxu0 0.0
    %5516 = vmatpush1.xpose.msra.mxu0 0.0
    %5517 = vmatprep.subr.mxu0 0.0
    %5518 = vmatpush1.xpose.msra.mxu0 0.0
    %5519 = vmatprep.subr.mxu0 0.0
    %5520 = vmatpush1.xpose.msra.mxu0 0.0
    %5521 = vmatprep.subr.mxu0 0.0
    %5522 = vmatpush1.xpose.msra.mxu0 0.0
    %5523 = vmatprep.subr.mxu0 0.0
    %5524 = vmatpush1.xpose.msra.mxu0 0.0
    %5525 = vmatprep.subr.mxu0 0.0
    %5526 = vmatpush1.xpose.msra.mxu0 0.0
    %5527 = vmatprep.subr.mxu0 0.0
    %5528 = vmatpush1.xpose.msra.mxu0 0.0
    %5529 = vmatprep.subr.mxu0 0.0
    %5530 = vmatpush1.xpose.msra.mxu0 0.0
    %5531 = vmatprep.subr.mxu0 0.0
    %5532 = vmatpush1.xpose.msra.mxu0 0.0
    %5533 = vmatprep.subr.mxu0 0.0
    %5534 = vmatpush1.xpose.msra.mxu0 0.0
    %5535 = vmatprep.subr.mxu0 0.0
    %5536 = vmatpush1.xpose.msra.mxu0 %v5503
    %5537 = vmatprep.subr.mxu0 0.0
    %5538 = vmatpush2.xpose.msra.mxu0 0.0
    %5539 = vmatprep.subr.mxu0 0.0
    %5540 = vmatpush2.xpose.msra.mxu0 0.0
    %5541 = vmatprep.subr.mxu0 0.0
    %5542 = vmatpush2.xpose.msra.mxu0 0.0
    %5543 = vmatprep.subr.mxu0 0.0
    %5544 = vmatpush2.xpose.msra.mxu0 0.0
    %5545 = vmatprep.subr.mxu0 0.0
    %5546 = vmatpush2.xpose.msra.mxu0 0.0
    %5547 = vmatprep.subr.mxu0 0.0
    %5548 = vmatpush2.xpose.msra.mxu0 0.0
    %5549 = vmatprep.subr.mxu0 0.0
    %5550 = vmatpush2.xpose.msra.mxu0 0.0
    %5551 = vmatprep.subr.mxu0 0.0
    %5552 = vmatpush2.xpose.msra.mxu0 0.0
    %5553 = vmatprep.subr.mxu0 0.0
    %5554 = vmatpush2.xpose.msra.mxu0 0.0
    %5555 = vmatprep.subr.mxu0 0.0
    %5556 = vmatpush2.xpose.msra.mxu0 0.0
    %5557 = vmatprep.subr.mxu0 0.0
    %5558 = vmatpush2.xpose.msra.mxu0 0.0
    %5559 = vmatprep.subr.mxu0 0.0
    %5560 = vmatpush2.xpose.msra.mxu0 0.0
    %5561 = vmatprep.subr.mxu0 0.0
    %5562 = vmatpush2.xpose.msra.mxu0 0.0
    %5563 = vmatprep.subr.mxu0 0.0
    %5564 = vmatpush2.xpose.msra.mxu0 0.0
    %5565 = vmatprep.subr.mxu0 0.0
    %5566 = vmatpush2.xpose.msra.mxu0 0.0
    %5567 = vmatprep.subr.mxu0 0.0
    %5568 = vmatpush2.xpose.msra.mxu0 0.0
    %5569 = vmatprep.mubr.f32.mxu0 0.0
    %5570 = vmatmul.mubr.f32.gmra.mxu0 %v5501
    %v5571 = vpop.f32.mrf.mxu0
    %v5572 = vadd.f32 0.0, %v5571
    %v5573 = vpop.f32.mrf.mxu0
    %5574 = vdwg.mxu0
    %v5575 = vsel %vm1358, %v4462, 0
    %v5577 = vsel %vm1358, %v4492, 0
    %5579 = vmatprep.subr.mxu0 0.0
    %5580 = vmatpush1.xpose.msra.mxu0 0.0
    %5581 = vmatprep.subr.mxu0 0.0
    %5582 = vmatpush1.xpose.msra.mxu0 0.0
    %5583 = vmatprep.subr.mxu0 0.0
    %5584 = vmatpush1.xpose.msra.mxu0 0.0
    %5585 = vmatprep.subr.mxu0 0.0
    %5586 = vmatpush1.xpose.msra.mxu0 0.0
    %5587 = vmatprep.subr.mxu0 0.0
    %5588 = vmatpush1.xpose.msra.mxu0 0.0
    %5589 = vmatprep.subr.mxu0 0.0
    %5590 = vmatpush1.xpose.msra.mxu0 0.0
    %5591 = vmatprep.subr.mxu0 0.0
    %5592 = vmatpush1.xpose.msra.mxu0 0.0
    %5593 = vmatprep.subr.mxu0 0.0
    %5594 = vmatpush1.xpose.msra.mxu0 0.0
    %5595 = vmatprep.subr.mxu0 0.0
    %5596 = vmatpush1.xpose.msra.mxu0 0.0
    %5597 = vmatprep.subr.mxu0 0.0
    %5598 = vmatpush1.xpose.msra.mxu0 0.0
    %5599 = vmatprep.subr.mxu0 0.0
    %5600 = vmatpush1.xpose.msra.mxu0 0.0
    %5601 = vmatprep.subr.mxu0 0.0
    %5602 = vmatpush1.xpose.msra.mxu0 0.0
    %5603 = vmatprep.subr.mxu0 0.0
    %5604 = vmatpush1.xpose.msra.mxu0 0.0
    %5605 = vmatprep.subr.mxu0 0.0
    %5606 = vmatpush1.xpose.msra.mxu0 0.0
    %5607 = vmatprep.subr.mxu0 0.0
    %5608 = vmatpush1.xpose.msra.mxu0 0.0
    %5609 = vmatprep.subr.mxu0 0.0
    %5610 = vmatpush1.xpose.msra.mxu0 %v5577
    %5611 = vmatprep.subr.mxu0 0.0
    %5612 = vmatpush2.xpose.msra.mxu0 0.0
    %5613 = vmatprep.subr.mxu0 0.0
    %5614 = vmatpush2.xpose.msra.mxu0 0.0
    %5615 = vmatprep.subr.mxu0 0.0
    %5616 = vmatpush2.xpose.msra.mxu0 0.0
    %5617 = vmatprep.subr.mxu0 0.0
    %5618 = vmatpush2.xpose.msra.mxu0 0.0
    %5619 = vmatprep.subr.mxu0 0.0
    %5620 = vmatpush2.xpose.msra.mxu0 0.0
    %5621 = vmatprep.subr.mxu0 0.0
    %5622 = vmatpush2.xpose.msra.mxu0 0.0
    %5623 = vmatprep.subr.mxu0 0.0
    %5624 = vmatpush2.xpose.msra.mxu0 0.0
    %5625 = vmatprep.subr.mxu0 0.0
    %5626 = vmatpush2.xpose.msra.mxu0 0.0
    %5627 = vmatprep.subr.mxu0 0.0
    %5628 = vmatpush2.xpose.msra.mxu0 0.0
    %5629 = vmatprep.subr.mxu0 0.0
    %5630 = vmatpush2.xpose.msra.mxu0 0.0
    %5631 = vmatprep.subr.mxu0 0.0
    %5632 = vmatpush2.xpose.msra.mxu0 0.0
    %5633 = vmatprep.subr.mxu0 0.0
    %5634 = vmatpush2.xpose.msra.mxu0 0.0
    %5635 = vmatprep.subr.mxu0 0.0
    %5636 = vmatpush2.xpose.msra.mxu0 0.0
    %5637 = vmatprep.subr.mxu0 0.0
    %5638 = vmatpush2.xpose.msra.mxu0 0.0
    %5639 = vmatprep.subr.mxu0 0.0
    %5640 = vmatpush2.xpose.msra.mxu0 0.0
    %5641 = vmatprep.subr.mxu0 0.0
    %5642 = vmatpush2.xpose.msra.mxu0 0.0
    %5643 = vmatprep.mubr.f32.mxu0 0.0
    %5644 = vmatmul.mubr.f32.gmra.mxu0 %v5575
    %v5645 = vpop.f32.mrf.mxu0
    %v5646 = vadd.f32 0.0, %v5645
    %v5647 = vpop.f32.mrf.mxu0
    %5648 = vdwg.mxu0
    %v5649 = vsel %vm1358, %v4464, 0
    %v5651 = vsel %vm1358, %v4494, 0
    %5653 = vmatprep.subr.mxu0 0.0
    %5654 = vmatpush1.xpose.msra.mxu0 0.0
    %5655 = vmatprep.subr.mxu0 0.0
    %5656 = vmatpush1.xpose.msra.mxu0 0.0
    %5657 = vmatprep.subr.mxu0 0.0
    %5658 = vmatpush1.xpose.msra.mxu0 0.0
    %5659 = vmatprep.subr.mxu0 0.0
    %5660 = vmatpush1.xpose.msra.mxu0 0.0
    %5661 = vmatprep.subr.mxu0 0.0
    %5662 = vmatpush1.xpose.msra.mxu0 0.0
    %5663 = vmatprep.subr.mxu0 0.0
    %5664 = vmatpush1.xpose.msra.mxu0 0.0
    %5665 = vmatprep.subr.mxu0 0.0
    %5666 = vmatpush1.xpose.msra.mxu0 0.0
    %5667 = vmatprep.subr.mxu0 0.0
    %5668 = vmatpush1.xpose.msra.mxu0 0.0
    %5669 = vmatprep.subr.mxu0 0.0
    %5670 = vmatpush1.xpose.msra.mxu0 0.0
    %5671 = vmatprep.subr.mxu0 0.0
    %5672 = vmatpush1.xpose.msra.mxu0 0.0
    %5673 = vmatprep.subr.mxu0 0.0
    %5674 = vmatpush1.xpose.msra.mxu0 0.0
    %5675 = vmatprep.subr.mxu0 0.0
    %5676 = vmatpush1.xpose.msra.mxu0 0.0
    %5677 = vmatprep.subr.mxu0 0.0
    %5678 = vmatpush1.xpose.msra.mxu0 0.0
    %5679 = vmatprep.subr.mxu0 0.0
    %5680 = vmatpush1.xpose.msra.mxu0 0.0
    %5681 = vmatprep.subr.mxu0 0.0
    %5682 = vmatpush1.xpose.msra.mxu0 0.0
    %5683 = vmatprep.subr.mxu0 0.0
    %5684 = vmatpush1.xpose.msra.mxu0 %v5651
    %5685 = vmatprep.subr.mxu0 0.0
    %5686 = vmatpush2.xpose.msra.mxu0 0.0
    %5687 = vmatprep.subr.mxu0 0.0
    %5688 = vmatpush2.xpose.msra.mxu0 0.0
    %5689 = vmatprep.subr.mxu0 0.0
    %5690 = vmatpush2.xpose.msra.mxu0 0.0
    %5691 = vmatprep.subr.mxu0 0.0
    %5692 = vmatpush2.xpose.msra.mxu0 0.0
    %5693 = vmatprep.subr.mxu0 0.0
    %5694 = vmatpush2.xpose.msra.mxu0 0.0
    %5695 = vmatprep.subr.mxu0 0.0
    %5696 = vmatpush2.xpose.msra.mxu0 0.0
    %5697 = vmatprep.subr.mxu0 0.0
    %5698 = vmatpush2.xpose.msra.mxu0 0.0
    %5699 = vmatprep.subr.mxu0 0.0
    %5700 = vmatpush2.xpose.msra.mxu0 0.0
    %5701 = vmatprep.subr.mxu0 0.0
    %5702 = vmatpush2.xpose.msra.mxu0 0.0
    %5703 = vmatprep.subr.mxu0 0.0
    %5704 = vmatpush2.xpose.msra.mxu0 0.0
    %5705 = vmatprep.subr.mxu0 0.0
    %5706 = vmatpush2.xpose.msra.mxu0 0.0
    %5707 = vmatprep.subr.mxu0 0.0
    %5708 = vmatpush2.xpose.msra.mxu0 0.0
    %5709 = vmatprep.subr.mxu0 0.0
    %5710 = vmatpush2.xpose.msra.mxu0 0.0
    %5711 = vmatprep.subr.mxu0 0.0
    %5712 = vmatpush2.xpose.msra.mxu0 0.0
    %5713 = vmatprep.subr.mxu0 0.0
    %5714 = vmatpush2.xpose.msra.mxu0 0.0
    %5715 = vmatprep.subr.mxu0 0.0
    %5716 = vmatpush2.xpose.msra.mxu0 0.0
    %5717 = vmatprep.mubr.f32.mxu0 0.0
    %5718 = vmatmul.mubr.f32.gmra.mxu0 %v5649
    %v5719 = vpop.f32.mrf.mxu0
    %v5720 = vadd.f32 0.0, %v5719
    %v5721 = vpop.f32.mrf.mxu0
    %5722 = vdwg.mxu0
    %v5723 = vmul.f32 %v4610, 0.17677669
    %v5724 = vmul.f32 %v4684, 0.17677669
    %v5725 = vmul.f32 %v4758, 0.17677669
    %v5726 = vmul.f32 %v4832, 0.17677669
    %v5727 = vmul.f32 %v4906, 0.17677669
    %v5728 = vmul.f32 %v4980, 0.17677669
    %v5729 = vmul.f32 %v5054, 0.17677669
    %v5730 = vmul.f32 %v5128, 0.17677669
    %v5731 = vmul.f32 %v5202, 0.17677669
    %v5732 = vmul.f32 %v5276, 0.17677669
    %v5733 = vmul.f32 %v5350, 0.17677669
    %v5734 = vmul.f32 %v5424, 0.17677669
    %v5735 = vmul.f32 %v5498, 0.17677669
    %v5736 = vmul.f32 %v5572, 0.17677669
    %v5737 = vmul.f32 %v5646, 0.17677669
    %v5738 = vmul.f32 %v5720, 0.17677669
    %v5739 = vsel %vm2559, %v5723, -inf
    %5740 = vmax.xlane.f32.xlu0 %v5739
    %v5741 = vpop.xlane.xlu0 %5740
    %v5742 = vsel %vm2559, %v5724, -inf
    %5743 = vmax.xlane.f32.xlu0 %v5742
    %v5744 = vpop.xlane.xlu0 %5743
    %v5745 = vsel %vm2559, %v5725, -inf
    %5746 = vmax.xlane.f32.xlu0 %v5745
    %v5747 = vpop.xlane.xlu0 %5746
    %v5748 = vsel %vm2559, %v5726, -inf
    %5749 = vmax.xlane.f32.xlu0 %v5748
    %v5750 = vpop.xlane.xlu0 %5749
    %v5751 = vsel %vm2559, %v5727, -inf
    %5752 = vmax.xlane.f32.xlu0 %v5751
    %v5753 = vpop.xlane.xlu0 %5752
    %v5754 = vsel %vm2559, %v5728, -inf
    %5755 = vmax.xlane.f32.xlu0 %v5754
    %v5756 = vpop.xlane.xlu0 %5755
    %v5757 = vsel %vm2559, %v5729, -inf
    %5758 = vmax.xlane.f32.xlu0 %v5757
    %v5759 = vpop.xlane.xlu0 %5758
    %v5760 = vsel %vm2559, %v5730, -inf
    %5761 = vmax.xlane.f32.xlu0 %v5760
    %v5762 = vpop.xlane.xlu0 %5761
    %v5763 = vsel %vm2559, %v5731, -inf
    %5764 = vmax.xlane.f32.xlu0 %v5763
    %v5765 = vpop.xlane.xlu0 %5764
    %v5766 = vsel %vm2559, %v5732, -inf
    %5767 = vmax.xlane.f32.xlu0 %v5766
    %v5768 = vpop.xlane.xlu0 %5767
    %v5769 = vsel %vm2559, %v5733, -inf
    %5770 = vmax.xlane.f32.xlu0 %v5769
    %v5771 = vpop.xlane.xlu0 %5770
    %v5772 = vsel %vm2559, %v5734, -inf
    %5773 = vmax.xlane.f32.xlu0 %v5772
    %v5774 = vpop.xlane.xlu0 %5773
    %v5775 = vsel %vm2559, %v5735, -inf
    %5776 = vmax.xlane.f32.xlu0 %v5775
    %v5777 = vpop.xlane.xlu0 %5776
    %v5778 = vsel %vm2559, %v5736, -inf
    %5779 = vmax.xlane.f32.xlu0 %v5778
    %v5780 = vpop.xlane.xlu0 %5779
    %v5781 = vsel %vm2559, %v5737, -inf
    %5782 = vmax.xlane.f32.xlu0 %v5781
    %v5783 = vpop.xlane.xlu0 %5782
    %v5784 = vsel %vm2559, %v5738, -inf
    %5785 = vmax.xlane.f32.xlu0 %v5784
    %v5786 = vpop.xlane.xlu0 %5785
    %v5787 = vsub.f32 %v5723, %v5741
    %v5788 = vsub.f32 %v5724, %v5744
    %v5789 = vsub.f32 %v5725, %v5747
    %v5790 = vsub.f32 %v5726, %v5750
    %v5791 = vsub.f32 %v5727, %v5753
    %v5792 = vsub.f32 %v5728, %v5756
    %v5793 = vsub.f32 %v5729, %v5759
    %v5794 = vsub.f32 %v5730, %v5762
    %v5795 = vsub.f32 %v5731, %v5765
    %v5796 = vsub.f32 %v5732, %v5768
    %v5797 = vsub.f32 %v5733, %v5771
    %v5798 = vsub.f32 %v5734, %v5774
    %v5799 = vsub.f32 %v5735, %v5777
    %v5800 = vsub.f32 %v5736, %v5780
    %v5801 = vsub.f32 %v5737, %v5783
    %v5802 = vsub.f32 %v5738, %v5786
    %v5803 = vmul.f32 %v5787, 1.442695
    %v5804 = vpow.pop %v5803
    %v5805 = vmul.f32 %v5788, 1.442695
    %v5806 = vpow.pop %v5805
    %v5807 = vmul.f32 %v5789, 1.442695
    %v5808 = vpow.pop %v5807
    %v5809 = vmul.f32 %v5790, 1.442695
    %v5810 = vpow.pop %v5809
    %v5811 = vmul.f32 %v5791, 1.442695
    %v5812 = vpow.pop %v5811
    %v5813 = vmul.f32 %v5792, 1.442695
    %v5814 = vpow.pop %v5813
    %v5815 = vmul.f32 %v5793, 1.442695
    %v5816 = vpow.pop %v5815
    %v5817 = vmul.f32 %v5794, 1.442695
    %v5818 = vpow.pop %v5817
    %v5819 = vmul.f32 %v5795, 1.442695
    %v5820 = vpow.pop %v5819
    %v5821 = vmul.f32 %v5796, 1.442695
    %v5822 = vpow.pop %v5821
    %v5823 = vmul.f32 %v5797, 1.442695
    %v5824 = vpow.pop %v5823
    %v5825 = vmul.f32 %v5798, 1.442695
    %v5826 = vpow.pop %v5825
    %v5827 = vmul.f32 %v5799, 1.442695
    %v5828 = vpow.pop %v5827
    %v5829 = vmul.f32 %v5800, 1.442695
    %v5830 = vpow.pop %v5829
    %v5831 = vmul.f32 %v5801, 1.442695
    %v5832 = vpow.pop %v5831
    %v5833 = vmul.f32 %v5802, 1.442695
    %v5834 = vpow.pop %v5833
    %v5835 = vsel %vm2559, %v5804, 0.0
    %5836 = vadd.xlane.f32.xlu0 %v5835
    %v5837 = vpop.xlane.xlu0 %5836
    %v5838 = vsel %vm2559, %v5806, 0.0
    %5839 = vadd.xlane.f32.xlu0 %v5838
    %v5840 = vpop.xlane.xlu0 %5839
    %v5841 = vsel %vm2559, %v5808, 0.0
    %5842 = vadd.xlane.f32.xlu0 %v5841
    %v5843 = vpop.xlane.xlu0 %5842
    %v5844 = vsel %vm2559, %v5810, 0.0
    %5845 = vadd.xlane.f32.xlu0 %v5844
    %v5846 = vpop.xlane.xlu0 %5845
    %v5847 = vsel %vm2559, %v5812, 0.0
    %5848 = vadd.xlane.f32.xlu0 %v5847
    %v5849 = vpop.xlane.xlu0 %5848
    %v5850 = vsel %vm2559, %v5814, 0.0
    %5851 = vadd.xlane.f32.xlu0 %v5850
    %v5852 = vpop.xlane.xlu0 %5851
    %v5853 = vsel %vm2559, %v5816, 0.0
    %5854 = vadd.xlane.f32.xlu0 %v5853
    %v5855 = vpop.xlane.xlu0 %5854
    %v5856 = vsel %vm2559, %v5818, 0.0
    %5857 = vadd.xlane.f32.xlu0 %v5856
    %v5858 = vpop.xlane.xlu0 %5857
    %v5859 = vsel %vm2559, %v5820, 0.0
    %5860 = vadd.xlane.f32.xlu0 %v5859
    %v5861 = vpop.xlane.xlu0 %5860
    %v5862 = vsel %vm2559, %v5822, 0.0
    %5863 = vadd.xlane.f32.xlu0 %v5862
    %v5864 = vpop.xlane.xlu0 %5863
    %v5865 = vsel %vm2559, %v5824, 0.0
    %5866 = vadd.xlane.f32.xlu0 %v5865
    %v5867 = vpop.xlane.xlu0 %5866
    %v5868 = vsel %vm2559, %v5826, 0.0
    %5869 = vadd.xlane.f32.xlu0 %v5868
    %v5870 = vpop.xlane.xlu0 %5869
    %v5871 = vsel %vm2559, %v5828, 0.0
    %5872 = vadd.xlane.f32.xlu0 %v5871
    %v5873 = vpop.xlane.xlu0 %5872
    %v5874 = vsel %vm2559, %v5830, 0.0
    %5875 = vadd.xlane.f32.xlu0 %v5874
    %v5876 = vpop.xlane.xlu0 %5875
    %v5877 = vsel %vm2559, %v5832, 0.0
    %5878 = vadd.xlane.f32.xlu0 %v5877
    %v5879 = vpop.xlane.xlu0 %5878
    %v5880 = vsel %vm2559, %v5834, 0.0
    %5881 = vadd.xlane.f32.xlu0 %v5880
    %v5882 = vpop.xlane.xlu0 %5881
    %v5883 = vrcp.pop %v5837
    %v5884 = vrcp.pop %v5840
    %v5885 = vrcp.pop %v5843
    %v5886 = vrcp.pop %v5846
    %v5887 = vrcp.pop %v5849
    %v5888 = vrcp.pop %v5852
    %v5889 = vrcp.pop %v5855
    %v5890 = vrcp.pop %v5858
    %v5891 = vrcp.pop %v5861
    %v5892 = vrcp.pop %v5864
    %v5893 = vrcp.pop %v5867
    %v5894 = vrcp.pop %v5870
    %v5895 = vrcp.pop %v5873
    %v5896 = vrcp.pop %v5876
    %v5897 = vrcp.pop %v5879
    %v5898 = vrcp.pop %v5882
    %v5899 = vmul.f32 %v5804, %v5883
    %v5900 = vmul.f32 %v5806, %v5884
    %v5901 = vmul.f32 %v5808, %v5885
    %v5902 = vmul.f32 %v5810, %v5886
    %v5903 = vmul.f32 %v5812, %v5887
    %v5904 = vmul.f32 %v5814, %v5888
    %v5905 = vmul.f32 %v5816, %v5889
    %v5906 = vmul.f32 %v5818, %v5890
    %v5907 = vmul.f32 %v5820, %v5891
    %v5908 = vmul.f32 %v5822, %v5892
    %v5909 = vmul.f32 %v5824, %v5893
    %v5910 = vmul.f32 %v5826, %v5894
    %v5911 = vmul.f32 %v5828, %v5895
    %v5912 = vmul.f32 %v5830, %v5896
    %v5913 = vmul.f32 %v5832, %v5897
    %v5914 = vmul.f32 %v5834, %v5898
    %v5916 = vsel %vm2559, %v5899, 0
    %5918 = vmatprep.subr.mxu0 0.0
    %5919 = vmatpush1.msra.mxu0 0.0
    %5920 = vmatprep.subr.mxu0 0.0
    %5921 = vmatpush1.msra.mxu0 0.0
    %5922 = vmatprep.subr.mxu0 0.0
    %5923 = vmatpush1.msra.mxu0 0.0
    %5924 = vmatprep.subr.mxu0 0.0
    %5925 = vmatpush1.msra.mxu0 0.0
    %5926 = vmatprep.subr.mxu0 0.0
    %5927 = vmatpush1.msra.mxu0 0.0
    %5928 = vmatprep.subr.mxu0 0.0
    %5929 = vmatpush1.msra.mxu0 0.0
    %5930 = vmatprep.subr.mxu0 0.0
    %5931 = vmatpush1.msra.mxu0 0.0
    %5932 = vmatprep.subr.mxu0 0.0
    %5933 = vmatpush1.msra.mxu0 0.0
    %5934 = vmatprep.subr.mxu0 0.0
    %5935 = vmatpush1.msra.mxu0 0.0
    %5936 = vmatprep.subr.mxu0 0.0
    %5937 = vmatpush1.msra.mxu0 0.0
    %5938 = vmatprep.subr.mxu0 0.0
    %5939 = vmatpush1.msra.mxu0 0.0
    %5940 = vmatprep.subr.mxu0 0.0
    %5941 = vmatpush1.msra.mxu0 0.0
    %5942 = vmatprep.subr.mxu0 0.0
    %5943 = vmatpush1.msra.mxu0 0.0
    %5944 = vmatprep.subr.mxu0 0.0
    %5945 = vmatpush1.msra.mxu0 0.0
    %5946 = vmatprep.subr.mxu0 0.0
    %5947 = vmatpush1.msra.mxu0 0.0
    %5948 = vmatprep.subr.mxu0 0.0
    %5949 = vmatpush1.msra.mxu0 %v4427
    %5950 = vmatprep.subr.mxu0 0.0
    %5951 = vmatpush2.msra.mxu0 0.0
    %5952 = vmatprep.subr.mxu0 0.0
    %5953 = vmatpush2.msra.mxu0 0.0
    %5954 = vmatprep.subr.mxu0 0.0
    %5955 = vmatpush2.msra.mxu0 0.0
    %5956 = vmatprep.subr.mxu0 0.0
    %5957 = vmatpush2.msra.mxu0 0.0
    %5958 = vmatprep.subr.mxu0 0.0
    %5959 = vmatpush2.msra.mxu0 0.0
    %5960 = vmatprep.subr.mxu0 0.0
    %5961 = vmatpush2.msra.mxu0 0.0
    %5962 = vmatprep.subr.mxu0 0.0
    %5963 = vmatpush2.msra.mxu0 0.0
    %5964 = vmatprep.subr.mxu0 0.0
    %5965 = vmatpush2.msra.mxu0 0.0
    %5966 = vmatprep.subr.mxu0 0.0
    %5967 = vmatpush2.msra.mxu0 0.0
    %5968 = vmatprep.subr.mxu0 0.0
    %5969 = vmatpush2.msra.mxu0 0.0
    %5970 = vmatprep.subr.mxu0 0.0
    %5971 = vmatpush2.msra.mxu0 0.0
    %5972 = vmatprep.subr.mxu0 0.0
    %5973 = vmatpush2.msra.mxu0 0.0
    %5974 = vmatprep.subr.mxu0 0.0
    %5975 = vmatpush2.msra.mxu0 0.0
    %5976 = vmatprep.subr.mxu0 0.0
    %5977 = vmatpush2.msra.mxu0 0.0
    %5978 = vmatprep.subr.mxu0 0.0
    %5979 = vmatpush2.msra.mxu0 0.0
    %5980 = vmatprep.subr.mxu0 0.0
    %5981 = vmatpush2.msra.mxu0 0.0
    %5982 = vmatprep.mubr.f32.mxu0 0.0
    %5983 = vmatmul.mubr.f32.gmra.mxu0 %v5916
    %v5984 = vpop.f32.mrf.mxu0
    %v5985 = vadd.f32 0.0, %v5984
    %v5986 = vpop.f32.mrf.mxu0
    %5987 = vdwg.mxu0
    %v5989 = vsel %vm2559, %v5900, 0
    %5991 = vmatprep.subr.mxu0 0.0
    %5992 = vmatpush1.msra.mxu0 0.0
    %5993 = vmatprep.subr.mxu0 0.0
    %5994 = vmatpush1.msra.mxu0 0.0
    %5995 = vmatprep.subr.mxu0 0.0
    %5996 = vmatpush1.msra.mxu0 0.0
    %5997 = vmatprep.subr.mxu0 0.0
    %5998 = vmatpush1.msra.mxu0 0.0
    %5999 = vmatprep.subr.mxu0 0.0
    %6000 = vmatpush1.msra.mxu0 0.0
    %6001 = vmatprep.subr.mxu0 0.0
    %6002 = vmatpush1.msra.mxu0 0.0
    %6003 = vmatprep.subr.mxu0 0.0
    %6004 = vmatpush1.msra.mxu0 0.0
    %6005 = vmatprep.subr.mxu0 0.0
    %6006 = vmatpush1.msra.mxu0 0.0
    %6007 = vmatprep.subr.mxu0 0.0
    %6008 = vmatpush1.msra.mxu0 0.0
    %6009 = vmatprep.subr.mxu0 0.0
    %6010 = vmatpush1.msra.mxu0 0.0
    %6011 = vmatprep.subr.mxu0 0.0
    %6012 = vmatpush1.msra.mxu0 0.0
    %6013 = vmatprep.subr.mxu0 0.0
    %6014 = vmatpush1.msra.mxu0 0.0
    %6015 = vmatprep.subr.mxu0 0.0
    %6016 = vmatpush1.msra.mxu0 0.0
    %6017 = vmatprep.subr.mxu0 0.0
    %6018 = vmatpush1.msra.mxu0 0.0
    %6019 = vmatprep.subr.mxu0 0.0
    %6020 = vmatpush1.msra.mxu0 0.0
    %6021 = vmatprep.subr.mxu0 0.0
    %6022 = vmatpush1.msra.mxu0 %v4497
    %6023 = vmatprep.subr.mxu0 0.0
    %6024 = vmatpush2.msra.mxu0 0.0
    %6025 = vmatprep.subr.mxu0 0.0
    %6026 = vmatpush2.msra.mxu0 0.0
    %6027 = vmatprep.subr.mxu0 0.0
    %6028 = vmatpush2.msra.mxu0 0.0
    %6029 = vmatprep.subr.mxu0 0.0
    %6030 = vmatpush2.msra.mxu0 0.0
    %6031 = vmatprep.subr.mxu0 0.0
    %6032 = vmatpush2.msra.mxu0 0.0
    %6033 = vmatprep.subr.mxu0 0.0
    %6034 = vmatpush2.msra.mxu0 0.0
    %6035 = vmatprep.subr.mxu0 0.0
    %6036 = vmatpush2.msra.mxu0 0.0
    %6037 = vmatprep.subr.mxu0 0.0
    %6038 = vmatpush2.msra.mxu0 0.0
    %6039 = vmatprep.subr.mxu0 0.0
    %6040 = vmatpush2.msra.mxu0 0.0
    %6041 = vmatprep.subr.mxu0 0.0
    %6042 = vmatpush2.msra.mxu0 0.0
    %6043 = vmatprep.subr.mxu0 0.0
    %6044 = vmatpush2.msra.mxu0 0.0
    %6045 = vmatprep.subr.mxu0 0.0
    %6046 = vmatpush2.msra.mxu0 0.0
    %6047 = vmatprep.subr.mxu0 0.0
    %6048 = vmatpush2.msra.mxu0 0.0
    %6049 = vmatprep.subr.mxu0 0.0
    %6050 = vmatpush2.msra.mxu0 0.0
    %6051 = vmatprep.subr.mxu0 0.0
    %6052 = vmatpush2.msra.mxu0 0.0
    %6053 = vmatprep.subr.mxu0 0.0
    %6054 = vmatpush2.msra.mxu0 0.0
    %6055 = vmatprep.mubr.f32.mxu0 0.0
    %6056 = vmatmul.mubr.f32.gmra.mxu0 %v5989
    %v6057 = vpop.f32.mrf.mxu0
    %v6058 = vadd.f32 0.0, %v6057
    %v6059 = vpop.f32.mrf.mxu0
    %6060 = vdwg.mxu0
    %v6062 = vsel %vm2559, %v5901, 0
    %6064 = vmatprep.subr.mxu0 0.0
    %6065 = vmatpush1.msra.mxu0 0.0
    %6066 = vmatprep.subr.mxu0 0.0
    %6067 = vmatpush1.msra.mxu0 0.0
    %6068 = vmatprep.subr.mxu0 0.0
    %6069 = vmatpush1.msra.mxu0 0.0
    %6070 = vmatprep.subr.mxu0 0.0
    %6071 = vmatpush1.msra.mxu0 0.0
    %6072 = vmatprep.subr.mxu0 0.0
    %6073 = vmatpush1.msra.mxu0 0.0
    %6074 = vmatprep.subr.mxu0 0.0
    %6075 = vmatpush1.msra.mxu0 0.0
    %6076 = vmatprep.subr.mxu0 0.0
    %6077 = vmatpush1.msra.mxu0 0.0
    %6078 = vmatprep.subr.mxu0 0.0
    %6079 = vmatpush1.msra.mxu0 0.0
    %6080 = vmatprep.subr.mxu0 0.0
    %6081 = vmatpush1.msra.mxu0 0.0
    %6082 = vmatprep.subr.mxu0 0.0
    %6083 = vmatpush1.msra.mxu0 0.0
    %6084 = vmatprep.subr.mxu0 0.0
    %6085 = vmatpush1.msra.mxu0 0.0
    %6086 = vmatprep.subr.mxu0 0.0
    %6087 = vmatpush1.msra.mxu0 0.0
    %6088 = vmatprep.subr.mxu0 0.0
    %6089 = vmatpush1.msra.mxu0 0.0
    %6090 = vmatprep.subr.mxu0 0.0
    %6091 = vmatpush1.msra.mxu0 0.0
    %6092 = vmatprep.subr.mxu0 0.0
    %6093 = vmatpush1.msra.mxu0 0.0
    %6094 = vmatprep.subr.mxu0 0.0
    %6095 = vmatpush1.msra.mxu0 %v4500
    %6096 = vmatprep.subr.mxu0 0.0
    %6097 = vmatpush2.msra.mxu0 0.0
    %6098 = vmatprep.subr.mxu0 0.0
    %6099 = vmatpush2.msra.mxu0 0.0
    %6100 = vmatprep.subr.mxu0 0.0
    %6101 = vmatpush2.msra.mxu0 0.0
    %6102 = vmatprep.subr.mxu0 0.0
    %6103 = vmatpush2.msra.mxu0 0.0
    %6104 = vmatprep.subr.mxu0 0.0
    %6105 = vmatpush2.msra.mxu0 0.0
    %6106 = vmatprep.subr.mxu0 0.0
    %6107 = vmatpush2.msra.mxu0 0.0
    %6108 = vmatprep.subr.mxu0 0.0
    %6109 = vmatpush2.msra.mxu0 0.0
    %6110 = vmatprep.subr.mxu0 0.0
    %6111 = vmatpush2.msra.mxu0 0.0
    %6112 = vmatprep.subr.mxu0 0.0
    %6113 = vmatpush2.msra.mxu0 0.0
    %6114 = vmatprep.subr.mxu0 0.0
    %6115 = vmatpush2.msra.mxu0 0.0
    %6116 = vmatprep.subr.mxu0 0.0
    %6117 = vmatpush2.msra.mxu0 0.0
    %6118 = vmatprep.subr.mxu0 0.0
    %6119 = vmatpush2.msra.mxu0 0.0
    %6120 = vmatprep.subr.mxu0 0.0
    %6121 = vmatpush2.msra.mxu0 0.0
    %6122 = vmatprep.subr.mxu0 0.0
    %6123 = vmatpush2.msra.mxu0 0.0
    %6124 = vmatprep.subr.mxu0 0.0
    %6125 = vmatpush2.msra.mxu0 0.0
    %6126 = vmatprep.subr.mxu0 0.0
    %6127 = vmatpush2.msra.mxu0 0.0
    %6128 = vmatprep.mubr.f32.mxu0 0.0
    %6129 = vmatmul.mubr.f32.gmra.mxu0 %v6062
    %v6130 = vpop.f32.mrf.mxu0
    %v6131 = vadd.f32 0.0, %v6130
    %v6132 = vpop.f32.mrf.mxu0
    %6133 = vdwg.mxu0
    %v6135 = vsel %vm2559, %v5902, 0
    %6137 = vmatprep.subr.mxu0 0.0
    %6138 = vmatpush1.msra.mxu0 0.0
    %6139 = vmatprep.subr.mxu0 0.0
    %6140 = vmatpush1.msra.mxu0 0.0
    %6141 = vmatprep.subr.mxu0 0.0
    %6142 = vmatpush1.msra.mxu0 0.0
    %6143 = vmatprep.subr.mxu0 0.0
    %6144 = vmatpush1.msra.mxu0 0.0
    %6145 = vmatprep.subr.mxu0 0.0
    %6146 = vmatpush1.msra.mxu0 0.0
    %6147 = vmatprep.subr.mxu0 0.0
    %6148 = vmatpush1.msra.mxu0 0.0
    %6149 = vmatprep.subr.mxu0 0.0
    %6150 = vmatpush1.msra.mxu0 0.0
    %6151 = vmatprep.subr.mxu0 0.0
    %6152 = vmatpush1.msra.mxu0 0.0
    %6153 = vmatprep.subr.mxu0 0.0
    %6154 = vmatpush1.msra.mxu0 0.0
    %6155 = vmatprep.subr.mxu0 0.0
    %6156 = vmatpush1.msra.mxu0 0.0
    %6157 = vmatprep.subr.mxu0 0.0
    %6158 = vmatpush1.msra.mxu0 0.0
    %6159 = vmatprep.subr.mxu0 0.0
    %6160 = vmatpush1.msra.mxu0 0.0
    %6161 = vmatprep.subr.mxu0 0.0
    %6162 = vmatpush1.msra.mxu0 0.0
    %6163 = vmatprep.subr.mxu0 0.0
    %6164 = vmatpush1.msra.mxu0 0.0
    %6165 = vmatprep.subr.mxu0 0.0
    %6166 = vmatpush1.msra.mxu0 0.0
    %6167 = vmatprep.subr.mxu0 0.0
    %6168 = vmatpush1.msra.mxu0 %v4503
    %6169 = vmatprep.subr.mxu0 0.0
    %6170 = vmatpush2.msra.mxu0 0.0
    %6171 = vmatprep.subr.mxu0 0.0
    %6172 = vmatpush2.msra.mxu0 0.0
    %6173 = vmatprep.subr.mxu0 0.0
    %6174 = vmatpush2.msra.mxu0 0.0
    %6175 = vmatprep.subr.mxu0 0.0
    %6176 = vmatpush2.msra.mxu0 0.0
    %6177 = vmatprep.subr.mxu0 0.0
    %6178 = vmatpush2.msra.mxu0 0.0
    %6179 = vmatprep.subr.mxu0 0.0
    %6180 = vmatpush2.msra.mxu0 0.0
    %6181 = vmatprep.subr.mxu0 0.0
    %6182 = vmatpush2.msra.mxu0 0.0
    %6183 = vmatprep.subr.mxu0 0.0
    %6184 = vmatpush2.msra.mxu0 0.0
    %6185 = vmatprep.subr.mxu0 0.0
    %6186 = vmatpush2.msra.mxu0 0.0
    %6187 = vmatprep.subr.mxu0 0.0
    %6188 = vmatpush2.msra.mxu0 0.0
    %6189 = vmatprep.subr.mxu0 0.0
    %6190 = vmatpush2.msra.mxu0 0.0
    %6191 = vmatprep.subr.mxu0 0.0
    %6192 = vmatpush2.msra.mxu0 0.0
    %6193 = vmatprep.subr.mxu0 0.0
    %6194 = vmatpush2.msra.mxu0 0.0
    %6195 = vmatprep.subr.mxu0 0.0
    %6196 = vmatpush2.msra.mxu0 0.0
    %6197 = vmatprep.subr.mxu0 0.0
    %6198 = vmatpush2.msra.mxu0 0.0
    %6199 = vmatprep.subr.mxu0 0.0
    %6200 = vmatpush2.msra.mxu0 0.0
    %6201 = vmatprep.mubr.f32.mxu0 0.0
    %6202 = vmatmul.mubr.f32.gmra.mxu0 %v6135
    %v6203 = vpop.f32.mrf.mxu0
    %v6204 = vadd.f32 0.0, %v6203
    %v6205 = vpop.f32.mrf.mxu0
    %6206 = vdwg.mxu0
    %v6208 = vsel %vm2559, %v5903, 0
    %6210 = vmatprep.subr.mxu0 0.0
    %6211 = vmatpush1.msra.mxu0 0.0
    %6212 = vmatprep.subr.mxu0 0.0
    %6213 = vmatpush1.msra.mxu0 0.0
    %6214 = vmatprep.subr.mxu0 0.0
    %6215 = vmatpush1.msra.mxu0 0.0
    %6216 = vmatprep.subr.mxu0 0.0
    %6217 = vmatpush1.msra.mxu0 0.0
    %6218 = vmatprep.subr.mxu0 0.0
    %6219 = vmatpush1.msra.mxu0 0.0
    %6220 = vmatprep.subr.mxu0 0.0
    %6221 = vmatpush1.msra.mxu0 0.0
    %6222 = vmatprep.subr.mxu0 0.0
    %6223 = vmatpush1.msra.mxu0 0.0
    %6224 = vmatprep.subr.mxu0 0.0
    %6225 = vmatpush1.msra.mxu0 0.0
    %6226 = vmatprep.subr.mxu0 0.0
    %6227 = vmatpush1.msra.mxu0 0.0
    %6228 = vmatprep.subr.mxu0 0.0
    %6229 = vmatpush1.msra.mxu0 0.0
    %6230 = vmatprep.subr.mxu0 0.0
    %6231 = vmatpush1.msra.mxu0 0.0
    %6232 = vmatprep.subr.mxu0 0.0
    %6233 = vmatpush1.msra.mxu0 0.0
    %6234 = vmatprep.subr.mxu0 0.0
    %6235 = vmatpush1.msra.mxu0 0.0
    %6236 = vmatprep.subr.mxu0 0.0
    %6237 = vmatpush1.msra.mxu0 0.0
    %6238 = vmatprep.subr.mxu0 0.0
    %6239 = vmatpush1.msra.mxu0 0.0
    %6240 = vmatprep.subr.mxu0 0.0
    %6241 = vmatpush1.msra.mxu0 %v4506
    %6242 = vmatprep.subr.mxu0 0.0
    %6243 = vmatpush2.msra.mxu0 0.0
    %6244 = vmatprep.subr.mxu0 0.0
    %6245 = vmatpush2.msra.mxu0 0.0
    %6246 = vmatprep.subr.mxu0 0.0
    %6247 = vmatpush2.msra.mxu0 0.0
    %6248 = vmatprep.subr.mxu0 0.0
    %6249 = vmatpush2.msra.mxu0 0.0
    %6250 = vmatprep.subr.mxu0 0.0
    %6251 = vmatpush2.msra.mxu0 0.0
    %6252 = vmatprep.subr.mxu0 0.0
    %6253 = vmatpush2.msra.mxu0 0.0
    %6254 = vmatprep.subr.mxu0 0.0
    %6255 = vmatpush2.msra.mxu0 0.0
    %6256 = vmatprep.subr.mxu0 0.0
    %6257 = vmatpush2.msra.mxu0 0.0
    %6258 = vmatprep.subr.mxu0 0.0
    %6259 = vmatpush2.msra.mxu0 0.0
    %6260 = vmatprep.subr.mxu0 0.0
    %6261 = vmatpush2.msra.mxu0 0.0
    %6262 = vmatprep.subr.mxu0 0.0
    %6263 = vmatpush2.msra.mxu0 0.0
    %6264 = vmatprep.subr.mxu0 0.0
    %6265 = vmatpush2.msra.mxu0 0.0
    %6266 = vmatprep.subr.mxu0 0.0
    %6267 = vmatpush2.msra.mxu0 0.0
    %6268 = vmatprep.subr.mxu0 0.0
    %6269 = vmatpush2.msra.mxu0 0.0
    %6270 = vmatprep.subr.mxu0 0.0
    %6271 = vmatpush2.msra.mxu0 0.0
    %6272 = vmatprep.subr.mxu0 0.0
    %6273 = vmatpush2.msra.mxu0 0.0
    %6274 = vmatprep.mubr.f32.mxu0 0.0
    %6275 = vmatmul.mubr.f32.gmra.mxu0 %v6208
    %v6276 = vpop.f32.mrf.mxu0
    %v6277 = vadd.f32 0.0, %v6276
    %v6278 = vpop.f32.mrf.mxu0
    %6279 = vdwg.mxu0
    %v6281 = vsel %vm2559, %v5904, 0
    %6283 = vmatprep.subr.mxu0 0.0
    %6284 = vmatpush1.msra.mxu0 0.0
    %6285 = vmatprep.subr.mxu0 0.0
    %6286 = vmatpush1.msra.mxu0 0.0
    %6287 = vmatprep.subr.mxu0 0.0
    %6288 = vmatpush1.msra.mxu0 0.0
    %6289 = vmatprep.subr.mxu0 0.0
    %6290 = vmatpush1.msra.mxu0 0.0
    %6291 = vmatprep.subr.mxu0 0.0
    %6292 = vmatpush1.msra.mxu0 0.0
    %6293 = vmatprep.subr.mxu0 0.0
    %6294 = vmatpush1.msra.mxu0 0.0
    %6295 = vmatprep.subr.mxu0 0.0
    %6296 = vmatpush1.msra.mxu0 0.0
    %6297 = vmatprep.subr.mxu0 0.0
    %6298 = vmatpush1.msra.mxu0 0.0
    %6299 = vmatprep.subr.mxu0 0.0
    %6300 = vmatpush1.msra.mxu0 0.0
    %6301 = vmatprep.subr.mxu0 0.0
    %6302 = vmatpush1.msra.mxu0 0.0
    %6303 = vmatprep.subr.mxu0 0.0
    %6304 = vmatpush1.msra.mxu0 0.0
    %6305 = vmatprep.subr.mxu0 0.0
    %6306 = vmatpush1.msra.mxu0 0.0
    %6307 = vmatprep.subr.mxu0 0.0
    %6308 = vmatpush1.msra.mxu0 0.0
    %6309 = vmatprep.subr.mxu0 0.0
    %6310 = vmatpush1.msra.mxu0 0.0
    %6311 = vmatprep.subr.mxu0 0.0
    %6312 = vmatpush1.msra.mxu0 0.0
    %6313 = vmatprep.subr.mxu0 0.0
    %6314 = vmatpush1.msra.mxu0 %v4509
    %6315 = vmatprep.subr.mxu0 0.0
    %6316 = vmatpush2.msra.mxu0 0.0
    %6317 = vmatprep.subr.mxu0 0.0
    %6318 = vmatpush2.msra.mxu0 0.0
    %6319 = vmatprep.subr.mxu0 0.0
    %6320 = vmatpush2.msra.mxu0 0.0
    %6321 = vmatprep.subr.mxu0 0.0
    %6322 = vmatpush2.msra.mxu0 0.0
    %6323 = vmatprep.subr.mxu0 0.0
    %6324 = vmatpush2.msra.mxu0 0.0
    %6325 = vmatprep.subr.mxu0 0.0
    %6326 = vmatpush2.msra.mxu0 0.0
    %6327 = vmatprep.subr.mxu0 0.0
    %6328 = vmatpush2.msra.mxu0 0.0
    %6329 = vmatprep.subr.mxu0 0.0
    %6330 = vmatpush2.msra.mxu0 0.0
    %6331 = vmatprep.subr.mxu0 0.0
    %6332 = vmatpush2.msra.mxu0 0.0
    %6333 = vmatprep.subr.mxu0 0.0
    %6334 = vmatpush2.msra.mxu0 0.0
    %6335 = vmatprep.subr.mxu0 0.0
    %6336 = vmatpush2.msra.mxu0 0.0
    %6337 = vmatprep.subr.mxu0 0.0
    %6338 = vmatpush2.msra.mxu0 0.0
    %6339 = vmatprep.subr.mxu0 0.0
    %6340 = vmatpush2.msra.mxu0 0.0
    %6341 = vmatprep.subr.mxu0 0.0
    %6342 = vmatpush2.msra.mxu0 0.0
    %6343 = vmatprep.subr.mxu0 0.0
    %6344 = vmatpush2.msra.mxu0 0.0
    %6345 = vmatprep.subr.mxu0 0.0
    %6346 = vmatpush2.msra.mxu0 0.0
    %6347 = vmatprep.mubr.f32.mxu0 0.0
    %6348 = vmatmul.mubr.f32.gmra.mxu0 %v6281
    %v6349 = vpop.f32.mrf.mxu0
    %v6350 = vadd.f32 0.0, %v6349
    %v6351 = vpop.f32.mrf.mxu0
    %6352 = vdwg.mxu0
    %v6354 = vsel %vm2559, %v5905, 0
    %6356 = vmatprep.subr.mxu0 0.0
    %6357 = vmatpush1.msra.mxu0 0.0
    %6358 = vmatprep.subr.mxu0 0.0
    %6359 = vmatpush1.msra.mxu0 0.0
    %6360 = vmatprep.subr.mxu0 0.0
    %6361 = vmatpush1.msra.mxu0 0.0
    %6362 = vmatprep.subr.mxu0 0.0
    %6363 = vmatpush1.msra.mxu0 0.0
    %6364 = vmatprep.subr.mxu0 0.0
    %6365 = vmatpush1.msra.mxu0 0.0
    %6366 = vmatprep.subr.mxu0 0.0
    %6367 = vmatpush1.msra.mxu0 0.0
    %6368 = vmatprep.subr.mxu0 0.0
    %6369 = vmatpush1.msra.mxu0 0.0
    %6370 = vmatprep.subr.mxu0 0.0
    %6371 = vmatpush1.msra.mxu0 0.0
    %6372 = vmatprep.subr.mxu0 0.0
    %6373 = vmatpush1.msra.mxu0 0.0
    %6374 = vmatprep.subr.mxu0 0.0
    %6375 = vmatpush1.msra.mxu0 0.0
    %6376 = vmatprep.subr.mxu0 0.0
    %6377 = vmatpush1.msra.mxu0 0.0
    %6378 = vmatprep.subr.mxu0 0.0
    %6379 = vmatpush1.msra.mxu0 0.0
    %6380 = vmatprep.subr.mxu0 0.0
    %6381 = vmatpush1.msra.mxu0 0.0
    %6382 = vmatprep.subr.mxu0 0.0
    %6383 = vmatpush1.msra.mxu0 0.0
    %6384 = vmatprep.subr.mxu0 0.0
    %6385 = vmatpush1.msra.mxu0 0.0
    %6386 = vmatprep.subr.mxu0 0.0
    %6387 = vmatpush1.msra.mxu0 %v4512
    %6388 = vmatprep.subr.mxu0 0.0
    %6389 = vmatpush2.msra.mxu0 0.0
    %6390 = vmatprep.subr.mxu0 0.0
    %6391 = vmatpush2.msra.mxu0 0.0
    %6392 = vmatprep.subr.mxu0 0.0
    %6393 = vmatpush2.msra.mxu0 0.0
    %6394 = vmatprep.subr.mxu0 0.0
    %6395 = vmatpush2.msra.mxu0 0.0
    %6396 = vmatprep.subr.mxu0 0.0
    %6397 = vmatpush2.msra.mxu0 0.0
    %6398 = vmatprep.subr.mxu0 0.0
    %6399 = vmatpush2.msra.mxu0 0.0
    %6400 = vmatprep.subr.mxu0 0.0
    %6401 = vmatpush2.msra.mxu0 0.0
    %6402 = vmatprep.subr.mxu0 0.0
    %6403 = vmatpush2.msra.mxu0 0.0
    %6404 = vmatprep.subr.mxu0 0.0
    %6405 = vmatpush2.msra.mxu0 0.0
    %6406 = vmatprep.subr.mxu0 0.0
    %6407 = vmatpush2.msra.mxu0 0.0
    %6408 = vmatprep.subr.mxu0 0.0
    %6409 = vmatpush2.msra.mxu0 0.0
    %6410 = vmatprep.subr.mxu0 0.0
    %6411 = vmatpush2.msra.mxu0 0.0
    %6412 = vmatprep.subr.mxu0 0.0
    %6413 = vmatpush2.msra.mxu0 0.0
    %6414 = vmatprep.subr.mxu0 0.0
    %6415 = vmatpush2.msra.mxu0 0.0
    %6416 = vmatprep.subr.mxu0 0.0
    %6417 = vmatpush2.msra.mxu0 0.0
    %6418 = vmatprep.subr.mxu0 0.0
    %6419 = vmatpush2.msra.mxu0 0.0
    %6420 = vmatprep.mubr.f32.mxu0 0.0
    %6421 = vmatmul.mubr.f32.gmra.mxu0 %v6354
    %v6422 = vpop.f32.mrf.mxu0
    %v6423 = vadd.f32 0.0, %v6422
    %v6424 = vpop.f32.mrf.mxu0
    %6425 = vdwg.mxu0
    %v6427 = vsel %vm2559, %v5906, 0
    %6429 = vmatprep.subr.mxu0 0.0
    %6430 = vmatpush1.msra.mxu0 0.0
    %6431 = vmatprep.subr.mxu0 0.0
    %6432 = vmatpush1.msra.mxu0 0.0
    %6433 = vmatprep.subr.mxu0 0.0
    %6434 = vmatpush1.msra.mxu0 0.0
    %6435 = vmatprep.subr.mxu0 0.0
    %6436 = vmatpush1.msra.mxu0 0.0
    %6437 = vmatprep.subr.mxu0 0.0
    %6438 = vmatpush1.msra.mxu0 0.0
    %6439 = vmatprep.subr.mxu0 0.0
    %6440 = vmatpush1.msra.mxu0 0.0
    %6441 = vmatprep.subr.mxu0 0.0
    %6442 = vmatpush1.msra.mxu0 0.0
    %6443 = vmatprep.subr.mxu0 0.0
    %6444 = vmatpush1.msra.mxu0 0.0
    %6445 = vmatprep.subr.mxu0 0.0
    %6446 = vmatpush1.msra.mxu0 0.0
    %6447 = vmatprep.subr.mxu0 0.0
    %6448 = vmatpush1.msra.mxu0 0.0
    %6449 = vmatprep.subr.mxu0 0.0
    %6450 = vmatpush1.msra.mxu0 0.0
    %6451 = vmatprep.subr.mxu0 0.0
    %6452 = vmatpush1.msra.mxu0 0.0
    %6453 = vmatprep.subr.mxu0 0.0
    %6454 = vmatpush1.msra.mxu0 0.0
    %6455 = vmatprep.subr.mxu0 0.0
    %6456 = vmatpush1.msra.mxu0 0.0
    %6457 = vmatprep.subr.mxu0 0.0
    %6458 = vmatpush1.msra.mxu0 0.0
    %6459 = vmatprep.subr.mxu0 0.0
    %6460 = vmatpush1.msra.mxu0 %v4515
    %6461 = vmatprep.subr.mxu0 0.0
    %6462 = vmatpush2.msra.mxu0 0.0
    %6463 = vmatprep.subr.mxu0 0.0
    %6464 = vmatpush2.msra.mxu0 0.0
    %6465 = vmatprep.subr.mxu0 0.0
    %6466 = vmatpush2.msra.mxu0 0.0
    %6467 = vmatprep.subr.mxu0 0.0
    %6468 = vmatpush2.msra.mxu0 0.0
    %6469 = vmatprep.subr.mxu0 0.0
    %6470 = vmatpush2.msra.mxu0 0.0
    %6471 = vmatprep.subr.mxu0 0.0
    %6472 = vmatpush2.msra.mxu0 0.0
    %6473 = vmatprep.subr.mxu0 0.0
    %6474 = vmatpush2.msra.mxu0 0.0
    %6475 = vmatprep.subr.mxu0 0.0
    %6476 = vmatpush2.msra.mxu0 0.0
    %6477 = vmatprep.subr.mxu0 0.0
    %6478 = vmatpush2.msra.mxu0 0.0
    %6479 = vmatprep.subr.mxu0 0.0
    %6480 = vmatpush2.msra.mxu0 0.0
    %6481 = vmatprep.subr.mxu0 0.0
    %6482 = vmatpush2.msra.mxu0 0.0
    %6483 = vmatprep.subr.mxu0 0.0
    %6484 = vmatpush2.msra.mxu0 0.0
    %6485 = vmatprep.subr.mxu0 0.0
    %6486 = vmatpush2.msra.mxu0 0.0
    %6487 = vmatprep.subr.mxu0 0.0
    %6488 = vmatpush2.msra.mxu0 0.0
    %6489 = vmatprep.subr.mxu0 0.0
    %6490 = vmatpush2.msra.mxu0 0.0
    %6491 = vmatprep.subr.mxu0 0.0
    %6492 = vmatpush2.msra.mxu0 0.0
    %6493 = vmatprep.mubr.f32.mxu0 0.0
    %6494 = vmatmul.mubr.f32.gmra.mxu0 %v6427
    %v6495 = vpop.f32.mrf.mxu0
    %v6496 = vadd.f32 0.0, %v6495
    %v6497 = vpop.f32.mrf.mxu0
    %6498 = vdwg.mxu0
    %v6500 = vsel %vm2559, %v5907, 0
    %6502 = vmatprep.subr.mxu0 0.0
    %6503 = vmatpush1.msra.mxu0 0.0
    %6504 = vmatprep.subr.mxu0 0.0
    %6505 = vmatpush1.msra.mxu0 0.0
    %6506 = vmatprep.subr.mxu0 0.0
    %6507 = vmatpush1.msra.mxu0 0.0
    %6508 = vmatprep.subr.mxu0 0.0
    %6509 = vmatpush1.msra.mxu0 0.0
    %6510 = vmatprep.subr.mxu0 0.0
    %6511 = vmatpush1.msra.mxu0 0.0
    %6512 = vmatprep.subr.mxu0 0.0
    %6513 = vmatpush1.msra.mxu0 0.0
    %6514 = vmatprep.subr.mxu0 0.0
    %6515 = vmatpush1.msra.mxu0 0.0
    %6516 = vmatprep.subr.mxu0 0.0
    %6517 = vmatpush1.msra.mxu0 0.0
    %6518 = vmatprep.subr.mxu0 0.0
    %6519 = vmatpush1.msra.mxu0 0.0
    %6520 = vmatprep.subr.mxu0 0.0
    %6521 = vmatpush1.msra.mxu0 0.0
    %6522 = vmatprep.subr.mxu0 0.0
    %6523 = vmatpush1.msra.mxu0 0.0
    %6524 = vmatprep.subr.mxu0 0.0
    %6525 = vmatpush1.msra.mxu0 0.0
    %6526 = vmatprep.subr.mxu0 0.0
    %6527 = vmatpush1.msra.mxu0 0.0
    %6528 = vmatprep.subr.mxu0 0.0
    %6529 = vmatpush1.msra.mxu0 0.0
    %6530 = vmatprep.subr.mxu0 0.0
    %6531 = vmatpush1.msra.mxu0 0.0
    %6532 = vmatprep.subr.mxu0 0.0
    %6533 = vmatpush1.msra.mxu0 %v4432
    %6534 = vmatprep.subr.mxu0 0.0
    %6535 = vmatpush2.msra.mxu0 0.0
    %6536 = vmatprep.subr.mxu0 0.0
    %6537 = vmatpush2.msra.mxu0 0.0
    %6538 = vmatprep.subr.mxu0 0.0
    %6539 = vmatpush2.msra.mxu0 0.0
    %6540 = vmatprep.subr.mxu0 0.0
    %6541 = vmatpush2.msra.mxu0 0.0
    %6542 = vmatprep.subr.mxu0 0.0
    %6543 = vmatpush2.msra.mxu0 0.0
    %6544 = vmatprep.subr.mxu0 0.0
    %6545 = vmatpush2.msra.mxu0 0.0
    %6546 = vmatprep.subr.mxu0 0.0
    %6547 = vmatpush2.msra.mxu0 0.0
    %6548 = vmatprep.subr.mxu0 0.0
    %6549 = vmatpush2.msra.mxu0 0.0
    %6550 = vmatprep.subr.mxu0 0.0
    %6551 = vmatpush2.msra.mxu0 0.0
    %6552 = vmatprep.subr.mxu0 0.0
    %6553 = vmatpush2.msra.mxu0 0.0
    %6554 = vmatprep.subr.mxu0 0.0
    %6555 = vmatpush2.msra.mxu0 0.0
    %6556 = vmatprep.subr.mxu0 0.0
    %6557 = vmatpush2.msra.mxu0 0.0
    %6558 = vmatprep.subr.mxu0 0.0
    %6559 = vmatpush2.msra.mxu0 0.0
    %6560 = vmatprep.subr.mxu0 0.0
    %6561 = vmatpush2.msra.mxu0 0.0
    %6562 = vmatprep.subr.mxu0 0.0
    %6563 = vmatpush2.msra.mxu0 0.0
    %6564 = vmatprep.subr.mxu0 0.0
    %6565 = vmatpush2.msra.mxu0 0.0
    %6566 = vmatprep.mubr.f32.mxu0 0.0
    %6567 = vmatmul.mubr.f32.gmra.mxu0 %v6500
    %v6568 = vpop.f32.mrf.mxu0
    %v6569 = vadd.f32 0.0, %v6568
    %v6570 = vpop.f32.mrf.mxu0
    %6571 = vdwg.mxu0
    %v6573 = vsel %vm2559, %v5908, 0
    %6575 = vmatprep.subr.mxu0 0.0
    %6576 = vmatpush1.msra.mxu0 0.0
    %6577 = vmatprep.subr.mxu0 0.0
    %6578 = vmatpush1.msra.mxu0 0.0
    %6579 = vmatprep.subr.mxu0 0.0
    %6580 = vmatpush1.msra.mxu0 0.0
    %6581 = vmatprep.subr.mxu0 0.0
    %6582 = vmatpush1.msra.mxu0 0.0
    %6583 = vmatprep.subr.mxu0 0.0
    %6584 = vmatpush1.msra.mxu0 0.0
    %6585 = vmatprep.subr.mxu0 0.0
    %6586 = vmatpush1.msra.mxu0 0.0
    %6587 = vmatprep.subr.mxu0 0.0
    %6588 = vmatpush1.msra.mxu0 0.0
    %6589 = vmatprep.subr.mxu0 0.0
    %6590 = vmatpush1.msra.mxu0 0.0
    %6591 = vmatprep.subr.mxu0 0.0
    %6592 = vmatpush1.msra.mxu0 0.0
    %6593 = vmatprep.subr.mxu0 0.0
    %6594 = vmatpush1.msra.mxu0 0.0
    %6595 = vmatprep.subr.mxu0 0.0
    %6596 = vmatpush1.msra.mxu0 0.0
    %6597 = vmatprep.subr.mxu0 0.0
    %6598 = vmatpush1.msra.mxu0 0.0
    %6599 = vmatprep.subr.mxu0 0.0
    %6600 = vmatpush1.msra.mxu0 0.0
    %6601 = vmatprep.subr.mxu0 0.0
    %6602 = vmatpush1.msra.mxu0 0.0
    %6603 = vmatprep.subr.mxu0 0.0
    %6604 = vmatpush1.msra.mxu0 0.0
    %6605 = vmatprep.subr.mxu0 0.0
    %6606 = vmatpush1.msra.mxu0 %v4519
    %6607 = vmatprep.subr.mxu0 0.0
    %6608 = vmatpush2.msra.mxu0 0.0
    %6609 = vmatprep.subr.mxu0 0.0
    %6610 = vmatpush2.msra.mxu0 0.0
    %6611 = vmatprep.subr.mxu0 0.0
    %6612 = vmatpush2.msra.mxu0 0.0
    %6613 = vmatprep.subr.mxu0 0.0
    %6614 = vmatpush2.msra.mxu0 0.0
    %6615 = vmatprep.subr.mxu0 0.0
    %6616 = vmatpush2.msra.mxu0 0.0
    %6617 = vmatprep.subr.mxu0 0.0
    %6618 = vmatpush2.msra.mxu0 0.0
    %6619 = vmatprep.subr.mxu0 0.0
    %6620 = vmatpush2.msra.mxu0 0.0
    %6621 = vmatprep.subr.mxu0 0.0
    %6622 = vmatpush2.msra.mxu0 0.0
    %6623 = vmatprep.subr.mxu0 0.0
    %6624 = vmatpush2.msra.mxu0 0.0
    %6625 = vmatprep.subr.mxu0 0.0
    %6626 = vmatpush2.msra.mxu0 0.0
    %6627 = vmatprep.subr.mxu0 0.0
    %6628 = vmatpush2.msra.mxu0 0.0
    %6629 = vmatprep.subr.mxu0 0.0
    %6630 = vmatpush2.msra.mxu0 0.0
    %6631 = vmatprep.subr.mxu0 0.0
    %6632 = vmatpush2.msra.mxu0 0.0
    %6633 = vmatprep.subr.mxu0 0.0
    %6634 = vmatpush2.msra.mxu0 0.0
    %6635 = vmatprep.subr.mxu0 0.0
    %6636 = vmatpush2.msra.mxu0 0.0
    %6637 = vmatprep.subr.mxu0 0.0
    %6638 = vmatpush2.msra.mxu0 0.0
    %6639 = vmatprep.mubr.f32.mxu0 0.0
    %6640 = vmatmul.mubr.f32.gmra.mxu0 %v6573
    %v6641 = vpop.f32.mrf.mxu0
    %v6642 = vadd.f32 0.0, %v6641
    %v6643 = vpop.f32.mrf.mxu0
    %6644 = vdwg.mxu0
    %v6646 = vsel %vm2559, %v5909, 0
    %6648 = vmatprep.subr.mxu0 0.0
    %6649 = vmatpush1.msra.mxu0 0.0
    %6650 = vmatprep.subr.mxu0 0.0
    %6651 = vmatpush1.msra.mxu0 0.0
    %6652 = vmatprep.subr.mxu0 0.0
    %6653 = vmatpush1.msra.mxu0 0.0
    %6654 = vmatprep.subr.mxu0 0.0
    %6655 = vmatpush1.msra.mxu0 0.0
    %6656 = vmatprep.subr.mxu0 0.0
    %6657 = vmatpush1.msra.mxu0 0.0
    %6658 = vmatprep.subr.mxu0 0.0
    %6659 = vmatpush1.msra.mxu0 0.0
    %6660 = vmatprep.subr.mxu0 0.0
    %6661 = vmatpush1.msra.mxu0 0.0
    %6662 = vmatprep.subr.mxu0 0.0
    %6663 = vmatpush1.msra.mxu0 0.0
    %6664 = vmatprep.subr.mxu0 0.0
    %6665 = vmatpush1.msra.mxu0 0.0
    %6666 = vmatprep.subr.mxu0 0.0
    %6667 = vmatpush1.msra.mxu0 0.0
    %6668 = vmatprep.subr.mxu0 0.0
    %6669 = vmatpush1.msra.mxu0 0.0
    %6670 = vmatprep.subr.mxu0 0.0
    %6671 = vmatpush1.msra.mxu0 0.0
    %6672 = vmatprep.subr.mxu0 0.0
    %6673 = vmatpush1.msra.mxu0 0.0
    %6674 = vmatprep.subr.mxu0 0.0
    %6675 = vmatpush1.msra.mxu0 0.0
    %6676 = vmatprep.subr.mxu0 0.0
    %6677 = vmatpush1.msra.mxu0 0.0
    %6678 = vmatprep.subr.mxu0 0.0
    %6679 = vmatpush1.msra.mxu0 %v4522
    %6680 = vmatprep.subr.mxu0 0.0
    %6681 = vmatpush2.msra.mxu0 0.0
    %6682 = vmatprep.subr.mxu0 0.0
    %6683 = vmatpush2.msra.mxu0 0.0
    %6684 = vmatprep.subr.mxu0 0.0
    %6685 = vmatpush2.msra.mxu0 0.0
    %6686 = vmatprep.subr.mxu0 0.0
    %6687 = vmatpush2.msra.mxu0 0.0
    %6688 = vmatprep.subr.mxu0 0.0
    %6689 = vmatpush2.msra.mxu0 0.0
    %6690 = vmatprep.subr.mxu0 0.0
    %6691 = vmatpush2.msra.mxu0 0.0
    %6692 = vmatprep.subr.mxu0 0.0
    %6693 = vmatpush2.msra.mxu0 0.0
    %6694 = vmatprep.subr.mxu0 0.0
    %6695 = vmatpush2.msra.mxu0 0.0
    %6696 = vmatprep.subr.mxu0 0.0
    %6697 = vmatpush2.msra.mxu0 0.0
    %6698 = vmatprep.subr.mxu0 0.0
    %6699 = vmatpush2.msra.mxu0 0.0
    %6700 = vmatprep.subr.mxu0 0.0
    %6701 = vmatpush2.msra.mxu0 0.0
    %6702 = vmatprep.subr.mxu0 0.0
    %6703 = vmatpush2.msra.mxu0 0.0
    %6704 = vmatprep.subr.mxu0 0.0
    %6705 = vmatpush2.msra.mxu0 0.0
    %6706 = vmatprep.subr.mxu0 0.0
    %6707 = vmatpush2.msra.mxu0 0.0
    %6708 = vmatprep.subr.mxu0 0.0
    %6709 = vmatpush2.msra.mxu0 0.0
    %6710 = vmatprep.subr.mxu0 0.0
    %6711 = vmatpush2.msra.mxu0 0.0
    %6712 = vmatprep.mubr.f32.mxu0 0.0
    %6713 = vmatmul.mubr.f32.gmra.mxu0 %v6646
    %v6714 = vpop.f32.mrf.mxu0
    %v6715 = vadd.f32 0.0, %v6714
    %v6716 = vpop.f32.mrf.mxu0
    %6717 = vdwg.mxu0
    %v6719 = vsel %vm2559, %v5910, 0
    %6721 = vmatprep.subr.mxu0 0.0
    %6722 = vmatpush1.msra.mxu0 0.0
    %6723 = vmatprep.subr.mxu0 0.0
    %6724 = vmatpush1.msra.mxu0 0.0
    %6725 = vmatprep.subr.mxu0 0.0
    %6726 = vmatpush1.msra.mxu0 0.0
    %6727 = vmatprep.subr.mxu0 0.0
    %6728 = vmatpush1.msra.mxu0 0.0
    %6729 = vmatprep.subr.mxu0 0.0
    %6730 = vmatpush1.msra.mxu0 0.0
    %6731 = vmatprep.subr.mxu0 0.0
    %6732 = vmatpush1.msra.mxu0 0.0
    %6733 = vmatprep.subr.mxu0 0.0
    %6734 = vmatpush1.msra.mxu0 0.0
    %6735 = vmatprep.subr.mxu0 0.0
    %6736 = vmatpush1.msra.mxu0 0.0
    %6737 = vmatprep.subr.mxu0 0.0
    %6738 = vmatpush1.msra.mxu0 0.0
    %6739 = vmatprep.subr.mxu0 0.0
    %6740 = vmatpush1.msra.mxu0 0.0
    %6741 = vmatprep.subr.mxu0 0.0
    %6742 = vmatpush1.msra.mxu0 0.0
    %6743 = vmatprep.subr.mxu0 0.0
    %6744 = vmatpush1.msra.mxu0 0.0
    %6745 = vmatprep.subr.mxu0 0.0
    %6746 = vmatpush1.msra.mxu0 0.0
    %6747 = vmatprep.subr.mxu0 0.0
    %6748 = vmatpush1.msra.mxu0 0.0
    %6749 = vmatprep.subr.mxu0 0.0
    %6750 = vmatpush1.msra.mxu0 0.0
    %6751 = vmatprep.subr.mxu0 0.0
    %6752 = vmatpush1.msra.mxu0 %v4525
    %6753 = vmatprep.subr.mxu0 0.0
    %6754 = vmatpush2.msra.mxu0 0.0
    %6755 = vmatprep.subr.mxu0 0.0
    %6756 = vmatpush2.msra.mxu0 0.0
    %6757 = vmatprep.subr.mxu0 0.0
    %6758 = vmatpush2.msra.mxu0 0.0
    %6759 = vmatprep.subr.mxu0 0.0
    %6760 = vmatpush2.msra.mxu0 0.0
    %6761 = vmatprep.subr.mxu0 0.0
    %6762 = vmatpush2.msra.mxu0 0.0
    %6763 = vmatprep.subr.mxu0 0.0
    %6764 = vmatpush2.msra.mxu0 0.0
    %6765 = vmatprep.subr.mxu0 0.0
    %6766 = vmatpush2.msra.mxu0 0.0
    %6767 = vmatprep.subr.mxu0 0.0
    %6768 = vmatpush2.msra.mxu0 0.0
    %6769 = vmatprep.subr.mxu0 0.0
    %6770 = vmatpush2.msra.mxu0 0.0
    %6771 = vmatprep.subr.mxu0 0.0
    %6772 = vmatpush2.msra.mxu0 0.0
    %6773 = vmatprep.subr.mxu0 0.0
    %6774 = vmatpush2.msra.mxu0 0.0
    %6775 = vmatprep.subr.mxu0 0.0
    %6776 = vmatpush2.msra.mxu0 0.0
    %6777 = vmatprep.subr.mxu0 0.0
    %6778 = vmatpush2.msra.mxu0 0.0
    %6779 = vmatprep.subr.mxu0 0.0
    %6780 = vmatpush2.msra.mxu0 0.0
    %6781 = vmatprep.subr.mxu0 0.0
    %6782 = vmatpush2.msra.mxu0 0.0
    %6783 = vmatprep.subr.mxu0 0.0
    %6784 = vmatpush2.msra.mxu0 0.0
    %6785 = vmatprep.mubr.f32.mxu0 0.0
    %6786 = vmatmul.mubr.f32.gmra.mxu0 %v6719
    %v6787 = vpop.f32.mrf.mxu0
    %v6788 = vadd.f32 0.0, %v6787
    %v6789 = vpop.f32.mrf.mxu0
    %6790 = vdwg.mxu0
    %v6792 = vsel %vm2559, %v5911, 0
    %6794 = vmatprep.subr.mxu0 0.0
    %6795 = vmatpush1.msra.mxu0 0.0
    %6796 = vmatprep.subr.mxu0 0.0
    %6797 = vmatpush1.msra.mxu0 0.0
    %6798 = vmatprep.subr.mxu0 0.0
    %6799 = vmatpush1.msra.mxu0 0.0
    %6800 = vmatprep.subr.mxu0 0.0
    %6801 = vmatpush1.msra.mxu0 0.0
    %6802 = vmatprep.subr.mxu0 0.0
    %6803 = vmatpush1.msra.mxu0 0.0
    %6804 = vmatprep.subr.mxu0 0.0
    %6805 = vmatpush1.msra.mxu0 0.0
    %6806 = vmatprep.subr.mxu0 0.0
    %6807 = vmatpush1.msra.mxu0 0.0
    %6808 = vmatprep.subr.mxu0 0.0
    %6809 = vmatpush1.msra.mxu0 0.0
    %6810 = vmatprep.subr.mxu0 0.0
    %6811 = vmatpush1.msra.mxu0 0.0
    %6812 = vmatprep.subr.mxu0 0.0
    %6813 = vmatpush1.msra.mxu0 0.0
    %6814 = vmatprep.subr.mxu0 0.0
    %6815 = vmatpush1.msra.mxu0 0.0
    %6816 = vmatprep.subr.mxu0 0.0
    %6817 = vmatpush1.msra.mxu0 0.0
    %6818 = vmatprep.subr.mxu0 0.0
    %6819 = vmatpush1.msra.mxu0 0.0
    %6820 = vmatprep.subr.mxu0 0.0
    %6821 = vmatpush1.msra.mxu0 0.0
    %6822 = vmatprep.subr.mxu0 0.0
    %6823 = vmatpush1.msra.mxu0 0.0
    %6824 = vmatprep.subr.mxu0 0.0
    %6825 = vmatpush1.msra.mxu0 %v4528
    %6826 = vmatprep.subr.mxu0 0.0
    %6827 = vmatpush2.msra.mxu0 0.0
    %6828 = vmatprep.subr.mxu0 0.0
    %6829 = vmatpush2.msra.mxu0 0.0
    %6830 = vmatprep.subr.mxu0 0.0
    %6831 = vmatpush2.msra.mxu0 0.0
    %6832 = vmatprep.subr.mxu0 0.0
    %6833 = vmatpush2.msra.mxu0 0.0
    %6834 = vmatprep.subr.mxu0 0.0
    %6835 = vmatpush2.msra.mxu0 0.0
    %6836 = vmatprep.subr.mxu0 0.0
    %6837 = vmatpush2.msra.mxu0 0.0
    %6838 = vmatprep.subr.mxu0 0.0
    %6839 = vmatpush2.msra.mxu0 0.0
    %6840 = vmatprep.subr.mxu0 0.0
    %6841 = vmatpush2.msra.mxu0 0.0
    %6842 = vmatprep.subr.mxu0 0.0
    %6843 = vmatpush2.msra.mxu0 0.0
    %6844 = vmatprep.subr.mxu0 0.0
    %6845 = vmatpush2.msra.mxu0 0.0
    %6846 = vmatprep.subr.mxu0 0.0
    %6847 = vmatpush2.msra.mxu0 0.0
    %6848 = vmatprep.subr.mxu0 0.0
    %6849 = vmatpush2.msra.mxu0 0.0
    %6850 = vmatprep.subr.mxu0 0.0
    %6851 = vmatpush2.msra.mxu0 0.0
    %6852 = vmatprep.subr.mxu0 0.0
    %6853 = vmatpush2.msra.mxu0 0.0
    %6854 = vmatprep.subr.mxu0 0.0
    %6855 = vmatpush2.msra.mxu0 0.0
    %6856 = vmatprep.subr.mxu0 0.0
    %6857 = vmatpush2.msra.mxu0 0.0
    %6858 = vmatprep.mubr.f32.mxu0 0.0
    %6859 = vmatmul.mubr.f32.gmra.mxu0 %v6792
    %v6860 = vpop.f32.mrf.mxu0
    %v6861 = vadd.f32 0.0, %v6860
    %v6862 = vpop.f32.mrf.mxu0
    %6863 = vdwg.mxu0
    %v6865 = vsel %vm2559, %v5912, 0
    %6867 = vmatprep.subr.mxu0 0.0
    %6868 = vmatpush1.msra.mxu0 0.0
    %6869 = vmatprep.subr.mxu0 0.0
    %6870 = vmatpush1.msra.mxu0 0.0
    %6871 = vmatprep.subr.mxu0 0.0
    %6872 = vmatpush1.msra.mxu0 0.0
    %6873 = vmatprep.subr.mxu0 0.0
    %6874 = vmatpush1.msra.mxu0 0.0
    %6875 = vmatprep.subr.mxu0 0.0
    %6876 = vmatpush1.msra.mxu0 0.0
    %6877 = vmatprep.subr.mxu0 0.0
    %6878 = vmatpush1.msra.mxu0 0.0
    %6879 = vmatprep.subr.mxu0 0.0
    %6880 = vmatpush1.msra.mxu0 0.0
    %6881 = vmatprep.subr.mxu0 0.0
    %6882 = vmatpush1.msra.mxu0 0.0
    %6883 = vmatprep.subr.mxu0 0.0
    %6884 = vmatpush1.msra.mxu0 0.0
    %6885 = vmatprep.subr.mxu0 0.0
    %6886 = vmatpush1.msra.mxu0 0.0
    %6887 = vmatprep.subr.mxu0 0.0
    %6888 = vmatpush1.msra.mxu0 0.0
    %6889 = vmatprep.subr.mxu0 0.0
    %6890 = vmatpush1.msra.mxu0 0.0
    %6891 = vmatprep.subr.mxu0 0.0
    %6892 = vmatpush1.msra.mxu0 0.0
    %6893 = vmatprep.subr.mxu0 0.0
    %6894 = vmatpush1.msra.mxu0 0.0
    %6895 = vmatprep.subr.mxu0 0.0
    %6896 = vmatpush1.msra.mxu0 0.0
    %6897 = vmatprep.subr.mxu0 0.0
    %6898 = vmatpush1.msra.mxu0 %v4531
    %6899 = vmatprep.subr.mxu0 0.0
    %6900 = vmatpush2.msra.mxu0 0.0
    %6901 = vmatprep.subr.mxu0 0.0
    %6902 = vmatpush2.msra.mxu0 0.0
    %6903 = vmatprep.subr.mxu0 0.0
    %6904 = vmatpush2.msra.mxu0 0.0
    %6905 = vmatprep.subr.mxu0 0.0
    %6906 = vmatpush2.msra.mxu0 0.0
    %6907 = vmatprep.subr.mxu0 0.0
    %6908 = vmatpush2.msra.mxu0 0.0
    %6909 = vmatprep.subr.mxu0 0.0
    %6910 = vmatpush2.msra.mxu0 0.0
    %6911 = vmatprep.subr.mxu0 0.0
    %6912 = vmatpush2.msra.mxu0 0.0
    %6913 = vmatprep.subr.mxu0 0.0
    %6914 = vmatpush2.msra.mxu0 0.0
    %6915 = vmatprep.subr.mxu0 0.0
    %6916 = vmatpush2.msra.mxu0 0.0
    %6917 = vmatprep.subr.mxu0 0.0
    %6918 = vmatpush2.msra.mxu0 0.0
    %6919 = vmatprep.subr.mxu0 0.0
    %6920 = vmatpush2.msra.mxu0 0.0
    %6921 = vmatprep.subr.mxu0 0.0
    %6922 = vmatpush2.msra.mxu0 0.0
    %6923 = vmatprep.subr.mxu0 0.0
    %6924 = vmatpush2.msra.mxu0 0.0
    %6925 = vmatprep.subr.mxu0 0.0
    %6926 = vmatpush2.msra.mxu0 0.0
    %6927 = vmatprep.subr.mxu0 0.0
    %6928 = vmatpush2.msra.mxu0 0.0
    %6929 = vmatprep.subr.mxu0 0.0
    %6930 = vmatpush2.msra.mxu0 0.0
    %6931 = vmatprep.mubr.f32.mxu0 0.0
    %6932 = vmatmul.mubr.f32.gmra.mxu0 %v6865
    %v6933 = vpop.f32.mrf.mxu0
    %v6934 = vadd.f32 0.0, %v6933
    %v6935 = vpop.f32.mrf.mxu0
    %6936 = vdwg.mxu0
    %v6938 = vsel %vm2559, %v5913, 0
    %6940 = vmatprep.subr.mxu0 0.0
    %6941 = vmatpush1.msra.mxu0 0.0
    %6942 = vmatprep.subr.mxu0 0.0
    %6943 = vmatpush1.msra.mxu0 0.0
    %6944 = vmatprep.subr.mxu0 0.0
    %6945 = vmatpush1.msra.mxu0 0.0
    %6946 = vmatprep.subr.mxu0 0.0
    %6947 = vmatpush1.msra.mxu0 0.0
    %6948 = vmatprep.subr.mxu0 0.0
    %6949 = vmatpush1.msra.mxu0 0.0
    %6950 = vmatprep.subr.mxu0 0.0
    %6951 = vmatpush1.msra.mxu0 0.0
    %6952 = vmatprep.subr.mxu0 0.0
    %6953 = vmatpush1.msra.mxu0 0.0
    %6954 = vmatprep.subr.mxu0 0.0
    %6955 = vmatpush1.msra.mxu0 0.0
    %6956 = vmatprep.subr.mxu0 0.0
    %6957 = vmatpush1.msra.mxu0 0.0
    %6958 = vmatprep.subr.mxu0 0.0
    %6959 = vmatpush1.msra.mxu0 0.0
    %6960 = vmatprep.subr.mxu0 0.0
    %6961 = vmatpush1.msra.mxu0 0.0
    %6962 = vmatprep.subr.mxu0 0.0
    %6963 = vmatpush1.msra.mxu0 0.0
    %6964 = vmatprep.subr.mxu0 0.0
    %6965 = vmatpush1.msra.mxu0 0.0
    %6966 = vmatprep.subr.mxu0 0.0
    %6967 = vmatpush1.msra.mxu0 0.0
    %6968 = vmatprep.subr.mxu0 0.0
    %6969 = vmatpush1.msra.mxu0 0.0
    %6970 = vmatprep.subr.mxu0 0.0
    %6971 = vmatpush1.msra.mxu0 %v4534
    %6972 = vmatprep.subr.mxu0 0.0
    %6973 = vmatpush2.msra.mxu0 0.0
    %6974 = vmatprep.subr.mxu0 0.0
    %6975 = vmatpush2.msra.mxu0 0.0
    %6976 = vmatprep.subr.mxu0 0.0
    %6977 = vmatpush2.msra.mxu0 0.0
    %6978 = vmatprep.subr.mxu0 0.0
    %6979 = vmatpush2.msra.mxu0 0.0
    %6980 = vmatprep.subr.mxu0 0.0
    %6981 = vmatpush2.msra.mxu0 0.0
    %6982 = vmatprep.subr.mxu0 0.0
    %6983 = vmatpush2.msra.mxu0 0.0
    %6984 = vmatprep.subr.mxu0 0.0
    %6985 = vmatpush2.msra.mxu0 0.0
    %6986 = vmatprep.subr.mxu0 0.0
    %6987 = vmatpush2.msra.mxu0 0.0
    %6988 = vmatprep.subr.mxu0 0.0
    %6989 = vmatpush2.msra.mxu0 0.0
    %6990 = vmatprep.subr.mxu0 0.0
    %6991 = vmatpush2.msra.mxu0 0.0
    %6992 = vmatprep.subr.mxu0 0.0
    %6993 = vmatpush2.msra.mxu0 0.0
    %6994 = vmatprep.subr.mxu0 0.0
    %6995 = vmatpush2.msra.mxu0 0.0
    %6996 = vmatprep.subr.mxu0 0.0
    %6997 = vmatpush2.msra.mxu0 0.0
    %6998 = vmatprep.subr.mxu0 0.0
    %6999 = vmatpush2.msra.mxu0 0.0
    %7000 = vmatprep.subr.mxu0 0.0
    %7001 = vmatpush2.msra.mxu0 0.0
    %7002 = vmatprep.subr.mxu0 0.0
    %7003 = vmatpush2.msra.mxu0 0.0
    %7004 = vmatprep.mubr.f32.mxu0 0.0
    %7005 = vmatmul.mubr.f32.gmra.mxu0 %v6938
    %v7006 = vpop.f32.mrf.mxu0
    %v7007 = vadd.f32 0.0, %v7006
    %v7008 = vpop.f32.mrf.mxu0
    %7009 = vdwg.mxu0
    %v7011 = vsel %vm2559, %v5914, 0
    %7013 = vmatprep.subr.mxu0 0.0
    %7014 = vmatpush1.msra.mxu0 0.0
    %7015 = vmatprep.subr.mxu0 0.0
    %7016 = vmatpush1.msra.mxu0 0.0
    %7017 = vmatprep.subr.mxu0 0.0
    %7018 = vmatpush1.msra.mxu0 0.0
    %7019 = vmatprep.subr.mxu0 0.0
    %7020 = vmatpush1.msra.mxu0 0.0
    %7021 = vmatprep.subr.mxu0 0.0
    %7022 = vmatpush1.msra.mxu0 0.0
    %7023 = vmatprep.subr.mxu0 0.0
    %7024 = vmatpush1.msra.mxu0 0.0
    %7025 = vmatprep.subr.mxu0 0.0
    %7026 = vmatpush1.msra.mxu0 0.0
    %7027 = vmatprep.subr.mxu0 0.0
    %7028 = vmatpush1.msra.mxu0 0.0
    %7029 = vmatprep.subr.mxu0 0.0
    %7030 = vmatpush1.msra.mxu0 0.0
    %7031 = vmatprep.subr.mxu0 0.0
    %7032 = vmatpush1.msra.mxu0 0.0
    %7033 = vmatprep.subr.mxu0 0.0
    %7034 = vmatpush1.msra.mxu0 0.0
    %7035 = vmatprep.subr.mxu0 0.0
    %7036 = vmatpush1.msra.mxu0 0.0
    %7037 = vmatprep.subr.mxu0 0.0
    %7038 = vmatpush1.msra.mxu0 0.0
    %7039 = vmatprep.subr.mxu0 0.0
    %7040 = vmatpush1.msra.mxu0 0.0
    %7041 = vmatprep.subr.mxu0 0.0
    %7042 = vmatpush1.msra.mxu0 0.0
    %7043 = vmatprep.subr.mxu0 0.0
    %7044 = vmatpush1.msra.mxu0 %v4537
    %7045 = vmatprep.subr.mxu0 0.0
    %7046 = vmatpush2.msra.mxu0 0.0
    %7047 = vmatprep.subr.mxu0 0.0
    %7048 = vmatpush2.msra.mxu0 0.0
    %7049 = vmatprep.subr.mxu0 0.0
    %7050 = vmatpush2.msra.mxu0 0.0
    %7051 = vmatprep.subr.mxu0 0.0
    %7052 = vmatpush2.msra.mxu0 0.0
    %7053 = vmatprep.subr.mxu0 0.0
    %7054 = vmatpush2.msra.mxu0 0.0
    %7055 = vmatprep.subr.mxu0 0.0
    %7056 = vmatpush2.msra.mxu0 0.0
    %7057 = vmatprep.subr.mxu0 0.0
    %7058 = vmatpush2.msra.mxu0 0.0
    %7059 = vmatprep.subr.mxu0 0.0
    %7060 = vmatpush2.msra.mxu0 0.0
    %7061 = vmatprep.subr.mxu0 0.0
    %7062 = vmatpush2.msra.mxu0 0.0
    %7063 = vmatprep.subr.mxu0 0.0
    %7064 = vmatpush2.msra.mxu0 0.0
    %7065 = vmatprep.subr.mxu0 0.0
    %7066 = vmatpush2.msra.mxu0 0.0
    %7067 = vmatprep.subr.mxu0 0.0
    %7068 = vmatpush2.msra.mxu0 0.0
    %7069 = vmatprep.subr.mxu0 0.0
    %7070 = vmatpush2.msra.mxu0 0.0
    %7071 = vmatprep.subr.mxu0 0.0
    %7072 = vmatpush2.msra.mxu0 0.0
    %7073 = vmatprep.subr.mxu0 0.0
    %7074 = vmatpush2.msra.mxu0 0.0
    %7075 = vmatprep.subr.mxu0 0.0
    %7076 = vmatpush2.msra.mxu0 0.0
    %7077 = vmatprep.mubr.f32.mxu0 0.0
    %7078 = vmatmul.mubr.f32.gmra.mxu0 %v7011
    %v7079 = vpop.f32.mrf.mxu0
    %v7080 = vadd.f32 0.0, %v7079
    %v7081 = vpop.f32.mrf.mxu0
    %7082 = vdwg.mxu0
    %7084 = vrot.lane.b32.xlu0 %v6058, 4
    %v7085 = vpop.permute.xlu0 %7084
    %7088 = vrot.lane.b32.xlu0 %v6131, 8
    %v7089 = vpop.permute.xlu0 %7088
    %7092 = vrot.lane.b32.xlu0 %v6204, 12
    %v7093 = vpop.permute.xlu0 %7092
    %7096 = vrot.lane.b32.xlu0 %v6277, 16
    %v7097 = vpop.permute.xlu0 %7096
    %7100 = vrot.lane.b32.xlu0 %v6350, 20
    %v7101 = vpop.permute.xlu0 %7100
    %7104 = vrot.lane.b32.xlu0 %v6423, 24
    %v7105 = vpop.permute.xlu0 %7104
    %7108 = vrot.lane.b32.xlu0 %v6496, 28
    %v7109 = vpop.permute.xlu0 %7108
    %v7111 = vsel %vm1358, %v5985, %v7085
    %v7112 = vsel %vm2559, %v7111, %v7089
    %v7113 = vsel %vm3934, %v7112, %v7093
    %v7114 = vsel %vm3936, %v7113, %v7097
    %v7115 = vsel %vm3938, %v7114, %v7101
    %v7116 = vsel %vm3940, %v7115, %v7105
    %v7117 = vsel %vm3942, %v7116, %v7109
    %7119 = vrot.lane.b32.xlu0 %v6642, 4
    %v7120 = vpop.permute.xlu0 %7119
    %7123 = vrot.lane.b32.xlu0 %v6715, 8
    %v7124 = vpop.permute.xlu0 %7123
    %7127 = vrot.lane.b32.xlu0 %v6788, 12
    %v7128 = vpop.permute.xlu0 %7127
    %7131 = vrot.lane.b32.xlu0 %v6861, 16
    %v7132 = vpop.permute.xlu0 %7131
    %7135 = vrot.lane.b32.xlu0 %v6934, 20
    %v7136 = vpop.permute.xlu0 %7135
    %7139 = vrot.lane.b32.xlu0 %v7007, 24
    %v7140 = vpop.permute.xlu0 %7139
    %7143 = vrot.lane.b32.xlu0 %v7080, 28
    %v7144 = vpop.permute.xlu0 %7143
    %v7146 = vsel %vm1358, %v6569, %v7120
    %v7147 = vsel %vm2559, %v7146, %v7124
    %v7148 = vsel %vm3934, %v7147, %v7128
    %v7149 = vsel %vm3936, %v7148, %v7132
    %v7150 = vsel %vm3938, %v7149, %v7136
    %v7151 = vsel %vm3940, %v7150, %v7140
    %v7152 = vsel %vm3942, %v7151, %v7144
    %v7153 = vadd.f32 %v4265, %v7117
    %v7154 = vadd.f32 %v4270, %v7152
    %v7155 = vsel %vm487, %v7153, 0.0
    %7156 = vadd.xlane.f32.xlu0 %v7155
    %v7157 = vpop.xlane.xlu0 %7156
    %v7158 = vsel %vm487, %v7154, 0.0
    %7159 = vadd.xlane.f32.xlu0 %v7158
    %v7160 = vpop.xlane.xlu0 %7159
    %v7161 = vmul.f32 %v7157, %v3987
    %v7162 = vmul.f32 %v7160, %v3987
    %v7163 = vsub.f32 %v7153, %v7161
    %v7164 = vsub.f32 %v7154, %v7162
    %v7165 = vmul.f32 %v7163, %v7163
    %v7166 = vmul.f32 %v7164, %v7164
    %v7167 = vsel %vm487, %v7165, 0.0
    %7168 = vadd.xlane.f32.xlu0 %v7167
    %v7169 = vpop.xlane.xlu0 %7168
    %v7170 = vsel %vm487, %v7166, 0.0
    %7171 = vadd.xlane.f32.xlu0 %v7170
    %v7172 = vpop.xlane.xlu0 %7171
    %v7173 = vmul.f32 %v7169, %v3987
    %v7174 = vmul.f32 %v7172, %v3987
    %v7175 = vadd.f32 %v7173, 1e-05
    %v7176 = vadd.f32 %v7174, 1e-05
    %v7177 = vrsqrt.pop %v7175
    %v7178 = vrsqrt.pop %v7176
    %v7179 = vmul.f32 %v7163, %v7177
    %v7180 = vmul.f32 %v7164, %v7178
    %v7182 = vlaneseq
    %v7183 = vshrl.u32 %v7182, 7
    %v7184 = vsub.s32 0, %v7183
    %v7185 = vrot.slane %v4188, %v7184
    %v7187 = vmul.f32 %v7179, %v7185
    %v7188 = vmul.f32 %v7180, %v7185
    %v7190 = vlaneseq
    %v7191 = vshrl.u32 %v7190, 7
    %v7192 = vsub.s32 0, %v7191
    %v7193 = vrot.slane %v4189, %v7192
    %v7195 = vadd.f32 %v7187, %v7193
    %v7196 = vadd.f32 %v7188, %v7193
    %v7198 = vlaneseq
    %v7199 = vshrl.u32 %v7198, 7
    %v7200 = vsub.s32 0, %v7199
    %v7201 = vrot.slane %v4187, %v7200
    %v7204 = vsel %vm487, %v7195, 0
    %v7207 = vsel %vm487, %v7196, 0
    %7209 = vmatprep.subr.mxu0 0.0
    %7210 = vmatpush1.msra.mxu0 0.0
    %7211 = vmatprep.subr.mxu0 0.0
    %7212 = vmatpush1.msra.mxu0 0.0
    %7213 = vmatprep.subr.mxu0 0.0
    %7214 = vmatpush1.msra.mxu0 0.0
    %7215 = vmatprep.subr.mxu0 0.0
    %7216 = vmatpush1.msra.mxu0 0.0
    %7217 = vmatprep.subr.mxu0 0.0
    %7218 = vmatpush1.msra.mxu0 0.0
    %7219 = vmatprep.subr.mxu0 0.0
    %7220 = vmatpush1.msra.mxu0 0.0
    %7221 = vmatprep.subr.mxu0 0.0
    %7222 = vmatpush1.msra.mxu0 0.0
    %7223 = vmatprep.subr.mxu0 0.0
    %7224 = vmatpush1.msra.mxu0 0.0
    %7225 = vmatprep.subr.mxu0 0.0
    %7226 = vmatpush1.msra.mxu0 0.0
    %7227 = vmatprep.subr.mxu0 0.0
    %7228 = vmatpush1.msra.mxu0 0.0
    %7229 = vmatprep.subr.mxu0 0.0
    %7230 = vmatpush1.msra.mxu0 0.0
    %7231 = vmatprep.subr.mxu0 0.0
    %7232 = vmatpush1.msra.mxu0 0.0
    %7233 = vmatprep.subr.mxu0 0.0
    %7234 = vmatpush1.msra.mxu0 %v4186
    %7235 = vmatprep.subr.mxu0 0.0
    %7236 = vmatpush1.msra.mxu0 %v4185
    %7237 = vmatprep.subr.mxu0 0.0
    %7238 = vmatpush1.msra.mxu0 %v4184
    %7239 = vmatprep.subr.mxu0 0.0
    %7240 = vmatpush1.msra.mxu0 %v4183
    %7241 = vmatprep.subr.mxu0 0.0
    %7242 = vmatpush2.msra.mxu0 0.0
    %7243 = vmatprep.subr.mxu0 0.0
    %7244 = vmatpush2.msra.mxu0 0.0
    %7245 = vmatprep.subr.mxu0 0.0
    %7246 = vmatpush2.msra.mxu0 0.0
    %7247 = vmatprep.subr.mxu0 0.0
    %7248 = vmatpush2.msra.mxu0 0.0
    %7249 = vmatprep.subr.mxu0 0.0
    %7250 = vmatpush2.msra.mxu0 0.0
    %7251 = vmatprep.subr.mxu0 0.0
    %7252 = vmatpush2.msra.mxu0 0.0
    %7253 = vmatprep.subr.mxu0 0.0
    %7254 = vmatpush2.msra.mxu0 0.0
    %7255 = vmatprep.subr.mxu0 0.0
    %7256 = vmatpush2.msra.mxu0 0.0
    %7257 = vmatprep.subr.mxu0 0.0
    %7258 = vmatpush2.msra.mxu0 0.0
    %7259 = vmatprep.subr.mxu0 0.0
    %7260 = vmatpush2.msra.mxu0 0.0
    %7261 = vmatprep.subr.mxu0 0.0
    %7262 = vmatpush2.msra.mxu0 0.0
    %7263 = vmatprep.subr.mxu0 0.0
    %7264 = vmatpush2.msra.mxu0 0.0
    %7265 = vmatprep.subr.mxu0 0.0
    %7266 = vmatpush2.msra.mxu0 0.0
    %7267 = vmatprep.subr.mxu0 0.0
    %7268 = vmatpush2.msra.mxu0 0.0
    %7269 = vmatprep.subr.mxu0 0.0
    %7270 = vmatpush2.msra.mxu0 0.0
    %7271 = vmatprep.subr.mxu0 0.0
    %7272 = vmatpush2.msra.mxu0 0.0
    %7273 = vmatprep.mubr.f32.mxu0 0.0
    %7274 = vmatmul.mubr.f32.gmra.mxu0 %v7204
    %v7275 = vpop.f32.mrf.mxu0
    %v7276 = vadd.f32 %v7201, %v7275
    %v7277 = vpop.f32.mrf.mxu0
    %7278 = vmatprep.mubr.f32.mxu0 0.0
    %7279 = vmatmul.mubr.f32.gmra.mxu0 %v7207
    %v7280 = vpop.f32.mrf.mxu0
    %v7281 = vadd.f32 %v7201, %v7280
    %v7282 = vpop.f32.mrf.mxu0
    %7283 = vdwg.mxu0
    %v7284 = vmax.f32 %v7276, 0.0
    %v7285 = vmax.f32 %v7281, 0.0
    %v7286 = vadd.f32 %v7195, %v7284
    %v7287 = vadd.f32 %v7196, %v7285
    %v7288 = vsel %vm487, %v7286, 0.0
    %7289 = vadd.xlane.f32.xlu0 %v7288
    %v7290 = vpop.xlane.xlu0 %7289
    %v7291 = vsel %vm487, %v7287, 0.0
    %7292 = vadd.xlane.f32.xlu0 %v7291
    %v7293 = vpop.xlane.xlu0 %7292
    %v7294 = vmul.f32 %v7290, %v3987
    %v7295 = vmul.f32 %v7293, %v3987
    %v7296 = vsub.f32 %v7286, %v7294
    %v7297 = vsub.f32 %v7287, %v7295
    %v7298 = vmul.f32 %v7296, %v7296
    %v7299 = vmul.f32 %v7297, %v7297
    %v7300 = vsel %vm487, %v7298, 0.0
    %7301 = vadd.xlane.f32.xlu0 %v7300
    %v7302 = vpop.xlane.xlu0 %7301
    %v7303 = vsel %vm487, %v7299, 0.0
    %7304 = vadd.xlane.f32.xlu0 %v7303
    %v7305 = vpop.xlane.xlu0 %7304
    %v7306 = vmul.f32 %v7302, %v3987
    %v7307 = vmul.f32 %v7305, %v3987
    %v7308 = vadd.f32 %v7306, 1e-05
    %v7309 = vadd.f32 %v7307, 1e-05
    %v7310 = vrsqrt.pop %v7308
    %v7311 = vrsqrt.pop %v7309
    %v7312 = vmul.f32 %v7296, %v7310
    %v7313 = vmul.f32 %v7297, %v7311
    %v7315 = vlaneseq
    %v7316 = vshrl.u32 %v7315, 7
    %v7317 = vsub.s32 0, %v7316
    %v7318 = vrot.slane %v4190, %v7317
    %v7320 = vmul.f32 %v7312, %v7318
    %v7321 = vmul.f32 %v7313, %v7318
    %v7323 = vlaneseq
    %v7324 = vshrl.u32 %v7323, 7
    %v7325 = vsub.s32 0, %v7324
    %v7326 = vrot.slane %v4191, %v7325
    %v7328 = vadd.f32 %v7320, %v7326
    %v7329 = vadd.f32 %v7321, %v7326
    %7330 = vst.msk [vmem:[#allocation34] sm:$0xff] %vm487, %v7328
    %7331 = vst.msk [vmem:[#allocation34 + $0x8] sm:$0xff] %vm487, %v7329
    // Predicated region
    $region206: #{neu_cross_attn_encoder.1} parent=1 // pred_check
      _
    $region207: #{neu_cross_attn_encoder.1} parent=1 // pred_check_branch
      %7333 = sbr.rel (0) target = $region209
    $region208: #{neu_cross_attn_encoder.1} parent=1 // pred_region
      %s7335 = ssub.s32 256, 256
      %7336 = vsyncadd [#allocation4], %s7335
      %s7337 = sshll.u32 [#allocation34], 4
      %s7338 = int_to_ptr.vmem [resolvable:$true] %s7337
      %7343 = dma.vmem_to_hbm [thread:$0]  %s7338, 256, %s63, [#allocation4], 128, 128, 8
    $region209: #{neu_cross_attn_encoder.1} parent=1 // pred_fallthru
      _
    // Predicated region
    $region210: #{neu_cross_attn_encoder.1} parent=1 // pred_check
      _
    $region211: #{neu_cross_attn_encoder.1} parent=1 // pred_check_branch
      %7345 = sbr.rel (0) target = $region213
    $region212: #{neu_cross_attn_encoder.1} parent=1 // pred_region
      %7346 = dma.done [#allocation4], 256
    $region213: #{neu_cross_attn_encoder.1} parent=1 // pred_fallthru
      _
    %7347 = vsyncpa [#allocation3], 1
    %7348 = vsyncpa [#allocation6], 1
    %7349 = vsyncpa [#allocation9], 1
    %7350 = vsyncpa [#allocation12], 1
    %7351 = vsyncpa [#allocation15], 1
    %7352 = vsyncpa [#allocation18], 1
    %7353 = vsyncpa [#allocation21], 1
    %7354 = vsyncpa [#allocation24], 1
    %7355 = vsyncpa [#allocation27], 1
    %7356 = vsyncpa [#allocation30], 1
    %7357 = vsyncpa [#allocation33], 1
    %7358 = vsyncpa [#allocation4], 1

</llo_original>
